<compile_context>
chip_gen: v5e
topology: v5e:2x2
jax: 0.10.0
libtpu: 0.0.40
codegen_flags: <defaults>
</compile_context>

<pallas_src>
import math

import jax
import jax.numpy as jnp
from jax.experimental import pallas as pl
from jax.experimental.pallas import tpu as pltpu


def _const_spec(arr):
    """Full-array block that is identical for every grid step."""
    zeros = (0,) * arr.ndim
    return pl.BlockSpec(arr.shape, lambda n, z=zeros: z)


# ----------------------------------------------------------------------------
# Fully fused kernel: conv stack + head convs + FC heads
# ----------------------------------------------------------------------------
def make_fused_resnet_kernel(H, W, NH, CP, CV, A, R):
    HW = H * W

    def kernel(*refs):
        x_ref = refs[0]
        ws_ref, bs_ref = refs[1], refs[2]
        i = 3
        if R > 0:
            w1_ref, b1_ref, w2_ref, b2_ref = refs[3:7]
            i = 7
        wh_ref, bh_ref = refs[i], refs[i + 1]
        wpf_ref, bpf_ref, wvf_ref, bvf_ref = refs[i + 2:i + 6]
        pol_ref, val_ref = refs[i + 6], refs[i + 7]
        xpad, col = refs[i + 8], refs[i + 9]

        # Zero the halo scratch once per grid step: the 1-pixel border stays
        # zero for every conv (the interior is fully rewritten before each
        # use).  Not gated on program_id==0: scratch persists per core and
        # under megacore each core runs its own subset of steps.
        xpad[...] = jnp.zeros(xpad.shape, jnp.float32)

        def conv_bn(act_flat, w, bias):
            """3x3 'same' conv + folded BN: im2col + one bf16 MXU matmul.

            act_flat: (H*W, NH) f32.  BN scale is pre-folded into `w` (bf16);
            only the per-channel bias add remains.  Returns (H*W, Cout) f32.
            """
            xpad[1:H + 1, 1:W + 1, :] = act_flat.reshape(H, W, NH)
            for k in range(9):
                dy, dx = divmod(k, 3)
                col[:, k * NH:(k + 1) * NH] = (
                    xpad[dy:dy + H, dx:dx + W, :]
                    .reshape(HW, NH).astype(jnp.bfloat16))
            return jnp.dot(col[...], w,
                           preferred_element_type=jnp.float32) + bias

        # startBlock: Conv -> BN -> ReLU (input already channel-padded to NH).
        act = jnp.maximum(
            conv_bn(x_ref[...].reshape(HW, NH), ws_ref[...], bs_ref[...]), 0.0)

        # backBone: ResBlocks, activations stay VMEM/register resident.
        # (Unrolled: fine for small R; use lax.fori_loop with dynamic
        #  w1_ref[r] indexing once R grows past a handful.)
        for r in range(R):
            residual = act
            a1 = jnp.maximum(conv_bn(act, w1_ref[r], b1_ref[r]), 0.0)
            act = jnp.maximum(conv_bn(a1, w2_ref[r], b2_ref[r]) + residual, 0.0)

        # Both head convs: ONE shared im2col staging, ONE MXU matmul with the
        # policy/value weights concatenated along the output dim, then ReLU.
        heads = jnp.maximum(conv_bn(act, wh_ref[...], bh_ref[...]), 0.0)
        p_act = heads[:, :CP]                      # (HW, CP) f32
        v_act = heads[:, CP:CP + CV]               # (HW, CV) f32

        # Policy Linear, fused.  Per-channel contraction over H*W avoids any
        # lane-collapse reshape of the activation; the MXU sees the same total
        # K rows as a single flattened (1, HW*CP) x (HW*CP, A) matmul.
        p_actT = p_act.T                           # (CP, HW) f32
        pol = bpf_ref[...]                         # (1, A) f32
        for c in range(CP):
            pol = pol + jnp.dot(p_actT[c:c + 1, :].astype(jnp.bfloat16),
                                wpf_ref[c],
                                preferred_element_type=jnp.float32)
        pol_ref[...] = pol.reshape(1, 1, A)

        # Value Linear + Tanh, fused: elementwise multiply + full reduction.
        val = jnp.sum(v_act * wvf_ref[...]) + bvf_ref[...]    # (1, 1) f32
        val_ref[...] = jnp.tanh(val).reshape(1, 1, 1)

    return kernel


def fused_resnet_call(x_nhwc, params):
    """x_nhwc: (N, H, W, NH) f32 (input channel-padded to NH).

    Returns policy (N, A) and value (N, 1).
    """
    N, H, W, NH = x_nhwc.shape
    HW = H * W
    R = params["w1"].shape[0] if "w1" in params else 0
    CP, CV = params["cp"], params["cv"]
    A = params["bp_fc"].shape[1]

    in_specs = [pl.BlockSpec((1, H, W, NH), lambda n: (n, 0, 0, 0))]
    args = [x_nhwc]
    consts = [params["w_start"], params["b_start"]]
    if R > 0:
        consts += [params["w1"], params["b1"], params["w2"], params["b2"]]
    consts += [params["w_heads"], params["b_heads"],
               params["wp_fc"], params["bp_fc"],
               params["wv_fc"], params["bv_fc"]]
    for arr in consts:
        in_specs.append(_const_spec(arr))
        args.append(arr)

    pol, val = pl.pallas_call(
        make_fused_resnet_kernel(H, W, NH, CP, CV, A, R),
        out_shape=(jax.ShapeDtypeStruct((N, 1, A), jnp.float32),
                   jax.ShapeDtypeStruct((N, 1, 1), jnp.float32)),
        grid=(N,),
        in_specs=in_specs,
        out_specs=(pl.BlockSpec((1, 1, A), lambda n: (n, 0, 0)),
                   pl.BlockSpec((1, 1, 1), lambda n: (n, 0, 0))),
        scratch_shapes=[
            pltpu.VMEM((H + 2, W + 2, NH), jnp.float32),   # halo'd activation
            pltpu.VMEM((HW, 9 * NH), jnp.bfloat16),        # im2col patch (bf16)
        ],
        compiler_params=pltpu.CompilerParams(
            dimension_semantics=("parallel",),
            vmem_limit_bytes=32 * 1024 * 1024),
    )(*args)
    return pol.reshape(N, A), val.reshape(N, 1)


# ----------------------------------------------------------------------------
# Parameter initialization (deterministic synthetic weights, NN.py shapes)
# ----------------------------------------------------------------------------
def _init_conv_raw(key, cin, cout):
    k1, k2 = jax.random.split(key)
    bound = 1.0 / math.sqrt(cin * 9)
    w = jax.random.uniform(k1, (3, 3, cin, cout), jnp.float32, -bound, bound)
    b = jax.random.uniform(k2, (cout,), jnp.float32, -bound, bound)
    return w, b                                    # HWIO weight, bias


def _init_fc_raw(key, fin, fout):
    k1, k2 = jax.random.split(key)
    bound = 1.0 / math.sqrt(fin)
    w = jax.random.uniform(k1, (fout, fin), jnp.float32, -bound, bound)
    b = jax.random.uniform(k2, (fout,), jnp.float32, -bound, bound)
    return w, b                                    # torch (O, F) layout


def _fold_bn(conv_bias, eps=1e-5):
    # PyTorch BatchNorm2d default init, eval mode, folded with the conv bias.
    cout = conv_bias.shape[0]
    gamma = jnp.ones((cout,), jnp.float32)
    beta = jnp.zeros((cout,), jnp.float32)
    mean = jnp.zeros((cout,), jnp.float32)
    var = jnp.ones((cout,), jnp.float32)
    scale = gamma / jnp.sqrt(var + eps)
    bias = (conv_bias - mean) * scale + beta
    return scale, bias


def _im2col_weight(w_hwio, bn_scale, cin_pad=None):
    """(3,3,cin,cout) HWIO -> (9*cin, cout) bf16 with BN scale folded in."""
    kh, kw, cin, cout = w_hwio.shape
    if cin_pad is not None and cin_pad > cin:
        w_hwio = jnp.pad(w_hwio, ((0, 0), (0, 0), (0, cin_pad - cin), (0, 0)))
        cin = cin_pad
    w = w_hwio.reshape(kh * kw * cin, cout) * bn_scale[None, :]
    return w.astype(jnp.bfloat16)                  # row = (dy*3+dx)*cin + ci


def init_resnet_params(key, num_res_blocks, num_hidden, rows, cols, action_size,
                       in_channels=13, policy_channels=32, value_channels=13):
    assert num_hidden >= in_channels
    keys = iter(jax.random.split(key, 2 * num_res_blocks + 6))

    raw = {"blocks": []}
    raw["start"] = _init_conv_raw(next(keys), in_channels, num_hidden)
    for _ in range(num_res_blocks):
        raw["blocks"].append((_init_conv_raw(next(keys), num_hidden, num_hidden),
                              _init_conv_raw(next(keys), num_hidden, num_hidden)))
    raw["policy_conv"] = _init_conv_raw(next(keys), num_hidden, policy_channels)
    raw["policy_fc"] = _init_fc_raw(next(keys), policy_channels * rows * cols,
                                    action_size)
    raw["value_conv"] = _init_conv_raw(next(keys), num_hidden, value_channels)
    raw["value_fc"] = _init_fc_raw(next(keys), value_channels * rows * cols, 1)

    params = {"num_hidden": num_hidden, "cp": policy_channels,
              "cv": value_channels}

    ws, bs = raw["start"]
    s0, b0 = _fold_bn(bs)
    params["w_start"] = _im2col_weight(ws, s0, cin_pad=num_hidden)
    params["b_start"] = b0.reshape(1, -1)

    if num_res_blocks > 0:
        w1s, b1s, w2s, b2s = [], [], [], []
        for (wc1, bc1), (wc2, bc2) in raw["blocks"]:
            s1, bi1 = _fold_bn(bc1)
            s2, bi2 = _fold_bn(bc2)
            w1s.append(_im2col_weight(wc1, s1)); b1s.append(bi1.reshape(1, -1))
            w2s.append(_im2col_weight(wc2, s2)); b2s.append(bi2.reshape(1, -1))
        params["w1"] = jnp.stack(w1s); params["b1"] = jnp.stack(b1s)
        params["w2"] = jnp.stack(w2s); params["b2"] = jnp.stack(b2s)

    wpc, bpc = raw["policy_conv"]
    wvc, bvc = raw["value_conv"]
    sp, bp = _fold_bn(bpc)
    sv, bv = _fold_bn(bvc)
    # Both head convs fused into ONE matmul: concat along the output dim.
    params["w_heads"] = jnp.concatenate(
        [_im2col_weight(wpc, sp), _im2col_weight(wvc, sv)], axis=1)
    params["b_heads"] = jnp.concatenate([bp, bv]).reshape(1, -1)

    # Policy FC: torch (A, CP*H*W) -> (CP, H*W, A) so the kernel contracts over
    # H*W per channel (torch NCHW flatten index = c*H*W + y*W + x).
    wpf, bpf = raw["policy_fc"]
    params["wp_fc"] = jnp.transpose(
        wpf.reshape(action_size, policy_channels, rows * cols),
        (1, 2, 0)).astype(jnp.bfloat16)
    params["bp_fc"] = bpf.reshape(1, -1)

    # Value FC: torch (1, CV*H*W) -> (H*W, CV); elementwise mult + reduce.
    wvf, bvf = raw["value_fc"]
    params["wv_fc"] = jnp.transpose(wvf.reshape(value_channels, rows * cols),
                                    (1, 0))
    params["bv_fc"] = bvf.reshape(1, 1)
    return params, raw


# ----------------------------------------------------------------------------
# Forward pass (matches ResNet.forward in NN.py)
# ----------------------------------------------------------------------------
def resnet_forward(x_nchw, params):
    NH = params["num_hidden"]
    x = jnp.transpose(x_nchw.astype(jnp.float32), (0, 2, 3, 1))   # NCHW -> NHWC
    N, H, W, Cin = x.shape
    if Cin < NH:                                   # pad input channels once
        x = jnp.pad(x, ((0, 0), (0, 0), (0, 0), (0, NH - Cin)))
    return fused_resnet_call(x, params)


# ----------------------------------------------------------------------------
# Pure-JAX reference (torch semantics) for a correctness cross-check
# ----------------------------------------------------------------------------
def reference_forward(x_nchw, raw):
    eps = 1e-5

    def conv_bn(x, wb, relu=True):
        w, b = wb
        y = jax.lax.conv_general_dilated(
            x, w, window_strides=(1, 1), padding="SAME",
            dimension_numbers=("NHWC", "HWIO", "NHWC"),
            precision=jax.lax.Precision.HIGHEST) + b
        y = y / jnp.sqrt(1.0 + eps)   # BN eval mode, default running stats
        return jnp.maximum(y, 0.0) if relu else y

    x = jnp.transpose(x_nchw.astype(jnp.float32), (0, 2, 3, 1))
    x = conv_bn(x, raw["start"])
    for wb1, wb2 in raw["blocks"]:
        res = x
        x = conv_bn(x, wb1)
        x = jnp.maximum(conv_bn(x, wb2, relu=False) + res, 0.0)

    n = x.shape[0]
    p = conv_bn(x, raw["policy_conv"])
    p_flat = jnp.transpose(p, (0, 3, 1, 2)).reshape(n, -1)        # torch flatten
    wpf, bpf = raw["policy_fc"]
    policy = jnp.dot(p_flat, wpf.T, precision=jax.lax.Precision.HIGHEST) + bpf

    v = conv_bn(x, raw["value_conv"])
    v_flat = jnp.transpose(v, (0, 3, 1, 2)).reshape(n, -1)
    wvf, bvf = raw["value_fc"]
    value = jnp.tanh(jnp.dot(v_flat, wvf.T,
                             precision=jax.lax.Precision.HIGHEST) + bvf)
    return policy, value


# ----------------------------------------------------------------------------
if __name__ == "__main__":
    # Small, deterministic configuration consistent with the module:
    # game: 8x8 board, actionSize=64; numHidden=32; numResBlocks=2; batch=2.
    batch, rows, cols = 2, 8, 8
    num_hidden, num_res_blocks, action_size = 32, 2, 64

    key = jax.random.PRNGKey(0)
    k_x, k_p = jax.random.split(key)
    x = jax.random.normal(k_x, (batch, 13, rows, cols), jnp.float32)  # NCHW
    params, raw = init_resnet_params(k_p, num_res_blocks, num_hidden,
                                     rows, cols, action_size)

    fwd = jax.jit(lambda inp: resnet_forward(inp, params))
    policy, value = fwd(x)
    jax.block_until_ready((policy, value))

    assert policy.shape == (batch, action_size)
    assert value.shape == (batch, 1)
    assert bool(jnp.all(jnp.isfinite(policy))) and bool(jnp.all(jnp.isfinite(value)))

    # Cross-check the fused kernel against an f32 XLA reference of the same
    # net.  Tolerance is loosened slightly because the kernel uses bf16 MXU
    # inputs (accumulation stays f32).
    ref_policy, ref_value = jax.jit(lambda inp: reference_forward(inp, raw))(x)
    assert bool(jnp.allclose(policy, ref_policy, rtol=5e-2, atol=5e-2))
    assert bool(jnp.allclose(value, ref_value, rtol=5e-2, atol=5e-2))

    print("KERNEL_OK")
</pallas_src>

<mosaic_0001>
module attributes {stable_mosaic.version = 11 : i64} {
  func.func @kernel(%arg0: i32, %arg1: memref<1x8x8x32xf32, #tpu.memory_space<vmem>>, %arg2: memref<288x32xbf16, #tpu.memory_space<vmem>>, %arg3: memref<1x32xf32, #tpu.memory_space<vmem>>, %arg4: memref<2x288x32xbf16, #tpu.memory_space<vmem>>, %arg5: memref<2x1x32xf32, #tpu.memory_space<vmem>>, %arg6: memref<2x288x32xbf16, #tpu.memory_space<vmem>>, %arg7: memref<2x1x32xf32, #tpu.memory_space<vmem>>, %arg8: memref<288x45xbf16, #tpu.memory_space<vmem>>, %arg9: memref<1x45xf32, #tpu.memory_space<vmem>>, %arg10: memref<32x64x64xbf16, #tpu.memory_space<vmem>>, %arg11: memref<1x64xf32, #tpu.memory_space<vmem>>, %arg12: memref<64x13xf32, #tpu.memory_space<vmem>>, %arg13: memref<1x1xf32, #tpu.memory_space<vmem>>, %arg14: memref<1x1x64xf32, #tpu.memory_space<vmem>>, %arg15: memref<1x1x1xf32, #tpu.memory_space<vmem>>, %arg16: memref<10x10x32xf32, #tpu.memory_space<vmem>>, %arg17: memref<64x288xbf16, #tpu.memory_space<vmem>>) attributes {dimension_semantics = [#tpu.dimension_semantics<parallel>], iteration_bounds = array<i64: 2>, scalar_prefetch = 0 : i64, scratch_operands = 2 : i64, tpu.core_type = #tpu.core_type<tc>, window_params = [{transform_indices = @transform_0, window_bounds = array<i64: 1, 8, 8, 32>}, {pipeline_mode = #tpu.pipeline_mode<synchronous>, transform_indices = @transform_1, window_bounds = array<i64: 288, 32>}, {pipeline_mode = #tpu.pipeline_mode<synchronous>, transform_indices = @transform_2, window_bounds = array<i64: 1, 32>}, {pipeline_mode = #tpu.pipeline_mode<synchronous>, transform_indices = @transform_3, window_bounds = array<i64: 2, 288, 32>}, {pipeline_mode = #tpu.pipeline_mode<synchronous>, transform_indices = @transform_4, window_bounds = array<i64: 2, 1, 32>}, {pipeline_mode = #tpu.pipeline_mode<synchronous>, transform_indices = @transform_5, window_bounds = array<i64: 2, 288, 32>}, {pipeline_mode = #tpu.pipeline_mode<synchronous>, transform_indices = @transform_6, window_bounds = array<i64: 2, 1, 32>}, {pipeline_mode = #tpu.pipeline_mode<synchronous>, transform_indices = @transform_7, window_bounds = array<i64: 288, 45>}, {pipeline_mode = #tpu.pipeline_mode<synchronous>, transform_indices = @transform_8, window_bounds = array<i64: 1, 45>}, {pipeline_mode = #tpu.pipeline_mode<synchronous>, transform_indices = @transform_9, window_bounds = array<i64: 32, 64, 64>}, {pipeline_mode = #tpu.pipeline_mode<synchronous>, transform_indices = @transform_10, window_bounds = array<i64: 1, 64>}, {pipeline_mode = #tpu.pipeline_mode<synchronous>, transform_indices = @transform_11, window_bounds = array<i64: 64, 13>}, {pipeline_mode = #tpu.pipeline_mode<synchronous>, transform_indices = @transform_12, window_bounds = array<i64: 1, 1>}, {transform_indices = @transform_13, window_bounds = array<i64: 1, 1, 64>}, {transform_indices = @transform_14, window_bounds = array<i64: 1, 1, 1>}]} {
    %cst = arith.constant 0.000000e+00 : f32
    %0 = vector.broadcast %cst : f32 to vector<10x10x32xf32>
    %c0 = arith.constant 0 : index
    %c0_0 = arith.constant 0 : index
    %c0_1 = arith.constant 0 : index
    %1 = vector.load %arg16[%c0, %c0_0, %c0_1] : memref<10x10x32xf32, #tpu.memory_space<vmem>>, vector<10x10x32xf32>
    tpu.vector_store %arg16[%c0, %c0_0, %c0_1], %0 {strides = array<i32>} : memref<10x10x32xf32, #tpu.memory_space<vmem>>, vector<10x10x32xf32>,
    %c0_2 = arith.constant 0 : index
    %c0_3 = arith.constant 0 : index
    %c0_4 = arith.constant 0 : index
    %c0_5 = arith.constant 0 : index
    %2 = vector.load %arg1[%c0_2, %c0_3, %c0_4, %c0_5] : memref<1x8x8x32xf32, #tpu.memory_space<vmem>>, vector<1x8x8x32xf32>
    %3 = vector.shape_cast %2 : vector<1x8x8x32xf32> to vector<64x32xf32>
    %c0_6 = arith.constant 0 : index
    %c0_7 = arith.constant 0 : index
    %4 = vector.load %arg2[%c0_6, %c0_7] : memref<288x32xbf16, #tpu.memory_space<vmem>>, vector<288x32xbf16>
    %c0_8 = arith.constant 0 : index
    %c0_9 = arith.constant 0 : index
    %5 = vector.load %arg3[%c0_8, %c0_9] : memref<1x32xf32, #tpu.memory_space<vmem>>, vector<1x32xf32>
    %6 = vector.shape_cast %3 : vector<64x32xf32> to vector<8x8x32xf32>
    %c1 = arith.constant 1 : index
    %c1_10 = arith.constant 1 : index
    %c0_11 = arith.constant 0 : index
    %7 = vector.load %arg16[%c1, %c1_10, %c0_11] : memref<10x10x32xf32, #tpu.memory_space<vmem>>, vector<8x8x32xf32>
    tpu.vector_store %arg16[%c1, %c1_10, %c0_11], %6 {strides = array<i32>} : memref<10x10x32xf32, #tpu.memory_space<vmem>>, vector<8x8x32xf32>,
    %c0_12 = arith.constant 0 : index
    %c0_13 = arith.constant 0 : index
    %c0_14 = arith.constant 0 : index
    %8 = vector.load %arg16[%c0_12, %c0_13, %c0_14] : memref<10x10x32xf32, #tpu.memory_space<vmem>>, vector<8x8x32xf32>
    %9 = vector.shape_cast %8 : vector<8x8x32xf32> to vector<64x32xf32>
    %10 = arith.truncf %9 : vector<64x32xf32> to vector<64x32xbf16>
    %c0_15 = arith.constant 0 : index
    %c0_16 = arith.constant 0 : index
    %11 = vector.load %arg17[%c0_15, %c0_16] : memref<64x288xbf16, #tpu.memory_space<vmem>>, vector<64x32xbf16>
    tpu.vector_store %arg17[%c0_15, %c0_16], %10 {strides = array<i32>} : memref<64x288xbf16, #tpu.memory_space<vmem>>, vector<64x32xbf16>,
    %c0_17 = arith.constant 0 : index
    %c1_18 = arith.constant 1 : index
    %c0_19 = arith.constant 0 : index
    %12 = vector.load %arg16[%c0_17, %c1_18, %c0_19] : memref<10x10x32xf32, #tpu.memory_space<vmem>>, vector<8x8x32xf32>
    %13 = vector.shape_cast %12 : vector<8x8x32xf32> to vector<64x32xf32>
    %14 = arith.truncf %13 : vector<64x32xf32> to vector<64x32xbf16>
    %c0_20 = arith.constant 0 : index
    %c32 = arith.constant 32 : index
    %15 = vector.load %arg17[%c0_20, %c32] : memref<64x288xbf16, #tpu.memory_space<vmem>>, vector<64x32xbf16>
    tpu.vector_store %arg17[%c0_20, %c32], %14 {strides = array<i32>} : memref<64x288xbf16, #tpu.memory_space<vmem>>, vector<64x32xbf16>,
    %c0_21 = arith.constant 0 : index
    %c2 = arith.constant 2 : index
    %c0_22 = arith.constant 0 : index
    %16 = vector.load %arg16[%c0_21, %c2, %c0_22] : memref<10x10x32xf32, #tpu.memory_space<vmem>>, vector<8x8x32xf32>
    %17 = vector.shape_cast %16 : vector<8x8x32xf32> to vector<64x32xf32>
    %18 = arith.truncf %17 : vector<64x32xf32> to vector<64x32xbf16>
    %c0_23 = arith.constant 0 : index
    %c64 = arith.constant 64 : index
    %19 = vector.load %arg17[%c0_23, %c64] : memref<64x288xbf16, #tpu.memory_space<vmem>>, vector<64x32xbf16>
    tpu.vector_store %arg17[%c0_23, %c64], %18 {strides = array<i32>} : memref<64x288xbf16, #tpu.memory_space<vmem>>, vector<64x32xbf16>,
    %c1_24 = arith.constant 1 : index
    %c0_25 = arith.constant 0 : index
    %c0_26 = arith.constant 0 : index
    %20 = vector.load %arg16[%c1_24, %c0_25, %c0_26] : memref<10x10x32xf32, #tpu.memory_space<vmem>>, vector<8x8x32xf32>
    %21 = vector.shape_cast %20 : vector<8x8x32xf32> to vector<64x32xf32>
    %22 = arith.truncf %21 : vector<64x32xf32> to vector<64x32xbf16>
    %c0_27 = arith.constant 0 : index
    %c96 = arith.constant 96 : index
    %23 = vector.load %arg17[%c0_27, %c96] : memref<64x288xbf16, #tpu.memory_space<vmem>>, vector<64x32xbf16>
    tpu.vector_store %arg17[%c0_27, %c96], %22 {strides = array<i32>} : memref<64x288xbf16, #tpu.memory_space<vmem>>, vector<64x32xbf16>,
    %c1_28 = arith.constant 1 : index
    %c1_29 = arith.constant 1 : index
    %c0_30 = arith.constant 0 : index
    %24 = vector.load %arg16[%c1_28, %c1_29, %c0_30] : memref<10x10x32xf32, #tpu.memory_space<vmem>>, vector<8x8x32xf32>
    %25 = vector.shape_cast %24 : vector<8x8x32xf32> to vector<64x32xf32>
    %26 = arith.truncf %25 : vector<64x32xf32> to vector<64x32xbf16>
    %c0_31 = arith.constant 0 : index
    %c128 = arith.constant 128 : index
    %27 = vector.load %arg17[%c0_31, %c128] : memref<64x288xbf16, #tpu.memory_space<vmem>>, vector<64x32xbf16>
    tpu.vector_store %arg17[%c0_31, %c128], %26 {strides = array<i32>} : memref<64x288xbf16, #tpu.memory_space<vmem>>, vector<64x32xbf16>,
    %c1_32 = arith.constant 1 : index
    %c2_33 = arith.constant 2 : index
    %c0_34 = arith.constant 0 : index
    %28 = vector.load %arg16[%c1_32, %c2_33, %c0_34] : memref<10x10x32xf32, #tpu.memory_space<vmem>>, vector<8x8x32xf32>
    %29 = vector.shape_cast %28 : vector<8x8x32xf32> to vector<64x32xf32>
    %30 = arith.truncf %29 : vector<64x32xf32> to vector<64x32xbf16>
    %c0_35 = arith.constant 0 : index
    %c160 = arith.constant 160 : index
    %31 = vector.load %arg17[%c0_35, %c160] : memref<64x288xbf16, #tpu.memory_space<vmem>>, vector<64x32xbf16>
    tpu.vector_store %arg17[%c0_35, %c160], %30 {strides = array<i32>} : memref<64x288xbf16, #tpu.memory_space<vmem>>, vector<64x32xbf16>,
    %c2_36 = arith.constant 2 : index
    %c0_37 = arith.constant 0 : index
    %c0_38 = arith.constant 0 : index
    %32 = vector.load %arg16[%c2_36, %c0_37, %c0_38] : memref<10x10x32xf32, #tpu.memory_space<vmem>>, vector<8x8x32xf32>
    %33 = vector.shape_cast %32 : vector<8x8x32xf32> to vector<64x32xf32>
    %34 = arith.truncf %33 : vector<64x32xf32> to vector<64x32xbf16>
    %c0_39 = arith.constant 0 : index
    %c192 = arith.constant 192 : index
    %35 = vector.load %arg17[%c0_39, %c192] : memref<64x288xbf16, #tpu.memory_space<vmem>>, vector<64x32xbf16>
    tpu.vector_store %arg17[%c0_39, %c192], %34 {strides = array<i32>} : memref<64x288xbf16, #tpu.memory_space<vmem>>, vector<64x32xbf16>,
    %c2_40 = arith.constant 2 : index
    %c1_41 = arith.constant 1 : index
    %c0_42 = arith.constant 0 : index
    %36 = vector.load %arg16[%c2_40, %c1_41, %c0_42] : memref<10x10x32xf32, #tpu.memory_space<vmem>>, vector<8x8x32xf32>
    %37 = vector.shape_cast %36 : vector<8x8x32xf32> to vector<64x32xf32>
    %38 = arith.truncf %37 : vector<64x32xf32> to vector<64x32xbf16>
    %c0_43 = arith.constant 0 : index
    %c224 = arith.constant 224 : index
    %39 = vector.load %arg17[%c0_43, %c224] : memref<64x288xbf16, #tpu.memory_space<vmem>>, vector<64x32xbf16>
    tpu.vector_store %arg17[%c0_43, %c224], %38 {strides = array<i32>} : memref<64x288xbf16, #tpu.memory_space<vmem>>, vector<64x32xbf16>,
    %c2_44 = arith.constant 2 : index
    %c2_45 = arith.constant 2 : index
    %c0_46 = arith.constant 0 : index
    %40 = vector.load %arg16[%c2_44, %c2_45, %c0_46] : memref<10x10x32xf32, #tpu.memory_space<vmem>>, vector<8x8x32xf32>
    %41 = vector.shape_cast %40 : vector<8x8x32xf32> to vector<64x32xf32>
    %42 = arith.truncf %41 : vector<64x32xf32> to vector<64x32xbf16>
    %c0_47 = arith.constant 0 : index
    %c256 = arith.constant 256 : index
    %43 = vector.load %arg17[%c0_47, %c256] : memref<64x288xbf16, #tpu.memory_space<vmem>>, vector<64x32xbf16>
    tpu.vector_store %arg17[%c0_47, %c256], %42 {strides = array<i32>} : memref<64x288xbf16, #tpu.memory_space<vmem>>, vector<64x32xbf16>,
    %c0_48 = arith.constant 0 : index
    %c0_49 = arith.constant 0 : index
    %44 = vector.load %arg17[%c0_48, %c0_49] : memref<64x288xbf16, #tpu.memory_space<vmem>>, vector<64x288xbf16>
    %cst_50 = arith.constant dense<0.000000e+00> : vector<64x32xf32>
    %45 = tpu.matmul %44, %4, %cst_50 {dimension_numbers = #tpu.dot_dimension_numbers<[1], [0], [0], [1], [0, 0, 1, 1], [], []>} : vector<64x288xbf16>, vector<288x32xbf16>, vector<64x32xf32> -> vector<64x32xf32>
    %46 = vector.broadcast %5 : vector<1x32xf32> to vector<64x32xf32>
    %47 = arith.addf %45, %46 : vector<64x32xf32>
    %cst_51 = arith.constant 0.000000e+00 : f32
    %48 = vector.broadcast %cst_51 : f32 to vector<64x32xf32>
    %49 = arith.maximumf %47, %48 : vector<64x32xf32>
    %c0_52 = arith.constant 0 : index
    %c0_53 = arith.constant 0 : index
    %c0_54 = arith.constant 0 : index
    %50 = vector.load %arg4[%c0_52, %c0_53, %c0_54] : memref<2x288x32xbf16, #tpu.memory_space<vmem>>, vector<1x288x32xbf16>
    %51 = vector.shape_cast %50 : vector<1x288x32xbf16> to vector<288x32xbf16>
    %c0_55 = arith.constant 0 : index
    %c0_56 = arith.constant 0 : index
    %c0_57 = arith.constant 0 : index
    %52 = vector.load %arg5[%c0_55, %c0_56, %c0_57] : memref<2x1x32xf32, #tpu.memory_space<vmem>>, vector<1x1x32xf32>
    %53 = vector.shape_cast %52 : vector<1x1x32xf32> to vector<1x32xf32>
    %54 = vector.shape_cast %49 : vector<64x32xf32> to vector<8x8x32xf32>
    %c1_58 = arith.constant 1 : index
    %c1_59 = arith.constant 1 : index
    %c0_60 = arith.constant 0 : index
    %55 = vector.load %arg16[%c1_58, %c1_59, %c0_60] : memref<10x10x32xf32, #tpu.memory_space<vmem>>, vector<8x8x32xf32>
    tpu.vector_store %arg16[%c1_58, %c1_59, %c0_60], %54 {strides = array<i32>} : memref<10x10x32xf32, #tpu.memory_space<vmem>>, vector<8x8x32xf32>,
    %c0_61 = arith.constant 0 : index
    %c0_62 = arith.constant 0 : index
    %c0_63 = arith.constant 0 : index
    %56 = vector.load %arg16[%c0_61, %c0_62, %c0_63] : memref<10x10x32xf32, #tpu.memory_space<vmem>>, vector<8x8x32xf32>
    %57 = vector.shape_cast %56 : vector<8x8x32xf32> to vector<64x32xf32>
    %58 = arith.truncf %57 : vector<64x32xf32> to vector<64x32xbf16>
    %c0_64 = arith.constant 0 : index
    %c0_65 = arith.constant 0 : index
    %59 = vector.load %arg17[%c0_64, %c0_65] : memref<64x288xbf16, #tpu.memory_space<vmem>>, vector<64x32xbf16>
    tpu.vector_store %arg17[%c0_64, %c0_65], %58 {strides = array<i32>} : memref<64x288xbf16, #tpu.memory_space<vmem>>, vector<64x32xbf16>,
    %c0_66 = arith.constant 0 : index
    %c1_67 = arith.constant 1 : index
    %c0_68 = arith.constant 0 : index
    %60 = vector.load %arg16[%c0_66, %c1_67, %c0_68] : memref<10x10x32xf32, #tpu.memory_space<vmem>>, vector<8x8x32xf32>
    %61 = vector.shape_cast %60 : vector<8x8x32xf32> to vector<64x32xf32>
    %62 = arith.truncf %61 : vector<64x32xf32> to vector<64x32xbf16>
    %c0_69 = arith.constant 0 : index
    %c32_70 = arith.constant 32 : index
    %63 = vector.load %arg17[%c0_69, %c32_70] : memref<64x288xbf16, #tpu.memory_space<vmem>>, vector<64x32xbf16>
    tpu.vector_store %arg17[%c0_69, %c32_70], %62 {strides = array<i32>} : memref<64x288xbf16, #tpu.memory_space<vmem>>, vector<64x32xbf16>,
    %c0_71 = arith.constant 0 : index
    %c2_72 = arith.constant 2 : index
    %c0_73 = arith.constant 0 : index
    %64 = vector.load %arg16[%c0_71, %c2_72, %c0_73] : memref<10x10x32xf32, #tpu.memory_space<vmem>>, vector<8x8x32xf32>
    %65 = vector.shape_cast %64 : vector<8x8x32xf32> to vector<64x32xf32>
    %66 = arith.truncf %65 : vector<64x32xf32> to vector<64x32xbf16>
    %c0_74 = arith.constant 0 : index
    %c64_75 = arith.constant 64 : index
    %67 = vector.load %arg17[%c0_74, %c64_75] : memref<64x288xbf16, #tpu.memory_space<vmem>>, vector<64x32xbf16>
    tpu.vector_store %arg17[%c0_74, %c64_75], %66 {strides = array<i32>} : memref<64x288xbf16, #tpu.memory_space<vmem>>, vector<64x32xbf16>,
    %c1_76 = arith.constant 1 : index
    %c0_77 = arith.constant 0 : index
    %c0_78 = arith.constant 0 : index
    %68 = vector.load %arg16[%c1_76, %c0_77, %c0_78] : memref<10x10x32xf32, #tpu.memory_space<vmem>>, vector<8x8x32xf32>
    %69 = vector.shape_cast %68 : vector<8x8x32xf32> to vector<64x32xf32>
    %70 = arith.truncf %69 : vector<64x32xf32> to vector<64x32xbf16>
    %c0_79 = arith.constant 0 : index
    %c96_80 = arith.constant 96 : index
    %71 = vector.load %arg17[%c0_79, %c96_80] : memref<64x288xbf16, #tpu.memory_space<vmem>>, vector<64x32xbf16>
    tpu.vector_store %arg17[%c0_79, %c96_80], %70 {strides = array<i32>} : memref<64x288xbf16, #tpu.memory_space<vmem>>, vector<64x32xbf16>,
    %c1_81 = arith.constant 1 : index
    %c1_82 = arith.constant 1 : index
    %c0_83 = arith.constant 0 : index
    %72 = vector.load %arg16[%c1_81, %c1_82, %c0_83] : memref<10x10x32xf32, #tpu.memory_space<vmem>>, vector<8x8x32xf32>
    %73 = vector.shape_cast %72 : vector<8x8x32xf32> to vector<64x32xf32>
    %74 = arith.truncf %73 : vector<64x32xf32> to vector<64x32xbf16>
    %c0_84 = arith.constant 0 : index
    %c128_85 = arith.constant 128 : index
    %75 = vector.load %arg17[%c0_84, %c128_85] : memref<64x288xbf16, #tpu.memory_space<vmem>>, vector<64x32xbf16>
    tpu.vector_store %arg17[%c0_84, %c128_85], %74 {strides = array<i32>} : memref<64x288xbf16, #tpu.memory_space<vmem>>, vector<64x32xbf16>,
    %c1_86 = arith.constant 1 : index
    %c2_87 = arith.constant 2 : index
    %c0_88 = arith.constant 0 : index
    %76 = vector.load %arg16[%c1_86, %c2_87, %c0_88] : memref<10x10x32xf32, #tpu.memory_space<vmem>>, vector<8x8x32xf32>
    %77 = vector.shape_cast %76 : vector<8x8x32xf32> to vector<64x32xf32>
    %78 = arith.truncf %77 : vector<64x32xf32> to vector<64x32xbf16>
    %c0_89 = arith.constant 0 : index
    %c160_90 = arith.constant 160 : index
    %79 = vector.load %arg17[%c0_89, %c160_90] : memref<64x288xbf16, #tpu.memory_space<vmem>>, vector<64x32xbf16>
    tpu.vector_store %arg17[%c0_89, %c160_90], %78 {strides = array<i32>} : memref<64x288xbf16, #tpu.memory_space<vmem>>, vector<64x32xbf16>,
    %c2_91 = arith.constant 2 : index
    %c0_92 = arith.constant 0 : index
    %c0_93 = arith.constant 0 : index
    %80 = vector.load %arg16[%c2_91, %c0_92, %c0_93] : memref<10x10x32xf32, #tpu.memory_space<vmem>>, vector<8x8x32xf32>
    %81 = vector.shape_cast %80 : vector<8x8x32xf32> to vector<64x32xf32>
    %82 = arith.truncf %81 : vector<64x32xf32> to vector<64x32xbf16>
    %c0_94 = arith.constant 0 : index
    %c192_95 = arith.constant 192 : index
    %83 = vector.load %arg17[%c0_94, %c192_95] : memref<64x288xbf16, #tpu.memory_space<vmem>>, vector<64x32xbf16>
    tpu.vector_store %arg17[%c0_94, %c192_95], %82 {strides = array<i32>} : memref<64x288xbf16, #tpu.memory_space<vmem>>, vector<64x32xbf16>,
    %c2_96 = arith.constant 2 : index
    %c1_97 = arith.constant 1 : index
    %c0_98 = arith.constant 0 : index
    %84 = vector.load %arg16[%c2_96, %c1_97, %c0_98] : memref<10x10x32xf32, #tpu.memory_space<vmem>>, vector<8x8x32xf32>
    %85 = vector.shape_cast %84 : vector<8x8x32xf32> to vector<64x32xf32>
    %86 = arith.truncf %85 : vector<64x32xf32> to vector<64x32xbf16>
    %c0_99 = arith.constant 0 : index
    %c224_100 = arith.constant 224 : index
    %87 = vector.load %arg17[%c0_99, %c224_100] : memref<64x288xbf16, #tpu.memory_space<vmem>>, vector<64x32xbf16>
    tpu.vector_store %arg17[%c0_99, %c224_100], %86 {strides = array<i32>} : memref<64x288xbf16, #tpu.memory_space<vmem>>, vector<64x32xbf16>,
    %c2_101 = arith.constant 2 : index
    %c2_102 = arith.constant 2 : index
    %c0_103 = arith.constant 0 : index
    %88 = vector.load %arg16[%c2_101, %c2_102, %c0_103] : memref<10x10x32xf32, #tpu.memory_space<vmem>>, vector<8x8x32xf32>
    %89 = vector.shape_cast %88 : vector<8x8x32xf32> to vector<64x32xf32>
    %90 = arith.truncf %89 : vector<64x32xf32> to vector<64x32xbf16>
    %c0_104 = arith.constant 0 : index
    %c256_105 = arith.constant 256 : index
    %91 = vector.load %arg17[%c0_104, %c256_105] : memref<64x288xbf16, #tpu.memory_space<vmem>>, vector<64x32xbf16>
    tpu.vector_store %arg17[%c0_104, %c256_105], %90 {strides = array<i32>} : memref<64x288xbf16, #tpu.memory_space<vmem>>, vector<64x32xbf16>,
    %c0_106 = arith.constant 0 : index
    %c0_107 = arith.constant 0 : index
    %92 = vector.load %arg17[%c0_106, %c0_107] : memref<64x288xbf16, #tpu.memory_space<vmem>>, vector<64x288xbf16>
    %cst_108 = arith.constant dense<0.000000e+00> : vector<64x32xf32>
    %93 = tpu.matmul %92, %51, %cst_108 {dimension_numbers = #tpu.dot_dimension_numbers<[1], [0], [0], [1], [0, 0, 1, 1], [], []>} : vector<64x288xbf16>, vector<288x32xbf16>, vector<64x32xf32> -> vector<64x32xf32>
    %94 = vector.broadcast %53 : vector<1x32xf32> to vector<64x32xf32>
    %95 = arith.addf %93, %94 : vector<64x32xf32>
    %cst_109 = arith.constant 0.000000e+00 : f32
    %96 = vector.broadcast %cst_109 : f32 to vector<64x32xf32>
    %97 = arith.maximumf %95, %96 : vector<64x32xf32>
    %c0_110 = arith.constant 0 : index
    %c0_111 = arith.constant 0 : index
    %c0_112 = arith.constant 0 : index
    %98 = vector.load %arg6[%c0_110, %c0_111, %c0_112] : memref<2x288x32xbf16, #tpu.memory_space<vmem>>, vector<1x288x32xbf16>
    %99 = vector.shape_cast %98 : vector<1x288x32xbf16> to vector<288x32xbf16>
    %c0_113 = arith.constant 0 : index
    %c0_114 = arith.constant 0 : index
    %c0_115 = arith.constant 0 : index
    %100 = vector.load %arg7[%c0_113, %c0_114, %c0_115] : memref<2x1x32xf32, #tpu.memory_space<vmem>>, vector<1x1x32xf32>
    %101 = vector.shape_cast %100 : vector<1x1x32xf32> to vector<1x32xf32>
    %102 = vector.shape_cast %97 : vector<64x32xf32> to vector<8x8x32xf32>
    %c1_116 = arith.constant 1 : index
    %c1_117 = arith.constant 1 : index
    %c0_118 = arith.constant 0 : index
    %103 = vector.load %arg16[%c1_116, %c1_117, %c0_118] : memref<10x10x32xf32, #tpu.memory_space<vmem>>, vector<8x8x32xf32>
    tpu.vector_store %arg16[%c1_116, %c1_117, %c0_118], %102 {strides = array<i32>} : memref<10x10x32xf32, #tpu.memory_space<vmem>>, vector<8x8x32xf32>,
    %c0_119 = arith.constant 0 : index
    %c0_120 = arith.constant 0 : index
    %c0_121 = arith.constant 0 : index
    %104 = vector.load %arg16[%c0_119, %c0_120, %c0_121] : memref<10x10x32xf32, #tpu.memory_space<vmem>>, vector<8x8x32xf32>
    %105 = vector.shape_cast %104 : vector<8x8x32xf32> to vector<64x32xf32>
    %106 = arith.truncf %105 : vector<64x32xf32> to vector<64x32xbf16>
    %c0_122 = arith.constant 0 : index
    %c0_123 = arith.constant 0 : index
    %107 = vector.load %arg17[%c0_122, %c0_123] : memref<64x288xbf16, #tpu.memory_space<vmem>>, vector<64x32xbf16>
    tpu.vector_store %arg17[%c0_122, %c0_123], %106 {strides = array<i32>} : memref<64x288xbf16, #tpu.memory_space<vmem>>, vector<64x32xbf16>,
    %c0_124 = arith.constant 0 : index
    %c1_125 = arith.constant 1 : index
    %c0_126 = arith.constant 0 : index
    %108 = vector.load %arg16[%c0_124, %c1_125, %c0_126] : memref<10x10x32xf32, #tpu.memory_space<vmem>>, vector<8x8x32xf32>
    %109 = vector.shape_cast %108 : vector<8x8x32xf32> to vector<64x32xf32>
    %110 = arith.truncf %109 : vector<64x32xf32> to vector<64x32xbf16>
    %c0_127 = arith.constant 0 : index
    %c32_128 = arith.constant 32 : index
    %111 = vector.load %arg17[%c0_127, %c32_128] : memref<64x288xbf16, #tpu.memory_space<vmem>>, vector<64x32xbf16>
    tpu.vector_store %arg17[%c0_127, %c32_128], %110 {strides = array<i32>} : memref<64x288xbf16, #tpu.memory_space<vmem>>, vector<64x32xbf16>,
    %c0_129 = arith.constant 0 : index
    %c2_130 = arith.constant 2 : index
    %c0_131 = arith.constant 0 : index
    %112 = vector.load %arg16[%c0_129, %c2_130, %c0_131] : memref<10x10x32xf32, #tpu.memory_space<vmem>>, vector<8x8x32xf32>
    %113 = vector.shape_cast %112 : vector<8x8x32xf32> to vector<64x32xf32>
    %114 = arith.truncf %113 : vector<64x32xf32> to vector<64x32xbf16>
    %c0_132 = arith.constant 0 : index
    %c64_133 = arith.constant 64 : index
    %115 = vector.load %arg17[%c0_132, %c64_133] : memref<64x288xbf16, #tpu.memory_space<vmem>>, vector<64x32xbf16>
    tpu.vector_store %arg17[%c0_132, %c64_133], %114 {strides = array<i32>} : memref<64x288xbf16, #tpu.memory_space<vmem>>, vector<64x32xbf16>,
    %c1_134 = arith.constant 1 : index
    %c0_135 = arith.constant 0 : index
    %c0_136 = arith.constant 0 : index
    %116 = vector.load %arg16[%c1_134, %c0_135, %c0_136] : memref<10x10x32xf32, #tpu.memory_space<vmem>>, vector<8x8x32xf32>
    %117 = vector.shape_cast %116 : vector<8x8x32xf32> to vector<64x32xf32>
    %118 = arith.truncf %117 : vector<64x32xf32> to vector<64x32xbf16>
    %c0_137 = arith.constant 0 : index
    %c96_138 = arith.constant 96 : index
    %119 = vector.load %arg17[%c0_137, %c96_138] : memref<64x288xbf16, #tpu.memory_space<vmem>>, vector<64x32xbf16>
    tpu.vector_store %arg17[%c0_137, %c96_138], %118 {strides = array<i32>} : memref<64x288xbf16, #tpu.memory_space<vmem>>, vector<64x32xbf16>,
    %c1_139 = arith.constant 1 : index
    %c1_140 = arith.constant 1 : index
    %c0_141 = arith.constant 0 : index
    %120 = vector.load %arg16[%c1_139, %c1_140, %c0_141] : memref<10x10x32xf32, #tpu.memory_space<vmem>>, vector<8x8x32xf32>
    %121 = vector.shape_cast %120 : vector<8x8x32xf32> to vector<64x32xf32>
    %122 = arith.truncf %121 : vector<64x32xf32> to vector<64x32xbf16>
    %c0_142 = arith.constant 0 : index
    %c128_143 = arith.constant 128 : index
    %123 = vector.load %arg17[%c0_142, %c128_143] : memref<64x288xbf16, #tpu.memory_space<vmem>>, vector<64x32xbf16>
    tpu.vector_store %arg17[%c0_142, %c128_143], %122 {strides = array<i32>} : memref<64x288xbf16, #tpu.memory_space<vmem>>, vector<64x32xbf16>,
    %c1_144 = arith.constant 1 : index
    %c2_145 = arith.constant 2 : index
    %c0_146 = arith.constant 0 : index
    %124 = vector.load %arg16[%c1_144, %c2_145, %c0_146] : memref<10x10x32xf32, #tpu.memory_space<vmem>>, vector<8x8x32xf32>
    %125 = vector.shape_cast %124 : vector<8x8x32xf32> to vector<64x32xf32>
    %126 = arith.truncf %125 : vector<64x32xf32> to vector<64x32xbf16>
    %c0_147 = arith.constant 0 : index
    %c160_148 = arith.constant 160 : index
    %127 = vector.load %arg17[%c0_147, %c160_148] : memref<64x288xbf16, #tpu.memory_space<vmem>>, vector<64x32xbf16>
    tpu.vector_store %arg17[%c0_147, %c160_148], %126 {strides = array<i32>} : memref<64x288xbf16, #tpu.memory_space<vmem>>, vector<64x32xbf16>,
    %c2_149 = arith.constant 2 : index
    %c0_150 = arith.constant 0 : index
    %c0_151 = arith.constant 0 : index
    %128 = vector.load %arg16[%c2_149, %c0_150, %c0_151] : memref<10x10x32xf32, #tpu.memory_space<vmem>>, vector<8x8x32xf32>
    %129 = vector.shape_cast %128 : vector<8x8x32xf32> to vector<64x32xf32>
    %130 = arith.truncf %129 : vector<64x32xf32> to vector<64x32xbf16>
    %c0_152 = arith.constant 0 : index
    %c192_153 = arith.constant 192 : index
    %131 = vector.load %arg17[%c0_152, %c192_153] : memref<64x288xbf16, #tpu.memory_space<vmem>>, vector<64x32xbf16>
    tpu.vector_store %arg17[%c0_152, %c192_153], %130 {strides = array<i32>} : memref<64x288xbf16, #tpu.memory_space<vmem>>, vector<64x32xbf16>,
    %c2_154 = arith.constant 2 : index
    %c1_155 = arith.constant 1 : index
    %c0_156 = arith.constant 0 : index
    %132 = vector.load %arg16[%c2_154, %c1_155, %c0_156] : memref<10x10x32xf32, #tpu.memory_space<vmem>>, vector<8x8x32xf32>
    %133 = vector.shape_cast %132 : vector<8x8x32xf32> to vector<64x32xf32>
    %134 = arith.truncf %133 : vector<64x32xf32> to vector<64x32xbf16>
    %c0_157 = arith.constant 0 : index
    %c224_158 = arith.constant 224 : index
    %135 = vector.load %arg17[%c0_157, %c224_158] : memref<64x288xbf16, #tpu.memory_space<vmem>>, vector<64x32xbf16>
    tpu.vector_store %arg17[%c0_157, %c224_158], %134 {strides = array<i32>} : memref<64x288xbf16, #tpu.memory_space<vmem>>, vector<64x32xbf16>,
    %c2_159 = arith.constant 2 : index
    %c2_160 = arith.constant 2 : index
    %c0_161 = arith.constant 0 : index
    %136 = vector.load %arg16[%c2_159, %c2_160, %c0_161] : memref<10x10x32xf32, #tpu.memory_space<vmem>>, vector<8x8x32xf32>
    %137 = vector.shape_cast %136 : vector<8x8x32xf32> to vector<64x32xf32>
    %138 = arith.truncf %137 : vector<64x32xf32> to vector<64x32xbf16>
    %c0_162 = arith.constant 0 : index
    %c256_163 = arith.constant 256 : index
    %139 = vector.load %arg17[%c0_162, %c256_163] : memref<64x288xbf16, #tpu.memory_space<vmem>>, vector<64x32xbf16>
    tpu.vector_store %arg17[%c0_162, %c256_163], %138 {strides = array<i32>} : memref<64x288xbf16, #tpu.memory_space<vmem>>, vector<64x32xbf16>,
    %c0_164 = arith.constant 0 : index
    %c0_165 = arith.constant 0 : index
    %140 = vector.load %arg17[%c0_164, %c0_165] : memref<64x288xbf16, #tpu.memory_space<vmem>>, vector<64x288xbf16>
    %cst_166 = arith.constant dense<0.000000e+00> : vector<64x32xf32>
    %141 = tpu.matmul %140, %99, %cst_166 {dimension_numbers = #tpu.dot_dimension_numbers<[1], [0], [0], [1], [0, 0, 1, 1], [], []>} : vector<64x288xbf16>, vector<288x32xbf16>, vector<64x32xf32> -> vector<64x32xf32>
    %142 = vector.broadcast %101 : vector<1x32xf32> to vector<64x32xf32>
    %143 = arith.addf %141, %142 : vector<64x32xf32>
    %144 = arith.addf %143, %49 : vector<64x32xf32>
    %cst_167 = arith.constant 0.000000e+00 : f32
    %145 = vector.broadcast %cst_167 : f32 to vector<64x32xf32>
    %146 = arith.maximumf %144, %145 : vector<64x32xf32>
    %c1_168 = arith.constant 1 : index
    %c0_169 = arith.constant 0 : index
    %c0_170 = arith.constant 0 : index
    %147 = vector.load %arg4[%c1_168, %c0_169, %c0_170] : memref<2x288x32xbf16, #tpu.memory_space<vmem>>, vector<1x288x32xbf16>
    %148 = vector.shape_cast %147 : vector<1x288x32xbf16> to vector<288x32xbf16>
    %c1_171 = arith.constant 1 : index
    %c0_172 = arith.constant 0 : index
    %c0_173 = arith.constant 0 : index
    %149 = vector.load %arg5[%c1_171, %c0_172, %c0_173] : memref<2x1x32xf32, #tpu.memory_space<vmem>>, vector<1x1x32xf32>
    %150 = vector.shape_cast %149 : vector<1x1x32xf32> to vector<1x32xf32>
    %151 = vector.shape_cast %146 : vector<64x32xf32> to vector<8x8x32xf32>
    %c1_174 = arith.constant 1 : index
    %c1_175 = arith.constant 1 : index
    %c0_176 = arith.constant 0 : index
    %152 = vector.load %arg16[%c1_174, %c1_175, %c0_176] : memref<10x10x32xf32, #tpu.memory_space<vmem>>, vector<8x8x32xf32>
    tpu.vector_store %arg16[%c1_174, %c1_175, %c0_176], %151 {strides = array<i32>} : memref<10x10x32xf32, #tpu.memory_space<vmem>>, vector<8x8x32xf32>,
    %c0_177 = arith.constant 0 : index
    %c0_178 = arith.constant 0 : index
    %c0_179 = arith.constant 0 : index
    %153 = vector.load %arg16[%c0_177, %c0_178, %c0_179] : memref<10x10x32xf32, #tpu.memory_space<vmem>>, vector<8x8x32xf32>
    %154 = vector.shape_cast %153 : vector<8x8x32xf32> to vector<64x32xf32>
    %155 = arith.truncf %154 : vector<64x32xf32> to vector<64x32xbf16>
    %c0_180 = arith.constant 0 : index
    %c0_181 = arith.constant 0 : index
    %156 = vector.load %arg17[%c0_180, %c0_181] : memref<64x288xbf16, #tpu.memory_space<vmem>>, vector<64x32xbf16>
    tpu.vector_store %arg17[%c0_180, %c0_181], %155 {strides = array<i32>} : memref<64x288xbf16, #tpu.memory_space<vmem>>, vector<64x32xbf16>,
    %c0_182 = arith.constant 0 : index
    %c1_183 = arith.constant 1 : index
    %c0_184 = arith.constant 0 : index
    %157 = vector.load %arg16[%c0_182, %c1_183, %c0_184] : memref<10x10x32xf32, #tpu.memory_space<vmem>>, vector<8x8x32xf32>
    %158 = vector.shape_cast %157 : vector<8x8x32xf32> to vector<64x32xf32>
    %159 = arith.truncf %158 : vector<64x32xf32> to vector<64x32xbf16>
    %c0_185 = arith.constant 0 : index
    %c32_186 = arith.constant 32 : index
    %160 = vector.load %arg17[%c0_185, %c32_186] : memref<64x288xbf16, #tpu.memory_space<vmem>>, vector<64x32xbf16>
    tpu.vector_store %arg17[%c0_185, %c32_186], %159 {strides = array<i32>} : memref<64x288xbf16, #tpu.memory_space<vmem>>, vector<64x32xbf16>,
    %c0_187 = arith.constant 0 : index
    %c2_188 = arith.constant 2 : index
    %c0_189 = arith.constant 0 : index
    %161 = vector.load %arg16[%c0_187, %c2_188, %c0_189] : memref<10x10x32xf32, #tpu.memory_space<vmem>>, vector<8x8x32xf32>
    %162 = vector.shape_cast %161 : vector<8x8x32xf32> to vector<64x32xf32>
    %163 = arith.truncf %162 : vector<64x32xf32> to vector<64x32xbf16>
    %c0_190 = arith.constant 0 : index
    %c64_191 = arith.constant 64 : index
    %164 = vector.load %arg17[%c0_190, %c64_191] : memref<64x288xbf16, #tpu.memory_space<vmem>>, vector<64x32xbf16>
    tpu.vector_store %arg17[%c0_190, %c64_191], %163 {strides = array<i32>} : memref<64x288xbf16, #tpu.memory_space<vmem>>, vector<64x32xbf16>,
    %c1_192 = arith.constant 1 : index
    %c0_193 = arith.constant 0 : index
    %c0_194 = arith.constant 0 : index
    %165 = vector.load %arg16[%c1_192, %c0_193, %c0_194] : memref<10x10x32xf32, #tpu.memory_space<vmem>>, vector<8x8x32xf32>
    %166 = vector.shape_cast %165 : vector<8x8x32xf32> to vector<64x32xf32>
    %167 = arith.truncf %166 : vector<64x32xf32> to vector<64x32xbf16>
    %c0_195 = arith.constant 0 : index
    %c96_196 = arith.constant 96 : index
    %168 = vector.load %arg17[%c0_195, %c96_196] : memref<64x288xbf16, #tpu.memory_space<vmem>>, vector<64x32xbf16>
    tpu.vector_store %arg17[%c0_195, %c96_196], %167 {strides = array<i32>} : memref<64x288xbf16, #tpu.memory_space<vmem>>, vector<64x32xbf16>,
    %c1_197 = arith.constant 1 : index
    %c1_198 = arith.constant 1 : index
    %c0_199 = arith.constant 0 : index
    %169 = vector.load %arg16[%c1_197, %c1_198, %c0_199] : memref<10x10x32xf32, #tpu.memory_space<vmem>>, vector<8x8x32xf32>
    %170 = vector.shape_cast %169 : vector<8x8x32xf32> to vector<64x32xf32>
    %171 = arith.truncf %170 : vector<64x32xf32> to vector<64x32xbf16>
    %c0_200 = arith.constant 0 : index
    %c128_201 = arith.constant 128 : index
    %172 = vector.load %arg17[%c0_200, %c128_201] : memref<64x288xbf16, #tpu.memory_space<vmem>>, vector<64x32xbf16>
    tpu.vector_store %arg17[%c0_200, %c128_201], %171 {strides = array<i32>} : memref<64x288xbf16, #tpu.memory_space<vmem>>, vector<64x32xbf16>,
    %c1_202 = arith.constant 1 : index
    %c2_203 = arith.constant 2 : index
    %c0_204 = arith.constant 0 : index
    %173 = vector.load %arg16[%c1_202, %c2_203, %c0_204] : memref<10x10x32xf32, #tpu.memory_space<vmem>>, vector<8x8x32xf32>
    %174 = vector.shape_cast %173 : vector<8x8x32xf32> to vector<64x32xf32>
    %175 = arith.truncf %174 : vector<64x32xf32> to vector<64x32xbf16>
    %c0_205 = arith.constant 0 : index
    %c160_206 = arith.constant 160 : index
    %176 = vector.load %arg17[%c0_205, %c160_206] : memref<64x288xbf16, #tpu.memory_space<vmem>>, vector<64x32xbf16>
    tpu.vector_store %arg17[%c0_205, %c160_206], %175 {strides = array<i32>} : memref<64x288xbf16, #tpu.memory_space<vmem>>, vector<64x32xbf16>,
    %c2_207 = arith.constant 2 : index
    %c0_208 = arith.constant 0 : index
    %c0_209 = arith.constant 0 : index
    %177 = vector.load %arg16[%c2_207, %c0_208, %c0_209] : memref<10x10x32xf32, #tpu.memory_space<vmem>>, vector<8x8x32xf32>
    %178 = vector.shape_cast %177 : vector<8x8x32xf32> to vector<64x32xf32>
    %179 = arith.truncf %178 : vector<64x32xf32> to vector<64x32xbf16>
    %c0_210 = arith.constant 0 : index
    %c192_211 = arith.constant 192 : index
    %180 = vector.load %arg17[%c0_210, %c192_211] : memref<64x288xbf16, #tpu.memory_space<vmem>>, vector<64x32xbf16>
    tpu.vector_store %arg17[%c0_210, %c192_211], %179 {strides = array<i32>} : memref<64x288xbf16, #tpu.memory_space<vmem>>, vector<64x32xbf16>,
    %c2_212 = arith.constant 2 : index
    %c1_213 = arith.constant 1 : index
    %c0_214 = arith.constant 0 : index
    %181 = vector.load %arg16[%c2_212, %c1_213, %c0_214] : memref<10x10x32xf32, #tpu.memory_space<vmem>>, vector<8x8x32xf32>
    %182 = vector.shape_cast %181 : vector<8x8x32xf32> to vector<64x32xf32>
    %183 = arith.truncf %182 : vector<64x32xf32> to vector<64x32xbf16>
    %c0_215 = arith.constant 0 : index
    %c224_216 = arith.constant 224 : index
    %184 = vector.load %arg17[%c0_215, %c224_216] : memref<64x288xbf16, #tpu.memory_space<vmem>>, vector<64x32xbf16>
    tpu.vector_store %arg17[%c0_215, %c224_216], %183 {strides = array<i32>} : memref<64x288xbf16, #tpu.memory_space<vmem>>, vector<64x32xbf16>,
    %c2_217 = arith.constant 2 : index
    %c2_218 = arith.constant 2 : index
    %c0_219 = arith.constant 0 : index
    %185 = vector.load %arg16[%c2_217, %c2_218, %c0_219] : memref<10x10x32xf32, #tpu.memory_space<vmem>>, vector<8x8x32xf32>
    %186 = vector.shape_cast %185 : vector<8x8x32xf32> to vector<64x32xf32>
    %187 = arith.truncf %186 : vector<64x32xf32> to vector<64x32xbf16>
    %c0_220 = arith.constant 0 : index
    %c256_221 = arith.constant 256 : index
    %188 = vector.load %arg17[%c0_220, %c256_221] : memref<64x288xbf16, #tpu.memory_space<vmem>>, vector<64x32xbf16>
    tpu.vector_store %arg17[%c0_220, %c256_221], %187 {strides = array<i32>} : memref<64x288xbf16, #tpu.memory_space<vmem>>, vector<64x32xbf16>,
    %c0_222 = arith.constant 0 : index
    %c0_223 = arith.constant 0 : index
    %189 = vector.load %arg17[%c0_222, %c0_223] : memref<64x288xbf16, #tpu.memory_space<vmem>>, vector<64x288xbf16>
    %cst_224 = arith.constant dense<0.000000e+00> : vector<64x32xf32>
    %190 = tpu.matmul %189, %148, %cst_224 {dimension_numbers = #tpu.dot_dimension_numbers<[1], [0], [0], [1], [0, 0, 1, 1], [], []>} : vector<64x288xbf16>, vector<288x32xbf16>, vector<64x32xf32> -> vector<64x32xf32>
    %191 = vector.broadcast %150 : vector<1x32xf32> to vector<64x32xf32>
    %192 = arith.addf %190, %191 : vector<64x32xf32>
    %cst_225 = arith.constant 0.000000e+00 : f32
    %193 = vector.broadcast %cst_225 : f32 to vector<64x32xf32>
    %194 = arith.maximumf %192, %193 : vector<64x32xf32>
    %c1_226 = arith.constant 1 : index
    %c0_227 = arith.constant 0 : index
    %c0_228 = arith.constant 0 : index
    %195 = vector.load %arg6[%c1_226, %c0_227, %c0_228] : memref<2x288x32xbf16, #tpu.memory_space<vmem>>, vector<1x288x32xbf16>
    %196 = vector.shape_cast %195 : vector<1x288x32xbf16> to vector<288x32xbf16>
    %c1_229 = arith.constant 1 : index
    %c0_230 = arith.constant 0 : index
    %c0_231 = arith.constant 0 : index
    %197 = vector.load %arg7[%c1_229, %c0_230, %c0_231] : memref<2x1x32xf32, #tpu.memory_space<vmem>>, vector<1x1x32xf32>
    %198 = vector.shape_cast %197 : vector<1x1x32xf32> to vector<1x32xf32>
    %199 = vector.shape_cast %194 : vector<64x32xf32> to vector<8x8x32xf32>
    %c1_232 = arith.constant 1 : index
    %c1_233 = arith.constant 1 : index
    %c0_234 = arith.constant 0 : index
    %200 = vector.load %arg16[%c1_232, %c1_233, %c0_234] : memref<10x10x32xf32, #tpu.memory_space<vmem>>, vector<8x8x32xf32>
    tpu.vector_store %arg16[%c1_232, %c1_233, %c0_234], %199 {strides = array<i32>} : memref<10x10x32xf32, #tpu.memory_space<vmem>>, vector<8x8x32xf32>,
    %c0_235 = arith.constant 0 : index
    %c0_236 = arith.constant 0 : index
    %c0_237 = arith.constant 0 : index
    %201 = vector.load %arg16[%c0_235, %c0_236, %c0_237] : memref<10x10x32xf32, #tpu.memory_space<vmem>>, vector<8x8x32xf32>
    %202 = vector.shape_cast %201 : vector<8x8x32xf32> to vector<64x32xf32>
    %203 = arith.truncf %202 : vector<64x32xf32> to vector<64x32xbf16>
    %c0_238 = arith.constant 0 : index
    %c0_239 = arith.constant 0 : index
    %204 = vector.load %arg17[%c0_238, %c0_239] : memref<64x288xbf16, #tpu.memory_space<vmem>>, vector<64x32xbf16>
    tpu.vector_store %arg17[%c0_238, %c0_239], %203 {strides = array<i32>} : memref<64x288xbf16, #tpu.memory_space<vmem>>, vector<64x32xbf16>,
    %c0_240 = arith.constant 0 : index
    %c1_241 = arith.constant 1 : index
    %c0_242 = arith.constant 0 : index
    %205 = vector.load %arg16[%c0_240, %c1_241, %c0_242] : memref<10x10x32xf32, #tpu.memory_space<vmem>>, vector<8x8x32xf32>
    %206 = vector.shape_cast %205 : vector<8x8x32xf32> to vector<64x32xf32>
    %207 = arith.truncf %206 : vector<64x32xf32> to vector<64x32xbf16>
    %c0_243 = arith.constant 0 : index
    %c32_244 = arith.constant 32 : index
    %208 = vector.load %arg17[%c0_243, %c32_244] : memref<64x288xbf16, #tpu.memory_space<vmem>>, vector<64x32xbf16>
    tpu.vector_store %arg17[%c0_243, %c32_244], %207 {strides = array<i32>} : memref<64x288xbf16, #tpu.memory_space<vmem>>, vector<64x32xbf16>,
    %c0_245 = arith.constant 0 : index
    %c2_246 = arith.constant 2 : index
    %c0_247 = arith.constant 0 : index
    %209 = vector.load %arg16[%c0_245, %c2_246, %c0_247] : memref<10x10x32xf32, #tpu.memory_space<vmem>>, vector<8x8x32xf32>
    %210 = vector.shape_cast %209 : vector<8x8x32xf32> to vector<64x32xf32>
    %211 = arith.truncf %210 : vector<64x32xf32> to vector<64x32xbf16>
    %c0_248 = arith.constant 0 : index
    %c64_249 = arith.constant 64 : index
    %212 = vector.load %arg17[%c0_248, %c64_249] : memref<64x288xbf16, #tpu.memory_space<vmem>>, vector<64x32xbf16>
    tpu.vector_store %arg17[%c0_248, %c64_249], %211 {strides = array<i32>} : memref<64x288xbf16, #tpu.memory_space<vmem>>, vector<64x32xbf16>,
    %c1_250 = arith.constant 1 : index
    %c0_251 = arith.constant 0 : index
    %c0_252 = arith.constant 0 : index
    %213 = vector.load %arg16[%c1_250, %c0_251, %c0_252] : memref<10x10x32xf32, #tpu.memory_space<vmem>>, vector<8x8x32xf32>
    %214 = vector.shape_cast %213 : vector<8x8x32xf32> to vector<64x32xf32>
    %215 = arith.truncf %214 : vector<64x32xf32> to vector<64x32xbf16>
    %c0_253 = arith.constant 0 : index
    %c96_254 = arith.constant 96 : index
    %216 = vector.load %arg17[%c0_253, %c96_254] : memref<64x288xbf16, #tpu.memory_space<vmem>>, vector<64x32xbf16>
    tpu.vector_store %arg17[%c0_253, %c96_254], %215 {strides = array<i32>} : memref<64x288xbf16, #tpu.memory_space<vmem>>, vector<64x32xbf16>,
    %c1_255 = arith.constant 1 : index
    %c1_256 = arith.constant 1 : index
    %c0_257 = arith.constant 0 : index
    %217 = vector.load %arg16[%c1_255, %c1_256, %c0_257] : memref<10x10x32xf32, #tpu.memory_space<vmem>>, vector<8x8x32xf32>
    %218 = vector.shape_cast %217 : vector<8x8x32xf32> to vector<64x32xf32>
    %219 = arith.truncf %218 : vector<64x32xf32> to vector<64x32xbf16>
    %c0_258 = arith.constant 0 : index
    %c128_259 = arith.constant 128 : index
    %220 = vector.load %arg17[%c0_258, %c128_259] : memref<64x288xbf16, #tpu.memory_space<vmem>>, vector<64x32xbf16>
    tpu.vector_store %arg17[%c0_258, %c128_259], %219 {strides = array<i32>} : memref<64x288xbf16, #tpu.memory_space<vmem>>, vector<64x32xbf16>,
    %c1_260 = arith.constant 1 : index
    %c2_261 = arith.constant 2 : index
    %c0_262 = arith.constant 0 : index
    %221 = vector.load %arg16[%c1_260, %c2_261, %c0_262] : memref<10x10x32xf32, #tpu.memory_space<vmem>>, vector<8x8x32xf32>
    %222 = vector.shape_cast %221 : vector<8x8x32xf32> to vector<64x32xf32>
    %223 = arith.truncf %222 : vector<64x32xf32> to vector<64x32xbf16>
    %c0_263 = arith.constant 0 : index
    %c160_264 = arith.constant 160 : index
    %224 = vector.load %arg17[%c0_263, %c160_264] : memref<64x288xbf16, #tpu.memory_space<vmem>>, vector<64x32xbf16>
    tpu.vector_store %arg17[%c0_263, %c160_264], %223 {strides = array<i32>} : memref<64x288xbf16, #tpu.memory_space<vmem>>, vector<64x32xbf16>,
    %c2_265 = arith.constant 2 : index
    %c0_266 = arith.constant 0 : index
    %c0_267 = arith.constant 0 : index
    %225 = vector.load %arg16[%c2_265, %c0_266, %c0_267] : memref<10x10x32xf32, #tpu.memory_space<vmem>>, vector<8x8x32xf32>
    %226 = vector.shape_cast %225 : vector<8x8x32xf32> to vector<64x32xf32>
    %227 = arith.truncf %226 : vector<64x32xf32> to vector<64x32xbf16>
    %c0_268 = arith.constant 0 : index
    %c192_269 = arith.constant 192 : index
    %228 = vector.load %arg17[%c0_268, %c192_269] : memref<64x288xbf16, #tpu.memory_space<vmem>>, vector<64x32xbf16>
    tpu.vector_store %arg17[%c0_268, %c192_269], %227 {strides = array<i32>} : memref<64x288xbf16, #tpu.memory_space<vmem>>, vector<64x32xbf16>,
    %c2_270 = arith.constant 2 : index
    %c1_271 = arith.constant 1 : index
    %c0_272 = arith.constant 0 : index
    %229 = vector.load %arg16[%c2_270, %c1_271, %c0_272] : memref<10x10x32xf32, #tpu.memory_space<vmem>>, vector<8x8x32xf32>
    %230 = vector.shape_cast %229 : vector<8x8x32xf32> to vector<64x32xf32>
    %231 = arith.truncf %230 : vector<64x32xf32> to vector<64x32xbf16>
    %c0_273 = arith.constant 0 : index
    %c224_274 = arith.constant 224 : index
    %232 = vector.load %arg17[%c0_273, %c224_274] : memref<64x288xbf16, #tpu.memory_space<vmem>>, vector<64x32xbf16>
    tpu.vector_store %arg17[%c0_273, %c224_274], %231 {strides = array<i32>} : memref<64x288xbf16, #tpu.memory_space<vmem>>, vector<64x32xbf16>,
    %c2_275 = arith.constant 2 : index
    %c2_276 = arith.constant 2 : index
    %c0_277 = arith.constant 0 : index
    %233 = vector.load %arg16[%c2_275, %c2_276, %c0_277] : memref<10x10x32xf32, #tpu.memory_space<vmem>>, vector<8x8x32xf32>
    %234 = vector.shape_cast %233 : vector<8x8x32xf32> to vector<64x32xf32>
    %235 = arith.truncf %234 : vector<64x32xf32> to vector<64x32xbf16>
    %c0_278 = arith.constant 0 : index
    %c256_279 = arith.constant 256 : index
    %236 = vector.load %arg17[%c0_278, %c256_279] : memref<64x288xbf16, #tpu.memory_space<vmem>>, vector<64x32xbf16>
    tpu.vector_store %arg17[%c0_278, %c256_279], %235 {strides = array<i32>} : memref<64x288xbf16, #tpu.memory_space<vmem>>, vector<64x32xbf16>,
    %c0_280 = arith.constant 0 : index
    %c0_281 = arith.constant 0 : index
    %237 = vector.load %arg17[%c0_280, %c0_281] : memref<64x288xbf16, #tpu.memory_space<vmem>>, vector<64x288xbf16>
    %cst_282 = arith.constant dense<0.000000e+00> : vector<64x32xf32>
    %238 = tpu.matmul %237, %196, %cst_282 {dimension_numbers = #tpu.dot_dimension_numbers<[1], [0], [0], [1], [0, 0, 1, 1], [], []>} : vector<64x288xbf16>, vector<288x32xbf16>, vector<64x32xf32> -> vector<64x32xf32>
    %239 = vector.broadcast %198 : vector<1x32xf32> to vector<64x32xf32>
    %240 = arith.addf %238, %239 : vector<64x32xf32>
    %241 = arith.addf %240, %146 : vector<64x32xf32>
    %cst_283 = arith.constant 0.000000e+00 : f32
    %242 = vector.broadcast %cst_283 : f32 to vector<64x32xf32>
    %243 = arith.maximumf %241, %242 : vector<64x32xf32>
    %c0_284 = arith.constant 0 : index
    %c0_285 = arith.constant 0 : index
    %244 = vector.load %arg8[%c0_284, %c0_285] : memref<288x45xbf16, #tpu.memory_space<vmem>>, vector<288x45xbf16>
    %c0_286 = arith.constant 0 : index
    %c0_287 = arith.constant 0 : index
    %245 = vector.load %arg9[%c0_286, %c0_287] : memref<1x45xf32, #tpu.memory_space<vmem>>, vector<1x45xf32>
    %246 = vector.shape_cast %243 : vector<64x32xf32> to vector<8x8x32xf32>
    %c1_288 = arith.constant 1 : index
    %c1_289 = arith.constant 1 : index
    %c0_290 = arith.constant 0 : index
    %247 = vector.load %arg16[%c1_288, %c1_289, %c0_290] : memref<10x10x32xf32, #tpu.memory_space<vmem>>, vector<8x8x32xf32>
    tpu.vector_store %arg16[%c1_288, %c1_289, %c0_290], %246 {strides = array<i32>} : memref<10x10x32xf32, #tpu.memory_space<vmem>>, vector<8x8x32xf32>,
    %c0_291 = arith.constant 0 : index
    %c0_292 = arith.constant 0 : index
    %c0_293 = arith.constant 0 : index
    %248 = vector.load %arg16[%c0_291, %c0_292, %c0_293] : memref<10x10x32xf32, #tpu.memory_space<vmem>>, vector<8x8x32xf32>
    %249 = vector.shape_cast %248 : vector<8x8x32xf32> to vector<64x32xf32>
    %250 = arith.truncf %249 : vector<64x32xf32> to vector<64x32xbf16>
    %c0_294 = arith.constant 0 : index
    %c0_295 = arith.constant 0 : index
    %251 = vector.load %arg17[%c0_294, %c0_295] : memref<64x288xbf16, #tpu.memory_space<vmem>>, vector<64x32xbf16>
    tpu.vector_store %arg17[%c0_294, %c0_295], %250 {strides = array<i32>} : memref<64x288xbf16, #tpu.memory_space<vmem>>, vector<64x32xbf16>,
    %c0_296 = arith.constant 0 : index
    %c1_297 = arith.constant 1 : index
    %c0_298 = arith.constant 0 : index
    %252 = vector.load %arg16[%c0_296, %c1_297, %c0_298] : memref<10x10x32xf32, #tpu.memory_space<vmem>>, vector<8x8x32xf32>
    %253 = vector.shape_cast %252 : vector<8x8x32xf32> to vector<64x32xf32>
    %254 = arith.truncf %253 : vector<64x32xf32> to vector<64x32xbf16>
    %c0_299 = arith.constant 0 : index
    %c32_300 = arith.constant 32 : index
    %255 = vector.load %arg17[%c0_299, %c32_300] : memref<64x288xbf16, #tpu.memory_space<vmem>>, vector<64x32xbf16>
    tpu.vector_store %arg17[%c0_299, %c32_300], %254 {strides = array<i32>} : memref<64x288xbf16, #tpu.memory_space<vmem>>, vector<64x32xbf16>,
    %c0_301 = arith.constant 0 : index
    %c2_302 = arith.constant 2 : index
    %c0_303 = arith.constant 0 : index
    %256 = vector.load %arg16[%c0_301, %c2_302, %c0_303] : memref<10x10x32xf32, #tpu.memory_space<vmem>>, vector<8x8x32xf32>
    %257 = vector.shape_cast %256 : vector<8x8x32xf32> to vector<64x32xf32>
    %258 = arith.truncf %257 : vector<64x32xf32> to vector<64x32xbf16>
    %c0_304 = arith.constant 0 : index
    %c64_305 = arith.constant 64 : index
    %259 = vector.load %arg17[%c0_304, %c64_305] : memref<64x288xbf16, #tpu.memory_space<vmem>>, vector<64x32xbf16>
    tpu.vector_store %arg17[%c0_304, %c64_305], %258 {strides = array<i32>} : memref<64x288xbf16, #tpu.memory_space<vmem>>, vector<64x32xbf16>,
    %c1_306 = arith.constant 1 : index
    %c0_307 = arith.constant 0 : index
    %c0_308 = arith.constant 0 : index
    %260 = vector.load %arg16[%c1_306, %c0_307, %c0_308] : memref<10x10x32xf32, #tpu.memory_space<vmem>>, vector<8x8x32xf32>
    %261 = vector.shape_cast %260 : vector<8x8x32xf32> to vector<64x32xf32>
    %262 = arith.truncf %261 : vector<64x32xf32> to vector<64x32xbf16>
    %c0_309 = arith.constant 0 : index
    %c96_310 = arith.constant 96 : index
    %263 = vector.load %arg17[%c0_309, %c96_310] : memref<64x288xbf16, #tpu.memory_space<vmem>>, vector<64x32xbf16>
    tpu.vector_store %arg17[%c0_309, %c96_310], %262 {strides = array<i32>} : memref<64x288xbf16, #tpu.memory_space<vmem>>, vector<64x32xbf16>,
    %c1_311 = arith.constant 1 : index
    %c1_312 = arith.constant 1 : index
    %c0_313 = arith.constant 0 : index
    %264 = vector.load %arg16[%c1_311, %c1_312, %c0_313] : memref<10x10x32xf32, #tpu.memory_space<vmem>>, vector<8x8x32xf32>
    %265 = vector.shape_cast %264 : vector<8x8x32xf32> to vector<64x32xf32>
    %266 = arith.truncf %265 : vector<64x32xf32> to vector<64x32xbf16>
    %c0_314 = arith.constant 0 : index
    %c128_315 = arith.constant 128 : index
    %267 = vector.load %arg17[%c0_314, %c128_315] : memref<64x288xbf16, #tpu.memory_space<vmem>>, vector<64x32xbf16>
    tpu.vector_store %arg17[%c0_314, %c128_315], %266 {strides = array<i32>} : memref<64x288xbf16, #tpu.memory_space<vmem>>, vector<64x32xbf16>,
    %c1_316 = arith.constant 1 : index
    %c2_317 = arith.constant 2 : index
    %c0_318 = arith.constant 0 : index
    %268 = vector.load %arg16[%c1_316, %c2_317, %c0_318] : memref<10x10x32xf32, #tpu.memory_space<vmem>>, vector<8x8x32xf32>
    %269 = vector.shape_cast %268 : vector<8x8x32xf32> to vector<64x32xf32>
    %270 = arith.truncf %269 : vector<64x32xf32> to vector<64x32xbf16>
    %c0_319 = arith.constant 0 : index
    %c160_320 = arith.constant 160 : index
    %271 = vector.load %arg17[%c0_319, %c160_320] : memref<64x288xbf16, #tpu.memory_space<vmem>>, vector<64x32xbf16>
    tpu.vector_store %arg17[%c0_319, %c160_320], %270 {strides = array<i32>} : memref<64x288xbf16, #tpu.memory_space<vmem>>, vector<64x32xbf16>,
    %c2_321 = arith.constant 2 : index
    %c0_322 = arith.constant 0 : index
    %c0_323 = arith.constant 0 : index
    %272 = vector.load %arg16[%c2_321, %c0_322, %c0_323] : memref<10x10x32xf32, #tpu.memory_space<vmem>>, vector<8x8x32xf32>
    %273 = vector.shape_cast %272 : vector<8x8x32xf32> to vector<64x32xf32>
    %274 = arith.truncf %273 : vector<64x32xf32> to vector<64x32xbf16>
    %c0_324 = arith.constant 0 : index
    %c192_325 = arith.constant 192 : index
    %275 = vector.load %arg17[%c0_324, %c192_325] : memref<64x288xbf16, #tpu.memory_space<vmem>>, vector<64x32xbf16>
    tpu.vector_store %arg17[%c0_324, %c192_325], %274 {strides = array<i32>} : memref<64x288xbf16, #tpu.memory_space<vmem>>, vector<64x32xbf16>,
    %c2_326 = arith.constant 2 : index
    %c1_327 = arith.constant 1 : index
    %c0_328 = arith.constant 0 : index
    %276 = vector.load %arg16[%c2_326, %c1_327, %c0_328] : memref<10x10x32xf32, #tpu.memory_space<vmem>>, vector<8x8x32xf32>
    %277 = vector.shape_cast %276 : vector<8x8x32xf32> to vector<64x32xf32>
    %278 = arith.truncf %277 : vector<64x32xf32> to vector<64x32xbf16>
    %c0_329 = arith.constant 0 : index
    %c224_330 = arith.constant 224 : index
    %279 = vector.load %arg17[%c0_329, %c224_330] : memref<64x288xbf16, #tpu.memory_space<vmem>>, vector<64x32xbf16>
    tpu.vector_store %arg17[%c0_329, %c224_330], %278 {strides = array<i32>} : memref<64x288xbf16, #tpu.memory_space<vmem>>, vector<64x32xbf16>,
    %c2_331 = arith.constant 2 : index
    %c2_332 = arith.constant 2 : index
    %c0_333 = arith.constant 0 : index
    %280 = vector.load %arg16[%c2_331, %c2_332, %c0_333] : memref<10x10x32xf32, #tpu.memory_space<vmem>>, vector<8x8x32xf32>
    %281 = vector.shape_cast %280 : vector<8x8x32xf32> to vector<64x32xf32>
    %282 = arith.truncf %281 : vector<64x32xf32> to vector<64x32xbf16>
    %c0_334 = arith.constant 0 : index
    %c256_335 = arith.constant 256 : index
    %283 = vector.load %arg17[%c0_334, %c256_335] : memref<64x288xbf16, #tpu.memory_space<vmem>>, vector<64x32xbf16>
    tpu.vector_store %arg17[%c0_334, %c256_335], %282 {strides = array<i32>} : memref<64x288xbf16, #tpu.memory_space<vmem>>, vector<64x32xbf16>,
    %c0_336 = arith.constant 0 : index
    %c0_337 = arith.constant 0 : index
    %284 = vector.load %arg17[%c0_336, %c0_337] : memref<64x288xbf16, #tpu.memory_space<vmem>>, vector<64x288xbf16>
    %cst_338 = arith.constant dense<0.000000e+00> : vector<64x45xf32>
    %285 = tpu.matmul %284, %244, %cst_338 {dimension_numbers = #tpu.dot_dimension_numbers<[1], [0], [0], [1], [0, 0, 1, 1], [], []>} : vector<64x288xbf16>, vector<288x45xbf16>, vector<64x45xf32> -> vector<64x45xf32>
    %286 = vector.broadcast %245 : vector<1x45xf32> to vector<64x45xf32>
    %287 = arith.addf %285, %286 : vector<64x45xf32>
    %cst_339 = arith.constant 0.000000e+00 : f32
    %288 = vector.broadcast %cst_339 : f32 to vector<64x45xf32>
    %289 = arith.maximumf %287, %288 : vector<64x45xf32>
    %290 = vector.extract_strided_slice %289 {offsets = [0, 0], sizes = [64, 32], strides = [1, 1]} : vector<64x45xf32> to vector<64x32xf32>
    %291 = vector.extract_strided_slice %289 {offsets = [0, 32], sizes = [64, 13], strides = [1, 1]} : vector<64x45xf32> to vector<64x13xf32>
    %292 = tpu.transpose %290, [1, 0] : vector<64x32xf32> -> vector<32x64xf32>
    %c0_340 = arith.constant 0 : index
    %c0_341 = arith.constant 0 : index
    %293 = vector.load %arg11[%c0_340, %c0_341] : memref<1x64xf32, #tpu.memory_space<vmem>>, vector<1x64xf32>
    %294 = vector.extract_strided_slice %292 {offsets = [0, 0], sizes = [1, 64], strides = [1, 1]} : vector<32x64xf32> to vector<1x64xf32>
    %295 = arith.truncf %294 : vector<1x64xf32> to vector<1x64xbf16>
    %c0_342 = arith.constant 0 : index
    %c0_343 = arith.constant 0 : index
    %c0_344 = arith.constant 0 : index
    %296 = vector.load %arg10[%c0_342, %c0_343, %c0_344] : memref<32x64x64xbf16, #tpu.memory_space<vmem>>, vector<1x64x64xbf16>
    %297 = vector.shape_cast %296 : vector<1x64x64xbf16> to vector<64x64xbf16>
    %cst_345 = arith.constant dense<0.000000e+00> : vector<1x64xf32>
    %298 = tpu.matmul %295, %297, %cst_345 {dimension_numbers = #tpu.dot_dimension_numbers<[1], [0], [0], [1], [0, 0, 1, 1], [], []>} : vector<1x64xbf16>, vector<64x64xbf16>, vector<1x64xf32> -> vector<1x64xf32>
    %299 = arith.addf %293, %298 : vector<1x64xf32>
    %300 = vector.extract_strided_slice %292 {offsets = [1, 0], sizes = [1, 64], strides = [1, 1]} : vector<32x64xf32> to vector<1x64xf32>
    %301 = arith.truncf %300 : vector<1x64xf32> to vector<1x64xbf16>
    %c1_346 = arith.constant 1 : index
    %c0_347 = arith.constant 0 : index
    %c0_348 = arith.constant 0 : index
    %302 = vector.load %arg10[%c1_346, %c0_347, %c0_348] : memref<32x64x64xbf16, #tpu.memory_space<vmem>>, vector<1x64x64xbf16>
    %303 = vector.shape_cast %302 : vector<1x64x64xbf16> to vector<64x64xbf16>
    %cst_349 = arith.constant dense<0.000000e+00> : vector<1x64xf32>
    %304 = tpu.matmul %301, %303, %cst_349 {dimension_numbers = #tpu.dot_dimension_numbers<[1], [0], [0], [1], [0, 0, 1, 1], [], []>} : vector<1x64xbf16>, vector<64x64xbf16>, vector<1x64xf32> -> vector<1x64xf32>
    %305 = arith.addf %299, %304 : vector<1x64xf32>
    %306 = vector.extract_strided_slice %292 {offsets = [2, 0], sizes = [1, 64], strides = [1, 1]} : vector<32x64xf32> to vector<1x64xf32>
    %307 = arith.truncf %306 : vector<1x64xf32> to vector<1x64xbf16>
    %c2_350 = arith.constant 2 : index
    %c0_351 = arith.constant 0 : index
    %c0_352 = arith.constant 0 : index
    %308 = vector.load %arg10[%c2_350, %c0_351, %c0_352] : memref<32x64x64xbf16, #tpu.memory_space<vmem>>, vector<1x64x64xbf16>
    %309 = vector.shape_cast %308 : vector<1x64x64xbf16> to vector<64x64xbf16>
    %cst_353 = arith.constant dense<0.000000e+00> : vector<1x64xf32>
    %310 = tpu.matmul %307, %309, %cst_353 {dimension_numbers = #tpu.dot_dimension_numbers<[1], [0], [0], [1], [0, 0, 1, 1], [], []>} : vector<1x64xbf16>, vector<64x64xbf16>, vector<1x64xf32> -> vector<1x64xf32>
    %311 = arith.addf %305, %310 : vector<1x64xf32>
    %312 = vector.extract_strided_slice %292 {offsets = [3, 0], sizes = [1, 64], strides = [1, 1]} : vector<32x64xf32> to vector<1x64xf32>
    %313 = arith.truncf %312 : vector<1x64xf32> to vector<1x64xbf16>
    %c3 = arith.constant 3 : index
    %c0_354 = arith.constant 0 : index
    %c0_355 = arith.constant 0 : index
    %314 = vector.load %arg10[%c3, %c0_354, %c0_355] : memref<32x64x64xbf16, #tpu.memory_space<vmem>>, vector<1x64x64xbf16>
    %315 = vector.shape_cast %314 : vector<1x64x64xbf16> to vector<64x64xbf16>
    %cst_356 = arith.constant dense<0.000000e+00> : vector<1x64xf32>
    %316 = tpu.matmul %313, %315, %cst_356 {dimension_numbers = #tpu.dot_dimension_numbers<[1], [0], [0], [1], [0, 0, 1, 1], [], []>} : vector<1x64xbf16>, vector<64x64xbf16>, vector<1x64xf32> -> vector<1x64xf32>
    %317 = arith.addf %311, %316 : vector<1x64xf32>
    %318 = vector.extract_strided_slice %292 {offsets = [4, 0], sizes = [1, 64], strides = [1, 1]} : vector<32x64xf32> to vector<1x64xf32>
    %319 = arith.truncf %318 : vector<1x64xf32> to vector<1x64xbf16>
    %c4 = arith.constant 4 : index
    %c0_357 = arith.constant 0 : index
    %c0_358 = arith.constant 0 : index
    %320 = vector.load %arg10[%c4, %c0_357, %c0_358] : memref<32x64x64xbf16, #tpu.memory_space<vmem>>, vector<1x64x64xbf16>
    %321 = vector.shape_cast %320 : vector<1x64x64xbf16> to vector<64x64xbf16>
    %cst_359 = arith.constant dense<0.000000e+00> : vector<1x64xf32>
    %322 = tpu.matmul %319, %321, %cst_359 {dimension_numbers = #tpu.dot_dimension_numbers<[1], [0], [0], [1], [0, 0, 1, 1], [], []>} : vector<1x64xbf16>, vector<64x64xbf16>, vector<1x64xf32> -> vector<1x64xf32>
    %323 = arith.addf %317, %322 : vector<1x64xf32>
    %324 = vector.extract_strided_slice %292 {offsets = [5, 0], sizes = [1, 64], strides = [1, 1]} : vector<32x64xf32> to vector<1x64xf32>
    %325 = arith.truncf %324 : vector<1x64xf32> to vector<1x64xbf16>
    %c5 = arith.constant 5 : index
    %c0_360 = arith.constant 0 : index
    %c0_361 = arith.constant 0 : index
    %326 = vector.load %arg10[%c5, %c0_360, %c0_361] : memref<32x64x64xbf16, #tpu.memory_space<vmem>>, vector<1x64x64xbf16>
    %327 = vector.shape_cast %326 : vector<1x64x64xbf16> to vector<64x64xbf16>
    %cst_362 = arith.constant dense<0.000000e+00> : vector<1x64xf32>
    %328 = tpu.matmul %325, %327, %cst_362 {dimension_numbers = #tpu.dot_dimension_numbers<[1], [0], [0], [1], [0, 0, 1, 1], [], []>} : vector<1x64xbf16>, vector<64x64xbf16>, vector<1x64xf32> -> vector<1x64xf32>
    %329 = arith.addf %323, %328 : vector<1x64xf32>
    %330 = vector.extract_strided_slice %292 {offsets = [6, 0], sizes = [1, 64], strides = [1, 1]} : vector<32x64xf32> to vector<1x64xf32>
    %331 = arith.truncf %330 : vector<1x64xf32> to vector<1x64xbf16>
    %c6 = arith.constant 6 : index
    %c0_363 = arith.constant 0 : index
    %c0_364 = arith.constant 0 : index
    %332 = vector.load %arg10[%c6, %c0_363, %c0_364] : memref<32x64x64xbf16, #tpu.memory_space<vmem>>, vector<1x64x64xbf16>
    %333 = vector.shape_cast %332 : vector<1x64x64xbf16> to vector<64x64xbf16>
    %cst_365 = arith.constant dense<0.000000e+00> : vector<1x64xf32>
    %334 = tpu.matmul %331, %333, %cst_365 {dimension_numbers = #tpu.dot_dimension_numbers<[1], [0], [0], [1], [0, 0, 1, 1], [], []>} : vector<1x64xbf16>, vector<64x64xbf16>, vector<1x64xf32> -> vector<1x64xf32>
    %335 = arith.addf %329, %334 : vector<1x64xf32>
    %336 = vector.extract_strided_slice %292 {offsets = [7, 0], sizes = [1, 64], strides = [1, 1]} : vector<32x64xf32> to vector<1x64xf32>
    %337 = arith.truncf %336 : vector<1x64xf32> to vector<1x64xbf16>
    %c7 = arith.constant 7 : index
    %c0_366 = arith.constant 0 : index
    %c0_367 = arith.constant 0 : index
    %338 = vector.load %arg10[%c7, %c0_366, %c0_367] : memref<32x64x64xbf16, #tpu.memory_space<vmem>>, vector<1x64x64xbf16>
    %339 = vector.shape_cast %338 : vector<1x64x64xbf16> to vector<64x64xbf16>
    %cst_368 = arith.constant dense<0.000000e+00> : vector<1x64xf32>
    %340 = tpu.matmul %337, %339, %cst_368 {dimension_numbers = #tpu.dot_dimension_numbers<[1], [0], [0], [1], [0, 0, 1, 1], [], []>} : vector<1x64xbf16>, vector<64x64xbf16>, vector<1x64xf32> -> vector<1x64xf32>
    %341 = arith.addf %335, %340 : vector<1x64xf32>
    %342 = vector.extract_strided_slice %292 {offsets = [8, 0], sizes = [1, 64], strides = [1, 1]} : vector<32x64xf32> to vector<1x64xf32>
    %343 = arith.truncf %342 : vector<1x64xf32> to vector<1x64xbf16>
    %c8 = arith.constant 8 : index
    %c0_369 = arith.constant 0 : index
    %c0_370 = arith.constant 0 : index
    %344 = vector.load %arg10[%c8, %c0_369, %c0_370] : memref<32x64x64xbf16, #tpu.memory_space<vmem>>, vector<1x64x64xbf16>
    %345 = vector.shape_cast %344 : vector<1x64x64xbf16> to vector<64x64xbf16>
    %cst_371 = arith.constant dense<0.000000e+00> : vector<1x64xf32>
    %346 = tpu.matmul %343, %345, %cst_371 {dimension_numbers = #tpu.dot_dimension_numbers<[1], [0], [0], [1], [0, 0, 1, 1], [], []>} : vector<1x64xbf16>, vector<64x64xbf16>, vector<1x64xf32> -> vector<1x64xf32>
    %347 = arith.addf %341, %346 : vector<1x64xf32>
    %348 = vector.extract_strided_slice %292 {offsets = [9, 0], sizes = [1, 64], strides = [1, 1]} : vector<32x64xf32> to vector<1x64xf32>
    %349 = arith.truncf %348 : vector<1x64xf32> to vector<1x64xbf16>
    %c9 = arith.constant 9 : index
    %c0_372 = arith.constant 0 : index
    %c0_373 = arith.constant 0 : index
    %350 = vector.load %arg10[%c9, %c0_372, %c0_373] : memref<32x64x64xbf16, #tpu.memory_space<vmem>>, vector<1x64x64xbf16>
    %351 = vector.shape_cast %350 : vector<1x64x64xbf16> to vector<64x64xbf16>
    %cst_374 = arith.constant dense<0.000000e+00> : vector<1x64xf32>
    %352 = tpu.matmul %349, %351, %cst_374 {dimension_numbers = #tpu.dot_dimension_numbers<[1], [0], [0], [1], [0, 0, 1, 1], [], []>} : vector<1x64xbf16>, vector<64x64xbf16>, vector<1x64xf32> -> vector<1x64xf32>
    %353 = arith.addf %347, %352 : vector<1x64xf32>
    %354 = vector.extract_strided_slice %292 {offsets = [10, 0], sizes = [1, 64], strides = [1, 1]} : vector<32x64xf32> to vector<1x64xf32>
    %355 = arith.truncf %354 : vector<1x64xf32> to vector<1x64xbf16>
    %c10 = arith.constant 10 : index
    %c0_375 = arith.constant 0 : index
    %c0_376 = arith.constant 0 : index
    %356 = vector.load %arg10[%c10, %c0_375, %c0_376] : memref<32x64x64xbf16, #tpu.memory_space<vmem>>, vector<1x64x64xbf16>
    %357 = vector.shape_cast %356 : vector<1x64x64xbf16> to vector<64x64xbf16>
    %cst_377 = arith.constant dense<0.000000e+00> : vector<1x64xf32>
    %358 = tpu.matmul %355, %357, %cst_377 {dimension_numbers = #tpu.dot_dimension_numbers<[1], [0], [0], [1], [0, 0, 1, 1], [], []>} : vector<1x64xbf16>, vector<64x64xbf16>, vector<1x64xf32> -> vector<1x64xf32>
    %359 = arith.addf %353, %358 : vector<1x64xf32>
    %360 = vector.extract_strided_slice %292 {offsets = [11, 0], sizes = [1, 64], strides = [1, 1]} : vector<32x64xf32> to vector<1x64xf32>
    %361 = arith.truncf %360 : vector<1x64xf32> to vector<1x64xbf16>
    %c11 = arith.constant 11 : index
    %c0_378 = arith.constant 0 : index
    %c0_379 = arith.constant 0 : index
    %362 = vector.load %arg10[%c11, %c0_378, %c0_379] : memref<32x64x64xbf16, #tpu.memory_space<vmem>>, vector<1x64x64xbf16>
    %363 = vector.shape_cast %362 : vector<1x64x64xbf16> to vector<64x64xbf16>
    %cst_380 = arith.constant dense<0.000000e+00> : vector<1x64xf32>
    %364 = tpu.matmul %361, %363, %cst_380 {dimension_numbers = #tpu.dot_dimension_numbers<[1], [0], [0], [1], [0, 0, 1, 1], [], []>} : vector<1x64xbf16>, vector<64x64xbf16>, vector<1x64xf32> -> vector<1x64xf32>
    %365 = arith.addf %359, %364 : vector<1x64xf32>
    %366 = vector.extract_strided_slice %292 {offsets = [12, 0], sizes = [1, 64], strides = [1, 1]} : vector<32x64xf32> to vector<1x64xf32>
    %367 = arith.truncf %366 : vector<1x64xf32> to vector<1x64xbf16>
    %c12 = arith.constant 12 : index
    %c0_381 = arith.constant 0 : index
    %c0_382 = arith.constant 0 : index
    %368 = vector.load %arg10[%c12, %c0_381, %c0_382] : memref<32x64x64xbf16, #tpu.memory_space<vmem>>, vector<1x64x64xbf16>
    %369 = vector.shape_cast %368 : vector<1x64x64xbf16> to vector<64x64xbf16>
    %cst_383 = arith.constant dense<0.000000e+00> : vector<1x64xf32>
    %370 = tpu.matmul %367, %369, %cst_383 {dimension_numbers = #tpu.dot_dimension_numbers<[1], [0], [0], [1], [0, 0, 1, 1], [], []>} : vector<1x64xbf16>, vector<64x64xbf16>, vector<1x64xf32> -> vector<1x64xf32>
    %371 = arith.addf %365, %370 : vector<1x64xf32>
    %372 = vector.extract_strided_slice %292 {offsets = [13, 0], sizes = [1, 64], strides = [1, 1]} : vector<32x64xf32> to vector<1x64xf32>
    %373 = arith.truncf %372 : vector<1x64xf32> to vector<1x64xbf16>
    %c13 = arith.constant 13 : index
    %c0_384 = arith.constant 0 : index
    %c0_385 = arith.constant 0 : index
    %374 = vector.load %arg10[%c13, %c0_384, %c0_385] : memref<32x64x64xbf16, #tpu.memory_space<vmem>>, vector<1x64x64xbf16>
    %375 = vector.shape_cast %374 : vector<1x64x64xbf16> to vector<64x64xbf16>
    %cst_386 = arith.constant dense<0.000000e+00> : vector<1x64xf32>
    %376 = tpu.matmul %373, %375, %cst_386 {dimension_numbers = #tpu.dot_dimension_numbers<[1], [0], [0], [1], [0, 0, 1, 1], [], []>} : vector<1x64xbf16>, vector<64x64xbf16>, vector<1x64xf32> -> vector<1x64xf32>
    %377 = arith.addf %371, %376 : vector<1x64xf32>
    %378 = vector.extract_strided_slice %292 {offsets = [14, 0], sizes = [1, 64], strides = [1, 1]} : vector<32x64xf32> to vector<1x64xf32>
    %379 = arith.truncf %378 : vector<1x64xf32> to vector<1x64xbf16>
    %c14 = arith.constant 14 : index
    %c0_387 = arith.constant 0 : index
    %c0_388 = arith.constant 0 : index
    %380 = vector.load %arg10[%c14, %c0_387, %c0_388] : memref<32x64x64xbf16, #tpu.memory_space<vmem>>, vector<1x64x64xbf16>
    %381 = vector.shape_cast %380 : vector<1x64x64xbf16> to vector<64x64xbf16>
    %cst_389 = arith.constant dense<0.000000e+00> : vector<1x64xf32>
    %382 = tpu.matmul %379, %381, %cst_389 {dimension_numbers = #tpu.dot_dimension_numbers<[1], [0], [0], [1], [0, 0, 1, 1], [], []>} : vector<1x64xbf16>, vector<64x64xbf16>, vector<1x64xf32> -> vector<1x64xf32>
    %383 = arith.addf %377, %382 : vector<1x64xf32>
    %384 = vector.extract_strided_slice %292 {offsets = [15, 0], sizes = [1, 64], strides = [1, 1]} : vector<32x64xf32> to vector<1x64xf32>
    %385 = arith.truncf %384 : vector<1x64xf32> to vector<1x64xbf16>
    %c15 = arith.constant 15 : index
    %c0_390 = arith.constant 0 : index
    %c0_391 = arith.constant 0 : index
    %386 = vector.load %arg10[%c15, %c0_390, %c0_391] : memref<32x64x64xbf16, #tpu.memory_space<vmem>>, vector<1x64x64xbf16>
    %387 = vector.shape_cast %386 : vector<1x64x64xbf16> to vector<64x64xbf16>
    %cst_392 = arith.constant dense<0.000000e+00> : vector<1x64xf32>
    %388 = tpu.matmul %385, %387, %cst_392 {dimension_numbers = #tpu.dot_dimension_numbers<[1], [0], [0], [1], [0, 0, 1, 1], [], []>} : vector<1x64xbf16>, vector<64x64xbf16>, vector<1x64xf32> -> vector<1x64xf32>
    %389 = arith.addf %383, %388 : vector<1x64xf32>
    %390 = vector.extract_strided_slice %292 {offsets = [16, 0], sizes = [1, 64], strides = [1, 1]} : vector<32x64xf32> to vector<1x64xf32>
    %391 = arith.truncf %390 : vector<1x64xf32> to vector<1x64xbf16>
    %c16 = arith.constant 16 : index
    %c0_393 = arith.constant 0 : index
    %c0_394 = arith.constant 0 : index
    %392 = vector.load %arg10[%c16, %c0_393, %c0_394] : memref<32x64x64xbf16, #tpu.memory_space<vmem>>, vector<1x64x64xbf16>
    %393 = vector.shape_cast %392 : vector<1x64x64xbf16> to vector<64x64xbf16>
    %cst_395 = arith.constant dense<0.000000e+00> : vector<1x64xf32>
    %394 = tpu.matmul %391, %393, %cst_395 {dimension_numbers = #tpu.dot_dimension_numbers<[1], [0], [0], [1], [0, 0, 1, 1], [], []>} : vector<1x64xbf16>, vector<64x64xbf16>, vector<1x64xf32> -> vector<1x64xf32>
    %395 = arith.addf %389, %394 : vector<1x64xf32>
    %396 = vector.extract_strided_slice %292 {offsets = [17, 0], sizes = [1, 64], strides = [1, 1]} : vector<32x64xf32> to vector<1x64xf32>
    %397 = arith.truncf %396 : vector<1x64xf32> to vector<1x64xbf16>
    %c17 = arith.constant 17 : index
    %c0_396 = arith.constant 0 : index
    %c0_397 = arith.constant 0 : index
    %398 = vector.load %arg10[%c17, %c0_396, %c0_397] : memref<32x64x64xbf16, #tpu.memory_space<vmem>>, vector<1x64x64xbf16>
    %399 = vector.shape_cast %398 : vector<1x64x64xbf16> to vector<64x64xbf16>
    %cst_398 = arith.constant dense<0.000000e+00> : vector<1x64xf32>
    %400 = tpu.matmul %397, %399, %cst_398 {dimension_numbers = #tpu.dot_dimension_numbers<[1], [0], [0], [1], [0, 0, 1, 1], [], []>} : vector<1x64xbf16>, vector<64x64xbf16>, vector<1x64xf32> -> vector<1x64xf32>
    %401 = arith.addf %395, %400 : vector<1x64xf32>
    %402 = vector.extract_strided_slice %292 {offsets = [18, 0], sizes = [1, 64], strides = [1, 1]} : vector<32x64xf32> to vector<1x64xf32>
    %403 = arith.truncf %402 : vector<1x64xf32> to vector<1x64xbf16>
    %c18 = arith.constant 18 : index
    %c0_399 = arith.constant 0 : index
    %c0_400 = arith.constant 0 : index
    %404 = vector.load %arg10[%c18, %c0_399, %c0_400] : memref<32x64x64xbf16, #tpu.memory_space<vmem>>, vector<1x64x64xbf16>
    %405 = vector.shape_cast %404 : vector<1x64x64xbf16> to vector<64x64xbf16>
    %cst_401 = arith.constant dense<0.000000e+00> : vector<1x64xf32>
    %406 = tpu.matmul %403, %405, %cst_401 {dimension_numbers = #tpu.dot_dimension_numbers<[1], [0], [0], [1], [0, 0, 1, 1], [], []>} : vector<1x64xbf16>, vector<64x64xbf16>, vector<1x64xf32> -> vector<1x64xf32>
    %407 = arith.addf %401, %406 : vector<1x64xf32>
    %408 = vector.extract_strided_slice %292 {offsets = [19, 0], sizes = [1, 64], strides = [1, 1]} : vector<32x64xf32> to vector<1x64xf32>
    %409 = arith.truncf %408 : vector<1x64xf32> to vector<1x64xbf16>
    %c19 = arith.constant 19 : index
    %c0_402 = arith.constant 0 : index
    %c0_403 = arith.constant 0 : index
    %410 = vector.load %arg10[%c19, %c0_402, %c0_403] : memref<32x64x64xbf16, #tpu.memory_space<vmem>>, vector<1x64x64xbf16>
    %411 = vector.shape_cast %410 : vector<1x64x64xbf16> to vector<64x64xbf16>
    %cst_404 = arith.constant dense<0.000000e+00> : vector<1x64xf32>
    %412 = tpu.matmul %409, %411, %cst_404 {dimension_numbers = #tpu.dot_dimension_numbers<[1], [0], [0], [1], [0, 0, 1, 1], [], []>} : vector<1x64xbf16>, vector<64x64xbf16>, vector<1x64xf32> -> vector<1x64xf32>
    %413 = arith.addf %407, %412 : vector<1x64xf32>
    %414 = vector.extract_strided_slice %292 {offsets = [20, 0], sizes = [1, 64], strides = [1, 1]} : vector<32x64xf32> to vector<1x64xf32>
    %415 = arith.truncf %414 : vector<1x64xf32> to vector<1x64xbf16>
    %c20 = arith.constant 20 : index
    %c0_405 = arith.constant 0 : index
    %c0_406 = arith.constant 0 : index
    %416 = vector.load %arg10[%c20, %c0_405, %c0_406] : memref<32x64x64xbf16, #tpu.memory_space<vmem>>, vector<1x64x64xbf16>
    %417 = vector.shape_cast %416 : vector<1x64x64xbf16> to vector<64x64xbf16>
    %cst_407 = arith.constant dense<0.000000e+00> : vector<1x64xf32>
    %418 = tpu.matmul %415, %417, %cst_407 {dimension_numbers = #tpu.dot_dimension_numbers<[1], [0], [0], [1], [0, 0, 1, 1], [], []>} : vector<1x64xbf16>, vector<64x64xbf16>, vector<1x64xf32> -> vector<1x64xf32>
    %419 = arith.addf %413, %418 : vector<1x64xf32>
    %420 = vector.extract_strided_slice %292 {offsets = [21, 0], sizes = [1, 64], strides = [1, 1]} : vector<32x64xf32> to vector<1x64xf32>
    %421 = arith.truncf %420 : vector<1x64xf32> to vector<1x64xbf16>
    %c21 = arith.constant 21 : index
    %c0_408 = arith.constant 0 : index
    %c0_409 = arith.constant 0 : index
    %422 = vector.load %arg10[%c21, %c0_408, %c0_409] : memref<32x64x64xbf16, #tpu.memory_space<vmem>>, vector<1x64x64xbf16>
    %423 = vector.shape_cast %422 : vector<1x64x64xbf16> to vector<64x64xbf16>
    %cst_410 = arith.constant dense<0.000000e+00> : vector<1x64xf32>
    %424 = tpu.matmul %421, %423, %cst_410 {dimension_numbers = #tpu.dot_dimension_numbers<[1], [0], [0], [1], [0, 0, 1, 1], [], []>} : vector<1x64xbf16>, vector<64x64xbf16>, vector<1x64xf32> -> vector<1x64xf32>
    %425 = arith.addf %419, %424 : vector<1x64xf32>
    %426 = vector.extract_strided_slice %292 {offsets = [22, 0], sizes = [1, 64], strides = [1, 1]} : vector<32x64xf32> to vector<1x64xf32>
    %427 = arith.truncf %426 : vector<1x64xf32> to vector<1x64xbf16>
    %c22 = arith.constant 22 : index
    %c0_411 = arith.constant 0 : index
    %c0_412 = arith.constant 0 : index
    %428 = vector.load %arg10[%c22, %c0_411, %c0_412] : memref<32x64x64xbf16, #tpu.memory_space<vmem>>, vector<1x64x64xbf16>
    %429 = vector.shape_cast %428 : vector<1x64x64xbf16> to vector<64x64xbf16>
    %cst_413 = arith.constant dense<0.000000e+00> : vector<1x64xf32>
    %430 = tpu.matmul %427, %429, %cst_413 {dimension_numbers = #tpu.dot_dimension_numbers<[1], [0], [0], [1], [0, 0, 1, 1], [], []>} : vector<1x64xbf16>, vector<64x64xbf16>, vector<1x64xf32> -> vector<1x64xf32>
    %431 = arith.addf %425, %430 : vector<1x64xf32>
    %432 = vector.extract_strided_slice %292 {offsets = [23, 0], sizes = [1, 64], strides = [1, 1]} : vector<32x64xf32> to vector<1x64xf32>
    %433 = arith.truncf %432 : vector<1x64xf32> to vector<1x64xbf16>
    %c23 = arith.constant 23 : index
    %c0_414 = arith.constant 0 : index
    %c0_415 = arith.constant 0 : index
    %434 = vector.load %arg10[%c23, %c0_414, %c0_415] : memref<32x64x64xbf16, #tpu.memory_space<vmem>>, vector<1x64x64xbf16>
    %435 = vector.shape_cast %434 : vector<1x64x64xbf16> to vector<64x64xbf16>
    %cst_416 = arith.constant dense<0.000000e+00> : vector<1x64xf32>
    %436 = tpu.matmul %433, %435, %cst_416 {dimension_numbers = #tpu.dot_dimension_numbers<[1], [0], [0], [1], [0, 0, 1, 1], [], []>} : vector<1x64xbf16>, vector<64x64xbf16>, vector<1x64xf32> -> vector<1x64xf32>
    %437 = arith.addf %431, %436 : vector<1x64xf32>
    %438 = vector.extract_strided_slice %292 {offsets = [24, 0], sizes = [1, 64], strides = [1, 1]} : vector<32x64xf32> to vector<1x64xf32>
    %439 = arith.truncf %438 : vector<1x64xf32> to vector<1x64xbf16>
    %c24 = arith.constant 24 : index
    %c0_417 = arith.constant 0 : index
    %c0_418 = arith.constant 0 : index
    %440 = vector.load %arg10[%c24, %c0_417, %c0_418] : memref<32x64x64xbf16, #tpu.memory_space<vmem>>, vector<1x64x64xbf16>
    %441 = vector.shape_cast %440 : vector<1x64x64xbf16> to vector<64x64xbf16>
    %cst_419 = arith.constant dense<0.000000e+00> : vector<1x64xf32>
    %442 = tpu.matmul %439, %441, %cst_419 {dimension_numbers = #tpu.dot_dimension_numbers<[1], [0], [0], [1], [0, 0, 1, 1], [], []>} : vector<1x64xbf16>, vector<64x64xbf16>, vector<1x64xf32> -> vector<1x64xf32>
    %443 = arith.addf %437, %442 : vector<1x64xf32>
    %444 = vector.extract_strided_slice %292 {offsets = [25, 0], sizes = [1, 64], strides = [1, 1]} : vector<32x64xf32> to vector<1x64xf32>
    %445 = arith.truncf %444 : vector<1x64xf32> to vector<1x64xbf16>
    %c25 = arith.constant 25 : index
    %c0_420 = arith.constant 0 : index
    %c0_421 = arith.constant 0 : index
    %446 = vector.load %arg10[%c25, %c0_420, %c0_421] : memref<32x64x64xbf16, #tpu.memory_space<vmem>>, vector<1x64x64xbf16>
    %447 = vector.shape_cast %446 : vector<1x64x64xbf16> to vector<64x64xbf16>
    %cst_422 = arith.constant dense<0.000000e+00> : vector<1x64xf32>
    %448 = tpu.matmul %445, %447, %cst_422 {dimension_numbers = #tpu.dot_dimension_numbers<[1], [0], [0], [1], [0, 0, 1, 1], [], []>} : vector<1x64xbf16>, vector<64x64xbf16>, vector<1x64xf32> -> vector<1x64xf32>
    %449 = arith.addf %443, %448 : vector<1x64xf32>
    %450 = vector.extract_strided_slice %292 {offsets = [26, 0], sizes = [1, 64], strides = [1, 1]} : vector<32x64xf32> to vector<1x64xf32>
    %451 = arith.truncf %450 : vector<1x64xf32> to vector<1x64xbf16>
    %c26 = arith.constant 26 : index
    %c0_423 = arith.constant 0 : index
    %c0_424 = arith.constant 0 : index
    %452 = vector.load %arg10[%c26, %c0_423, %c0_424] : memref<32x64x64xbf16, #tpu.memory_space<vmem>>, vector<1x64x64xbf16>
    %453 = vector.shape_cast %452 : vector<1x64x64xbf16> to vector<64x64xbf16>
    %cst_425 = arith.constant dense<0.000000e+00> : vector<1x64xf32>
    %454 = tpu.matmul %451, %453, %cst_425 {dimension_numbers = #tpu.dot_dimension_numbers<[1], [0], [0], [1], [0, 0, 1, 1], [], []>} : vector<1x64xbf16>, vector<64x64xbf16>, vector<1x64xf32> -> vector<1x64xf32>
    %455 = arith.addf %449, %454 : vector<1x64xf32>
    %456 = vector.extract_strided_slice %292 {offsets = [27, 0], sizes = [1, 64], strides = [1, 1]} : vector<32x64xf32> to vector<1x64xf32>
    %457 = arith.truncf %456 : vector<1x64xf32> to vector<1x64xbf16>
    %c27 = arith.constant 27 : index
    %c0_426 = arith.constant 0 : index
    %c0_427 = arith.constant 0 : index
    %458 = vector.load %arg10[%c27, %c0_426, %c0_427] : memref<32x64x64xbf16, #tpu.memory_space<vmem>>, vector<1x64x64xbf16>
    %459 = vector.shape_cast %458 : vector<1x64x64xbf16> to vector<64x64xbf16>
    %cst_428 = arith.constant dense<0.000000e+00> : vector<1x64xf32>
    %460 = tpu.matmul %457, %459, %cst_428 {dimension_numbers = #tpu.dot_dimension_numbers<[1], [0], [0], [1], [0, 0, 1, 1], [], []>} : vector<1x64xbf16>, vector<64x64xbf16>, vector<1x64xf32> -> vector<1x64xf32>
    %461 = arith.addf %455, %460 : vector<1x64xf32>
    %462 = vector.extract_strided_slice %292 {offsets = [28, 0], sizes = [1, 64], strides = [1, 1]} : vector<32x64xf32> to vector<1x64xf32>
    %463 = arith.truncf %462 : vector<1x64xf32> to vector<1x64xbf16>
    %c28 = arith.constant 28 : index
    %c0_429 = arith.constant 0 : index
    %c0_430 = arith.constant 0 : index
    %464 = vector.load %arg10[%c28, %c0_429, %c0_430] : memref<32x64x64xbf16, #tpu.memory_space<vmem>>, vector<1x64x64xbf16>
    %465 = vector.shape_cast %464 : vector<1x64x64xbf16> to vector<64x64xbf16>
    %cst_431 = arith.constant dense<0.000000e+00> : vector<1x64xf32>
    %466 = tpu.matmul %463, %465, %cst_431 {dimension_numbers = #tpu.dot_dimension_numbers<[1], [0], [0], [1], [0, 0, 1, 1], [], []>} : vector<1x64xbf16>, vector<64x64xbf16>, vector<1x64xf32> -> vector<1x64xf32>
    %467 = arith.addf %461, %466 : vector<1x64xf32>
    %468 = vector.extract_strided_slice %292 {offsets = [29, 0], sizes = [1, 64], strides = [1, 1]} : vector<32x64xf32> to vector<1x64xf32>
    %469 = arith.truncf %468 : vector<1x64xf32> to vector<1x64xbf16>
    %c29 = arith.constant 29 : index
    %c0_432 = arith.constant 0 : index
    %c0_433 = arith.constant 0 : index
    %470 = vector.load %arg10[%c29, %c0_432, %c0_433] : memref<32x64x64xbf16, #tpu.memory_space<vmem>>, vector<1x64x64xbf16>
    %471 = vector.shape_cast %470 : vector<1x64x64xbf16> to vector<64x64xbf16>
    %cst_434 = arith.constant dense<0.000000e+00> : vector<1x64xf32>
    %472 = tpu.matmul %469, %471, %cst_434 {dimension_numbers = #tpu.dot_dimension_numbers<[1], [0], [0], [1], [0, 0, 1, 1], [], []>} : vector<1x64xbf16>, vector<64x64xbf16>, vector<1x64xf32> -> vector<1x64xf32>
    %473 = arith.addf %467, %472 : vector<1x64xf32>
    %474 = vector.extract_strided_slice %292 {offsets = [30, 0], sizes = [1, 64], strides = [1, 1]} : vector<32x64xf32> to vector<1x64xf32>
    %475 = arith.truncf %474 : vector<1x64xf32> to vector<1x64xbf16>
    %c30 = arith.constant 30 : index
    %c0_435 = arith.constant 0 : index
    %c0_436 = arith.constant 0 : index
    %476 = vector.load %arg10[%c30, %c0_435, %c0_436] : memref<32x64x64xbf16, #tpu.memory_space<vmem>>, vector<1x64x64xbf16>
    %477 = vector.shape_cast %476 : vector<1x64x64xbf16> to vector<64x64xbf16>
    %cst_437 = arith.constant dense<0.000000e+00> : vector<1x64xf32>
    %478 = tpu.matmul %475, %477, %cst_437 {dimension_numbers = #tpu.dot_dimension_numbers<[1], [0], [0], [1], [0, 0, 1, 1], [], []>} : vector<1x64xbf16>, vector<64x64xbf16>, vector<1x64xf32> -> vector<1x64xf32>
    %479 = arith.addf %473, %478 : vector<1x64xf32>
    %480 = vector.extract_strided_slice %292 {offsets = [31, 0], sizes = [1, 64], strides = [1, 1]} : vector<32x64xf32> to vector<1x64xf32>
    %481 = arith.truncf %480 : vector<1x64xf32> to vector<1x64xbf16>
    %c31 = arith.constant 31 : index
    %c0_438 = arith.constant 0 : index
    %c0_439 = arith.constant 0 : index
    %482 = vector.load %arg10[%c31, %c0_438, %c0_439] : memref<32x64x64xbf16, #tpu.memory_space<vmem>>, vector<1x64x64xbf16>
    %483 = vector.shape_cast %482 : vector<1x64x64xbf16> to vector<64x64xbf16>
    %cst_440 = arith.constant dense<0.000000e+00> : vector<1x64xf32>
    %484 = tpu.matmul %481, %483, %cst_440 {dimension_numbers = #tpu.dot_dimension_numbers<[1], [0], [0], [1], [0, 0, 1, 1], [], []>} : vector<1x64xbf16>, vector<64x64xbf16>, vector<1x64xf32> -> vector<1x64xf32>
    %485 = arith.addf %479, %484 : vector<1x64xf32>
    %486 = vector.shape_cast %485 : vector<1x64xf32> to vector<1x1x64xf32>
    %c0_441 = arith.constant 0 : index
    %c0_442 = arith.constant 0 : index
    %c0_443 = arith.constant 0 : index
    %487 = vector.load %arg14[%c0_441, %c0_442, %c0_443] : memref<1x1x64xf32, #tpu.memory_space<vmem>>, vector<1x1x64xf32>
    tpu.vector_store %arg14[%c0_441, %c0_442, %c0_443], %486 {strides = array<i32>} : memref<1x1x64xf32, #tpu.memory_space<vmem>>, vector<1x1x64xf32>,
    %c0_444 = arith.constant 0 : index
    %c0_445 = arith.constant 0 : index
    %488 = vector.load %arg12[%c0_444, %c0_445] : memref<64x13xf32, #tpu.memory_space<vmem>>, vector<64x13xf32>
    %489 = arith.mulf %291, %488 : vector<64x13xf32>
    %490 = vector.shape_cast %489 : vector<64x13xf32> to vector<1x64x13xf32>
    %cst_446 = arith.constant dense<0.000000e+00> : vector<1xf32>
    %491 = vector.multi_reduction <add>, %490, %cst_446 [1, 2] : vector<1x64x13xf32> to vector<1xf32>
    %492 = vector.shape_cast %491 : vector<1xf32> to vector<1x1x1xf32>
    %493 = vector.extract %492[0, 0, 0] : f32 from vector<1x1x1xf32>
    %c0_447 = arith.constant 0 : index
    %c0_448 = arith.constant 0 : index
    %494 = vector.load %arg13[%c0_447, %c0_448] : memref<1x1xf32, #tpu.memory_space<vmem>>, vector<1x1xf32>
    %495 = vector.broadcast %493 : f32 to vector<1x1xf32>
    %496 = arith.addf %495, %494 : vector<1x1xf32>
    %497 = math.tanh %496 : vector<1x1xf32>
    %498 = vector.shape_cast %497 : vector<1x1xf32> to vector<1x1x1xf32>
    %c0_449 = arith.constant 0 : index
    %c0_450 = arith.constant 0 : index
    %c0_451 = arith.constant 0 : index
    %499 = vector.load %arg15[%c0_449, %c0_450, %c0_451] : memref<1x1x1xf32, #tpu.memory_space<vmem>>, vector<1x1x1xf32>
    tpu.vector_store %arg15[%c0_449, %c0_450, %c0_451], %498 {strides = array<i32>} : memref<1x1x1xf32, #tpu.memory_space<vmem>>, vector<1x1x1xf32>,
    return
  }
  func.func @transform_0(%arg0: i32) -> (i32, i32, i32, i32) {
    %c0_i32 = arith.constant 0 : i32
    %c0_i32_0 = arith.constant 0 : i32
    %c0_i32_1 = arith.constant 0 : i32
    %c0_i32_2 = arith.constant 0 : i32
    return %arg0, %c0_i32, %c0_i32_0, %c0_i32_1 : i32, i32, i32, i32
  }
  func.func @transform_1(%arg0: i32) -> (i32, i32) {
    %c0_i32 = arith.constant 0 : i32
    %c0_i32_0 = arith.constant 0 : i32
    %c0_i32_1 = arith.constant 0 : i32
    return %c0_i32, %c0_i32_0 : i32, i32
  }
  func.func @transform_2(%arg0: i32) -> (i32, i32) {
    %c0_i32 = arith.constant 0 : i32
    %c0_i32_0 = arith.constant 0 : i32
    %c0_i32_1 = arith.constant 0 : i32
    return %c0_i32, %c0_i32_0 : i32, i32
  }
  func.func @transform_3(%arg0: i32) -> (i32, i32, i32) {
    %c0_i32 = arith.constant 0 : i32
    %c0_i32_0 = arith.constant 0 : i32
    %c0_i32_1 = arith.constant 0 : i32
    %c0_i32_2 = arith.constant 0 : i32
    return %c0_i32, %c0_i32_0, %c0_i32_1 : i32, i32, i32
  }
  func.func @transform_4(%arg0: i32) -> (i32, i32, i32) {
    %c0_i32 = arith.constant 0 : i32
    %c0_i32_0 = arith.constant 0 : i32
    %c0_i32_1 = arith.constant 0 : i32
    %c0_i32_2 = arith.constant 0 : i32
    return %c0_i32, %c0_i32_0, %c0_i32_1 : i32, i32, i32
  }
  func.func @transform_5(%arg0: i32) -> (i32, i32, i32) {
    %c0_i32 = arith.constant 0 : i32
    %c0_i32_0 = arith.constant 0 : i32
    %c0_i32_1 = arith.constant 0 : i32
    %c0_i32_2 = arith.constant 0 : i32
    return %c0_i32, %c0_i32_0, %c0_i32_1 : i32, i32, i32
  }
  func.func @transform_6(%arg0: i32) -> (i32, i32, i32) {
    %c0_i32 = arith.constant 0 : i32
    %c0_i32_0 = arith.constant 0 : i32
    %c0_i32_1 = arith.constant 0 : i32
    %c0_i32_2 = arith.constant 0 : i32
    return %c0_i32, %c0_i32_0, %c0_i32_1 : i32, i32, i32
  }
  func.func @transform_7(%arg0: i32) -> (i32, i32) {
    %c0_i32 = arith.constant 0 : i32
    %c0_i32_0 = arith.constant 0 : i32
    %c0_i32_1 = arith.constant 0 : i32
    return %c0_i32, %c0_i32_0 : i32, i32
  }
  func.func @transform_8(%arg0: i32) -> (i32, i32) {
    %c0_i32 = arith.constant 0 : i32
    %c0_i32_0 = arith.constant 0 : i32
    %c0_i32_1 = arith.constant 0 : i32
    return %c0_i32, %c0_i32_0 : i32, i32
  }
  func.func @transform_9(%arg0: i32) -> (i32, i32, i32) {
    %c0_i32 = arith.constant 0 : i32
    %c0_i32_0 = arith.constant 0 : i32
    %c0_i32_1 = arith.constant 0 : i32
    %c0_i32_2 = arith.constant 0 : i32
    return %c0_i32, %c0_i32_0, %c0_i32_1 : i32, i32, i32
  }
  func.func @transform_10(%arg0: i32) -> (i32, i32) {
    %c0_i32 = arith.constant 0 : i32
    %c0_i32_0 = arith.constant 0 : i32
    %c0_i32_1 = arith.constant 0 : i32
    return %c0_i32, %c0_i32_0 : i32, i32
  }
  func.func @transform_11(%arg0: i32) -> (i32, i32) {
    %c0_i32 = arith.constant 0 : i32
    %c0_i32_0 = arith.constant 0 : i32
    %c0_i32_1 = arith.constant 0 : i32
    return %c0_i32, %c0_i32_0 : i32, i32
  }
  func.func @transform_12(%arg0: i32) -> (i32, i32) {
    %c0_i32 = arith.constant 0 : i32
    %c0_i32_0 = arith.constant 0 : i32
    %c0_i32_1 = arith.constant 0 : i32
    return %c0_i32, %c0_i32_0 : i32, i32
  }
  func.func @transform_13(%arg0: i32) -> (i32, i32, i32) {
    %c0_i32 = arith.constant 0 : i32
    %c0_i32_0 = arith.constant 0 : i32
    %c0_i32_1 = arith.constant 0 : i32
    return %arg0, %c0_i32, %c0_i32_0 : i32, i32, i32
  }
  func.func @transform_14(%arg0: i32) -> (i32, i32, i32) {
    %c0_i32 = arith.constant 0 : i32
    %c0_i32_0 = arith.constant 0 : i32
    %c0_i32_1 = arith.constant 0 : i32
    return %arg0, %c0_i32, %c0_i32_0 : i32, i32, i32
  }
}

</mosaic_0001>

<llo_original>
// kernel: _lambda_.1
$region0: #{_lambda_.1}
  #allocation0 [shape = 'u32[]', space=smem, size = 0x4, offset = 0x4, fixed_abs, tag = 'smem constant byte address 0x4 - core index']
  #allocation1 [shape = 'u32[72,128]{1,0:T(1,128)}', space=vmem, size = 0x9000, scoped, tag = 'internal scratch']
  #allocation2 [shape = 'f32[10,10,32]{2,1,0:T(8,128)}', space=vmem, size = 0x14000, scoped, tag = 'scratch operand']
  #allocation3 [shape = 'bf16[64,288]{1,0:T(8,128)(2,1)}', space=vmem, size = 0xc000, scoped, tag = 'scratch operand']
  #allocation4 [shape = 'f32[1,1]{1,0:T(1,128)S(1)}', space=vmem, size = 0x200, scoped, tag = 'scoped memory for _lambda_.1']
  %s0 = inlined_call_operand.vmem [shape: f32[2,8,8,32], index: 0, kind: input, shape index: {}]
  %s1 = inlined_call_operand.hbm [shape: bf16[288,32], index: 1, kind: input, shape index: {}]
  %s2 = inlined_call_operand.vmem [shape: f32[1,32], index: 2, kind: input, shape index: {}]
  %s3 = inlined_call_operand.hbm [shape: bf16[2,288,32], index: 3, kind: input, shape index: {}]
  %s4 = inlined_call_operand.vmem [shape: f32[2,1,32], index: 4, kind: input, shape index: {}]
  %s5 = inlined_call_operand.hbm [shape: bf16[2,288,32], index: 5, kind: input, shape index: {}]
  %s6 = inlined_call_operand.vmem [shape: f32[2,1,32], index: 6, kind: input, shape index: {}]
  %s7 = inlined_call_operand.vmem [shape: bf16[288,45], index: 7, kind: input, shape index: {}]
  %s8 = inlined_call_operand.vmem [shape: f32[1,45], index: 8, kind: input, shape index: {}]
  %s9 = inlined_call_operand.hbm [shape: bf16[32,64,64], index: 9, kind: input, shape index: {}]
  %s10 = inlined_call_operand.vmem [shape: f32[1,64], index: 10, kind: input, shape index: {}]
  %s11 = inlined_call_operand.vmem [shape: f32[64,13], index: 11, kind: input, shape index: {}]
  %s12 = inlined_call_operand.<no memory space> [shape: f32[1,1], index: 12, kind: input, shape index: {}]
  %s13 = inlined_call_operand.hbm [shape: f32[2,1,64], index: 13, kind: output, shape index: {0}]
  %s14 = inlined_call_operand.vmem [shape: f32[2,1,1], index: 14, kind: output, shape index: {1}]
  %15 = xla_tuple %s13, %s14
  %s16 = sld [smem:[#allocation0]]
  $region109: #{_lambda_.1} parent=0
    _
  %s18 = ssub.s32 1, %s16
  %s19 = scalar_select 0, %s18, %s16
  %v20 = vstv %s12
  %21 = vst [vmem:[#allocation4] sm:$0x1] %v20
  $region1: #{_lambda_.1} parent=0
    #allocation5 [shape = 'u8[73728]{0}', space=vmem, size = 0x12000, scoped, tag = 'input window, operand 1, single buffered']
    #allocation6 [shape = 's32[2]{0}', space=sflag, size = 0x8, scoped, tag = 'scoped memory for _lambda_.1']
    #allocation7 [shape = 's32[2]{0}', space=sflag, size = 0x8, scoped, tag = 'scoped memory for _lambda_.1']
    #allocation8 [shape = 'u8[147456]{0}', space=vmem, size = 0x24000, scoped, tag = 'input window, operand 3, single buffered']
    #allocation9 [shape = 's32[1]{0}', space=sflag, size = 0x4, scoped, tag = 'scoped memory for _lambda_.1']
    #allocation10 [shape = 'u8[147456]{0}', space=vmem, size = 0x24000, scoped, tag = 'input window, operand 5, single buffered']
    #allocation11 [shape = 'u8[524288]{0}', space=vmem, size = 0x80000, scoped, tag = 'input window, operand 9, single buffered']
    #allocation12 [shape = 's32[1]{0}', space=sflag, size = 0x4, scoped, tag = 'scoped memory for _lambda_.1']
    #allocation13 [shape = 'u8[1024]{0}', space=vmem, size = 0x400, scoped, tag = 'output window, operand 0']
    %22 = vsyncpa [#allocation6], 0
    %23 = vsyncpa [#allocation9], 0
    %24 = vsyncpa [#allocation12], 0
    %25 = vsyncpa [#allocation7], 0
    %s26 = scalar_lea.sflag [#allocation7], 1
    %27 = vsyncpa %s26, 0
    loop: start=0, step=1, limit=4
    $region2: #{_lambda_.1} parent=1 // loop_pre_header
      _
    $region3: #{_lambda_.1} parent=1 // loop_header
      %s29 = sphi 0, %s33
      %p30 = scmp.ge.s32.totalorder %s29, 4
      %s39 = sphi 0, %s41
      %s42 = sphi 0, %s39
      %s43 = sphi 0, %s42
      %s59 = sphi 0, %s43
      %s63 = sphi 0, %s63
      %s65 = sphi 0, %s63
      %s66 = sphi 0, %s65
      %s80 = sphi 0, %s66
      %s84 = sphi 0, %s84
      %s86 = sphi 0, %s84
      %s87 = sphi 0, %s86
      %s101 = sphi 0, %s87
      %s105 = sphi 0, %s105
      %s107 = sphi 0, %s105
      %s108 = sphi 0, %s107
      %s122 = sphi 0, %s108
      %s126 = sphi 0, %s126
      %s128 = sphi 0, %s126
      %s129 = sphi 0, %s128
      %s143 = sphi 0, %s129
      %s147 = sphi 0, %s147
      %s149 = sphi 0, %s147
      %s150 = sphi 0, %s149
      %s164 = sphi 0, %s150
      %s168 = sphi 0, %s168
      %s170 = sphi 0, %s168
      %s171 = sphi 0, %s170
      %s185 = sphi 0, %s171
      %s189 = sphi 0, %s189
      %s191 = sphi 0, %s189
      %s192 = sphi 0, %s191
      %s206 = sphi 0, %s192
      %s210 = sphi 0, %s210
      %s212 = sphi 0, %s210
      %s213 = sphi 0, %s212
      %s227 = sphi 0, %s213
      %s231 = sphi 0, %s231
      %s233 = sphi 0, %s231
      %s234 = sphi 0, %s233
      %s248 = sphi 0, %s234
      %s252 = sphi 0, %s252
      %s254 = sphi 0, %s252
      %s255 = sphi 0, %s254
      %s269 = sphi 0, %s255
      %s273 = sphi 0, %s273
      %s275 = sphi 0, %s273
      %s276 = sphi 0, %s275
      %s290 = sphi 0, %s276
      %s294 = sphi 0, %s294
      %s296 = sphi 0, %s294
      %s297 = sphi 0, %s296
      %s311 = sphi 0, %s297
      %s317 = sphi 0, %s319
      %s320 = sphi 0, %s317
      %s321 = sphi 0, %s320
      %s337 = sphi 0, %s321
      %s343 = sphi 0, %s345
      %s346 = sphi 0, %s343
      %s347 = sphi 0, %s346
      %s363 = sphi 0, %s347
    $region4: #{_lambda_.1} parent=1 // loop_header_branch
      %32 = sbr.rel (%p30) target = $region8
    $region5: #{_lambda_.1} parent=1 // loop_body
      %s34 = ssub.s32 %s29, 1
      %s35 = ssub.s32 %s29, 2
      %s36 = sadd.s32 %s29, 1
      %s37 = ssub.s32 %s29, %s36
      %p38 = scmp.eq.s32.totalorder %s37, 0
      %s40 = sadd.s32 %s39, 1
      %s41 = scalar_select %p38, %s39, %s40
      %p44 = pneg %p38
      %p45 = scmp.eq.s32.totalorder %s29, 1
      %p46 = por %p44, %p45
      %p47 = scmp.ne.s32.totalorder %s39, %s42
      %p48 = scmp.eq.s32.totalorder %s29, 0
      %p49 = por %p47, %p48
      %p50 = scmp.ne.s32.totalorder %s39, %s42
      %p51 = scmp.eq.s32.totalorder %s34, 1
      %p52 = por %p50, %p51
      %p53 = scmp.ne.s32.totalorder %s42, %s43
      %p54 = scmp.eq.s32.totalorder %s34, 0
      %p55 = por %p53, %p54
      %p56 = scmp.ne.s32.totalorder %s42, %s43
      %p57 = scmp.eq.s32.totalorder %s35, 1
      %p58 = por %p56, %p57
      %p60 = scmp.ne.s32.totalorder %s43, %s59
      %p61 = scmp.eq.s32.totalorder %s35, 0
      %p62 = por %p60, %p61
      %s64 = sadd.s32 %s63, 1
      %p67 = scmp.eq.s32.totalorder %s29, 1
      %p68 = scmp.ne.s32.totalorder %s63, %s65
      %p69 = scmp.eq.s32.totalorder %s29, 0
      %p70 = por %p68, %p69
      %p71 = scmp.ne.s32.totalorder %s63, %s65
      %p72 = scmp.eq.s32.totalorder %s34, 1
      %p73 = por %p71, %p72
      %p74 = scmp.ne.s32.totalorder %s65, %s66
      %p75 = scmp.eq.s32.totalorder %s34, 0
      %p76 = por %p74, %p75
      %p77 = scmp.ne.s32.totalorder %s65, %s66
      %p78 = scmp.eq.s32.totalorder %s35, 1
      %p79 = por %p77, %p78
      %p81 = scmp.ne.s32.totalorder %s66, %s80
      %p82 = scmp.eq.s32.totalorder %s35, 0
      %p83 = por %p81, %p82
      %s85 = sadd.s32 %s84, 1
      %p88 = scmp.eq.s32.totalorder %s29, 1
      %p89 = scmp.ne.s32.totalorder %s84, %s86
      %p90 = scmp.eq.s32.totalorder %s29, 0
      %p91 = por %p89, %p90
      %p92 = scmp.ne.s32.totalorder %s84, %s86
      %p93 = scmp.eq.s32.totalorder %s34, 1
      %p94 = por %p92, %p93
      %p95 = scmp.ne.s32.totalorder %s86, %s87
      %p96 = scmp.eq.s32.totalorder %s34, 0
      %p97 = por %p95, %p96
      %p98 = scmp.ne.s32.totalorder %s86, %s87
      %p99 = scmp.eq.s32.totalorder %s35, 1
      %p100 = por %p98, %p99
      %p102 = scmp.ne.s32.totalorder %s87, %s101
      %p103 = scmp.eq.s32.totalorder %s35, 0
      %p104 = por %p102, %p103
      %s106 = sadd.s32 %s105, 1
      %p109 = scmp.eq.s32.totalorder %s29, 1
      %p110 = scmp.ne.s32.totalorder %s105, %s107
      %p111 = scmp.eq.s32.totalorder %s29, 0
      %p112 = por %p110, %p111
      %p113 = scmp.ne.s32.totalorder %s105, %s107
      %p114 = scmp.eq.s32.totalorder %s34, 1
      %p115 = por %p113, %p114
      %p116 = scmp.ne.s32.totalorder %s107, %s108
      %p117 = scmp.eq.s32.totalorder %s34, 0
      %p118 = por %p116, %p117
      %p119 = scmp.ne.s32.totalorder %s107, %s108
      %p120 = scmp.eq.s32.totalorder %s35, 1
      %p121 = por %p119, %p120
      %p123 = scmp.ne.s32.totalorder %s108, %s122
      %p124 = scmp.eq.s32.totalorder %s35, 0
      %p125 = por %p123, %p124
      %s127 = sadd.s32 %s126, 1
      %p130 = scmp.eq.s32.totalorder %s29, 1
      %p131 = scmp.ne.s32.totalorder %s126, %s128
      %p132 = scmp.eq.s32.totalorder %s29, 0
      %p133 = por %p131, %p132
      %p134 = scmp.ne.s32.totalorder %s126, %s128
      %p135 = scmp.eq.s32.totalorder %s34, 1
      %p136 = por %p134, %p135
      %p137 = scmp.ne.s32.totalorder %s128, %s129
      %p138 = scmp.eq.s32.totalorder %s34, 0
      %p139 = por %p137, %p138
      %p140 = scmp.ne.s32.totalorder %s128, %s129
      %p141 = scmp.eq.s32.totalorder %s35, 1
      %p142 = por %p140, %p141
      %p144 = scmp.ne.s32.totalorder %s129, %s143
      %p145 = scmp.eq.s32.totalorder %s35, 0
      %p146 = por %p144, %p145
      %s148 = sadd.s32 %s147, 1
      %p151 = scmp.eq.s32.totalorder %s29, 1
      %p152 = scmp.ne.s32.totalorder %s147, %s149
      %p153 = scmp.eq.s32.totalorder %s29, 0
      %p154 = por %p152, %p153
      %p155 = scmp.ne.s32.totalorder %s147, %s149
      %p156 = scmp.eq.s32.totalorder %s34, 1
      %p157 = por %p155, %p156
      %p158 = scmp.ne.s32.totalorder %s149, %s150
      %p159 = scmp.eq.s32.totalorder %s34, 0
      %p160 = por %p158, %p159
      %p161 = scmp.ne.s32.totalorder %s149, %s150
      %p162 = scmp.eq.s32.totalorder %s35, 1
      %p163 = por %p161, %p162
      %p165 = scmp.ne.s32.totalorder %s150, %s164
      %p166 = scmp.eq.s32.totalorder %s35, 0
      %p167 = por %p165, %p166
      %s169 = sadd.s32 %s168, 1
      %p172 = scmp.eq.s32.totalorder %s29, 1
      %p173 = scmp.ne.s32.totalorder %s168, %s170
      %p174 = scmp.eq.s32.totalorder %s29, 0
      %p175 = por %p173, %p174
      %p176 = scmp.ne.s32.totalorder %s168, %s170
      %p177 = scmp.eq.s32.totalorder %s34, 1
      %p178 = por %p176, %p177
      %p179 = scmp.ne.s32.totalorder %s170, %s171
      %p180 = scmp.eq.s32.totalorder %s34, 0
      %p181 = por %p179, %p180
      %p182 = scmp.ne.s32.totalorder %s170, %s171
      %p183 = scmp.eq.s32.totalorder %s35, 1
      %p184 = por %p182, %p183
      %p186 = scmp.ne.s32.totalorder %s171, %s185
      %p187 = scmp.eq.s32.totalorder %s35, 0
      %p188 = por %p186, %p187
      %s190 = sadd.s32 %s189, 1
      %p193 = scmp.eq.s32.totalorder %s29, 1
      %p194 = scmp.ne.s32.totalorder %s189, %s191
      %p195 = scmp.eq.s32.totalorder %s29, 0
      %p196 = por %p194, %p195
      %p197 = scmp.ne.s32.totalorder %s189, %s191
      %p198 = scmp.eq.s32.totalorder %s34, 1
      %p199 = por %p197, %p198
      %p200 = scmp.ne.s32.totalorder %s191, %s192
      %p201 = scmp.eq.s32.totalorder %s34, 0
      %p202 = por %p200, %p201
      %p203 = scmp.ne.s32.totalorder %s191, %s192
      %p204 = scmp.eq.s32.totalorder %s35, 1
      %p205 = por %p203, %p204
      %p207 = scmp.ne.s32.totalorder %s192, %s206
      %p208 = scmp.eq.s32.totalorder %s35, 0
      %p209 = por %p207, %p208
      %s211 = sadd.s32 %s210, 1
      %p214 = scmp.eq.s32.totalorder %s29, 1
      %p215 = scmp.ne.s32.totalorder %s210, %s212
      %p216 = scmp.eq.s32.totalorder %s29, 0
      %p217 = por %p215, %p216
      %p218 = scmp.ne.s32.totalorder %s210, %s212
      %p219 = scmp.eq.s32.totalorder %s34, 1
      %p220 = por %p218, %p219
      %p221 = scmp.ne.s32.totalorder %s212, %s213
      %p222 = scmp.eq.s32.totalorder %s34, 0
      %p223 = por %p221, %p222
      %p224 = scmp.ne.s32.totalorder %s212, %s213
      %p225 = scmp.eq.s32.totalorder %s35, 1
      %p226 = por %p224, %p225
      %p228 = scmp.ne.s32.totalorder %s213, %s227
      %p229 = scmp.eq.s32.totalorder %s35, 0
      %p230 = por %p228, %p229
      %s232 = sadd.s32 %s231, 1
      %p235 = scmp.eq.s32.totalorder %s29, 1
      %p236 = scmp.ne.s32.totalorder %s231, %s233
      %p237 = scmp.eq.s32.totalorder %s29, 0
      %p238 = por %p236, %p237
      %p239 = scmp.ne.s32.totalorder %s231, %s233
      %p240 = scmp.eq.s32.totalorder %s34, 1
      %p241 = por %p239, %p240
      %p242 = scmp.ne.s32.totalorder %s233, %s234
      %p243 = scmp.eq.s32.totalorder %s34, 0
      %p244 = por %p242, %p243
      %p245 = scmp.ne.s32.totalorder %s233, %s234
      %p246 = scmp.eq.s32.totalorder %s35, 1
      %p247 = por %p245, %p246
      %p249 = scmp.ne.s32.totalorder %s234, %s248
      %p250 = scmp.eq.s32.totalorder %s35, 0
      %p251 = por %p249, %p250
      %s253 = sadd.s32 %s252, 1
      %p256 = scmp.eq.s32.totalorder %s29, 1
      %p257 = scmp.ne.s32.totalorder %s252, %s254
      %p258 = scmp.eq.s32.totalorder %s29, 0
      %p259 = por %p257, %p258
      %p260 = scmp.ne.s32.totalorder %s252, %s254
      %p261 = scmp.eq.s32.totalorder %s34, 1
      %p262 = por %p260, %p261
      %p263 = scmp.ne.s32.totalorder %s254, %s255
      %p264 = scmp.eq.s32.totalorder %s34, 0
      %p265 = por %p263, %p264
      %p266 = scmp.ne.s32.totalorder %s254, %s255
      %p267 = scmp.eq.s32.totalorder %s35, 1
      %p268 = por %p266, %p267
      %p270 = scmp.ne.s32.totalorder %s255, %s269
      %p271 = scmp.eq.s32.totalorder %s35, 0
      %p272 = por %p270, %p271
      %s274 = sadd.s32 %s273, 1
      %p277 = scmp.eq.s32.totalorder %s29, 1
      %p278 = scmp.ne.s32.totalorder %s273, %s275
      %p279 = scmp.eq.s32.totalorder %s29, 0
      %p280 = por %p278, %p279
      %p281 = scmp.ne.s32.totalorder %s273, %s275
      %p282 = scmp.eq.s32.totalorder %s34, 1
      %p283 = por %p281, %p282
      %p284 = scmp.ne.s32.totalorder %s275, %s276
      %p285 = scmp.eq.s32.totalorder %s34, 0
      %p286 = por %p284, %p285
      %p287 = scmp.ne.s32.totalorder %s275, %s276
      %p288 = scmp.eq.s32.totalorder %s35, 1
      %p289 = por %p287, %p288
      %p291 = scmp.ne.s32.totalorder %s276, %s290
      %p292 = scmp.eq.s32.totalorder %s35, 0
      %p293 = por %p291, %p292
      %s295 = sadd.s32 %s294, 1
      %p298 = scmp.eq.s32.totalorder %s29, 1
      %p299 = scmp.ne.s32.totalorder %s294, %s296
      %p300 = scmp.eq.s32.totalorder %s29, 0
      %p301 = por %p299, %p300
      %p302 = scmp.ne.s32.totalorder %s294, %s296
      %p303 = scmp.eq.s32.totalorder %s34, 1
      %p304 = por %p302, %p303
      %p305 = scmp.ne.s32.totalorder %s296, %s297
      %p306 = scmp.eq.s32.totalorder %s34, 0
      %p307 = por %p305, %p306
      %p308 = scmp.ne.s32.totalorder %s296, %s297
      %p309 = scmp.eq.s32.totalorder %s35, 1
      %p310 = por %p308, %p309
      %p312 = scmp.ne.s32.totalorder %s297, %s311
      %p313 = scmp.eq.s32.totalorder %s35, 0
      %p314 = por %p312, %p313
      %s315 = ssub.s32 %s29, %s36
      %p316 = scmp.eq.s32.totalorder %s315, 0
      %s318 = sadd.s32 %s317, 1
      %s319 = scalar_select %p316, %s317, %s318
      %p322 = pneg %p316
      %p323 = scmp.eq.s32.totalorder %s29, 1
      %p324 = por %p322, %p323
      %p325 = scmp.ne.s32.totalorder %s317, %s320
      %p326 = scmp.eq.s32.totalorder %s29, 0
      %p327 = por %p325, %p326
      %p328 = scmp.ne.s32.totalorder %s317, %s320
      %p329 = scmp.eq.s32.totalorder %s34, 1
      %p330 = por %p328, %p329
      %p331 = scmp.ne.s32.totalorder %s320, %s321
      %p332 = scmp.eq.s32.totalorder %s34, 0
      %p333 = por %p331, %p332
      %p334 = scmp.ne.s32.totalorder %s320, %s321
      %p335 = scmp.eq.s32.totalorder %s35, 1
      %p336 = por %p334, %p335
      %p338 = scmp.ne.s32.totalorder %s321, %s337
      %p339 = scmp.eq.s32.totalorder %s35, 0
      %p340 = por %p338, %p339
      %s341 = ssub.s32 %s29, %s36
      %p342 = scmp.eq.s32.totalorder %s341, 0
      %s344 = sadd.s32 %s343, 1
      %s345 = scalar_select %p342, %s343, %s344
      %p348 = pneg %p342
      %p349 = scmp.eq.s32.totalorder %s29, 1
      %p350 = por %p348, %p349
      %p351 = scmp.ne.s32.totalorder %s343, %s346
      %p352 = scmp.eq.s32.totalorder %s29, 0
      %p353 = por %p351, %p352
      %p354 = scmp.ne.s32.totalorder %s343, %s346
      %p355 = scmp.eq.s32.totalorder %s34, 1
      %p356 = por %p354, %p355
      %p357 = scmp.ne.s32.totalorder %s346, %s347
      %p358 = scmp.eq.s32.totalorder %s34, 0
      %p359 = por %p357, %p358
      %p360 = scmp.ne.s32.totalorder %s346, %s347
      %p361 = scmp.eq.s32.totalorder %s35, 1
      %p362 = por %p360, %p361
      %p364 = scmp.ne.s32.totalorder %s347, %s363
      %p365 = scmp.eq.s32.totalorder %s35, 0
      %p366 = por %p364, %p365
      %p367 = scmp.le.s32.totalorder 1, %s29
      %p368 = scmp.lt.s32.totalorder %s29, 3
      %p369 = pnand %p367, %p368
      %p370 = pneg %p369
      // Predicated region
      $region9: #{_lambda_.1} parent=5 // pred_check
        _
      $region10: #{_lambda_.1} parent=5 // pred_check_branch
        %372 = sbr.rel (%p369) target = $region12
      $region11: #{_lambda_.1} parent=5 // pred_region
        %s373 = ssub.s32 %s29, 1
        // Predicated region
        $region13: #{_lambda_.1} parent=11 // pred_check
          %p374 = pneg %p76
        $region14: #{_lambda_.1} parent=11 // pred_check_branch
          %376 = sbr.rel (%p374) target = $region16
        $region15: #{_lambda_.1} parent=11 // pred_region
          %378 = vsyncadd [#allocation6], 0
          %s379 = sshll.u32 %s1, 4
          %s380 = int_to_ptr.hbm [resolvable:$true] %s379
          %s381 = sshll.u32 [#allocation5], 4
          %s382 = int_to_ptr.vmem [resolvable:$true] %s381
          %387 = dma.hbm_to_vmem [thread:$0]  %s380, 2304, %s382, [#allocation6], 64, 64, 4
        $region16: #{_lambda_.1} parent=11 // pred_fallthru
          _
        // Predicated region
        $region17: #{_lambda_.1} parent=11 // pred_check
          %p388 = pneg %p97
        $region18: #{_lambda_.1} parent=11 // pred_check_branch
          %390 = sbr.rel (%p388) target = $region20
        $region19: #{_lambda_.1} parent=11 // pred_region
          _
        $region20: #{_lambda_.1} parent=11 // pred_fallthru
          _
        // Predicated region
        $region21: #{_lambda_.1} parent=11 // pred_check
          %p391 = pneg %p118
        $region22: #{_lambda_.1} parent=11 // pred_check_branch
          %393 = sbr.rel (%p391) target = $region24
        $region23: #{_lambda_.1} parent=11 // pred_region
          %395 = vsyncadd [#allocation9], 0
          %s396 = sshll.u32 %s3, 4
          %s397 = int_to_ptr.hbm [resolvable:$true] %s396
          %s398 = sshll.u32 [#allocation8], 4
          %s399 = int_to_ptr.vmem [resolvable:$true] %s398
          %404 = dma.hbm_to_vmem [thread:$0]  %s397, 4608, %s399, [#allocation9], 64, 64, 4
        $region24: #{_lambda_.1} parent=11 // pred_fallthru
          _
        // Predicated region
        $region25: #{_lambda_.1} parent=11 // pred_check
          %p405 = pneg %p139
        $region26: #{_lambda_.1} parent=11 // pred_check_branch
          %407 = sbr.rel (%p405) target = $region28
        $region27: #{_lambda_.1} parent=11 // pred_region
          _
        $region28: #{_lambda_.1} parent=11 // pred_fallthru
          _
        // Predicated region
        $region29: #{_lambda_.1} parent=11 // pred_check
          %p408 = pneg %p160
        $region30: #{_lambda_.1} parent=11 // pred_check_branch
          %410 = sbr.rel (%p408) target = $region32
        $region31: #{_lambda_.1} parent=11 // pred_region
          %412 = vsyncadd [#allocation9], 0
          %s413 = sshll.u32 %s5, 4
          %s414 = int_to_ptr.hbm [resolvable:$true] %s413
          %s415 = sshll.u32 [#allocation10], 4
          %s416 = int_to_ptr.vmem [resolvable:$true] %s415
          %421 = dma.hbm_to_vmem [thread:$0]  %s414, 4608, %s416, [#allocation9], 64, 64, 4
        $region32: #{_lambda_.1} parent=11 // pred_fallthru
          _
        // Predicated region
        $region33: #{_lambda_.1} parent=11 // pred_check
          %p422 = pneg %p181
        $region34: #{_lambda_.1} parent=11 // pred_check_branch
          %424 = sbr.rel (%p422) target = $region36
        $region35: #{_lambda_.1} parent=11 // pred_region
          _
        $region36: #{_lambda_.1} parent=11 // pred_fallthru
          _
        // Predicated region
        $region37: #{_lambda_.1} parent=11 // pred_check
          %p425 = pneg %p202
        $region38: #{_lambda_.1} parent=11 // pred_check_branch
          %427 = sbr.rel (%p425) target = $region40
        $region39: #{_lambda_.1} parent=11 // pred_region
          _
        $region40: #{_lambda_.1} parent=11 // pred_fallthru
          _
        // Predicated region
        $region41: #{_lambda_.1} parent=11 // pred_check
          %p428 = pneg %p223
        $region42: #{_lambda_.1} parent=11 // pred_check_branch
          %430 = sbr.rel (%p428) target = $region44
        $region43: #{_lambda_.1} parent=11 // pred_region
          _
        $region44: #{_lambda_.1} parent=11 // pred_fallthru
          _
        // Predicated region
        $region45: #{_lambda_.1} parent=11 // pred_check
          %p431 = pneg %p244
        $region46: #{_lambda_.1} parent=11 // pred_check_branch
          %433 = sbr.rel (%p431) target = $region48
        $region47: #{_lambda_.1} parent=11 // pred_region
          %435 = vsyncadd [#allocation12], 0
          %s436 = sshll.u32 %s9, 4
          %s437 = int_to_ptr.hbm [resolvable:$true] %s436
          %s438 = sshll.u32 [#allocation11], 4
          %s439 = int_to_ptr.vmem [resolvable:$true] %s438
          %444 = dma.hbm_to_vmem [thread:$0]  %s437, 16384, %s439, [#allocation12], 64, 64, 4
        $region48: #{_lambda_.1} parent=11 // pred_fallthru
          _
        // Predicated region
        $region49: #{_lambda_.1} parent=11 // pred_check
          %p445 = pneg %p265
        $region50: #{_lambda_.1} parent=11 // pred_check_branch
          %447 = sbr.rel (%p445) target = $region52
        $region51: #{_lambda_.1} parent=11 // pred_region
          _
        $region52: #{_lambda_.1} parent=11 // pred_fallthru
          _
        // Predicated region
        $region53: #{_lambda_.1} parent=11 // pred_check
          %p448 = pneg %p286
        $region54: #{_lambda_.1} parent=11 // pred_check_branch
          %450 = sbr.rel (%p448) target = $region56
        $region55: #{_lambda_.1} parent=11 // pred_region
          _
        $region56: #{_lambda_.1} parent=11 // pred_fallthru
          _
        // Predicated region
        $region57: #{_lambda_.1} parent=11 // pred_check
          %p451 = pneg %p307
        $region58: #{_lambda_.1} parent=11 // pred_check_branch
          %453 = sbr.rel (%p451) target = $region60
        $region59: #{_lambda_.1} parent=11 // pred_region
          _
        $region60: #{_lambda_.1} parent=11 // pred_fallthru
          _
      $region12: #{_lambda_.1} parent=5 // pred_fallthru
        _
      %p454 = scmp.lt.s32.totalorder %s29, 2
      // Predicated region
      $region61: #{_lambda_.1} parent=5 // pred_check
        %p455 = pneg %p454
      $region62: #{_lambda_.1} parent=5 // pred_check_branch
        %457 = sbr.rel (%p455) target = $region64
      $region63: #{_lambda_.1} parent=5 // pred_region
        // Predicated region
        $region65: #{_lambda_.1} parent=63 // pred_check
          %p458 = pneg %p49
        $region66: #{_lambda_.1} parent=63 // pred_check_branch
          %460 = sbr.rel (%p458) target = $region68
        $region67: #{_lambda_.1} parent=63 // pred_region
          %p461 = scmp.lt.s32.totalorder %s29, 1
          %s462 = scalar_select %p461, %s29, 1
          %s463 = smul.addr %s462, 8
          %s464 = smul.addr %s463, 8
          %s465 = scalar_lea.vmem %s0, %s464
        $region68: #{_lambda_.1} parent=63 // pred_fallthru
          _
      $region64: #{_lambda_.1} parent=5 // pred_fallthru
        _
      %p466 = scmp.le.s32.totalorder 1, %s29
      %p467 = scmp.lt.s32.totalorder %s29, 3
      %p468 = pnand %p466, %p467
      %p469 = pneg %p468
      // Predicated region
      $region69: #{_lambda_.1} parent=5 // pred_check
        _
      $region70: #{_lambda_.1} parent=5 // pred_check_branch
        %471 = sbr.rel (%p468) target = $region72
      $region71: #{_lambda_.1} parent=5 // pred_region
        %s472 = ssub.s32 %s29, 1
        // Predicated region
        $region73: #{_lambda_.1} parent=71 // pred_check
          %p473 = pneg %p76
        $region74: #{_lambda_.1} parent=71 // pred_check_branch
          %475 = sbr.rel (%p473) target = $region76
        $region75: #{_lambda_.1} parent=71 // pred_region
          %477 = dma.done [#allocation6], 2304
        $region76: #{_lambda_.1} parent=71 // pred_fallthru
          _
        // Predicated region
        $region77: #{_lambda_.1} parent=71 // pred_check
          %p478 = pneg %p118
        $region78: #{_lambda_.1} parent=71 // pred_check_branch
          %480 = sbr.rel (%p478) target = $region80
        $region79: #{_lambda_.1} parent=71 // pred_region
          %482 = dma.done [#allocation9], 4608
        $region80: #{_lambda_.1} parent=71 // pred_fallthru
          _
        // Predicated region
        $region81: #{_lambda_.1} parent=71 // pred_check
          %p483 = pneg %p160
        $region82: #{_lambda_.1} parent=71 // pred_check_branch
          %485 = sbr.rel (%p483) target = $region84
        $region83: #{_lambda_.1} parent=71 // pred_region
          %487 = dma.done [#allocation9], 4608
        $region84: #{_lambda_.1} parent=71 // pred_fallthru
          _
        // Predicated region
        $region85: #{_lambda_.1} parent=71 // pred_check
          %p488 = pneg %p244
        $region86: #{_lambda_.1} parent=71 // pred_check_branch
          %490 = sbr.rel (%p488) target = $region88
        $region87: #{_lambda_.1} parent=71 // pred_region
          %492 = dma.done [#allocation12], 16384
        $region88: #{_lambda_.1} parent=71 // pred_fallthru
          _
        %p493 = scmp.lt.s32.totalorder %s34, 1
        %s494 = scalar_select %p493, %s34, 1
        %s495 = smul.addr %s494, 8
        %s496 = smul.addr %s495, 8
        %s497 = scalar_lea.vmem %s0, %s496
        %p498 = pneg %p55
        %p499 = pneg %p52
        %p500 = pneg %p76
        %p501 = pneg %p73
        %p502 = pneg %p97
        %p503 = pneg %p94
        %p504 = pneg %p118
        %p505 = pneg %p115
        %p506 = pneg %p139
        %p507 = pneg %p136
        %p508 = pneg %p160
        %p509 = pneg %p157
        %p510 = pneg %p181
        %p511 = pneg %p178
        %p512 = pneg %p202
        %p513 = pneg %p199
        %p514 = pneg %p223
        %p515 = pneg %p220
        %p516 = pneg %p244
        %p517 = pneg %p241
        %p518 = pneg %p265
        %p519 = pneg %p262
        %p520 = pneg %p286
        %p521 = pneg %p283
        %p522 = pneg %p307
        %p523 = pneg %p304
        %p524 = pneg %p333
        %p525 = pneg %p330
        %s526 = sand.u32 %s320, 1
        %s527 = scalar_lea.sflag [#allocation7], %s526
        %s528 = sand.u32 %s320, 1
        %s529 = scalar_lea.vmem [#allocation13], %s528
        %p530 = pneg %p359
        %p531 = pneg %p356
        %p532 = scmp.lt.s32.totalorder %s34, 1
        %s533 = scalar_select %p532, %s34, 1
        %s534 = scalar_lea.vmem %s14, %s533
        %p535 = scmp.lt.s32.totalorder %s34, 1
        %s536 = scalar_select %p535, %s34, 1
        %s537 = smul.addr %s536, 8
        %s538 = smul.addr %s537, 8
        %s539 = scalar_lea.vmem %s0, %s538
        %p540 = scmp.lt.s32.totalorder %s34, 1
        %s541 = scalar_select %p540, %s34, 1
        %s542 = scalar_lea.vmem %s14, %s541
        %vm544 = vcmask 261120
        %545 = vst.msk [vmem:[#allocation2] sm:$0xff] %vm544, 0.0
        %vm546 = vcmask 254976
        %547 = vst.msk [vmem:[#allocation2 + $0x8] sm:$0x3] %vm546, 0.0
        %548 = vst.msk [vmem:[#allocation2 + $0x10] sm:$0xff] %vm544, 0.0
        %549 = vst.msk [vmem:[#allocation2 + $0x18] sm:$0x3] %vm546, 0.0
        %550 = vst.msk [vmem:[#allocation2 + $0x20] sm:$0xff] %vm544, 0.0
        %551 = vst.msk [vmem:[#allocation2 + $0x28] sm:$0x3] %vm546, 0.0
        %552 = vst.msk [vmem:[#allocation2 + $0x30] sm:$0xff] %vm544, 0.0
        %553 = vst.msk [vmem:[#allocation2 + $0x38] sm:$0x3] %vm546, 0.0
        %554 = vst.msk [vmem:[#allocation2 + $0x40] sm:$0xff] %vm544, 0.0
        %555 = vst.msk [vmem:[#allocation2 + $0x48] sm:$0x3] %vm546, 0.0
        %556 = vst.msk [vmem:[#allocation2 + $0x50] sm:$0xff] %vm544, 0.0
        %557 = vst.msk [vmem:[#allocation2 + $0x58] sm:$0x3] %vm546, 0.0
        %558 = vst.msk [vmem:[#allocation2 + $0x60] sm:$0xff] %vm544, 0.0
        %559 = vst.msk [vmem:[#allocation2 + $0x68] sm:$0x3] %vm546, 0.0
        %560 = vst.msk [vmem:[#allocation2 + $0x70] sm:$0xff] %vm544, 0.0
        %561 = vst.msk [vmem:[#allocation2 + $0x78] sm:$0x3] %vm546, 0.0
        %562 = vst.msk [vmem:[#allocation2 + $0x80] sm:$0xff] %vm544, 0.0
        %563 = vst.msk [vmem:[#allocation2 + $0x88] sm:$0x3] %vm546, 0.0
        %564 = vst.msk [vmem:[#allocation2 + $0x90] sm:$0xff] %vm544, 0.0
        %565 = vst.msk [vmem:[#allocation2 + $0x98] sm:$0x3] %vm546, 0.0
        %v566 = vld [vmem:[%s539] sm:$0xff]
        %v567 = vld [vmem:[%s539 + $0x8] sm:$0xff]
        %v568 = vld [vmem:[%s539 + $0x10] sm:$0xff]
        %v569 = vld [vmem:[%s539 + $0x18] sm:$0xff]
        %v570 = vld [vmem:[%s539 + $0x20] sm:$0xff]
        %v571 = vld [vmem:[%s539 + $0x28] sm:$0xff]
        %v572 = vld [vmem:[%s539 + $0x30] sm:$0xff]
        %v573 = vld [vmem:[%s539 + $0x38] sm:$0xff]
        %v574 = vld [vmem:[#allocation5] sm:$0xf]
        %v575 = vld [vmem:[#allocation5 + $0x4] sm:$0xf]
        %v576 = vld [vmem:[#allocation5 + $0x8] sm:$0xf]
        %v577 = vld [vmem:[#allocation5 + $0xc] sm:$0xf]
        %v578 = vld [vmem:[#allocation5 + $0x10] sm:$0xf]
        %v579 = vld [vmem:[#allocation5 + $0x14] sm:$0xf]
        %v580 = vld [vmem:[#allocation5 + $0x18] sm:$0xf]
        %v581 = vld [vmem:[#allocation5 + $0x1c] sm:$0xf]
        %v582 = vld [vmem:[#allocation5 + $0x20] sm:$0xf]
        %v583 = vld [vmem:[#allocation5 + $0x24] sm:$0xf]
        %v584 = vld [vmem:[#allocation5 + $0x28] sm:$0xf]
        %v585 = vld [vmem:[#allocation5 + $0x2c] sm:$0xf]
        %v586 = vld [vmem:[#allocation5 + $0x30] sm:$0xf]
        %v587 = vld [vmem:[#allocation5 + $0x34] sm:$0xf]
        %v588 = vld [vmem:[#allocation5 + $0x38] sm:$0xf]
        %v589 = vld [vmem:[#allocation5 + $0x3c] sm:$0xf]
        %v590 = vld [vmem:[#allocation5 + $0x40] sm:$0xf]
        %v591 = vld [vmem:[#allocation5 + $0x44] sm:$0xf]
        %v592 = vld [vmem:[#allocation5 + $0x48] sm:$0xf]
        %v593 = vld [vmem:[#allocation5 + $0x4c] sm:$0xf]
        %v594 = vld [vmem:[#allocation5 + $0x50] sm:$0xf]
        %v595 = vld [vmem:[#allocation5 + $0x54] sm:$0xf]
        %v596 = vld [vmem:[#allocation5 + $0x58] sm:$0xf]
        %v597 = vld [vmem:[#allocation5 + $0x5c] sm:$0xf]
        %v598 = vld [vmem:[#allocation5 + $0x60] sm:$0xf]
        %v599 = vld [vmem:[#allocation5 + $0x64] sm:$0xf]
        %v600 = vld [vmem:[#allocation5 + $0x68] sm:$0xf]
        %v601 = vld [vmem:[#allocation5 + $0x6c] sm:$0xf]
        %v602 = vld [vmem:[#allocation5 + $0x70] sm:$0xf]
        %v603 = vld [vmem:[#allocation5 + $0x74] sm:$0xf]
        %v604 = vld [vmem:[#allocation5 + $0x78] sm:$0xf]
        %v605 = vld [vmem:[#allocation5 + $0x7c] sm:$0xf]
        %v606 = vld [vmem:[#allocation5 + $0x80] sm:$0xf]
        %v607 = vld [vmem:[#allocation5 + $0x84] sm:$0xf]
        %v608 = vld [vmem:[#allocation5 + $0x88] sm:$0xf]
        %v609 = vld [vmem:[#allocation5 + $0x8c] sm:$0xf]
        %v610 = vld [vmem:[%s2] sm:$0x1]
        %s611 = scalar_lea.vmem [#allocation2], 16
        %612 = vst.msk [vmem:[%s611 + $0x1] sm:$0xff] %vm544, %v566
        %613 = vst.msk [vmem:[%s611 + $0x11] sm:$0xff] %vm544, %v567
        %614 = vst.msk [vmem:[%s611 + $0x21] sm:$0xff] %vm544, %v568
        %615 = vst.msk [vmem:[%s611 + $0x31] sm:$0xff] %vm544, %v569
        %616 = vst.msk [vmem:[%s611 + $0x41] sm:$0xff] %vm544, %v570
        %617 = vst.msk [vmem:[%s611 + $0x51] sm:$0xff] %vm544, %v571
        %618 = vst.msk [vmem:[%s611 + $0x61] sm:$0xff] %vm544, %v572
        %619 = vst.msk [vmem:[%s611 + $0x71] sm:$0xff] %vm544, %v573
        %v620 = vld [vmem:[#allocation2] sm:$0xff]
        %v621 = vld [vmem:[#allocation2 + $0x10] sm:$0xff]
        %v622 = vld [vmem:[#allocation2 + $0x20] sm:$0xff]
        %v623 = vld [vmem:[#allocation2 + $0x30] sm:$0xff]
        %v624 = vld [vmem:[#allocation2 + $0x40] sm:$0xff]
        %v625 = vld [vmem:[#allocation2 + $0x50] sm:$0xff]
        %v626 = vld [vmem:[#allocation2 + $0x60] sm:$0xff]
        %v627 = vld [vmem:[#allocation2 + $0x70] sm:$0xff]
        %v628 = vpack.c.bf16 %v620, %v620
        %v629 = vpack.c.bf16 %v621, %v621
        %v630 = vpack.c.bf16 %v622, %v622
        %v631 = vpack.c.bf16 %v623, %v623
        %v632 = vpack.c.bf16 %v624, %v624
        %v633 = vpack.c.bf16 %v625, %v625
        %v634 = vpack.c.bf16 %v626, %v626
        %v635 = vpack.c.bf16 %v627, %v627
        %vm636 = vcmask 257024
        %637 = vst.msk [vmem:[#allocation3] sm:$0xf] %vm636, %v628
        %638 = vst.msk [vmem:[#allocation3 + $0xc] sm:$0xf] %vm636, %v629
        %639 = vst.msk [vmem:[#allocation3 + $0x18] sm:$0xf] %vm636, %v630
        %640 = vst.msk [vmem:[#allocation3 + $0x24] sm:$0xf] %vm636, %v631
        %641 = vst.msk [vmem:[#allocation3 + $0x30] sm:$0xf] %vm636, %v632
        %642 = vst.msk [vmem:[#allocation3 + $0x3c] sm:$0xf] %vm636, %v633
        %643 = vst.msk [vmem:[#allocation3 + $0x48] sm:$0xf] %vm636, %v634
        %644 = vst.msk [vmem:[#allocation3 + $0x54] sm:$0xf] %vm636, %v635
        %v645 = vld [vmem:[#allocation2 + $0x1] sm:$0xff]
        %v646 = vld [vmem:[#allocation2 + $0x11] sm:$0xff]
        %v647 = vld [vmem:[#allocation2 + $0x21] sm:$0xff]
        %v648 = vld [vmem:[#allocation2 + $0x31] sm:$0xff]
        %v649 = vld [vmem:[#allocation2 + $0x41] sm:$0xff]
        %v650 = vld [vmem:[#allocation2 + $0x51] sm:$0xff]
        %v651 = vld [vmem:[#allocation2 + $0x61] sm:$0xff]
        %v652 = vld [vmem:[#allocation2 + $0x71] sm:$0xff]
        %v653 = vpack.c.bf16 %v645, %v645
        %v654 = vpack.c.bf16 %v646, %v646
        %v655 = vpack.c.bf16 %v647, %v647
        %v656 = vpack.c.bf16 %v648, %v648
        %v657 = vpack.c.bf16 %v649, %v649
        %v658 = vpack.c.bf16 %v650, %v650
        %v659 = vpack.c.bf16 %v651, %v651
        %v660 = vpack.c.bf16 %v652, %v652
        %669 = vrot.lane.b32.xlu0 %v653, 32
        %v670 = vpop.permute.xlu0 %669
        %671 = vrot.lane.b32.xlu0 %v654, 32
        %v672 = vpop.permute.xlu0 %671
        %673 = vrot.lane.b32.xlu0 %v655, 32
        %v674 = vpop.permute.xlu0 %673
        %675 = vrot.lane.b32.xlu0 %v656, 32
        %v676 = vpop.permute.xlu0 %675
        %677 = vrot.lane.b32.xlu0 %v657, 32
        %v678 = vpop.permute.xlu0 %677
        %679 = vrot.lane.b32.xlu0 %v658, 32
        %v680 = vpop.permute.xlu0 %679
        %681 = vrot.lane.b32.xlu0 %v659, 32
        %v682 = vpop.permute.xlu0 %681
        %683 = vrot.lane.b32.xlu0 %v660, 32
        %v684 = vpop.permute.xlu0 %683
        %vm693 = vcmask 519424
        %694 = vst.msk [vmem:[#allocation3] sm:$0xf] %vm693, %v670
        %695 = vst.msk [vmem:[#allocation3 + $0xc] sm:$0xf] %vm693, %v672
        %696 = vst.msk [vmem:[#allocation3 + $0x18] sm:$0xf] %vm693, %v674
        %697 = vst.msk [vmem:[#allocation3 + $0x24] sm:$0xf] %vm693, %v676
        %698 = vst.msk [vmem:[#allocation3 + $0x30] sm:$0xf] %vm693, %v678
        %699 = vst.msk [vmem:[#allocation3 + $0x3c] sm:$0xf] %vm693, %v680
        %700 = vst.msk [vmem:[#allocation3 + $0x48] sm:$0xf] %vm693, %v682
        %701 = vst.msk [vmem:[#allocation3 + $0x54] sm:$0xf] %vm693, %v684
        %v702 = vld [vmem:[#allocation2 + $0x2] sm:$0xff]
        %v703 = vld [vmem:[#allocation2 + $0x12] sm:$0xff]
        %v704 = vld [vmem:[#allocation2 + $0x22] sm:$0xff]
        %v705 = vld [vmem:[#allocation2 + $0x32] sm:$0xff]
        %v706 = vld [vmem:[#allocation2 + $0x42] sm:$0xff]
        %v707 = vld [vmem:[#allocation2 + $0x52] sm:$0xff]
        %v708 = vld [vmem:[#allocation2 + $0x62] sm:$0xff]
        %v709 = vld [vmem:[#allocation2 + $0x72] sm:$0xff]
        %v710 = vpack.c.bf16 %v702, %v702
        %v711 = vpack.c.bf16 %v703, %v703
        %v712 = vpack.c.bf16 %v704, %v704
        %v713 = vpack.c.bf16 %v705, %v705
        %v714 = vpack.c.bf16 %v706, %v706
        %v715 = vpack.c.bf16 %v707, %v707
        %v716 = vpack.c.bf16 %v708, %v708
        %v717 = vpack.c.bf16 %v709, %v709
        %726 = vrot.lane.b32.xlu0 %v710, 64
        %v727 = vpop.permute.xlu0 %726
        %728 = vrot.lane.b32.xlu0 %v711, 64
        %v729 = vpop.permute.xlu0 %728
        %730 = vrot.lane.b32.xlu0 %v712, 64
        %v731 = vpop.permute.xlu0 %730
        %732 = vrot.lane.b32.xlu0 %v713, 64
        %v733 = vpop.permute.xlu0 %732
        %734 = vrot.lane.b32.xlu0 %v714, 64
        %v735 = vpop.permute.xlu0 %734
        %736 = vrot.lane.b32.xlu0 %v715, 64
        %v737 = vpop.permute.xlu0 %736
        %738 = vrot.lane.b32.xlu0 %v716, 64
        %v739 = vpop.permute.xlu0 %738
        %740 = vrot.lane.b32.xlu0 %v717, 64
        %v741 = vpop.permute.xlu0 %740
        %vm750 = vcmask 781824
        %751 = vst.msk [vmem:[#allocation3] sm:$0xf] %vm750, %v727
        %752 = vst.msk [vmem:[#allocation3 + $0xc] sm:$0xf] %vm750, %v729
        %753 = vst.msk [vmem:[#allocation3 + $0x18] sm:$0xf] %vm750, %v731
        %754 = vst.msk [vmem:[#allocation3 + $0x24] sm:$0xf] %vm750, %v733
        %755 = vst.msk [vmem:[#allocation3 + $0x30] sm:$0xf] %vm750, %v735
        %756 = vst.msk [vmem:[#allocation3 + $0x3c] sm:$0xf] %vm750, %v737
        %757 = vst.msk [vmem:[#allocation3 + $0x48] sm:$0xf] %vm750, %v739
        %758 = vst.msk [vmem:[#allocation3 + $0x54] sm:$0xf] %vm750, %v741
        %v759 = vld [vmem:[%s611] sm:$0xff]
        %v760 = vld [vmem:[%s611 + $0x10] sm:$0xff]
        %v761 = vld [vmem:[%s611 + $0x20] sm:$0xff]
        %v762 = vld [vmem:[%s611 + $0x30] sm:$0xff]
        %v763 = vld [vmem:[%s611 + $0x40] sm:$0xff]
        %v764 = vld [vmem:[%s611 + $0x50] sm:$0xff]
        %v765 = vld [vmem:[%s611 + $0x60] sm:$0xff]
        %v766 = vld [vmem:[%s611 + $0x70] sm:$0xff]
        %v767 = vpack.c.bf16 %v759, %v759
        %v768 = vpack.c.bf16 %v760, %v760
        %v769 = vpack.c.bf16 %v761, %v761
        %v770 = vpack.c.bf16 %v762, %v762
        %v771 = vpack.c.bf16 %v763, %v763
        %v772 = vpack.c.bf16 %v764, %v764
        %v773 = vpack.c.bf16 %v765, %v765
        %v774 = vpack.c.bf16 %v766, %v766
        %783 = vrot.lane.b32.xlu0 %v767, 96
        %v784 = vpop.permute.xlu0 %783
        %785 = vrot.lane.b32.xlu0 %v768, 96
        %v786 = vpop.permute.xlu0 %785
        %787 = vrot.lane.b32.xlu0 %v769, 96
        %v788 = vpop.permute.xlu0 %787
        %789 = vrot.lane.b32.xlu0 %v770, 96
        %v790 = vpop.permute.xlu0 %789
        %791 = vrot.lane.b32.xlu0 %v771, 96
        %v792 = vpop.permute.xlu0 %791
        %793 = vrot.lane.b32.xlu0 %v772, 96
        %v794 = vpop.permute.xlu0 %793
        %795 = vrot.lane.b32.xlu0 %v773, 96
        %v796 = vpop.permute.xlu0 %795
        %797 = vrot.lane.b32.xlu0 %v774, 96
        %v798 = vpop.permute.xlu0 %797
        %vm807 = vcmask 1044224
        %808 = vst.msk [vmem:[#allocation3] sm:$0xf] %vm807, %v784
        %809 = vst.msk [vmem:[#allocation3 + $0xc] sm:$0xf] %vm807, %v786
        %810 = vst.msk [vmem:[#allocation3 + $0x18] sm:$0xf] %vm807, %v788
        %811 = vst.msk [vmem:[#allocation3 + $0x24] sm:$0xf] %vm807, %v790
        %812 = vst.msk [vmem:[#allocation3 + $0x30] sm:$0xf] %vm807, %v792
        %813 = vst.msk [vmem:[#allocation3 + $0x3c] sm:$0xf] %vm807, %v794
        %814 = vst.msk [vmem:[#allocation3 + $0x48] sm:$0xf] %vm807, %v796
        %815 = vst.msk [vmem:[#allocation3 + $0x54] sm:$0xf] %vm807, %v798
        %v816 = vld [vmem:[%s611 + $0x1] sm:$0xff]
        %v817 = vld [vmem:[%s611 + $0x11] sm:$0xff]
        %v818 = vld [vmem:[%s611 + $0x21] sm:$0xff]
        %v819 = vld [vmem:[%s611 + $0x31] sm:$0xff]
        %v820 = vld [vmem:[%s611 + $0x41] sm:$0xff]
        %v821 = vld [vmem:[%s611 + $0x51] sm:$0xff]
        %v822 = vld [vmem:[%s611 + $0x61] sm:$0xff]
        %v823 = vld [vmem:[%s611 + $0x71] sm:$0xff]
        %v824 = vpack.c.bf16 %v816, %v816
        %v825 = vpack.c.bf16 %v817, %v817
        %v826 = vpack.c.bf16 %v818, %v818
        %v827 = vpack.c.bf16 %v819, %v819
        %v828 = vpack.c.bf16 %v820, %v820
        %v829 = vpack.c.bf16 %v821, %v821
        %v830 = vpack.c.bf16 %v822, %v822
        %v831 = vpack.c.bf16 %v823, %v823
        %832 = vst.msk [vmem:[#allocation3 + $0x4] sm:$0xf] %vm636, %v824
        %833 = vst.msk [vmem:[#allocation3 + $0x10] sm:$0xf] %vm636, %v825
        %834 = vst.msk [vmem:[#allocation3 + $0x1c] sm:$0xf] %vm636, %v826
        %835 = vst.msk [vmem:[#allocation3 + $0x28] sm:$0xf] %vm636, %v827
        %836 = vst.msk [vmem:[#allocation3 + $0x34] sm:$0xf] %vm636, %v828
        %837 = vst.msk [vmem:[#allocation3 + $0x40] sm:$0xf] %vm636, %v829
        %838 = vst.msk [vmem:[#allocation3 + $0x4c] sm:$0xf] %vm636, %v830
        %839 = vst.msk [vmem:[#allocation3 + $0x58] sm:$0xf] %vm636, %v831
        %v840 = vld [vmem:[%s611 + $0x2] sm:$0xff]
        %v841 = vld [vmem:[%s611 + $0x12] sm:$0xff]
        %v842 = vld [vmem:[%s611 + $0x22] sm:$0xff]
        %v843 = vld [vmem:[%s611 + $0x32] sm:$0xff]
        %v844 = vld [vmem:[%s611 + $0x42] sm:$0xff]
        %v845 = vld [vmem:[%s611 + $0x52] sm:$0xff]
        %v846 = vld [vmem:[%s611 + $0x62] sm:$0xff]
        %v847 = vld [vmem:[%s611 + $0x72] sm:$0xff]
        %v848 = vpack.c.bf16 %v840, %v840
        %v849 = vpack.c.bf16 %v841, %v841
        %v850 = vpack.c.bf16 %v842, %v842
        %v851 = vpack.c.bf16 %v843, %v843
        %v852 = vpack.c.bf16 %v844, %v844
        %v853 = vpack.c.bf16 %v845, %v845
        %v854 = vpack.c.bf16 %v846, %v846
        %v855 = vpack.c.bf16 %v847, %v847
        %864 = vrot.lane.b32.xlu0 %v848, 32
        %v865 = vpop.permute.xlu0 %864
        %866 = vrot.lane.b32.xlu0 %v849, 32
        %v867 = vpop.permute.xlu0 %866
        %868 = vrot.lane.b32.xlu0 %v850, 32
        %v869 = vpop.permute.xlu0 %868
        %870 = vrot.lane.b32.xlu0 %v851, 32
        %v871 = vpop.permute.xlu0 %870
        %872 = vrot.lane.b32.xlu0 %v852, 32
        %v873 = vpop.permute.xlu0 %872
        %874 = vrot.lane.b32.xlu0 %v853, 32
        %v875 = vpop.permute.xlu0 %874
        %876 = vrot.lane.b32.xlu0 %v854, 32
        %v877 = vpop.permute.xlu0 %876
        %878 = vrot.lane.b32.xlu0 %v855, 32
        %v879 = vpop.permute.xlu0 %878
        %888 = vst.msk [vmem:[#allocation3 + $0x4] sm:$0xf] %vm693, %v865
        %889 = vst.msk [vmem:[#allocation3 + $0x10] sm:$0xf] %vm693, %v867
        %890 = vst.msk [vmem:[#allocation3 + $0x1c] sm:$0xf] %vm693, %v869
        %891 = vst.msk [vmem:[#allocation3 + $0x28] sm:$0xf] %vm693, %v871
        %892 = vst.msk [vmem:[#allocation3 + $0x34] sm:$0xf] %vm693, %v873
        %893 = vst.msk [vmem:[#allocation3 + $0x40] sm:$0xf] %vm693, %v875
        %894 = vst.msk [vmem:[#allocation3 + $0x4c] sm:$0xf] %vm693, %v877
        %895 = vst.msk [vmem:[#allocation3 + $0x58] sm:$0xf] %vm693, %v879
        %s896 = scalar_lea.vmem [#allocation2], 32
        %v897 = vld [vmem:[%s896] sm:$0xff]
        %v898 = vld [vmem:[%s896 + $0x10] sm:$0xff]
        %v899 = vld [vmem:[%s896 + $0x20] sm:$0xff]
        %v900 = vld [vmem:[%s896 + $0x30] sm:$0xff]
        %v901 = vld [vmem:[%s896 + $0x40] sm:$0xff]
        %v902 = vld [vmem:[%s896 + $0x50] sm:$0xff]
        %v903 = vld [vmem:[%s896 + $0x60] sm:$0xff]
        %v904 = vld [vmem:[%s896 + $0x70] sm:$0xff]
        %v905 = vpack.c.bf16 %v897, %v897
        %v906 = vpack.c.bf16 %v898, %v898
        %v907 = vpack.c.bf16 %v899, %v899
        %v908 = vpack.c.bf16 %v900, %v900
        %v909 = vpack.c.bf16 %v901, %v901
        %v910 = vpack.c.bf16 %v902, %v902
        %v911 = vpack.c.bf16 %v903, %v903
        %v912 = vpack.c.bf16 %v904, %v904
        %921 = vrot.lane.b32.xlu0 %v905, 64
        %v922 = vpop.permute.xlu0 %921
        %923 = vrot.lane.b32.xlu0 %v906, 64
        %v924 = vpop.permute.xlu0 %923
        %925 = vrot.lane.b32.xlu0 %v907, 64
        %v926 = vpop.permute.xlu0 %925
        %927 = vrot.lane.b32.xlu0 %v908, 64
        %v928 = vpop.permute.xlu0 %927
        %929 = vrot.lane.b32.xlu0 %v909, 64
        %v930 = vpop.permute.xlu0 %929
        %931 = vrot.lane.b32.xlu0 %v910, 64
        %v932 = vpop.permute.xlu0 %931
        %933 = vrot.lane.b32.xlu0 %v911, 64
        %v934 = vpop.permute.xlu0 %933
        %935 = vrot.lane.b32.xlu0 %v912, 64
        %v936 = vpop.permute.xlu0 %935
        %945 = vst.msk [vmem:[#allocation3 + $0x4] sm:$0xf] %vm750, %v922
        %946 = vst.msk [vmem:[#allocation3 + $0x10] sm:$0xf] %vm750, %v924
        %947 = vst.msk [vmem:[#allocation3 + $0x1c] sm:$0xf] %vm750, %v926
        %948 = vst.msk [vmem:[#allocation3 + $0x28] sm:$0xf] %vm750, %v928
        %949 = vst.msk [vmem:[#allocation3 + $0x34] sm:$0xf] %vm750, %v930
        %950 = vst.msk [vmem:[#allocation3 + $0x40] sm:$0xf] %vm750, %v932
        %951 = vst.msk [vmem:[#allocation3 + $0x4c] sm:$0xf] %vm750, %v934
        %952 = vst.msk [vmem:[#allocation3 + $0x58] sm:$0xf] %vm750, %v936
        %v953 = vld [vmem:[%s896 + $0x1] sm:$0xff]
        %v954 = vld [vmem:[%s896 + $0x11] sm:$0xff]
        %v955 = vld [vmem:[%s896 + $0x21] sm:$0xff]
        %v956 = vld [vmem:[%s896 + $0x31] sm:$0xff]
        %v957 = vld [vmem:[%s896 + $0x41] sm:$0xff]
        %v958 = vld [vmem:[%s896 + $0x51] sm:$0xff]
        %v959 = vld [vmem:[%s896 + $0x61] sm:$0xff]
        %v960 = vld [vmem:[%s896 + $0x71] sm:$0xff]
        %v961 = vpack.c.bf16 %v953, %v953
        %v962 = vpack.c.bf16 %v954, %v954
        %v963 = vpack.c.bf16 %v955, %v955
        %v964 = vpack.c.bf16 %v956, %v956
        %v965 = vpack.c.bf16 %v957, %v957
        %v966 = vpack.c.bf16 %v958, %v958
        %v967 = vpack.c.bf16 %v959, %v959
        %v968 = vpack.c.bf16 %v960, %v960
        %977 = vrot.lane.b32.xlu0 %v961, 96
        %v978 = vpop.permute.xlu0 %977
        %979 = vrot.lane.b32.xlu0 %v962, 96
        %v980 = vpop.permute.xlu0 %979
        %981 = vrot.lane.b32.xlu0 %v963, 96
        %v982 = vpop.permute.xlu0 %981
        %983 = vrot.lane.b32.xlu0 %v964, 96
        %v984 = vpop.permute.xlu0 %983
        %985 = vrot.lane.b32.xlu0 %v965, 96
        %v986 = vpop.permute.xlu0 %985
        %987 = vrot.lane.b32.xlu0 %v966, 96
        %v988 = vpop.permute.xlu0 %987
        %989 = vrot.lane.b32.xlu0 %v967, 96
        %v990 = vpop.permute.xlu0 %989
        %991 = vrot.lane.b32.xlu0 %v968, 96
        %v992 = vpop.permute.xlu0 %991
        %1001 = vst.msk [vmem:[#allocation3 + $0x4] sm:$0xf] %vm807, %v978
        %1002 = vst.msk [vmem:[#allocation3 + $0x10] sm:$0xf] %vm807, %v980
        %1003 = vst.msk [vmem:[#allocation3 + $0x1c] sm:$0xf] %vm807, %v982
        %1004 = vst.msk [vmem:[#allocation3 + $0x28] sm:$0xf] %vm807, %v984
        %1005 = vst.msk [vmem:[#allocation3 + $0x34] sm:$0xf] %vm807, %v986
        %1006 = vst.msk [vmem:[#allocation3 + $0x40] sm:$0xf] %vm807, %v988
        %1007 = vst.msk [vmem:[#allocation3 + $0x4c] sm:$0xf] %vm807, %v990
        %1008 = vst.msk [vmem:[#allocation3 + $0x58] sm:$0xf] %vm807, %v992
        %v1009 = vld [vmem:[%s896 + $0x2] sm:$0xff]
        %v1010 = vld [vmem:[%s896 + $0x12] sm:$0xff]
        %v1011 = vld [vmem:[%s896 + $0x22] sm:$0xff]
        %v1012 = vld [vmem:[%s896 + $0x32] sm:$0xff]
        %v1013 = vld [vmem:[%s896 + $0x42] sm:$0xff]
        %v1014 = vld [vmem:[%s896 + $0x52] sm:$0xff]
        %v1015 = vld [vmem:[%s896 + $0x62] sm:$0xff]
        %v1016 = vld [vmem:[%s896 + $0x72] sm:$0xff]
        %v1017 = vpack.c.bf16 %v1009, %v1009
        %v1018 = vpack.c.bf16 %v1010, %v1010
        %v1019 = vpack.c.bf16 %v1011, %v1011
        %v1020 = vpack.c.bf16 %v1012, %v1012
        %v1021 = vpack.c.bf16 %v1013, %v1013
        %v1022 = vpack.c.bf16 %v1014, %v1014
        %v1023 = vpack.c.bf16 %v1015, %v1015
        %v1024 = vpack.c.bf16 %v1016, %v1016
        %1025 = vst.msk [vmem:[#allocation3 + $0x8] sm:$0xf] %vm636, %v1017
        %1026 = vst.msk [vmem:[#allocation3 + $0x14] sm:$0xf] %vm636, %v1018
        %1027 = vst.msk [vmem:[#allocation3 + $0x20] sm:$0xf] %vm636, %v1019
        %1028 = vst.msk [vmem:[#allocation3 + $0x2c] sm:$0xf] %vm636, %v1020
        %1029 = vst.msk [vmem:[#allocation3 + $0x38] sm:$0xf] %vm636, %v1021
        %1030 = vst.msk [vmem:[#allocation3 + $0x44] sm:$0xf] %vm636, %v1022
        %1031 = vst.msk [vmem:[#allocation3 + $0x50] sm:$0xf] %vm636, %v1023
        %1032 = vst.msk [vmem:[#allocation3 + $0x5c] sm:$0xf] %vm636, %v1024
        %v1033 = vld [vmem:[#allocation3] sm:$0xff]
        %v1034 = vld [vmem:[#allocation3 + $0x8] sm:$0xf]
        %v1035 = vld [vmem:[#allocation3 + $0xc] sm:$0xff]
        %v1036 = vld [vmem:[#allocation3 + $0x14] sm:$0xf]
        %v1037 = vld [vmem:[#allocation3 + $0x18] sm:$0xff]
        %v1038 = vld [vmem:[#allocation3 + $0x20] sm:$0xf]
        %v1039 = vld [vmem:[#allocation3 + $0x24] sm:$0xff]
        %v1040 = vld [vmem:[#allocation3 + $0x2c] sm:$0xf]
        %v1041 = vld [vmem:[#allocation3 + $0x30] sm:$0xff]
        %v1042 = vld [vmem:[#allocation3 + $0x38] sm:$0xf]
        %v1043 = vld [vmem:[#allocation3 + $0x3c] sm:$0xff]
        %v1044 = vld [vmem:[#allocation3 + $0x44] sm:$0xf]
        %v1045 = vld [vmem:[#allocation3 + $0x48] sm:$0xff]
        %v1046 = vld [vmem:[#allocation3 + $0x50] sm:$0xf]
        %v1047 = vld [vmem:[#allocation3 + $0x54] sm:$0xff]
        %v1048 = vld [vmem:[#allocation3 + $0x5c] sm:$0xf]
        %v1050 = vperm.slane %v610, 0
        %v1068 = vunpack.c.l.b16 %v1033
        %v1069 = vunpack.c.h.b16 %v1033
        %v1070 = vunpack.c.l.b16 %v1034
        %v1071 = vunpack.c.l.b16 %v1035
        %v1072 = vunpack.c.h.b16 %v1035
        %v1073 = vunpack.c.l.b16 %v1036
        %v1074 = vunpack.c.l.b16 %v1037
        %v1075 = vunpack.c.h.b16 %v1037
        %v1076 = vunpack.c.l.b16 %v1038
        %v1077 = vunpack.c.l.b16 %v1039
        %v1078 = vunpack.c.h.b16 %v1039
        %v1079 = vunpack.c.l.b16 %v1040
        %v1080 = vunpack.c.l.b16 %v1041
        %v1081 = vunpack.c.h.b16 %v1041
        %v1082 = vunpack.c.l.b16 %v1042
        %v1083 = vunpack.c.l.b16 %v1043
        %v1084 = vunpack.c.h.b16 %v1043
        %v1085 = vunpack.c.l.b16 %v1044
        %v1086 = vunpack.c.l.b16 %v1045
        %v1087 = vunpack.c.h.b16 %v1045
        %v1088 = vunpack.c.l.b16 %v1046
        %v1089 = vunpack.c.l.b16 %v1047
        %v1090 = vunpack.c.h.b16 %v1047
        %v1091 = vunpack.c.l.b16 %v1048
        %v1092 = vpack.c.b16 %v1071, %v1068
        %v1093 = vpack.c.b16 %v1072, %v1069
        %v1094 = vpack.c.b16 %v1073, %v1070
        %v1095 = vpack.c.b16 %v1077, %v1074
        %v1096 = vpack.c.b16 %v1078, %v1075
        %v1097 = vpack.c.b16 %v1079, %v1076
        %v1098 = vpack.c.b16 %v1083, %v1080
        %v1099 = vpack.c.b16 %v1084, %v1081
        %v1100 = vpack.c.b16 %v1085, %v1082
        %v1101 = vpack.c.b16 %v1089, %v1086
        %v1102 = vpack.c.b16 %v1090, %v1087
        %v1103 = vpack.c.b16 %v1091, %v1088
        %v1148 = vunpack.c.l.b16 %v574
        %v1149 = vunpack.c.l.b16 %v575
        %v1150 = vunpack.c.l.b16 %v576
        %v1151 = vunpack.c.l.b16 %v577
        %v1152 = vunpack.c.l.b16 %v578
        %v1153 = vunpack.c.l.b16 %v579
        %v1154 = vunpack.c.l.b16 %v580
        %v1155 = vunpack.c.l.b16 %v581
        %v1156 = vunpack.c.l.b16 %v582
        %v1157 = vunpack.c.l.b16 %v583
        %v1158 = vunpack.c.l.b16 %v584
        %v1159 = vunpack.c.l.b16 %v585
        %v1160 = vunpack.c.l.b16 %v586
        %v1161 = vunpack.c.l.b16 %v587
        %v1162 = vunpack.c.l.b16 %v588
        %v1163 = vunpack.c.l.b16 %v589
        %v1164 = vunpack.c.l.b16 %v590
        %v1165 = vunpack.c.l.b16 %v591
        %v1166 = vunpack.c.l.b16 %v592
        %v1167 = vunpack.c.l.b16 %v593
        %v1168 = vunpack.c.l.b16 %v594
        %v1169 = vunpack.c.l.b16 %v595
        %v1170 = vunpack.c.l.b16 %v596
        %v1171 = vunpack.c.l.b16 %v597
        %v1172 = vunpack.c.l.b16 %v598
        %v1173 = vunpack.c.l.b16 %v599
        %v1174 = vunpack.c.l.b16 %v600
        %v1175 = vunpack.c.l.b16 %v601
        %v1176 = vunpack.c.l.b16 %v602
        %v1177 = vunpack.c.l.b16 %v603
        %v1178 = vunpack.c.l.b16 %v604
        %v1179 = vunpack.c.l.b16 %v605
        %v1180 = vunpack.c.l.b16 %v606
        %v1181 = vunpack.c.l.b16 %v607
        %v1182 = vunpack.c.l.b16 %v608
        %v1183 = vunpack.c.l.b16 %v609
        %v1184 = vpack.c.b16 %v1149, %v1148
        %v1185 = vpack.c.b16 %v1151, %v1150
        %v1186 = vpack.c.b16 %v1153, %v1152
        %v1187 = vpack.c.b16 %v1155, %v1154
        %v1188 = vpack.c.b16 %v1157, %v1156
        %v1189 = vpack.c.b16 %v1159, %v1158
        %v1190 = vpack.c.b16 %v1161, %v1160
        %v1191 = vpack.c.b16 %v1163, %v1162
        %v1192 = vpack.c.b16 %v1165, %v1164
        %v1193 = vpack.c.b16 %v1167, %v1166
        %v1194 = vpack.c.b16 %v1169, %v1168
        %v1195 = vpack.c.b16 %v1171, %v1170
        %v1196 = vpack.c.b16 %v1173, %v1172
        %v1197 = vpack.c.b16 %v1175, %v1174
        %v1198 = vpack.c.b16 %v1177, %v1176
        %v1199 = vpack.c.b16 %v1179, %v1178
        %v1200 = vpack.c.b16 %v1181, %v1180
        %v1201 = vpack.c.b16 %v1183, %v1182
        %v1221 = vsel %vm544, %v1094, 0
        %v1224 = vsel %vm544, %v1097, 0
        %v1227 = vsel %vm544, %v1100, 0
        %v1230 = vsel %vm544, %v1103, 0
        %1232 = vmatpush.bf16.msra.mxu0 %v1191
        %1233 = vmatpush.bf16.msra.mxu0 %v1190
        %1234 = vmatpush.bf16.msra.mxu0 %v1189
        %1235 = vmatpush.bf16.msra.mxu0 %v1188
        %1236 = vmatpush.bf16.msra.mxu0 %v1187
        %1237 = vmatpush.bf16.msra.mxu0 %v1186
        %1238 = vmatpush.bf16.msra.mxu0 %v1185
        %1239 = vmatpush.bf16.msra.mxu0 %v1184
        %1240 = vmatmul.bf16.gmra.mxu0 %v1092
        %v1241 = vpop.f32.mrf.mxu0
        %v1242 = vadd.f32 %v1050, %v1241
        %v1243 = vpop.f32.mrf.mxu0
        %v1244 = vadd.f32 %v1050, %v1243
        %1245 = vmatmul.bf16.gmra.mxu0 %v1095
        %v1246 = vpop.f32.mrf.mxu0
        %v1247 = vadd.f32 %v1050, %v1246
        %v1248 = vpop.f32.mrf.mxu0
        %v1249 = vadd.f32 %v1050, %v1248
        %1250 = vmatmul.bf16.gmra.mxu0 %v1098
        %v1251 = vpop.f32.mrf.mxu0
        %v1252 = vadd.f32 %v1050, %v1251
        %v1253 = vpop.f32.mrf.mxu0
        %v1254 = vadd.f32 %v1050, %v1253
        %1255 = vmatmul.bf16.gmra.mxu0 %v1101
        %v1256 = vpop.f32.mrf.mxu0
        %v1257 = vadd.f32 %v1050, %v1256
        %v1258 = vpop.f32.mrf.mxu0
        %v1259 = vadd.f32 %v1050, %v1258
        %1260 = vdwg.mxu0
        %1261 = vmatpush.bf16.msra.mxu0 %v1199
        %1262 = vmatpush.bf16.msra.mxu0 %v1198
        %1263 = vmatpush.bf16.msra.mxu0 %v1197
        %1264 = vmatpush.bf16.msra.mxu0 %v1196
        %1265 = vmatpush.bf16.msra.mxu0 %v1195
        %1266 = vmatpush.bf16.msra.mxu0 %v1194
        %1267 = vmatpush.bf16.msra.mxu0 %v1193
        %1268 = vmatpush.bf16.msra.mxu0 %v1192
        %1269 = vmatmul.bf16.gmra.mxu0 %v1093
        %v1270 = vpop.f32.mrf.mxu0
        %v1271 = vadd.f32 %v1242, %v1270
        %v1272 = vpop.f32.mrf.mxu0
        %v1273 = vadd.f32 %v1244, %v1272
        %1274 = vmatmul.bf16.gmra.mxu0 %v1096
        %v1275 = vpop.f32.mrf.mxu0
        %v1276 = vadd.f32 %v1247, %v1275
        %v1277 = vpop.f32.mrf.mxu0
        %v1278 = vadd.f32 %v1249, %v1277
        %1279 = vmatmul.bf16.gmra.mxu0 %v1099
        %v1280 = vpop.f32.mrf.mxu0
        %v1281 = vadd.f32 %v1252, %v1280
        %v1282 = vpop.f32.mrf.mxu0
        %v1283 = vadd.f32 %v1254, %v1282
        %1284 = vmatmul.bf16.gmra.mxu0 %v1102
        %v1285 = vpop.f32.mrf.mxu0
        %v1286 = vadd.f32 %v1257, %v1285
        %v1287 = vpop.f32.mrf.mxu0
        %v1288 = vadd.f32 %v1259, %v1287
        %1289 = vdwg.mxu0
        %1290 = vmatpush.bf16.msra.mxu0 0
        %1291 = vmatpush.bf16.msra.mxu0 0
        %1292 = vmatpush.bf16.msra.mxu0 0
        %1293 = vmatpush.bf16.msra.mxu0 0
        %1294 = vmatpush.bf16.msra.mxu0 0
        %1295 = vmatpush.bf16.msra.mxu0 0
        %1296 = vmatpush.bf16.msra.mxu0 %v1201
        %1297 = vmatpush.bf16.msra.mxu0 %v1200
        %1298 = vmatmul.bf16.gmra.mxu0 %v1221
        %v1299 = vpop.f32.mrf.mxu0
        %v1300 = vadd.f32 %v1271, %v1299
        %v1301 = vpop.f32.mrf.mxu0
        %v1302 = vadd.f32 %v1273, %v1301
        %1303 = vmatmul.bf16.gmra.mxu0 %v1224
        %v1304 = vpop.f32.mrf.mxu0
        %v1305 = vadd.f32 %v1276, %v1304
        %v1306 = vpop.f32.mrf.mxu0
        %v1307 = vadd.f32 %v1278, %v1306
        %1308 = vmatmul.bf16.gmra.mxu0 %v1227
        %v1309 = vpop.f32.mrf.mxu0
        %v1310 = vadd.f32 %v1281, %v1309
        %v1311 = vpop.f32.mrf.mxu0
        %v1312 = vadd.f32 %v1283, %v1311
        %1313 = vmatmul.bf16.gmra.mxu0 %v1230
        %v1314 = vpop.f32.mrf.mxu0
        %v1315 = vadd.f32 %v1286, %v1314
        %v1316 = vpop.f32.mrf.mxu0
        %v1317 = vadd.f32 %v1288, %v1316
        %1318 = vdwg.mxu0
        %v1319 = vmax.f32 %v1300, 0.0
        %v1320 = vmax.f32 %v1302, 0.0
        %v1321 = vmax.f32 %v1305, 0.0
        %v1322 = vmax.f32 %v1307, 0.0
        %v1323 = vmax.f32 %v1310, 0.0
        %v1324 = vmax.f32 %v1312, 0.0
        %v1325 = vmax.f32 %v1315, 0.0
        %v1326 = vmax.f32 %v1317, 0.0
        %v1327 = vld [vmem:[#allocation8] sm:$0xf]
        %v1328 = vld [vmem:[#allocation8 + $0x4] sm:$0xf]
        %v1329 = vld [vmem:[#allocation8 + $0x8] sm:$0xf]
        %v1330 = vld [vmem:[#allocation8 + $0xc] sm:$0xf]
        %v1331 = vld [vmem:[#allocation8 + $0x10] sm:$0xf]
        %v1332 = vld [vmem:[#allocation8 + $0x14] sm:$0xf]
        %v1333 = vld [vmem:[#allocation8 + $0x18] sm:$0xf]
        %v1334 = vld [vmem:[#allocation8 + $0x1c] sm:$0xf]
        %v1335 = vld [vmem:[#allocation8 + $0x20] sm:$0xf]
        %v1336 = vld [vmem:[#allocation8 + $0x24] sm:$0xf]
        %v1337 = vld [vmem:[#allocation8 + $0x28] sm:$0xf]
        %v1338 = vld [vmem:[#allocation8 + $0x2c] sm:$0xf]
        %v1339 = vld [vmem:[#allocation8 + $0x30] sm:$0xf]
        %v1340 = vld [vmem:[#allocation8 + $0x34] sm:$0xf]
        %v1341 = vld [vmem:[#allocation8 + $0x38] sm:$0xf]
        %v1342 = vld [vmem:[#allocation8 + $0x3c] sm:$0xf]
        %v1343 = vld [vmem:[#allocation8 + $0x40] sm:$0xf]
        %v1344 = vld [vmem:[#allocation8 + $0x44] sm:$0xf]
        %v1345 = vld [vmem:[#allocation8 + $0x48] sm:$0xf]
        %v1346 = vld [vmem:[#allocation8 + $0x4c] sm:$0xf]
        %v1347 = vld [vmem:[#allocation8 + $0x50] sm:$0xf]
        %v1348 = vld [vmem:[#allocation8 + $0x54] sm:$0xf]
        %v1349 = vld [vmem:[#allocation8 + $0x58] sm:$0xf]
        %v1350 = vld [vmem:[#allocation8 + $0x5c] sm:$0xf]
        %v1351 = vld [vmem:[#allocation8 + $0x60] sm:$0xf]
        %v1352 = vld [vmem:[#allocation8 + $0x64] sm:$0xf]
        %v1353 = vld [vmem:[#allocation8 + $0x68] sm:$0xf]
        %v1354 = vld [vmem:[#allocation8 + $0x6c] sm:$0xf]
        %v1355 = vld [vmem:[#allocation8 + $0x70] sm:$0xf]
        %v1356 = vld [vmem:[#allocation8 + $0x74] sm:$0xf]
        %v1357 = vld [vmem:[#allocation8 + $0x78] sm:$0xf]
        %v1358 = vld [vmem:[#allocation8 + $0x7c] sm:$0xf]
        %v1359 = vld [vmem:[#allocation8 + $0x80] sm:$0xf]
        %v1360 = vld [vmem:[#allocation8 + $0x84] sm:$0xf]
        %v1361 = vld [vmem:[#allocation8 + $0x88] sm:$0xf]
        %v1362 = vld [vmem:[#allocation8 + $0x8c] sm:$0xf]
        %v1363 = vld [vmem:[%s4] sm:$0x1]
        %1364 = vst.msk [vmem:[%s611 + $0x1] sm:$0xff] %vm544, %v1319
        %1365 = vst.msk [vmem:[%s611 + $0x11] sm:$0xff] %vm544, %v1320
        %1366 = vst.msk [vmem:[%s611 + $0x21] sm:$0xff] %vm544, %v1321
        %1367 = vst.msk [vmem:[%s611 + $0x31] sm:$0xff] %vm544, %v1322
        %1368 = vst.msk [vmem:[%s611 + $0x41] sm:$0xff] %vm544, %v1323
        %1369 = vst.msk [vmem:[%s611 + $0x51] sm:$0xff] %vm544, %v1324
        %1370 = vst.msk [vmem:[%s611 + $0x61] sm:$0xff] %vm544, %v1325
        %1371 = vst.msk [vmem:[%s611 + $0x71] sm:$0xff] %vm544, %v1326
        %v1372 = vld [vmem:[#allocation2] sm:$0xff]
        %v1373 = vld [vmem:[#allocation2 + $0x10] sm:$0xff]
        %v1374 = vld [vmem:[#allocation2 + $0x20] sm:$0xff]
        %v1375 = vld [vmem:[#allocation2 + $0x30] sm:$0xff]
        %v1376 = vld [vmem:[#allocation2 + $0x40] sm:$0xff]
        %v1377 = vld [vmem:[#allocation2 + $0x50] sm:$0xff]
        %v1378 = vld [vmem:[#allocation2 + $0x60] sm:$0xff]
        %v1379 = vld [vmem:[#allocation2 + $0x70] sm:$0xff]
        %v1380 = vpack.c.bf16 %v1372, %v1372
        %v1381 = vpack.c.bf16 %v1373, %v1373
        %v1382 = vpack.c.bf16 %v1374, %v1374
        %v1383 = vpack.c.bf16 %v1375, %v1375
        %v1384 = vpack.c.bf16 %v1376, %v1376
        %v1385 = vpack.c.bf16 %v1377, %v1377
        %v1386 = vpack.c.bf16 %v1378, %v1378
        %v1387 = vpack.c.bf16 %v1379, %v1379
        %1388 = vst.msk [vmem:[#allocation3] sm:$0xf] %vm636, %v1380
        %1389 = vst.msk [vmem:[#allocation3 + $0xc] sm:$0xf] %vm636, %v1381
        %1390 = vst.msk [vmem:[#allocation3 + $0x18] sm:$0xf] %vm636, %v1382
        %1391 = vst.msk [vmem:[#allocation3 + $0x24] sm:$0xf] %vm636, %v1383
        %1392 = vst.msk [vmem:[#allocation3 + $0x30] sm:$0xf] %vm636, %v1384
        %1393 = vst.msk [vmem:[#allocation3 + $0x3c] sm:$0xf] %vm636, %v1385
        %1394 = vst.msk [vmem:[#allocation3 + $0x48] sm:$0xf] %vm636, %v1386
        %1395 = vst.msk [vmem:[#allocation3 + $0x54] sm:$0xf] %vm636, %v1387
        %v1396 = vld [vmem:[#allocation2 + $0x1] sm:$0xff]
        %v1397 = vld [vmem:[#allocation2 + $0x11] sm:$0xff]
        %v1398 = vld [vmem:[#allocation2 + $0x21] sm:$0xff]
        %v1399 = vld [vmem:[#allocation2 + $0x31] sm:$0xff]
        %v1400 = vld [vmem:[#allocation2 + $0x41] sm:$0xff]
        %v1401 = vld [vmem:[#allocation2 + $0x51] sm:$0xff]
        %v1402 = vld [vmem:[#allocation2 + $0x61] sm:$0xff]
        %v1403 = vld [vmem:[#allocation2 + $0x71] sm:$0xff]
        %v1404 = vpack.c.bf16 %v1396, %v1396
        %v1405 = vpack.c.bf16 %v1397, %v1397
        %v1406 = vpack.c.bf16 %v1398, %v1398
        %v1407 = vpack.c.bf16 %v1399, %v1399
        %v1408 = vpack.c.bf16 %v1400, %v1400
        %v1409 = vpack.c.bf16 %v1401, %v1401
        %v1410 = vpack.c.bf16 %v1402, %v1402
        %v1411 = vpack.c.bf16 %v1403, %v1403
        %1420 = vrot.lane.b32.xlu0 %v1404, 32
        %v1421 = vpop.permute.xlu0 %1420
        %1422 = vrot.lane.b32.xlu0 %v1405, 32
        %v1423 = vpop.permute.xlu0 %1422
        %1424 = vrot.lane.b32.xlu0 %v1406, 32
        %v1425 = vpop.permute.xlu0 %1424
        %1426 = vrot.lane.b32.xlu0 %v1407, 32
        %v1427 = vpop.permute.xlu0 %1426
        %1428 = vrot.lane.b32.xlu0 %v1408, 32
        %v1429 = vpop.permute.xlu0 %1428
        %1430 = vrot.lane.b32.xlu0 %v1409, 32
        %v1431 = vpop.permute.xlu0 %1430
        %1432 = vrot.lane.b32.xlu0 %v1410, 32
        %v1433 = vpop.permute.xlu0 %1432
        %1434 = vrot.lane.b32.xlu0 %v1411, 32
        %v1435 = vpop.permute.xlu0 %1434
        %1444 = vst.msk [vmem:[#allocation3] sm:$0xf] %vm693, %v1421
        %1445 = vst.msk [vmem:[#allocation3 + $0xc] sm:$0xf] %vm693, %v1423
        %1446 = vst.msk [vmem:[#allocation3 + $0x18] sm:$0xf] %vm693, %v1425
        %1447 = vst.msk [vmem:[#allocation3 + $0x24] sm:$0xf] %vm693, %v1427
        %1448 = vst.msk [vmem:[#allocation3 + $0x30] sm:$0xf] %vm693, %v1429
        %1449 = vst.msk [vmem:[#allocation3 + $0x3c] sm:$0xf] %vm693, %v1431
        %1450 = vst.msk [vmem:[#allocation3 + $0x48] sm:$0xf] %vm693, %v1433
        %1451 = vst.msk [vmem:[#allocation3 + $0x54] sm:$0xf] %vm693, %v1435
        %v1452 = vld [vmem:[#allocation2 + $0x2] sm:$0xff]
        %v1453 = vld [vmem:[#allocation2 + $0x12] sm:$0xff]
        %v1454 = vld [vmem:[#allocation2 + $0x22] sm:$0xff]
        %v1455 = vld [vmem:[#allocation2 + $0x32] sm:$0xff]
        %v1456 = vld [vmem:[#allocation2 + $0x42] sm:$0xff]
        %v1457 = vld [vmem:[#allocation2 + $0x52] sm:$0xff]
        %v1458 = vld [vmem:[#allocation2 + $0x62] sm:$0xff]
        %v1459 = vld [vmem:[#allocation2 + $0x72] sm:$0xff]
        %v1460 = vpack.c.bf16 %v1452, %v1452
        %v1461 = vpack.c.bf16 %v1453, %v1453
        %v1462 = vpack.c.bf16 %v1454, %v1454
        %v1463 = vpack.c.bf16 %v1455, %v1455
        %v1464 = vpack.c.bf16 %v1456, %v1456
        %v1465 = vpack.c.bf16 %v1457, %v1457
        %v1466 = vpack.c.bf16 %v1458, %v1458
        %v1467 = vpack.c.bf16 %v1459, %v1459
        %1476 = vrot.lane.b32.xlu0 %v1460, 64
        %v1477 = vpop.permute.xlu0 %1476
        %1478 = vrot.lane.b32.xlu0 %v1461, 64
        %v1479 = vpop.permute.xlu0 %1478
        %1480 = vrot.lane.b32.xlu0 %v1462, 64
        %v1481 = vpop.permute.xlu0 %1480
        %1482 = vrot.lane.b32.xlu0 %v1463, 64
        %v1483 = vpop.permute.xlu0 %1482
        %1484 = vrot.lane.b32.xlu0 %v1464, 64
        %v1485 = vpop.permute.xlu0 %1484
        %1486 = vrot.lane.b32.xlu0 %v1465, 64
        %v1487 = vpop.permute.xlu0 %1486
        %1488 = vrot.lane.b32.xlu0 %v1466, 64
        %v1489 = vpop.permute.xlu0 %1488
        %1490 = vrot.lane.b32.xlu0 %v1467, 64
        %v1491 = vpop.permute.xlu0 %1490
        %1500 = vst.msk [vmem:[#allocation3] sm:$0xf] %vm750, %v1477
        %1501 = vst.msk [vmem:[#allocation3 + $0xc] sm:$0xf] %vm750, %v1479
        %1502 = vst.msk [vmem:[#allocation3 + $0x18] sm:$0xf] %vm750, %v1481
        %1503 = vst.msk [vmem:[#allocation3 + $0x24] sm:$0xf] %vm750, %v1483
        %1504 = vst.msk [vmem:[#allocation3 + $0x30] sm:$0xf] %vm750, %v1485
        %1505 = vst.msk [vmem:[#allocation3 + $0x3c] sm:$0xf] %vm750, %v1487
        %1506 = vst.msk [vmem:[#allocation3 + $0x48] sm:$0xf] %vm750, %v1489
        %1507 = vst.msk [vmem:[#allocation3 + $0x54] sm:$0xf] %vm750, %v1491
        %v1508 = vld [vmem:[%s611] sm:$0xff]
        %v1509 = vld [vmem:[%s611 + $0x10] sm:$0xff]
        %v1510 = vld [vmem:[%s611 + $0x20] sm:$0xff]
        %v1511 = vld [vmem:[%s611 + $0x30] sm:$0xff]
        %v1512 = vld [vmem:[%s611 + $0x40] sm:$0xff]
        %v1513 = vld [vmem:[%s611 + $0x50] sm:$0xff]
        %v1514 = vld [vmem:[%s611 + $0x60] sm:$0xff]
        %v1515 = vld [vmem:[%s611 + $0x70] sm:$0xff]
        %v1516 = vpack.c.bf16 %v1508, %v1508
        %v1517 = vpack.c.bf16 %v1509, %v1509
        %v1518 = vpack.c.bf16 %v1510, %v1510
        %v1519 = vpack.c.bf16 %v1511, %v1511
        %v1520 = vpack.c.bf16 %v1512, %v1512
        %v1521 = vpack.c.bf16 %v1513, %v1513
        %v1522 = vpack.c.bf16 %v1514, %v1514
        %v1523 = vpack.c.bf16 %v1515, %v1515
        %1532 = vrot.lane.b32.xlu0 %v1516, 96
        %v1533 = vpop.permute.xlu0 %1532
        %1534 = vrot.lane.b32.xlu0 %v1517, 96
        %v1535 = vpop.permute.xlu0 %1534
        %1536 = vrot.lane.b32.xlu0 %v1518, 96
        %v1537 = vpop.permute.xlu0 %1536
        %1538 = vrot.lane.b32.xlu0 %v1519, 96
        %v1539 = vpop.permute.xlu0 %1538
        %1540 = vrot.lane.b32.xlu0 %v1520, 96
        %v1541 = vpop.permute.xlu0 %1540
        %1542 = vrot.lane.b32.xlu0 %v1521, 96
        %v1543 = vpop.permute.xlu0 %1542
        %1544 = vrot.lane.b32.xlu0 %v1522, 96
        %v1545 = vpop.permute.xlu0 %1544
        %1546 = vrot.lane.b32.xlu0 %v1523, 96
        %v1547 = vpop.permute.xlu0 %1546
        %1556 = vst.msk [vmem:[#allocation3] sm:$0xf] %vm807, %v1533
        %1557 = vst.msk [vmem:[#allocation3 + $0xc] sm:$0xf] %vm807, %v1535
        %1558 = vst.msk [vmem:[#allocation3 + $0x18] sm:$0xf] %vm807, %v1537
        %1559 = vst.msk [vmem:[#allocation3 + $0x24] sm:$0xf] %vm807, %v1539
        %1560 = vst.msk [vmem:[#allocation3 + $0x30] sm:$0xf] %vm807, %v1541
        %1561 = vst.msk [vmem:[#allocation3 + $0x3c] sm:$0xf] %vm807, %v1543
        %1562 = vst.msk [vmem:[#allocation3 + $0x48] sm:$0xf] %vm807, %v1545
        %1563 = vst.msk [vmem:[#allocation3 + $0x54] sm:$0xf] %vm807, %v1547
        %v1564 = vld [vmem:[%s611 + $0x1] sm:$0xff]
        %v1565 = vld [vmem:[%s611 + $0x11] sm:$0xff]
        %v1566 = vld [vmem:[%s611 + $0x21] sm:$0xff]
        %v1567 = vld [vmem:[%s611 + $0x31] sm:$0xff]
        %v1568 = vld [vmem:[%s611 + $0x41] sm:$0xff]
        %v1569 = vld [vmem:[%s611 + $0x51] sm:$0xff]
        %v1570 = vld [vmem:[%s611 + $0x61] sm:$0xff]
        %v1571 = vld [vmem:[%s611 + $0x71] sm:$0xff]
        %v1572 = vpack.c.bf16 %v1564, %v1564
        %v1573 = vpack.c.bf16 %v1565, %v1565
        %v1574 = vpack.c.bf16 %v1566, %v1566
        %v1575 = vpack.c.bf16 %v1567, %v1567
        %v1576 = vpack.c.bf16 %v1568, %v1568
        %v1577 = vpack.c.bf16 %v1569, %v1569
        %v1578 = vpack.c.bf16 %v1570, %v1570
        %v1579 = vpack.c.bf16 %v1571, %v1571
        %1580 = vst.msk [vmem:[#allocation3 + $0x4] sm:$0xf] %vm636, %v1572
        %1581 = vst.msk [vmem:[#allocation3 + $0x10] sm:$0xf] %vm636, %v1573
        %1582 = vst.msk [vmem:[#allocation3 + $0x1c] sm:$0xf] %vm636, %v1574
        %1583 = vst.msk [vmem:[#allocation3 + $0x28] sm:$0xf] %vm636, %v1575
        %1584 = vst.msk [vmem:[#allocation3 + $0x34] sm:$0xf] %vm636, %v1576
        %1585 = vst.msk [vmem:[#allocation3 + $0x40] sm:$0xf] %vm636, %v1577
        %1586 = vst.msk [vmem:[#allocation3 + $0x4c] sm:$0xf] %vm636, %v1578
        %1587 = vst.msk [vmem:[#allocation3 + $0x58] sm:$0xf] %vm636, %v1579
        %v1588 = vld [vmem:[%s611 + $0x2] sm:$0xff]
        %v1589 = vld [vmem:[%s611 + $0x12] sm:$0xff]
        %v1590 = vld [vmem:[%s611 + $0x22] sm:$0xff]
        %v1591 = vld [vmem:[%s611 + $0x32] sm:$0xff]
        %v1592 = vld [vmem:[%s611 + $0x42] sm:$0xff]
        %v1593 = vld [vmem:[%s611 + $0x52] sm:$0xff]
        %v1594 = vld [vmem:[%s611 + $0x62] sm:$0xff]
        %v1595 = vld [vmem:[%s611 + $0x72] sm:$0xff]
        %v1596 = vpack.c.bf16 %v1588, %v1588
        %v1597 = vpack.c.bf16 %v1589, %v1589
        %v1598 = vpack.c.bf16 %v1590, %v1590
        %v1599 = vpack.c.bf16 %v1591, %v1591
        %v1600 = vpack.c.bf16 %v1592, %v1592
        %v1601 = vpack.c.bf16 %v1593, %v1593
        %v1602 = vpack.c.bf16 %v1594, %v1594
        %v1603 = vpack.c.bf16 %v1595, %v1595
        %1612 = vrot.lane.b32.xlu0 %v1596, 32
        %v1613 = vpop.permute.xlu0 %1612
        %1614 = vrot.lane.b32.xlu0 %v1597, 32
        %v1615 = vpop.permute.xlu0 %1614
        %1616 = vrot.lane.b32.xlu0 %v1598, 32
        %v1617 = vpop.permute.xlu0 %1616
        %1618 = vrot.lane.b32.xlu0 %v1599, 32
        %v1619 = vpop.permute.xlu0 %1618
        %1620 = vrot.lane.b32.xlu0 %v1600, 32
        %v1621 = vpop.permute.xlu0 %1620
        %1622 = vrot.lane.b32.xlu0 %v1601, 32
        %v1623 = vpop.permute.xlu0 %1622
        %1624 = vrot.lane.b32.xlu0 %v1602, 32
        %v1625 = vpop.permute.xlu0 %1624
        %1626 = vrot.lane.b32.xlu0 %v1603, 32
        %v1627 = vpop.permute.xlu0 %1626
        %1636 = vst.msk [vmem:[#allocation3 + $0x4] sm:$0xf] %vm693, %v1613
        %1637 = vst.msk [vmem:[#allocation3 + $0x10] sm:$0xf] %vm693, %v1615
        %1638 = vst.msk [vmem:[#allocation3 + $0x1c] sm:$0xf] %vm693, %v1617
        %1639 = vst.msk [vmem:[#allocation3 + $0x28] sm:$0xf] %vm693, %v1619
        %1640 = vst.msk [vmem:[#allocation3 + $0x34] sm:$0xf] %vm693, %v1621
        %1641 = vst.msk [vmem:[#allocation3 + $0x40] sm:$0xf] %vm693, %v1623
        %1642 = vst.msk [vmem:[#allocation3 + $0x4c] sm:$0xf] %vm693, %v1625
        %1643 = vst.msk [vmem:[#allocation3 + $0x58] sm:$0xf] %vm693, %v1627
        %v1644 = vld [vmem:[%s896] sm:$0xff]
        %v1645 = vld [vmem:[%s896 + $0x10] sm:$0xff]
        %v1646 = vld [vmem:[%s896 + $0x20] sm:$0xff]
        %v1647 = vld [vmem:[%s896 + $0x30] sm:$0xff]
        %v1648 = vld [vmem:[%s896 + $0x40] sm:$0xff]
        %v1649 = vld [vmem:[%s896 + $0x50] sm:$0xff]
        %v1650 = vld [vmem:[%s896 + $0x60] sm:$0xff]
        %v1651 = vld [vmem:[%s896 + $0x70] sm:$0xff]
        %v1652 = vpack.c.bf16 %v1644, %v1644
        %v1653 = vpack.c.bf16 %v1645, %v1645
        %v1654 = vpack.c.bf16 %v1646, %v1646
        %v1655 = vpack.c.bf16 %v1647, %v1647
        %v1656 = vpack.c.bf16 %v1648, %v1648
        %v1657 = vpack.c.bf16 %v1649, %v1649
        %v1658 = vpack.c.bf16 %v1650, %v1650
        %v1659 = vpack.c.bf16 %v1651, %v1651
        %1668 = vrot.lane.b32.xlu0 %v1652, 64
        %v1669 = vpop.permute.xlu0 %1668
        %1670 = vrot.lane.b32.xlu0 %v1653, 64
        %v1671 = vpop.permute.xlu0 %1670
        %1672 = vrot.lane.b32.xlu0 %v1654, 64
        %v1673 = vpop.permute.xlu0 %1672
        %1674 = vrot.lane.b32.xlu0 %v1655, 64
        %v1675 = vpop.permute.xlu0 %1674
        %1676 = vrot.lane.b32.xlu0 %v1656, 64
        %v1677 = vpop.permute.xlu0 %1676
        %1678 = vrot.lane.b32.xlu0 %v1657, 64
        %v1679 = vpop.permute.xlu0 %1678
        %1680 = vrot.lane.b32.xlu0 %v1658, 64
        %v1681 = vpop.permute.xlu0 %1680
        %1682 = vrot.lane.b32.xlu0 %v1659, 64
        %v1683 = vpop.permute.xlu0 %1682
        %1692 = vst.msk [vmem:[#allocation3 + $0x4] sm:$0xf] %vm750, %v1669
        %1693 = vst.msk [vmem:[#allocation3 + $0x10] sm:$0xf] %vm750, %v1671
        %1694 = vst.msk [vmem:[#allocation3 + $0x1c] sm:$0xf] %vm750, %v1673
        %1695 = vst.msk [vmem:[#allocation3 + $0x28] sm:$0xf] %vm750, %v1675
        %1696 = vst.msk [vmem:[#allocation3 + $0x34] sm:$0xf] %vm750, %v1677
        %1697 = vst.msk [vmem:[#allocation3 + $0x40] sm:$0xf] %vm750, %v1679
        %1698 = vst.msk [vmem:[#allocation3 + $0x4c] sm:$0xf] %vm750, %v1681
        %1699 = vst.msk [vmem:[#allocation3 + $0x58] sm:$0xf] %vm750, %v1683
        %v1700 = vld [vmem:[%s896 + $0x1] sm:$0xff]
        %v1701 = vld [vmem:[%s896 + $0x11] sm:$0xff]
        %v1702 = vld [vmem:[%s896 + $0x21] sm:$0xff]
        %v1703 = vld [vmem:[%s896 + $0x31] sm:$0xff]
        %v1704 = vld [vmem:[%s896 + $0x41] sm:$0xff]
        %v1705 = vld [vmem:[%s896 + $0x51] sm:$0xff]
        %v1706 = vld [vmem:[%s896 + $0x61] sm:$0xff]
        %v1707 = vld [vmem:[%s896 + $0x71] sm:$0xff]
        %v1708 = vpack.c.bf16 %v1700, %v1700
        %v1709 = vpack.c.bf16 %v1701, %v1701
        %v1710 = vpack.c.bf16 %v1702, %v1702
        %v1711 = vpack.c.bf16 %v1703, %v1703
        %v1712 = vpack.c.bf16 %v1704, %v1704
        %v1713 = vpack.c.bf16 %v1705, %v1705
        %v1714 = vpack.c.bf16 %v1706, %v1706
        %v1715 = vpack.c.bf16 %v1707, %v1707
        %1724 = vrot.lane.b32.xlu0 %v1708, 96
        %v1725 = vpop.permute.xlu0 %1724
        %1726 = vrot.lane.b32.xlu0 %v1709, 96
        %v1727 = vpop.permute.xlu0 %1726
        %1728 = vrot.lane.b32.xlu0 %v1710, 96
        %v1729 = vpop.permute.xlu0 %1728
        %1730 = vrot.lane.b32.xlu0 %v1711, 96
        %v1731 = vpop.permute.xlu0 %1730
        %1732 = vrot.lane.b32.xlu0 %v1712, 96
        %v1733 = vpop.permute.xlu0 %1732
        %1734 = vrot.lane.b32.xlu0 %v1713, 96
        %v1735 = vpop.permute.xlu0 %1734
        %1736 = vrot.lane.b32.xlu0 %v1714, 96
        %v1737 = vpop.permute.xlu0 %1736
        %1738 = vrot.lane.b32.xlu0 %v1715, 96
        %v1739 = vpop.permute.xlu0 %1738
        %1748 = vst.msk [vmem:[#allocation3 + $0x4] sm:$0xf] %vm807, %v1725
        %1749 = vst.msk [vmem:[#allocation3 + $0x10] sm:$0xf] %vm807, %v1727
        %1750 = vst.msk [vmem:[#allocation3 + $0x1c] sm:$0xf] %vm807, %v1729
        %1751 = vst.msk [vmem:[#allocation3 + $0x28] sm:$0xf] %vm807, %v1731
        %1752 = vst.msk [vmem:[#allocation3 + $0x34] sm:$0xf] %vm807, %v1733
        %1753 = vst.msk [vmem:[#allocation3 + $0x40] sm:$0xf] %vm807, %v1735
        %1754 = vst.msk [vmem:[#allocation3 + $0x4c] sm:$0xf] %vm807, %v1737
        %1755 = vst.msk [vmem:[#allocation3 + $0x58] sm:$0xf] %vm807, %v1739
        %v1756 = vld [vmem:[%s896 + $0x2] sm:$0xff]
        %v1757 = vld [vmem:[%s896 + $0x12] sm:$0xff]
        %v1758 = vld [vmem:[%s896 + $0x22] sm:$0xff]
        %v1759 = vld [vmem:[%s896 + $0x32] sm:$0xff]
        %v1760 = vld [vmem:[%s896 + $0x42] sm:$0xff]
        %v1761 = vld [vmem:[%s896 + $0x52] sm:$0xff]
        %v1762 = vld [vmem:[%s896 + $0x62] sm:$0xff]
        %v1763 = vld [vmem:[%s896 + $0x72] sm:$0xff]
        %v1764 = vpack.c.bf16 %v1756, %v1756
        %v1765 = vpack.c.bf16 %v1757, %v1757
        %v1766 = vpack.c.bf16 %v1758, %v1758
        %v1767 = vpack.c.bf16 %v1759, %v1759
        %v1768 = vpack.c.bf16 %v1760, %v1760
        %v1769 = vpack.c.bf16 %v1761, %v1761
        %v1770 = vpack.c.bf16 %v1762, %v1762
        %v1771 = vpack.c.bf16 %v1763, %v1763
        %1772 = vst.msk [vmem:[#allocation3 + $0x8] sm:$0xf] %vm636, %v1764
        %1773 = vst.msk [vmem:[#allocation3 + $0x14] sm:$0xf] %vm636, %v1765
        %1774 = vst.msk [vmem:[#allocation3 + $0x20] sm:$0xf] %vm636, %v1766
        %1775 = vst.msk [vmem:[#allocation3 + $0x2c] sm:$0xf] %vm636, %v1767
        %1776 = vst.msk [vmem:[#allocation3 + $0x38] sm:$0xf] %vm636, %v1768
        %1777 = vst.msk [vmem:[#allocation3 + $0x44] sm:$0xf] %vm636, %v1769
        %1778 = vst.msk [vmem:[#allocation3 + $0x50] sm:$0xf] %vm636, %v1770
        %1779 = vst.msk [vmem:[#allocation3 + $0x5c] sm:$0xf] %vm636, %v1771
        %v1780 = vld [vmem:[#allocation3] sm:$0xff]
        %v1781 = vld [vmem:[#allocation3 + $0x8] sm:$0xf]
        %v1782 = vld [vmem:[#allocation3 + $0xc] sm:$0xff]
        %v1783 = vld [vmem:[#allocation3 + $0x14] sm:$0xf]
        %v1784 = vld [vmem:[#allocation3 + $0x18] sm:$0xff]
        %v1785 = vld [vmem:[#allocation3 + $0x20] sm:$0xf]
        %v1786 = vld [vmem:[#allocation3 + $0x24] sm:$0xff]
        %v1787 = vld [vmem:[#allocation3 + $0x2c] sm:$0xf]
        %v1788 = vld [vmem:[#allocation3 + $0x30] sm:$0xff]
        %v1789 = vld [vmem:[#allocation3 + $0x38] sm:$0xf]
        %v1790 = vld [vmem:[#allocation3 + $0x3c] sm:$0xff]
        %v1791 = vld [vmem:[#allocation3 + $0x44] sm:$0xf]
        %v1792 = vld [vmem:[#allocation3 + $0x48] sm:$0xff]
        %v1793 = vld [vmem:[#allocation3 + $0x50] sm:$0xf]
        %v1794 = vld [vmem:[#allocation3 + $0x54] sm:$0xff]
        %v1795 = vld [vmem:[#allocation3 + $0x5c] sm:$0xf]
        %v1797 = vperm.slane %v1363, 0
        %v1815 = vunpack.c.l.b16 %v1780
        %v1816 = vunpack.c.h.b16 %v1780
        %v1817 = vunpack.c.l.b16 %v1781
        %v1818 = vunpack.c.l.b16 %v1782
        %v1819 = vunpack.c.h.b16 %v1782
        %v1820 = vunpack.c.l.b16 %v1783
        %v1821 = vunpack.c.l.b16 %v1784
        %v1822 = vunpack.c.h.b16 %v1784
        %v1823 = vunpack.c.l.b16 %v1785
        %v1824 = vunpack.c.l.b16 %v1786
        %v1825 = vunpack.c.h.b16 %v1786
        %v1826 = vunpack.c.l.b16 %v1787
        %v1827 = vunpack.c.l.b16 %v1788
        %v1828 = vunpack.c.h.b16 %v1788
        %v1829 = vunpack.c.l.b16 %v1789
        %v1830 = vunpack.c.l.b16 %v1790
        %v1831 = vunpack.c.h.b16 %v1790
        %v1832 = vunpack.c.l.b16 %v1791
        %v1833 = vunpack.c.l.b16 %v1792
        %v1834 = vunpack.c.h.b16 %v1792
        %v1835 = vunpack.c.l.b16 %v1793
        %v1836 = vunpack.c.l.b16 %v1794
        %v1837 = vunpack.c.h.b16 %v1794
        %v1838 = vunpack.c.l.b16 %v1795
        %v1839 = vpack.c.b16 %v1818, %v1815
        %v1840 = vpack.c.b16 %v1819, %v1816
        %v1841 = vpack.c.b16 %v1820, %v1817
        %v1842 = vpack.c.b16 %v1824, %v1821
        %v1843 = vpack.c.b16 %v1825, %v1822
        %v1844 = vpack.c.b16 %v1826, %v1823
        %v1845 = vpack.c.b16 %v1830, %v1827
        %v1846 = vpack.c.b16 %v1831, %v1828
        %v1847 = vpack.c.b16 %v1832, %v1829
        %v1848 = vpack.c.b16 %v1836, %v1833
        %v1849 = vpack.c.b16 %v1837, %v1834
        %v1850 = vpack.c.b16 %v1838, %v1835
        %v1895 = vunpack.c.l.b16 %v1327
        %v1896 = vunpack.c.l.b16 %v1328
        %v1897 = vunpack.c.l.b16 %v1329
        %v1898 = vunpack.c.l.b16 %v1330
        %v1899 = vunpack.c.l.b16 %v1331
        %v1900 = vunpack.c.l.b16 %v1332
        %v1901 = vunpack.c.l.b16 %v1333
        %v1902 = vunpack.c.l.b16 %v1334
        %v1903 = vunpack.c.l.b16 %v1335
        %v1904 = vunpack.c.l.b16 %v1336
        %v1905 = vunpack.c.l.b16 %v1337
        %v1906 = vunpack.c.l.b16 %v1338
        %v1907 = vunpack.c.l.b16 %v1339
        %v1908 = vunpack.c.l.b16 %v1340
        %v1909 = vunpack.c.l.b16 %v1341
        %v1910 = vunpack.c.l.b16 %v1342
        %v1911 = vunpack.c.l.b16 %v1343
        %v1912 = vunpack.c.l.b16 %v1344
        %v1913 = vunpack.c.l.b16 %v1345
        %v1914 = vunpack.c.l.b16 %v1346
        %v1915 = vunpack.c.l.b16 %v1347
        %v1916 = vunpack.c.l.b16 %v1348
        %v1917 = vunpack.c.l.b16 %v1349
        %v1918 = vunpack.c.l.b16 %v1350
        %v1919 = vunpack.c.l.b16 %v1351
        %v1920 = vunpack.c.l.b16 %v1352
        %v1921 = vunpack.c.l.b16 %v1353
        %v1922 = vunpack.c.l.b16 %v1354
        %v1923 = vunpack.c.l.b16 %v1355
        %v1924 = vunpack.c.l.b16 %v1356
        %v1925 = vunpack.c.l.b16 %v1357
        %v1926 = vunpack.c.l.b16 %v1358
        %v1927 = vunpack.c.l.b16 %v1359
        %v1928 = vunpack.c.l.b16 %v1360
        %v1929 = vunpack.c.l.b16 %v1361
        %v1930 = vunpack.c.l.b16 %v1362
        %v1931 = vpack.c.b16 %v1896, %v1895
        %v1932 = vpack.c.b16 %v1898, %v1897
        %v1933 = vpack.c.b16 %v1900, %v1899
        %v1934 = vpack.c.b16 %v1902, %v1901
        %v1935 = vpack.c.b16 %v1904, %v1903
        %v1936 = vpack.c.b16 %v1906, %v1905
        %v1937 = vpack.c.b16 %v1908, %v1907
        %v1938 = vpack.c.b16 %v1910, %v1909
        %v1939 = vpack.c.b16 %v1912, %v1911
        %v1940 = vpack.c.b16 %v1914, %v1913
        %v1941 = vpack.c.b16 %v1916, %v1915
        %v1942 = vpack.c.b16 %v1918, %v1917
        %v1943 = vpack.c.b16 %v1920, %v1919
        %v1944 = vpack.c.b16 %v1922, %v1921
        %v1945 = vpack.c.b16 %v1924, %v1923
        %v1946 = vpack.c.b16 %v1926, %v1925
        %v1947 = vpack.c.b16 %v1928, %v1927
        %v1948 = vpack.c.b16 %v1930, %v1929
        %v1968 = vsel %vm544, %v1841, 0
        %v1971 = vsel %vm544, %v1844, 0
        %v1974 = vsel %vm544, %v1847, 0
        %v1977 = vsel %vm544, %v1850, 0
        %1979 = vmatpush.bf16.msra.mxu0 %v1938
        %1980 = vmatpush.bf16.msra.mxu0 %v1937
        %1981 = vmatpush.bf16.msra.mxu0 %v1936
        %1982 = vmatpush.bf16.msra.mxu0 %v1935
        %1983 = vmatpush.bf16.msra.mxu0 %v1934
        %1984 = vmatpush.bf16.msra.mxu0 %v1933
        %1985 = vmatpush.bf16.msra.mxu0 %v1932
        %1986 = vmatpush.bf16.msra.mxu0 %v1931
        %1987 = vmatmul.bf16.gmra.mxu0 %v1839
        %v1988 = vpop.f32.mrf.mxu0
        %v1989 = vadd.f32 %v1797, %v1988
        %v1990 = vpop.f32.mrf.mxu0
        %v1991 = vadd.f32 %v1797, %v1990
        %1992 = vmatmul.bf16.gmra.mxu0 %v1842
        %v1993 = vpop.f32.mrf.mxu0
        %v1994 = vadd.f32 %v1797, %v1993
        %v1995 = vpop.f32.mrf.mxu0
        %v1996 = vadd.f32 %v1797, %v1995
        %1997 = vmatmul.bf16.gmra.mxu0 %v1845
        %v1998 = vpop.f32.mrf.mxu0
        %v1999 = vadd.f32 %v1797, %v1998
        %v2000 = vpop.f32.mrf.mxu0
        %v2001 = vadd.f32 %v1797, %v2000
        %2002 = vmatmul.bf16.gmra.mxu0 %v1848
        %v2003 = vpop.f32.mrf.mxu0
        %v2004 = vadd.f32 %v1797, %v2003
        %v2005 = vpop.f32.mrf.mxu0
        %v2006 = vadd.f32 %v1797, %v2005
        %2007 = vdwg.mxu0
        %2008 = vmatpush.bf16.msra.mxu0 %v1946
        %2009 = vmatpush.bf16.msra.mxu0 %v1945
        %2010 = vmatpush.bf16.msra.mxu0 %v1944
        %2011 = vmatpush.bf16.msra.mxu0 %v1943
        %2012 = vmatpush.bf16.msra.mxu0 %v1942
        %2013 = vmatpush.bf16.msra.mxu0 %v1941
        %2014 = vmatpush.bf16.msra.mxu0 %v1940
        %2015 = vmatpush.bf16.msra.mxu0 %v1939
        %2016 = vmatmul.bf16.gmra.mxu0 %v1840
        %v2017 = vpop.f32.mrf.mxu0
        %v2018 = vadd.f32 %v1989, %v2017
        %v2019 = vpop.f32.mrf.mxu0
        %v2020 = vadd.f32 %v1991, %v2019
        %2021 = vmatmul.bf16.gmra.mxu0 %v1843
        %v2022 = vpop.f32.mrf.mxu0
        %v2023 = vadd.f32 %v1994, %v2022
        %v2024 = vpop.f32.mrf.mxu0
        %v2025 = vadd.f32 %v1996, %v2024
        %2026 = vmatmul.bf16.gmra.mxu0 %v1846
        %v2027 = vpop.f32.mrf.mxu0
        %v2028 = vadd.f32 %v1999, %v2027
        %v2029 = vpop.f32.mrf.mxu0
        %v2030 = vadd.f32 %v2001, %v2029
        %2031 = vmatmul.bf16.gmra.mxu0 %v1849
        %v2032 = vpop.f32.mrf.mxu0
        %v2033 = vadd.f32 %v2004, %v2032
        %v2034 = vpop.f32.mrf.mxu0
        %v2035 = vadd.f32 %v2006, %v2034
        %2036 = vdwg.mxu0
        %2037 = vmatpush.bf16.msra.mxu0 0
        %2038 = vmatpush.bf16.msra.mxu0 0
        %2039 = vmatpush.bf16.msra.mxu0 0
        %2040 = vmatpush.bf16.msra.mxu0 0
        %2041 = vmatpush.bf16.msra.mxu0 0
        %2042 = vmatpush.bf16.msra.mxu0 0
        %2043 = vmatpush.bf16.msra.mxu0 %v1948
        %2044 = vmatpush.bf16.msra.mxu0 %v1947
        %2045 = vmatmul.bf16.gmra.mxu0 %v1968
        %v2046 = vpop.f32.mrf.mxu0
        %v2047 = vadd.f32 %v2018, %v2046
        %v2048 = vpop.f32.mrf.mxu0
        %v2049 = vadd.f32 %v2020, %v2048
        %2050 = vmatmul.bf16.gmra.mxu0 %v1971
        %v2051 = vpop.f32.mrf.mxu0
        %v2052 = vadd.f32 %v2023, %v2051
        %v2053 = vpop.f32.mrf.mxu0
        %v2054 = vadd.f32 %v2025, %v2053
        %2055 = vmatmul.bf16.gmra.mxu0 %v1974
        %v2056 = vpop.f32.mrf.mxu0
        %v2057 = vadd.f32 %v2028, %v2056
        %v2058 = vpop.f32.mrf.mxu0
        %v2059 = vadd.f32 %v2030, %v2058
        %2060 = vmatmul.bf16.gmra.mxu0 %v1977
        %v2061 = vpop.f32.mrf.mxu0
        %v2062 = vadd.f32 %v2033, %v2061
        %v2063 = vpop.f32.mrf.mxu0
        %v2064 = vadd.f32 %v2035, %v2063
        %2065 = vdwg.mxu0
        %v2066 = vmax.f32 %v2047, 0.0
        %v2067 = vmax.f32 %v2049, 0.0
        %v2068 = vmax.f32 %v2052, 0.0
        %v2069 = vmax.f32 %v2054, 0.0
        %v2070 = vmax.f32 %v2057, 0.0
        %v2071 = vmax.f32 %v2059, 0.0
        %v2072 = vmax.f32 %v2062, 0.0
        %v2073 = vmax.f32 %v2064, 0.0
        %v2074 = vld [vmem:[#allocation10] sm:$0xf]
        %v2075 = vld [vmem:[#allocation10 + $0x4] sm:$0xf]
        %v2076 = vld [vmem:[#allocation10 + $0x8] sm:$0xf]
        %v2077 = vld [vmem:[#allocation10 + $0xc] sm:$0xf]
        %v2078 = vld [vmem:[#allocation10 + $0x10] sm:$0xf]
        %v2079 = vld [vmem:[#allocation10 + $0x14] sm:$0xf]
        %v2080 = vld [vmem:[#allocation10 + $0x18] sm:$0xf]
        %v2081 = vld [vmem:[#allocation10 + $0x1c] sm:$0xf]
        %v2082 = vld [vmem:[#allocation10 + $0x20] sm:$0xf]
        %v2083 = vld [vmem:[#allocation10 + $0x24] sm:$0xf]
        %v2084 = vld [vmem:[#allocation10 + $0x28] sm:$0xf]
        %v2085 = vld [vmem:[#allocation10 + $0x2c] sm:$0xf]
        %v2086 = vld [vmem:[#allocation10 + $0x30] sm:$0xf]
        %v2087 = vld [vmem:[#allocation10 + $0x34] sm:$0xf]
        %v2088 = vld [vmem:[#allocation10 + $0x38] sm:$0xf]
        %v2089 = vld [vmem:[#allocation10 + $0x3c] sm:$0xf]
        %v2090 = vld [vmem:[#allocation10 + $0x40] sm:$0xf]
        %v2091 = vld [vmem:[#allocation10 + $0x44] sm:$0xf]
        %v2092 = vld [vmem:[#allocation10 + $0x48] sm:$0xf]
        %v2093 = vld [vmem:[#allocation10 + $0x4c] sm:$0xf]
        %v2094 = vld [vmem:[#allocation10 + $0x50] sm:$0xf]
        %v2095 = vld [vmem:[#allocation10 + $0x54] sm:$0xf]
        %v2096 = vld [vmem:[#allocation10 + $0x58] sm:$0xf]
        %v2097 = vld [vmem:[#allocation10 + $0x5c] sm:$0xf]
        %v2098 = vld [vmem:[#allocation10 + $0x60] sm:$0xf]
        %v2099 = vld [vmem:[#allocation10 + $0x64] sm:$0xf]
        %v2100 = vld [vmem:[#allocation10 + $0x68] sm:$0xf]
        %v2101 = vld [vmem:[#allocation10 + $0x6c] sm:$0xf]
        %v2102 = vld [vmem:[#allocation10 + $0x70] sm:$0xf]
        %v2103 = vld [vmem:[#allocation10 + $0x74] sm:$0xf]
        %v2104 = vld [vmem:[#allocation10 + $0x78] sm:$0xf]
        %v2105 = vld [vmem:[#allocation10 + $0x7c] sm:$0xf]
        %v2106 = vld [vmem:[#allocation10 + $0x80] sm:$0xf]
        %v2107 = vld [vmem:[#allocation10 + $0x84] sm:$0xf]
        %v2108 = vld [vmem:[#allocation10 + $0x88] sm:$0xf]
        %v2109 = vld [vmem:[#allocation10 + $0x8c] sm:$0xf]
        %v2110 = vld [vmem:[%s6] sm:$0x1]
        %2111 = vst.msk [vmem:[%s611 + $0x1] sm:$0xff] %vm544, %v2066
        %2112 = vst.msk [vmem:[%s611 + $0x11] sm:$0xff] %vm544, %v2067
        %2113 = vst.msk [vmem:[%s611 + $0x21] sm:$0xff] %vm544, %v2068
        %2114 = vst.msk [vmem:[%s611 + $0x31] sm:$0xff] %vm544, %v2069
        %2115 = vst.msk [vmem:[%s611 + $0x41] sm:$0xff] %vm544, %v2070
        %2116 = vst.msk [vmem:[%s611 + $0x51] sm:$0xff] %vm544, %v2071
        %2117 = vst.msk [vmem:[%s611 + $0x61] sm:$0xff] %vm544, %v2072
        %2118 = vst.msk [vmem:[%s611 + $0x71] sm:$0xff] %vm544, %v2073
        %v2119 = vld [vmem:[#allocation2] sm:$0xff]
        %v2120 = vld [vmem:[#allocation2 + $0x10] sm:$0xff]
        %v2121 = vld [vmem:[#allocation2 + $0x20] sm:$0xff]
        %v2122 = vld [vmem:[#allocation2 + $0x30] sm:$0xff]
        %v2123 = vld [vmem:[#allocation2 + $0x40] sm:$0xff]
        %v2124 = vld [vmem:[#allocation2 + $0x50] sm:$0xff]
        %v2125 = vld [vmem:[#allocation2 + $0x60] sm:$0xff]
        %v2126 = vld [vmem:[#allocation2 + $0x70] sm:$0xff]
        %v2127 = vpack.c.bf16 %v2119, %v2119
        %v2128 = vpack.c.bf16 %v2120, %v2120
        %v2129 = vpack.c.bf16 %v2121, %v2121
        %v2130 = vpack.c.bf16 %v2122, %v2122
        %v2131 = vpack.c.bf16 %v2123, %v2123
        %v2132 = vpack.c.bf16 %v2124, %v2124
        %v2133 = vpack.c.bf16 %v2125, %v2125
        %v2134 = vpack.c.bf16 %v2126, %v2126
        %2135 = vst.msk [vmem:[#allocation3] sm:$0xf] %vm636, %v2127
        %2136 = vst.msk [vmem:[#allocation3 + $0xc] sm:$0xf] %vm636, %v2128
        %2137 = vst.msk [vmem:[#allocation3 + $0x18] sm:$0xf] %vm636, %v2129
        %2138 = vst.msk [vmem:[#allocation3 + $0x24] sm:$0xf] %vm636, %v2130
        %2139 = vst.msk [vmem:[#allocation3 + $0x30] sm:$0xf] %vm636, %v2131
        %2140 = vst.msk [vmem:[#allocation3 + $0x3c] sm:$0xf] %vm636, %v2132
        %2141 = vst.msk [vmem:[#allocation3 + $0x48] sm:$0xf] %vm636, %v2133
        %2142 = vst.msk [vmem:[#allocation3 + $0x54] sm:$0xf] %vm636, %v2134
        %v2143 = vld [vmem:[#allocation2 + $0x1] sm:$0xff]
        %v2144 = vld [vmem:[#allocation2 + $0x11] sm:$0xff]
        %v2145 = vld [vmem:[#allocation2 + $0x21] sm:$0xff]
        %v2146 = vld [vmem:[#allocation2 + $0x31] sm:$0xff]
        %v2147 = vld [vmem:[#allocation2 + $0x41] sm:$0xff]
        %v2148 = vld [vmem:[#allocation2 + $0x51] sm:$0xff]
        %v2149 = vld [vmem:[#allocation2 + $0x61] sm:$0xff]
        %v2150 = vld [vmem:[#allocation2 + $0x71] sm:$0xff]
        %v2151 = vpack.c.bf16 %v2143, %v2143
        %v2152 = vpack.c.bf16 %v2144, %v2144
        %v2153 = vpack.c.bf16 %v2145, %v2145
        %v2154 = vpack.c.bf16 %v2146, %v2146
        %v2155 = vpack.c.bf16 %v2147, %v2147
        %v2156 = vpack.c.bf16 %v2148, %v2148
        %v2157 = vpack.c.bf16 %v2149, %v2149
        %v2158 = vpack.c.bf16 %v2150, %v2150
        %2167 = vrot.lane.b32.xlu0 %v2151, 32
        %v2168 = vpop.permute.xlu0 %2167
        %2169 = vrot.lane.b32.xlu0 %v2152, 32
        %v2170 = vpop.permute.xlu0 %2169
        %2171 = vrot.lane.b32.xlu0 %v2153, 32
        %v2172 = vpop.permute.xlu0 %2171
        %2173 = vrot.lane.b32.xlu0 %v2154, 32
        %v2174 = vpop.permute.xlu0 %2173
        %2175 = vrot.lane.b32.xlu0 %v2155, 32
        %v2176 = vpop.permute.xlu0 %2175
        %2177 = vrot.lane.b32.xlu0 %v2156, 32
        %v2178 = vpop.permute.xlu0 %2177
        %2179 = vrot.lane.b32.xlu0 %v2157, 32
        %v2180 = vpop.permute.xlu0 %2179
        %2181 = vrot.lane.b32.xlu0 %v2158, 32
        %v2182 = vpop.permute.xlu0 %2181
        %2191 = vst.msk [vmem:[#allocation3] sm:$0xf] %vm693, %v2168
        %2192 = vst.msk [vmem:[#allocation3 + $0xc] sm:$0xf] %vm693, %v2170
        %2193 = vst.msk [vmem:[#allocation3 + $0x18] sm:$0xf] %vm693, %v2172
        %2194 = vst.msk [vmem:[#allocation3 + $0x24] sm:$0xf] %vm693, %v2174
        %2195 = vst.msk [vmem:[#allocation3 + $0x30] sm:$0xf] %vm693, %v2176
        %2196 = vst.msk [vmem:[#allocation3 + $0x3c] sm:$0xf] %vm693, %v2178
        %2197 = vst.msk [vmem:[#allocation3 + $0x48] sm:$0xf] %vm693, %v2180
        %2198 = vst.msk [vmem:[#allocation3 + $0x54] sm:$0xf] %vm693, %v2182
        %v2199 = vld [vmem:[#allocation2 + $0x2] sm:$0xff]
        %v2200 = vld [vmem:[#allocation2 + $0x12] sm:$0xff]
        %v2201 = vld [vmem:[#allocation2 + $0x22] sm:$0xff]
        %v2202 = vld [vmem:[#allocation2 + $0x32] sm:$0xff]
        %v2203 = vld [vmem:[#allocation2 + $0x42] sm:$0xff]
        %v2204 = vld [vmem:[#allocation2 + $0x52] sm:$0xff]
        %v2205 = vld [vmem:[#allocation2 + $0x62] sm:$0xff]
        %v2206 = vld [vmem:[#allocation2 + $0x72] sm:$0xff]
        %v2207 = vpack.c.bf16 %v2199, %v2199
        %v2208 = vpack.c.bf16 %v2200, %v2200
        %v2209 = vpack.c.bf16 %v2201, %v2201
        %v2210 = vpack.c.bf16 %v2202, %v2202
        %v2211 = vpack.c.bf16 %v2203, %v2203
        %v2212 = vpack.c.bf16 %v2204, %v2204
        %v2213 = vpack.c.bf16 %v2205, %v2205
        %v2214 = vpack.c.bf16 %v2206, %v2206
        %2223 = vrot.lane.b32.xlu0 %v2207, 64
        %v2224 = vpop.permute.xlu0 %2223
        %2225 = vrot.lane.b32.xlu0 %v2208, 64
        %v2226 = vpop.permute.xlu0 %2225
        %2227 = vrot.lane.b32.xlu0 %v2209, 64
        %v2228 = vpop.permute.xlu0 %2227
        %2229 = vrot.lane.b32.xlu0 %v2210, 64
        %v2230 = vpop.permute.xlu0 %2229
        %2231 = vrot.lane.b32.xlu0 %v2211, 64
        %v2232 = vpop.permute.xlu0 %2231
        %2233 = vrot.lane.b32.xlu0 %v2212, 64
        %v2234 = vpop.permute.xlu0 %2233
        %2235 = vrot.lane.b32.xlu0 %v2213, 64
        %v2236 = vpop.permute.xlu0 %2235
        %2237 = vrot.lane.b32.xlu0 %v2214, 64
        %v2238 = vpop.permute.xlu0 %2237
        %2247 = vst.msk [vmem:[#allocation3] sm:$0xf] %vm750, %v2224
        %2248 = vst.msk [vmem:[#allocation3 + $0xc] sm:$0xf] %vm750, %v2226
        %2249 = vst.msk [vmem:[#allocation3 + $0x18] sm:$0xf] %vm750, %v2228
        %2250 = vst.msk [vmem:[#allocation3 + $0x24] sm:$0xf] %vm750, %v2230
        %2251 = vst.msk [vmem:[#allocation3 + $0x30] sm:$0xf] %vm750, %v2232
        %2252 = vst.msk [vmem:[#allocation3 + $0x3c] sm:$0xf] %vm750, %v2234
        %2253 = vst.msk [vmem:[#allocation3 + $0x48] sm:$0xf] %vm750, %v2236
        %2254 = vst.msk [vmem:[#allocation3 + $0x54] sm:$0xf] %vm750, %v2238
        %v2255 = vld [vmem:[%s611] sm:$0xff]
        %v2256 = vld [vmem:[%s611 + $0x10] sm:$0xff]
        %v2257 = vld [vmem:[%s611 + $0x20] sm:$0xff]
        %v2258 = vld [vmem:[%s611 + $0x30] sm:$0xff]
        %v2259 = vld [vmem:[%s611 + $0x40] sm:$0xff]
        %v2260 = vld [vmem:[%s611 + $0x50] sm:$0xff]
        %v2261 = vld [vmem:[%s611 + $0x60] sm:$0xff]
        %v2262 = vld [vmem:[%s611 + $0x70] sm:$0xff]
        %v2263 = vpack.c.bf16 %v2255, %v2255
        %v2264 = vpack.c.bf16 %v2256, %v2256
        %v2265 = vpack.c.bf16 %v2257, %v2257
        %v2266 = vpack.c.bf16 %v2258, %v2258
        %v2267 = vpack.c.bf16 %v2259, %v2259
        %v2268 = vpack.c.bf16 %v2260, %v2260
        %v2269 = vpack.c.bf16 %v2261, %v2261
        %v2270 = vpack.c.bf16 %v2262, %v2262
        %2279 = vrot.lane.b32.xlu0 %v2263, 96
        %v2280 = vpop.permute.xlu0 %2279
        %2281 = vrot.lane.b32.xlu0 %v2264, 96
        %v2282 = vpop.permute.xlu0 %2281
        %2283 = vrot.lane.b32.xlu0 %v2265, 96
        %v2284 = vpop.permute.xlu0 %2283
        %2285 = vrot.lane.b32.xlu0 %v2266, 96
        %v2286 = vpop.permute.xlu0 %2285
        %2287 = vrot.lane.b32.xlu0 %v2267, 96
        %v2288 = vpop.permute.xlu0 %2287
        %2289 = vrot.lane.b32.xlu0 %v2268, 96
        %v2290 = vpop.permute.xlu0 %2289
        %2291 = vrot.lane.b32.xlu0 %v2269, 96
        %v2292 = vpop.permute.xlu0 %2291
        %2293 = vrot.lane.b32.xlu0 %v2270, 96
        %v2294 = vpop.permute.xlu0 %2293
        %2303 = vst.msk [vmem:[#allocation3] sm:$0xf] %vm807, %v2280
        %2304 = vst.msk [vmem:[#allocation3 + $0xc] sm:$0xf] %vm807, %v2282
        %2305 = vst.msk [vmem:[#allocation3 + $0x18] sm:$0xf] %vm807, %v2284
        %2306 = vst.msk [vmem:[#allocation3 + $0x24] sm:$0xf] %vm807, %v2286
        %2307 = vst.msk [vmem:[#allocation3 + $0x30] sm:$0xf] %vm807, %v2288
        %2308 = vst.msk [vmem:[#allocation3 + $0x3c] sm:$0xf] %vm807, %v2290
        %2309 = vst.msk [vmem:[#allocation3 + $0x48] sm:$0xf] %vm807, %v2292
        %2310 = vst.msk [vmem:[#allocation3 + $0x54] sm:$0xf] %vm807, %v2294
        %v2311 = vld [vmem:[%s611 + $0x1] sm:$0xff]
        %v2312 = vld [vmem:[%s611 + $0x11] sm:$0xff]
        %v2313 = vld [vmem:[%s611 + $0x21] sm:$0xff]
        %v2314 = vld [vmem:[%s611 + $0x31] sm:$0xff]
        %v2315 = vld [vmem:[%s611 + $0x41] sm:$0xff]
        %v2316 = vld [vmem:[%s611 + $0x51] sm:$0xff]
        %v2317 = vld [vmem:[%s611 + $0x61] sm:$0xff]
        %v2318 = vld [vmem:[%s611 + $0x71] sm:$0xff]
        %v2319 = vpack.c.bf16 %v2311, %v2311
        %v2320 = vpack.c.bf16 %v2312, %v2312
        %v2321 = vpack.c.bf16 %v2313, %v2313
        %v2322 = vpack.c.bf16 %v2314, %v2314
        %v2323 = vpack.c.bf16 %v2315, %v2315
        %v2324 = vpack.c.bf16 %v2316, %v2316
        %v2325 = vpack.c.bf16 %v2317, %v2317
        %v2326 = vpack.c.bf16 %v2318, %v2318
        %2327 = vst.msk [vmem:[#allocation3 + $0x4] sm:$0xf] %vm636, %v2319
        %2328 = vst.msk [vmem:[#allocation3 + $0x10] sm:$0xf] %vm636, %v2320
        %2329 = vst.msk [vmem:[#allocation3 + $0x1c] sm:$0xf] %vm636, %v2321
        %2330 = vst.msk [vmem:[#allocation3 + $0x28] sm:$0xf] %vm636, %v2322
        %2331 = vst.msk [vmem:[#allocation3 + $0x34] sm:$0xf] %vm636, %v2323
        %2332 = vst.msk [vmem:[#allocation3 + $0x40] sm:$0xf] %vm636, %v2324
        %2333 = vst.msk [vmem:[#allocation3 + $0x4c] sm:$0xf] %vm636, %v2325
        %2334 = vst.msk [vmem:[#allocation3 + $0x58] sm:$0xf] %vm636, %v2326
        %v2335 = vld [vmem:[%s611 + $0x2] sm:$0xff]
        %v2336 = vld [vmem:[%s611 + $0x12] sm:$0xff]
        %v2337 = vld [vmem:[%s611 + $0x22] sm:$0xff]
        %v2338 = vld [vmem:[%s611 + $0x32] sm:$0xff]
        %v2339 = vld [vmem:[%s611 + $0x42] sm:$0xff]
        %v2340 = vld [vmem:[%s611 + $0x52] sm:$0xff]
        %v2341 = vld [vmem:[%s611 + $0x62] sm:$0xff]
        %v2342 = vld [vmem:[%s611 + $0x72] sm:$0xff]
        %v2343 = vpack.c.bf16 %v2335, %v2335
        %v2344 = vpack.c.bf16 %v2336, %v2336
        %v2345 = vpack.c.bf16 %v2337, %v2337
        %v2346 = vpack.c.bf16 %v2338, %v2338
        %v2347 = vpack.c.bf16 %v2339, %v2339
        %v2348 = vpack.c.bf16 %v2340, %v2340
        %v2349 = vpack.c.bf16 %v2341, %v2341
        %v2350 = vpack.c.bf16 %v2342, %v2342
        %2359 = vrot.lane.b32.xlu0 %v2343, 32
        %v2360 = vpop.permute.xlu0 %2359
        %2361 = vrot.lane.b32.xlu0 %v2344, 32
        %v2362 = vpop.permute.xlu0 %2361
        %2363 = vrot.lane.b32.xlu0 %v2345, 32
        %v2364 = vpop.permute.xlu0 %2363
        %2365 = vrot.lane.b32.xlu0 %v2346, 32
        %v2366 = vpop.permute.xlu0 %2365
        %2367 = vrot.lane.b32.xlu0 %v2347, 32
        %v2368 = vpop.permute.xlu0 %2367
        %2369 = vrot.lane.b32.xlu0 %v2348, 32
        %v2370 = vpop.permute.xlu0 %2369
        %2371 = vrot.lane.b32.xlu0 %v2349, 32
        %v2372 = vpop.permute.xlu0 %2371
        %2373 = vrot.lane.b32.xlu0 %v2350, 32
        %v2374 = vpop.permute.xlu0 %2373
        %2383 = vst.msk [vmem:[#allocation3 + $0x4] sm:$0xf] %vm693, %v2360
        %2384 = vst.msk [vmem:[#allocation3 + $0x10] sm:$0xf] %vm693, %v2362
        %2385 = vst.msk [vmem:[#allocation3 + $0x1c] sm:$0xf] %vm693, %v2364
        %2386 = vst.msk [vmem:[#allocation3 + $0x28] sm:$0xf] %vm693, %v2366
        %2387 = vst.msk [vmem:[#allocation3 + $0x34] sm:$0xf] %vm693, %v2368
        %2388 = vst.msk [vmem:[#allocation3 + $0x40] sm:$0xf] %vm693, %v2370
        %2389 = vst.msk [vmem:[#allocation3 + $0x4c] sm:$0xf] %vm693, %v2372
        %2390 = vst.msk [vmem:[#allocation3 + $0x58] sm:$0xf] %vm693, %v2374
        %v2391 = vld [vmem:[%s896] sm:$0xff]
        %v2392 = vld [vmem:[%s896 + $0x10] sm:$0xff]
        %v2393 = vld [vmem:[%s896 + $0x20] sm:$0xff]
        %v2394 = vld [vmem:[%s896 + $0x30] sm:$0xff]
        %v2395 = vld [vmem:[%s896 + $0x40] sm:$0xff]
        %v2396 = vld [vmem:[%s896 + $0x50] sm:$0xff]
        %v2397 = vld [vmem:[%s896 + $0x60] sm:$0xff]
        %v2398 = vld [vmem:[%s896 + $0x70] sm:$0xff]
        %v2399 = vpack.c.bf16 %v2391, %v2391
        %v2400 = vpack.c.bf16 %v2392, %v2392
        %v2401 = vpack.c.bf16 %v2393, %v2393
        %v2402 = vpack.c.bf16 %v2394, %v2394
        %v2403 = vpack.c.bf16 %v2395, %v2395
        %v2404 = vpack.c.bf16 %v2396, %v2396
        %v2405 = vpack.c.bf16 %v2397, %v2397
        %v2406 = vpack.c.bf16 %v2398, %v2398
        %2415 = vrot.lane.b32.xlu0 %v2399, 64
        %v2416 = vpop.permute.xlu0 %2415
        %2417 = vrot.lane.b32.xlu0 %v2400, 64
        %v2418 = vpop.permute.xlu0 %2417
        %2419 = vrot.lane.b32.xlu0 %v2401, 64
        %v2420 = vpop.permute.xlu0 %2419
        %2421 = vrot.lane.b32.xlu0 %v2402, 64
        %v2422 = vpop.permute.xlu0 %2421
        %2423 = vrot.lane.b32.xlu0 %v2403, 64
        %v2424 = vpop.permute.xlu0 %2423
        %2425 = vrot.lane.b32.xlu0 %v2404, 64
        %v2426 = vpop.permute.xlu0 %2425
        %2427 = vrot.lane.b32.xlu0 %v2405, 64
        %v2428 = vpop.permute.xlu0 %2427
        %2429 = vrot.lane.b32.xlu0 %v2406, 64
        %v2430 = vpop.permute.xlu0 %2429
        %2439 = vst.msk [vmem:[#allocation3 + $0x4] sm:$0xf] %vm750, %v2416
        %2440 = vst.msk [vmem:[#allocation3 + $0x10] sm:$0xf] %vm750, %v2418
        %2441 = vst.msk [vmem:[#allocation3 + $0x1c] sm:$0xf] %vm750, %v2420
        %2442 = vst.msk [vmem:[#allocation3 + $0x28] sm:$0xf] %vm750, %v2422
        %2443 = vst.msk [vmem:[#allocation3 + $0x34] sm:$0xf] %vm750, %v2424
        %2444 = vst.msk [vmem:[#allocation3 + $0x40] sm:$0xf] %vm750, %v2426
        %2445 = vst.msk [vmem:[#allocation3 + $0x4c] sm:$0xf] %vm750, %v2428
        %2446 = vst.msk [vmem:[#allocation3 + $0x58] sm:$0xf] %vm750, %v2430
        %v2447 = vld [vmem:[%s896 + $0x1] sm:$0xff]
        %v2448 = vld [vmem:[%s896 + $0x11] sm:$0xff]
        %v2449 = vld [vmem:[%s896 + $0x21] sm:$0xff]
        %v2450 = vld [vmem:[%s896 + $0x31] sm:$0xff]
        %v2451 = vld [vmem:[%s896 + $0x41] sm:$0xff]
        %v2452 = vld [vmem:[%s896 + $0x51] sm:$0xff]
        %v2453 = vld [vmem:[%s896 + $0x61] sm:$0xff]
        %v2454 = vld [vmem:[%s896 + $0x71] sm:$0xff]
        %v2455 = vpack.c.bf16 %v2447, %v2447
        %v2456 = vpack.c.bf16 %v2448, %v2448
        %v2457 = vpack.c.bf16 %v2449, %v2449
        %v2458 = vpack.c.bf16 %v2450, %v2450
        %v2459 = vpack.c.bf16 %v2451, %v2451
        %v2460 = vpack.c.bf16 %v2452, %v2452
        %v2461 = vpack.c.bf16 %v2453, %v2453
        %v2462 = vpack.c.bf16 %v2454, %v2454
        %2471 = vrot.lane.b32.xlu0 %v2455, 96
        %v2472 = vpop.permute.xlu0 %2471
        %2473 = vrot.lane.b32.xlu0 %v2456, 96
        %v2474 = vpop.permute.xlu0 %2473
        %2475 = vrot.lane.b32.xlu0 %v2457, 96
        %v2476 = vpop.permute.xlu0 %2475
        %2477 = vrot.lane.b32.xlu0 %v2458, 96
        %v2478 = vpop.permute.xlu0 %2477
        %2479 = vrot.lane.b32.xlu0 %v2459, 96
        %v2480 = vpop.permute.xlu0 %2479
        %2481 = vrot.lane.b32.xlu0 %v2460, 96
        %v2482 = vpop.permute.xlu0 %2481
        %2483 = vrot.lane.b32.xlu0 %v2461, 96
        %v2484 = vpop.permute.xlu0 %2483
        %2485 = vrot.lane.b32.xlu0 %v2462, 96
        %v2486 = vpop.permute.xlu0 %2485
        %2495 = vst.msk [vmem:[#allocation3 + $0x4] sm:$0xf] %vm807, %v2472
        %2496 = vst.msk [vmem:[#allocation3 + $0x10] sm:$0xf] %vm807, %v2474
        %2497 = vst.msk [vmem:[#allocation3 + $0x1c] sm:$0xf] %vm807, %v2476
        %2498 = vst.msk [vmem:[#allocation3 + $0x28] sm:$0xf] %vm807, %v2478
        %2499 = vst.msk [vmem:[#allocation3 + $0x34] sm:$0xf] %vm807, %v2480
        %2500 = vst.msk [vmem:[#allocation3 + $0x40] sm:$0xf] %vm807, %v2482
        %2501 = vst.msk [vmem:[#allocation3 + $0x4c] sm:$0xf] %vm807, %v2484
        %2502 = vst.msk [vmem:[#allocation3 + $0x58] sm:$0xf] %vm807, %v2486
        %v2503 = vld [vmem:[%s896 + $0x2] sm:$0xff]
        %v2504 = vld [vmem:[%s896 + $0x12] sm:$0xff]
        %v2505 = vld [vmem:[%s896 + $0x22] sm:$0xff]
        %v2506 = vld [vmem:[%s896 + $0x32] sm:$0xff]
        %v2507 = vld [vmem:[%s896 + $0x42] sm:$0xff]
        %v2508 = vld [vmem:[%s896 + $0x52] sm:$0xff]
        %v2509 = vld [vmem:[%s896 + $0x62] sm:$0xff]
        %v2510 = vld [vmem:[%s896 + $0x72] sm:$0xff]
        %v2511 = vpack.c.bf16 %v2503, %v2503
        %v2512 = vpack.c.bf16 %v2504, %v2504
        %v2513 = vpack.c.bf16 %v2505, %v2505
        %v2514 = vpack.c.bf16 %v2506, %v2506
        %v2515 = vpack.c.bf16 %v2507, %v2507
        %v2516 = vpack.c.bf16 %v2508, %v2508
        %v2517 = vpack.c.bf16 %v2509, %v2509
        %v2518 = vpack.c.bf16 %v2510, %v2510
        %2519 = vst.msk [vmem:[#allocation3 + $0x8] sm:$0xf] %vm636, %v2511
        %2520 = vst.msk [vmem:[#allocation3 + $0x14] sm:$0xf] %vm636, %v2512
        %2521 = vst.msk [vmem:[#allocation3 + $0x20] sm:$0xf] %vm636, %v2513
        %2522 = vst.msk [vmem:[#allocation3 + $0x2c] sm:$0xf] %vm636, %v2514
        %2523 = vst.msk [vmem:[#allocation3 + $0x38] sm:$0xf] %vm636, %v2515
        %2524 = vst.msk [vmem:[#allocation3 + $0x44] sm:$0xf] %vm636, %v2516
        %2525 = vst.msk [vmem:[#allocation3 + $0x50] sm:$0xf] %vm636, %v2517
        %2526 = vst.msk [vmem:[#allocation3 + $0x5c] sm:$0xf] %vm636, %v2518
        %v2527 = vld [vmem:[#allocation3] sm:$0xff]
        %v2528 = vld [vmem:[#allocation3 + $0x8] sm:$0xf]
        %v2529 = vld [vmem:[#allocation3 + $0xc] sm:$0xff]
        %v2530 = vld [vmem:[#allocation3 + $0x14] sm:$0xf]
        %v2531 = vld [vmem:[#allocation3 + $0x18] sm:$0xff]
        %v2532 = vld [vmem:[#allocation3 + $0x20] sm:$0xf]
        %v2533 = vld [vmem:[#allocation3 + $0x24] sm:$0xff]
        %v2534 = vld [vmem:[#allocation3 + $0x2c] sm:$0xf]
        %v2535 = vld [vmem:[#allocation3 + $0x30] sm:$0xff]
        %v2536 = vld [vmem:[#allocation3 + $0x38] sm:$0xf]
        %v2537 = vld [vmem:[#allocation3 + $0x3c] sm:$0xff]
        %v2538 = vld [vmem:[#allocation3 + $0x44] sm:$0xf]
        %v2539 = vld [vmem:[#allocation3 + $0x48] sm:$0xff]
        %v2540 = vld [vmem:[#allocation3 + $0x50] sm:$0xf]
        %v2541 = vld [vmem:[#allocation3 + $0x54] sm:$0xff]
        %v2542 = vld [vmem:[#allocation3 + $0x5c] sm:$0xf]
        %v2544 = vperm.slane %v2110, 0
        %v2562 = vunpack.c.l.b16 %v2527
        %v2563 = vunpack.c.h.b16 %v2527
        %v2564 = vunpack.c.l.b16 %v2528
        %v2565 = vunpack.c.l.b16 %v2529
        %v2566 = vunpack.c.h.b16 %v2529
        %v2567 = vunpack.c.l.b16 %v2530
        %v2568 = vunpack.c.l.b16 %v2531
        %v2569 = vunpack.c.h.b16 %v2531
        %v2570 = vunpack.c.l.b16 %v2532
        %v2571 = vunpack.c.l.b16 %v2533
        %v2572 = vunpack.c.h.b16 %v2533
        %v2573 = vunpack.c.l.b16 %v2534
        %v2574 = vunpack.c.l.b16 %v2535
        %v2575 = vunpack.c.h.b16 %v2535
        %v2576 = vunpack.c.l.b16 %v2536
        %v2577 = vunpack.c.l.b16 %v2537
        %v2578 = vunpack.c.h.b16 %v2537
        %v2579 = vunpack.c.l.b16 %v2538
        %v2580 = vunpack.c.l.b16 %v2539
        %v2581 = vunpack.c.h.b16 %v2539
        %v2582 = vunpack.c.l.b16 %v2540
        %v2583 = vunpack.c.l.b16 %v2541
        %v2584 = vunpack.c.h.b16 %v2541
        %v2585 = vunpack.c.l.b16 %v2542
        %v2586 = vpack.c.b16 %v2565, %v2562
        %v2587 = vpack.c.b16 %v2566, %v2563
        %v2588 = vpack.c.b16 %v2567, %v2564
        %v2589 = vpack.c.b16 %v2571, %v2568
        %v2590 = vpack.c.b16 %v2572, %v2569
        %v2591 = vpack.c.b16 %v2573, %v2570
        %v2592 = vpack.c.b16 %v2577, %v2574
        %v2593 = vpack.c.b16 %v2578, %v2575
        %v2594 = vpack.c.b16 %v2579, %v2576
        %v2595 = vpack.c.b16 %v2583, %v2580
        %v2596 = vpack.c.b16 %v2584, %v2581
        %v2597 = vpack.c.b16 %v2585, %v2582
        %v2642 = vunpack.c.l.b16 %v2074
        %v2643 = vunpack.c.l.b16 %v2075
        %v2644 = vunpack.c.l.b16 %v2076
        %v2645 = vunpack.c.l.b16 %v2077
        %v2646 = vunpack.c.l.b16 %v2078
        %v2647 = vunpack.c.l.b16 %v2079
        %v2648 = vunpack.c.l.b16 %v2080
        %v2649 = vunpack.c.l.b16 %v2081
        %v2650 = vunpack.c.l.b16 %v2082
        %v2651 = vunpack.c.l.b16 %v2083
        %v2652 = vunpack.c.l.b16 %v2084
        %v2653 = vunpack.c.l.b16 %v2085
        %v2654 = vunpack.c.l.b16 %v2086
        %v2655 = vunpack.c.l.b16 %v2087
        %v2656 = vunpack.c.l.b16 %v2088
        %v2657 = vunpack.c.l.b16 %v2089
        %v2658 = vunpack.c.l.b16 %v2090
        %v2659 = vunpack.c.l.b16 %v2091
        %v2660 = vunpack.c.l.b16 %v2092
        %v2661 = vunpack.c.l.b16 %v2093
        %v2662 = vunpack.c.l.b16 %v2094
        %v2663 = vunpack.c.l.b16 %v2095
        %v2664 = vunpack.c.l.b16 %v2096
        %v2665 = vunpack.c.l.b16 %v2097
        %v2666 = vunpack.c.l.b16 %v2098
        %v2667 = vunpack.c.l.b16 %v2099
        %v2668 = vunpack.c.l.b16 %v2100
        %v2669 = vunpack.c.l.b16 %v2101
        %v2670 = vunpack.c.l.b16 %v2102
        %v2671 = vunpack.c.l.b16 %v2103
        %v2672 = vunpack.c.l.b16 %v2104
        %v2673 = vunpack.c.l.b16 %v2105
        %v2674 = vunpack.c.l.b16 %v2106
        %v2675 = vunpack.c.l.b16 %v2107
        %v2676 = vunpack.c.l.b16 %v2108
        %v2677 = vunpack.c.l.b16 %v2109
        %v2678 = vpack.c.b16 %v2643, %v2642
        %v2679 = vpack.c.b16 %v2645, %v2644
        %v2680 = vpack.c.b16 %v2647, %v2646
        %v2681 = vpack.c.b16 %v2649, %v2648
        %v2682 = vpack.c.b16 %v2651, %v2650
        %v2683 = vpack.c.b16 %v2653, %v2652
        %v2684 = vpack.c.b16 %v2655, %v2654
        %v2685 = vpack.c.b16 %v2657, %v2656
        %v2686 = vpack.c.b16 %v2659, %v2658
        %v2687 = vpack.c.b16 %v2661, %v2660
        %v2688 = vpack.c.b16 %v2663, %v2662
        %v2689 = vpack.c.b16 %v2665, %v2664
        %v2690 = vpack.c.b16 %v2667, %v2666
        %v2691 = vpack.c.b16 %v2669, %v2668
        %v2692 = vpack.c.b16 %v2671, %v2670
        %v2693 = vpack.c.b16 %v2673, %v2672
        %v2694 = vpack.c.b16 %v2675, %v2674
        %v2695 = vpack.c.b16 %v2677, %v2676
        %v2715 = vsel %vm544, %v2588, 0
        %v2718 = vsel %vm544, %v2591, 0
        %v2721 = vsel %vm544, %v2594, 0
        %v2724 = vsel %vm544, %v2597, 0
        %2726 = vmatpush.bf16.msra.mxu0 %v2685
        %2727 = vmatpush.bf16.msra.mxu0 %v2684
        %2728 = vmatpush.bf16.msra.mxu0 %v2683
        %2729 = vmatpush.bf16.msra.mxu0 %v2682
        %2730 = vmatpush.bf16.msra.mxu0 %v2681
        %2731 = vmatpush.bf16.msra.mxu0 %v2680
        %2732 = vmatpush.bf16.msra.mxu0 %v2679
        %2733 = vmatpush.bf16.msra.mxu0 %v2678
        %2734 = vmatmul.bf16.gmra.mxu0 %v2586
        %v2735 = vpop.f32.mrf.mxu0
        %v2736 = vadd.f32 %v2544, %v2735
        %v2737 = vpop.f32.mrf.mxu0
        %v2738 = vadd.f32 %v2544, %v2737
        %2739 = vmatmul.bf16.gmra.mxu0 %v2589
        %v2740 = vpop.f32.mrf.mxu0
        %v2741 = vadd.f32 %v2544, %v2740
        %v2742 = vpop.f32.mrf.mxu0
        %v2743 = vadd.f32 %v2544, %v2742
        %2744 = vmatmul.bf16.gmra.mxu0 %v2592
        %v2745 = vpop.f32.mrf.mxu0
        %v2746 = vadd.f32 %v2544, %v2745
        %v2747 = vpop.f32.mrf.mxu0
        %v2748 = vadd.f32 %v2544, %v2747
        %2749 = vmatmul.bf16.gmra.mxu0 %v2595
        %v2750 = vpop.f32.mrf.mxu0
        %v2751 = vadd.f32 %v2544, %v2750
        %v2752 = vpop.f32.mrf.mxu0
        %v2753 = vadd.f32 %v2544, %v2752
        %2754 = vdwg.mxu0
        %2755 = vmatpush.bf16.msra.mxu0 %v2693
        %2756 = vmatpush.bf16.msra.mxu0 %v2692
        %2757 = vmatpush.bf16.msra.mxu0 %v2691
        %2758 = vmatpush.bf16.msra.mxu0 %v2690
        %2759 = vmatpush.bf16.msra.mxu0 %v2689
        %2760 = vmatpush.bf16.msra.mxu0 %v2688
        %2761 = vmatpush.bf16.msra.mxu0 %v2687
        %2762 = vmatpush.bf16.msra.mxu0 %v2686
        %2763 = vmatmul.bf16.gmra.mxu0 %v2587
        %v2764 = vpop.f32.mrf.mxu0
        %v2765 = vadd.f32 %v2736, %v2764
        %v2766 = vpop.f32.mrf.mxu0
        %v2767 = vadd.f32 %v2738, %v2766
        %2768 = vmatmul.bf16.gmra.mxu0 %v2590
        %v2769 = vpop.f32.mrf.mxu0
        %v2770 = vadd.f32 %v2741, %v2769
        %v2771 = vpop.f32.mrf.mxu0
        %v2772 = vadd.f32 %v2743, %v2771
        %2773 = vmatmul.bf16.gmra.mxu0 %v2593
        %v2774 = vpop.f32.mrf.mxu0
        %v2775 = vadd.f32 %v2746, %v2774
        %v2776 = vpop.f32.mrf.mxu0
        %v2777 = vadd.f32 %v2748, %v2776
        %2778 = vmatmul.bf16.gmra.mxu0 %v2596
        %v2779 = vpop.f32.mrf.mxu0
        %v2780 = vadd.f32 %v2751, %v2779
        %v2781 = vpop.f32.mrf.mxu0
        %v2782 = vadd.f32 %v2753, %v2781
        %2783 = vdwg.mxu0
        %2784 = vmatpush.bf16.msra.mxu0 0
        %2785 = vmatpush.bf16.msra.mxu0 0
        %2786 = vmatpush.bf16.msra.mxu0 0
        %2787 = vmatpush.bf16.msra.mxu0 0
        %2788 = vmatpush.bf16.msra.mxu0 0
        %2789 = vmatpush.bf16.msra.mxu0 0
        %2790 = vmatpush.bf16.msra.mxu0 %v2695
        %2791 = vmatpush.bf16.msra.mxu0 %v2694
        %2792 = vmatmul.bf16.gmra.mxu0 %v2715
        %v2793 = vpop.f32.mrf.mxu0
        %v2794 = vadd.f32 %v2765, %v2793
        %v2795 = vpop.f32.mrf.mxu0
        %v2796 = vadd.f32 %v2767, %v2795
        %2797 = vmatmul.bf16.gmra.mxu0 %v2718
        %v2798 = vpop.f32.mrf.mxu0
        %v2799 = vadd.f32 %v2770, %v2798
        %v2800 = vpop.f32.mrf.mxu0
        %v2801 = vadd.f32 %v2772, %v2800
        %2802 = vmatmul.bf16.gmra.mxu0 %v2721
        %v2803 = vpop.f32.mrf.mxu0
        %v2804 = vadd.f32 %v2775, %v2803
        %v2805 = vpop.f32.mrf.mxu0
        %v2806 = vadd.f32 %v2777, %v2805
        %2807 = vmatmul.bf16.gmra.mxu0 %v2724
        %v2808 = vpop.f32.mrf.mxu0
        %v2809 = vadd.f32 %v2780, %v2808
        %v2810 = vpop.f32.mrf.mxu0
        %v2811 = vadd.f32 %v2782, %v2810
        %2812 = vdwg.mxu0
        %v2813 = vadd.f32 %v2794, %v1319
        %v2814 = vadd.f32 %v2796, %v1320
        %v2815 = vadd.f32 %v2799, %v1321
        %v2816 = vadd.f32 %v2801, %v1322
        %v2817 = vadd.f32 %v2804, %v1323
        %v2818 = vadd.f32 %v2806, %v1324
        %v2819 = vadd.f32 %v2809, %v1325
        %v2820 = vadd.f32 %v2811, %v1326
        %v2821 = vmax.f32 %v2813, 0.0
        %v2822 = vmax.f32 %v2814, 0.0
        %v2823 = vmax.f32 %v2815, 0.0
        %v2824 = vmax.f32 %v2816, 0.0
        %v2825 = vmax.f32 %v2817, 0.0
        %v2826 = vmax.f32 %v2818, 0.0
        %v2827 = vmax.f32 %v2819, 0.0
        %v2828 = vmax.f32 %v2820, 0.0
        %s2829 = scalar_lea.vmem [#allocation8], 144
        %v2830 = vld [vmem:[%s2829] sm:$0xf]
        %v2831 = vld [vmem:[%s2829 + $0x4] sm:$0xf]
        %v2832 = vld [vmem:[%s2829 + $0x8] sm:$0xf]
        %v2833 = vld [vmem:[%s2829 + $0xc] sm:$0xf]
        %v2834 = vld [vmem:[%s2829 + $0x10] sm:$0xf]
        %v2835 = vld [vmem:[%s2829 + $0x14] sm:$0xf]
        %v2836 = vld [vmem:[%s2829 + $0x18] sm:$0xf]
        %v2837 = vld [vmem:[%s2829 + $0x1c] sm:$0xf]
        %v2838 = vld [vmem:[%s2829 + $0x20] sm:$0xf]
        %v2839 = vld [vmem:[%s2829 + $0x24] sm:$0xf]
        %v2840 = vld [vmem:[%s2829 + $0x28] sm:$0xf]
        %v2841 = vld [vmem:[%s2829 + $0x2c] sm:$0xf]
        %v2842 = vld [vmem:[%s2829 + $0x30] sm:$0xf]
        %v2843 = vld [vmem:[%s2829 + $0x34] sm:$0xf]
        %v2844 = vld [vmem:[%s2829 + $0x38] sm:$0xf]
        %v2845 = vld [vmem:[%s2829 + $0x3c] sm:$0xf]
        %v2846 = vld [vmem:[%s2829 + $0x40] sm:$0xf]
        %v2847 = vld [vmem:[%s2829 + $0x44] sm:$0xf]
        %v2848 = vld [vmem:[%s2829 + $0x48] sm:$0xf]
        %v2849 = vld [vmem:[%s2829 + $0x4c] sm:$0xf]
        %v2850 = vld [vmem:[%s2829 + $0x50] sm:$0xf]
        %v2851 = vld [vmem:[%s2829 + $0x54] sm:$0xf]
        %v2852 = vld [vmem:[%s2829 + $0x58] sm:$0xf]
        %v2853 = vld [vmem:[%s2829 + $0x5c] sm:$0xf]
        %v2854 = vld [vmem:[%s2829 + $0x60] sm:$0xf]
        %v2855 = vld [vmem:[%s2829 + $0x64] sm:$0xf]
        %v2856 = vld [vmem:[%s2829 + $0x68] sm:$0xf]
        %v2857 = vld [vmem:[%s2829 + $0x6c] sm:$0xf]
        %v2858 = vld [vmem:[%s2829 + $0x70] sm:$0xf]
        %v2859 = vld [vmem:[%s2829 + $0x74] sm:$0xf]
        %v2860 = vld [vmem:[%s2829 + $0x78] sm:$0xf]
        %v2861 = vld [vmem:[%s2829 + $0x7c] sm:$0xf]
        %v2862 = vld [vmem:[%s2829 + $0x80] sm:$0xf]
        %v2863 = vld [vmem:[%s2829 + $0x84] sm:$0xf]
        %v2864 = vld [vmem:[%s2829 + $0x88] sm:$0xf]
        %v2865 = vld [vmem:[%s2829 + $0x8c] sm:$0xf]
        %s2866 = scalar_lea.vmem %s4, 1
        %v2867 = vld [vmem:[%s2866] sm:$0x1]
        %2868 = vst.msk [vmem:[%s611 + $0x1] sm:$0xff] %vm544, %v2821
        %2869 = vst.msk [vmem:[%s611 + $0x11] sm:$0xff] %vm544, %v2822
        %2870 = vst.msk [vmem:[%s611 + $0x21] sm:$0xff] %vm544, %v2823
        %2871 = vst.msk [vmem:[%s611 + $0x31] sm:$0xff] %vm544, %v2824
        %2872 = vst.msk [vmem:[%s611 + $0x41] sm:$0xff] %vm544, %v2825
        %2873 = vst.msk [vmem:[%s611 + $0x51] sm:$0xff] %vm544, %v2826
        %2874 = vst.msk [vmem:[%s611 + $0x61] sm:$0xff] %vm544, %v2827
        %2875 = vst.msk [vmem:[%s611 + $0x71] sm:$0xff] %vm544, %v2828
        %v2876 = vld [vmem:[#allocation2] sm:$0xff]
        %v2877 = vld [vmem:[#allocation2 + $0x10] sm:$0xff]
        %v2878 = vld [vmem:[#allocation2 + $0x20] sm:$0xff]
        %v2879 = vld [vmem:[#allocation2 + $0x30] sm:$0xff]
        %v2880 = vld [vmem:[#allocation2 + $0x40] sm:$0xff]
        %v2881 = vld [vmem:[#allocation2 + $0x50] sm:$0xff]
        %v2882 = vld [vmem:[#allocation2 + $0x60] sm:$0xff]
        %v2883 = vld [vmem:[#allocation2 + $0x70] sm:$0xff]
        %v2884 = vpack.c.bf16 %v2876, %v2876
        %v2885 = vpack.c.bf16 %v2877, %v2877
        %v2886 = vpack.c.bf16 %v2878, %v2878
        %v2887 = vpack.c.bf16 %v2879, %v2879
        %v2888 = vpack.c.bf16 %v2880, %v2880
        %v2889 = vpack.c.bf16 %v2881, %v2881
        %v2890 = vpack.c.bf16 %v2882, %v2882
        %v2891 = vpack.c.bf16 %v2883, %v2883
        %2892 = vst.msk [vmem:[#allocation3] sm:$0xf] %vm636, %v2884
        %2893 = vst.msk [vmem:[#allocation3 + $0xc] sm:$0xf] %vm636, %v2885
        %2894 = vst.msk [vmem:[#allocation3 + $0x18] sm:$0xf] %vm636, %v2886
        %2895 = vst.msk [vmem:[#allocation3 + $0x24] sm:$0xf] %vm636, %v2887
        %2896 = vst.msk [vmem:[#allocation3 + $0x30] sm:$0xf] %vm636, %v2888
        %2897 = vst.msk [vmem:[#allocation3 + $0x3c] sm:$0xf] %vm636, %v2889
        %2898 = vst.msk [vmem:[#allocation3 + $0x48] sm:$0xf] %vm636, %v2890
        %2899 = vst.msk [vmem:[#allocation3 + $0x54] sm:$0xf] %vm636, %v2891
        %v2900 = vld [vmem:[#allocation2 + $0x1] sm:$0xff]
        %v2901 = vld [vmem:[#allocation2 + $0x11] sm:$0xff]
        %v2902 = vld [vmem:[#allocation2 + $0x21] sm:$0xff]
        %v2903 = vld [vmem:[#allocation2 + $0x31] sm:$0xff]
        %v2904 = vld [vmem:[#allocation2 + $0x41] sm:$0xff]
        %v2905 = vld [vmem:[#allocation2 + $0x51] sm:$0xff]
        %v2906 = vld [vmem:[#allocation2 + $0x61] sm:$0xff]
        %v2907 = vld [vmem:[#allocation2 + $0x71] sm:$0xff]
        %v2908 = vpack.c.bf16 %v2900, %v2900
        %v2909 = vpack.c.bf16 %v2901, %v2901
        %v2910 = vpack.c.bf16 %v2902, %v2902
        %v2911 = vpack.c.bf16 %v2903, %v2903
        %v2912 = vpack.c.bf16 %v2904, %v2904
        %v2913 = vpack.c.bf16 %v2905, %v2905
        %v2914 = vpack.c.bf16 %v2906, %v2906
        %v2915 = vpack.c.bf16 %v2907, %v2907
        %2924 = vrot.lane.b32.xlu0 %v2908, 32
        %v2925 = vpop.permute.xlu0 %2924
        %2926 = vrot.lane.b32.xlu0 %v2909, 32
        %v2927 = vpop.permute.xlu0 %2926
        %2928 = vrot.lane.b32.xlu0 %v2910, 32
        %v2929 = vpop.permute.xlu0 %2928
        %2930 = vrot.lane.b32.xlu0 %v2911, 32
        %v2931 = vpop.permute.xlu0 %2930
        %2932 = vrot.lane.b32.xlu0 %v2912, 32
        %v2933 = vpop.permute.xlu0 %2932
        %2934 = vrot.lane.b32.xlu0 %v2913, 32
        %v2935 = vpop.permute.xlu0 %2934
        %2936 = vrot.lane.b32.xlu0 %v2914, 32
        %v2937 = vpop.permute.xlu0 %2936
        %2938 = vrot.lane.b32.xlu0 %v2915, 32
        %v2939 = vpop.permute.xlu0 %2938
        %2948 = vst.msk [vmem:[#allocation3] sm:$0xf] %vm693, %v2925
        %2949 = vst.msk [vmem:[#allocation3 + $0xc] sm:$0xf] %vm693, %v2927
        %2950 = vst.msk [vmem:[#allocation3 + $0x18] sm:$0xf] %vm693, %v2929
        %2951 = vst.msk [vmem:[#allocation3 + $0x24] sm:$0xf] %vm693, %v2931
        %2952 = vst.msk [vmem:[#allocation3 + $0x30] sm:$0xf] %vm693, %v2933
        %2953 = vst.msk [vmem:[#allocation3 + $0x3c] sm:$0xf] %vm693, %v2935
        %2954 = vst.msk [vmem:[#allocation3 + $0x48] sm:$0xf] %vm693, %v2937
        %2955 = vst.msk [vmem:[#allocation3 + $0x54] sm:$0xf] %vm693, %v2939
        %v2956 = vld [vmem:[#allocation2 + $0x2] sm:$0xff]
        %v2957 = vld [vmem:[#allocation2 + $0x12] sm:$0xff]
        %v2958 = vld [vmem:[#allocation2 + $0x22] sm:$0xff]
        %v2959 = vld [vmem:[#allocation2 + $0x32] sm:$0xff]
        %v2960 = vld [vmem:[#allocation2 + $0x42] sm:$0xff]
        %v2961 = vld [vmem:[#allocation2 + $0x52] sm:$0xff]
        %v2962 = vld [vmem:[#allocation2 + $0x62] sm:$0xff]
        %v2963 = vld [vmem:[#allocation2 + $0x72] sm:$0xff]
        %v2964 = vpack.c.bf16 %v2956, %v2956
        %v2965 = vpack.c.bf16 %v2957, %v2957
        %v2966 = vpack.c.bf16 %v2958, %v2958
        %v2967 = vpack.c.bf16 %v2959, %v2959
        %v2968 = vpack.c.bf16 %v2960, %v2960
        %v2969 = vpack.c.bf16 %v2961, %v2961
        %v2970 = vpack.c.bf16 %v2962, %v2962
        %v2971 = vpack.c.bf16 %v2963, %v2963
        %2980 = vrot.lane.b32.xlu0 %v2964, 64
        %v2981 = vpop.permute.xlu0 %2980
        %2982 = vrot.lane.b32.xlu0 %v2965, 64
        %v2983 = vpop.permute.xlu0 %2982
        %2984 = vrot.lane.b32.xlu0 %v2966, 64
        %v2985 = vpop.permute.xlu0 %2984
        %2986 = vrot.lane.b32.xlu0 %v2967, 64
        %v2987 = vpop.permute.xlu0 %2986
        %2988 = vrot.lane.b32.xlu0 %v2968, 64
        %v2989 = vpop.permute.xlu0 %2988
        %2990 = vrot.lane.b32.xlu0 %v2969, 64
        %v2991 = vpop.permute.xlu0 %2990
        %2992 = vrot.lane.b32.xlu0 %v2970, 64
        %v2993 = vpop.permute.xlu0 %2992
        %2994 = vrot.lane.b32.xlu0 %v2971, 64
        %v2995 = vpop.permute.xlu0 %2994
        %3004 = vst.msk [vmem:[#allocation3] sm:$0xf] %vm750, %v2981
        %3005 = vst.msk [vmem:[#allocation3 + $0xc] sm:$0xf] %vm750, %v2983
        %3006 = vst.msk [vmem:[#allocation3 + $0x18] sm:$0xf] %vm750, %v2985
        %3007 = vst.msk [vmem:[#allocation3 + $0x24] sm:$0xf] %vm750, %v2987
        %3008 = vst.msk [vmem:[#allocation3 + $0x30] sm:$0xf] %vm750, %v2989
        %3009 = vst.msk [vmem:[#allocation3 + $0x3c] sm:$0xf] %vm750, %v2991
        %3010 = vst.msk [vmem:[#allocation3 + $0x48] sm:$0xf] %vm750, %v2993
        %3011 = vst.msk [vmem:[#allocation3 + $0x54] sm:$0xf] %vm750, %v2995
        %v3012 = vld [vmem:[%s611] sm:$0xff]
        %v3013 = vld [vmem:[%s611 + $0x10] sm:$0xff]
        %v3014 = vld [vmem:[%s611 + $0x20] sm:$0xff]
        %v3015 = vld [vmem:[%s611 + $0x30] sm:$0xff]
        %v3016 = vld [vmem:[%s611 + $0x40] sm:$0xff]
        %v3017 = vld [vmem:[%s611 + $0x50] sm:$0xff]
        %v3018 = vld [vmem:[%s611 + $0x60] sm:$0xff]
        %v3019 = vld [vmem:[%s611 + $0x70] sm:$0xff]
        %v3020 = vpack.c.bf16 %v3012, %v3012
        %v3021 = vpack.c.bf16 %v3013, %v3013
        %v3022 = vpack.c.bf16 %v3014, %v3014
        %v3023 = vpack.c.bf16 %v3015, %v3015
        %v3024 = vpack.c.bf16 %v3016, %v3016
        %v3025 = vpack.c.bf16 %v3017, %v3017
        %v3026 = vpack.c.bf16 %v3018, %v3018
        %v3027 = vpack.c.bf16 %v3019, %v3019
        %3036 = vrot.lane.b32.xlu0 %v3020, 96
        %v3037 = vpop.permute.xlu0 %3036
        %3038 = vrot.lane.b32.xlu0 %v3021, 96
        %v3039 = vpop.permute.xlu0 %3038
        %3040 = vrot.lane.b32.xlu0 %v3022, 96
        %v3041 = vpop.permute.xlu0 %3040
        %3042 = vrot.lane.b32.xlu0 %v3023, 96
        %v3043 = vpop.permute.xlu0 %3042
        %3044 = vrot.lane.b32.xlu0 %v3024, 96
        %v3045 = vpop.permute.xlu0 %3044
        %3046 = vrot.lane.b32.xlu0 %v3025, 96
        %v3047 = vpop.permute.xlu0 %3046
        %3048 = vrot.lane.b32.xlu0 %v3026, 96
        %v3049 = vpop.permute.xlu0 %3048
        %3050 = vrot.lane.b32.xlu0 %v3027, 96
        %v3051 = vpop.permute.xlu0 %3050
        %3060 = vst.msk [vmem:[#allocation3] sm:$0xf] %vm807, %v3037
        %3061 = vst.msk [vmem:[#allocation3 + $0xc] sm:$0xf] %vm807, %v3039
        %3062 = vst.msk [vmem:[#allocation3 + $0x18] sm:$0xf] %vm807, %v3041
        %3063 = vst.msk [vmem:[#allocation3 + $0x24] sm:$0xf] %vm807, %v3043
        %3064 = vst.msk [vmem:[#allocation3 + $0x30] sm:$0xf] %vm807, %v3045
        %3065 = vst.msk [vmem:[#allocation3 + $0x3c] sm:$0xf] %vm807, %v3047
        %3066 = vst.msk [vmem:[#allocation3 + $0x48] sm:$0xf] %vm807, %v3049
        %3067 = vst.msk [vmem:[#allocation3 + $0x54] sm:$0xf] %vm807, %v3051
        %v3068 = vld [vmem:[%s611 + $0x1] sm:$0xff]
        %v3069 = vld [vmem:[%s611 + $0x11] sm:$0xff]
        %v3070 = vld [vmem:[%s611 + $0x21] sm:$0xff]
        %v3071 = vld [vmem:[%s611 + $0x31] sm:$0xff]
        %v3072 = vld [vmem:[%s611 + $0x41] sm:$0xff]
        %v3073 = vld [vmem:[%s611 + $0x51] sm:$0xff]
        %v3074 = vld [vmem:[%s611 + $0x61] sm:$0xff]
        %v3075 = vld [vmem:[%s611 + $0x71] sm:$0xff]
        %v3076 = vpack.c.bf16 %v3068, %v3068
        %v3077 = vpack.c.bf16 %v3069, %v3069
        %v3078 = vpack.c.bf16 %v3070, %v3070
        %v3079 = vpack.c.bf16 %v3071, %v3071
        %v3080 = vpack.c.bf16 %v3072, %v3072
        %v3081 = vpack.c.bf16 %v3073, %v3073
        %v3082 = vpack.c.bf16 %v3074, %v3074
        %v3083 = vpack.c.bf16 %v3075, %v3075
        %3084 = vst.msk [vmem:[#allocation3 + $0x4] sm:$0xf] %vm636, %v3076
        %3085 = vst.msk [vmem:[#allocation3 + $0x10] sm:$0xf] %vm636, %v3077
        %3086 = vst.msk [vmem:[#allocation3 + $0x1c] sm:$0xf] %vm636, %v3078
        %3087 = vst.msk [vmem:[#allocation3 + $0x28] sm:$0xf] %vm636, %v3079
        %3088 = vst.msk [vmem:[#allocation3 + $0x34] sm:$0xf] %vm636, %v3080
        %3089 = vst.msk [vmem:[#allocation3 + $0x40] sm:$0xf] %vm636, %v3081
        %3090 = vst.msk [vmem:[#allocation3 + $0x4c] sm:$0xf] %vm636, %v3082
        %3091 = vst.msk [vmem:[#allocation3 + $0x58] sm:$0xf] %vm636, %v3083
        %v3092 = vld [vmem:[%s611 + $0x2] sm:$0xff]
        %v3093 = vld [vmem:[%s611 + $0x12] sm:$0xff]
        %v3094 = vld [vmem:[%s611 + $0x22] sm:$0xff]
        %v3095 = vld [vmem:[%s611 + $0x32] sm:$0xff]
        %v3096 = vld [vmem:[%s611 + $0x42] sm:$0xff]
        %v3097 = vld [vmem:[%s611 + $0x52] sm:$0xff]
        %v3098 = vld [vmem:[%s611 + $0x62] sm:$0xff]
        %v3099 = vld [vmem:[%s611 + $0x72] sm:$0xff]
        %v3100 = vpack.c.bf16 %v3092, %v3092
        %v3101 = vpack.c.bf16 %v3093, %v3093
        %v3102 = vpack.c.bf16 %v3094, %v3094
        %v3103 = vpack.c.bf16 %v3095, %v3095
        %v3104 = vpack.c.bf16 %v3096, %v3096
        %v3105 = vpack.c.bf16 %v3097, %v3097
        %v3106 = vpack.c.bf16 %v3098, %v3098
        %v3107 = vpack.c.bf16 %v3099, %v3099
        %3116 = vrot.lane.b32.xlu0 %v3100, 32
        %v3117 = vpop.permute.xlu0 %3116
        %3118 = vrot.lane.b32.xlu0 %v3101, 32
        %v3119 = vpop.permute.xlu0 %3118
        %3120 = vrot.lane.b32.xlu0 %v3102, 32
        %v3121 = vpop.permute.xlu0 %3120
        %3122 = vrot.lane.b32.xlu0 %v3103, 32
        %v3123 = vpop.permute.xlu0 %3122
        %3124 = vrot.lane.b32.xlu0 %v3104, 32
        %v3125 = vpop.permute.xlu0 %3124
        %3126 = vrot.lane.b32.xlu0 %v3105, 32
        %v3127 = vpop.permute.xlu0 %3126
        %3128 = vrot.lane.b32.xlu0 %v3106, 32
        %v3129 = vpop.permute.xlu0 %3128
        %3130 = vrot.lane.b32.xlu0 %v3107, 32
        %v3131 = vpop.permute.xlu0 %3130
        %3140 = vst.msk [vmem:[#allocation3 + $0x4] sm:$0xf] %vm693, %v3117
        %3141 = vst.msk [vmem:[#allocation3 + $0x10] sm:$0xf] %vm693, %v3119
        %3142 = vst.msk [vmem:[#allocation3 + $0x1c] sm:$0xf] %vm693, %v3121
        %3143 = vst.msk [vmem:[#allocation3 + $0x28] sm:$0xf] %vm693, %v3123
        %3144 = vst.msk [vmem:[#allocation3 + $0x34] sm:$0xf] %vm693, %v3125
        %3145 = vst.msk [vmem:[#allocation3 + $0x40] sm:$0xf] %vm693, %v3127
        %3146 = vst.msk [vmem:[#allocation3 + $0x4c] sm:$0xf] %vm693, %v3129
        %3147 = vst.msk [vmem:[#allocation3 + $0x58] sm:$0xf] %vm693, %v3131
        %v3148 = vld [vmem:[%s896] sm:$0xff]
        %v3149 = vld [vmem:[%s896 + $0x10] sm:$0xff]
        %v3150 = vld [vmem:[%s896 + $0x20] sm:$0xff]
        %v3151 = vld [vmem:[%s896 + $0x30] sm:$0xff]
        %v3152 = vld [vmem:[%s896 + $0x40] sm:$0xff]
        %v3153 = vld [vmem:[%s896 + $0x50] sm:$0xff]
        %v3154 = vld [vmem:[%s896 + $0x60] sm:$0xff]
        %v3155 = vld [vmem:[%s896 + $0x70] sm:$0xff]
        %v3156 = vpack.c.bf16 %v3148, %v3148
        %v3157 = vpack.c.bf16 %v3149, %v3149
        %v3158 = vpack.c.bf16 %v3150, %v3150
        %v3159 = vpack.c.bf16 %v3151, %v3151
        %v3160 = vpack.c.bf16 %v3152, %v3152
        %v3161 = vpack.c.bf16 %v3153, %v3153
        %v3162 = vpack.c.bf16 %v3154, %v3154
        %v3163 = vpack.c.bf16 %v3155, %v3155
        %3172 = vrot.lane.b32.xlu0 %v3156, 64
        %v3173 = vpop.permute.xlu0 %3172
        %3174 = vrot.lane.b32.xlu0 %v3157, 64
        %v3175 = vpop.permute.xlu0 %3174
        %3176 = vrot.lane.b32.xlu0 %v3158, 64
        %v3177 = vpop.permute.xlu0 %3176
        %3178 = vrot.lane.b32.xlu0 %v3159, 64
        %v3179 = vpop.permute.xlu0 %3178
        %3180 = vrot.lane.b32.xlu0 %v3160, 64
        %v3181 = vpop.permute.xlu0 %3180
        %3182 = vrot.lane.b32.xlu0 %v3161, 64
        %v3183 = vpop.permute.xlu0 %3182
        %3184 = vrot.lane.b32.xlu0 %v3162, 64
        %v3185 = vpop.permute.xlu0 %3184
        %3186 = vrot.lane.b32.xlu0 %v3163, 64
        %v3187 = vpop.permute.xlu0 %3186
        %3196 = vst.msk [vmem:[#allocation3 + $0x4] sm:$0xf] %vm750, %v3173
        %3197 = vst.msk [vmem:[#allocation3 + $0x10] sm:$0xf] %vm750, %v3175
        %3198 = vst.msk [vmem:[#allocation3 + $0x1c] sm:$0xf] %vm750, %v3177
        %3199 = vst.msk [vmem:[#allocation3 + $0x28] sm:$0xf] %vm750, %v3179
        %3200 = vst.msk [vmem:[#allocation3 + $0x34] sm:$0xf] %vm750, %v3181
        %3201 = vst.msk [vmem:[#allocation3 + $0x40] sm:$0xf] %vm750, %v3183
        %3202 = vst.msk [vmem:[#allocation3 + $0x4c] sm:$0xf] %vm750, %v3185
        %3203 = vst.msk [vmem:[#allocation3 + $0x58] sm:$0xf] %vm750, %v3187
        %v3204 = vld [vmem:[%s896 + $0x1] sm:$0xff]
        %v3205 = vld [vmem:[%s896 + $0x11] sm:$0xff]
        %v3206 = vld [vmem:[%s896 + $0x21] sm:$0xff]
        %v3207 = vld [vmem:[%s896 + $0x31] sm:$0xff]
        %v3208 = vld [vmem:[%s896 + $0x41] sm:$0xff]
        %v3209 = vld [vmem:[%s896 + $0x51] sm:$0xff]
        %v3210 = vld [vmem:[%s896 + $0x61] sm:$0xff]
        %v3211 = vld [vmem:[%s896 + $0x71] sm:$0xff]
        %v3212 = vpack.c.bf16 %v3204, %v3204
        %v3213 = vpack.c.bf16 %v3205, %v3205
        %v3214 = vpack.c.bf16 %v3206, %v3206
        %v3215 = vpack.c.bf16 %v3207, %v3207
        %v3216 = vpack.c.bf16 %v3208, %v3208
        %v3217 = vpack.c.bf16 %v3209, %v3209
        %v3218 = vpack.c.bf16 %v3210, %v3210
        %v3219 = vpack.c.bf16 %v3211, %v3211
        %3228 = vrot.lane.b32.xlu0 %v3212, 96
        %v3229 = vpop.permute.xlu0 %3228
        %3230 = vrot.lane.b32.xlu0 %v3213, 96
        %v3231 = vpop.permute.xlu0 %3230
        %3232 = vrot.lane.b32.xlu0 %v3214, 96
        %v3233 = vpop.permute.xlu0 %3232
        %3234 = vrot.lane.b32.xlu0 %v3215, 96
        %v3235 = vpop.permute.xlu0 %3234
        %3236 = vrot.lane.b32.xlu0 %v3216, 96
        %v3237 = vpop.permute.xlu0 %3236
        %3238 = vrot.lane.b32.xlu0 %v3217, 96
        %v3239 = vpop.permute.xlu0 %3238
        %3240 = vrot.lane.b32.xlu0 %v3218, 96
        %v3241 = vpop.permute.xlu0 %3240
        %3242 = vrot.lane.b32.xlu0 %v3219, 96
        %v3243 = vpop.permute.xlu0 %3242
        %3252 = vst.msk [vmem:[#allocation3 + $0x4] sm:$0xf] %vm807, %v3229
        %3253 = vst.msk [vmem:[#allocation3 + $0x10] sm:$0xf] %vm807, %v3231
        %3254 = vst.msk [vmem:[#allocation3 + $0x1c] sm:$0xf] %vm807, %v3233
        %3255 = vst.msk [vmem:[#allocation3 + $0x28] sm:$0xf] %vm807, %v3235
        %3256 = vst.msk [vmem:[#allocation3 + $0x34] sm:$0xf] %vm807, %v3237
        %3257 = vst.msk [vmem:[#allocation3 + $0x40] sm:$0xf] %vm807, %v3239
        %3258 = vst.msk [vmem:[#allocation3 + $0x4c] sm:$0xf] %vm807, %v3241
        %3259 = vst.msk [vmem:[#allocation3 + $0x58] sm:$0xf] %vm807, %v3243
        %v3260 = vld [vmem:[%s896 + $0x2] sm:$0xff]
        %v3261 = vld [vmem:[%s896 + $0x12] sm:$0xff]
        %v3262 = vld [vmem:[%s896 + $0x22] sm:$0xff]
        %v3263 = vld [vmem:[%s896 + $0x32] sm:$0xff]
        %v3264 = vld [vmem:[%s896 + $0x42] sm:$0xff]
        %v3265 = vld [vmem:[%s896 + $0x52] sm:$0xff]
        %v3266 = vld [vmem:[%s896 + $0x62] sm:$0xff]
        %v3267 = vld [vmem:[%s896 + $0x72] sm:$0xff]
        %v3268 = vpack.c.bf16 %v3260, %v3260
        %v3269 = vpack.c.bf16 %v3261, %v3261
        %v3270 = vpack.c.bf16 %v3262, %v3262
        %v3271 = vpack.c.bf16 %v3263, %v3263
        %v3272 = vpack.c.bf16 %v3264, %v3264
        %v3273 = vpack.c.bf16 %v3265, %v3265
        %v3274 = vpack.c.bf16 %v3266, %v3266
        %v3275 = vpack.c.bf16 %v3267, %v3267
        %3276 = vst.msk [vmem:[#allocation3 + $0x8] sm:$0xf] %vm636, %v3268
        %3277 = vst.msk [vmem:[#allocation3 + $0x14] sm:$0xf] %vm636, %v3269
        %3278 = vst.msk [vmem:[#allocation3 + $0x20] sm:$0xf] %vm636, %v3270
        %3279 = vst.msk [vmem:[#allocation3 + $0x2c] sm:$0xf] %vm636, %v3271
        %3280 = vst.msk [vmem:[#allocation3 + $0x38] sm:$0xf] %vm636, %v3272
        %3281 = vst.msk [vmem:[#allocation3 + $0x44] sm:$0xf] %vm636, %v3273
        %3282 = vst.msk [vmem:[#allocation3 + $0x50] sm:$0xf] %vm636, %v3274
        %3283 = vst.msk [vmem:[#allocation3 + $0x5c] sm:$0xf] %vm636, %v3275
        %v3284 = vld [vmem:[#allocation3] sm:$0xff]
        %v3285 = vld [vmem:[#allocation3 + $0x8] sm:$0xf]
        %v3286 = vld [vmem:[#allocation3 + $0xc] sm:$0xff]
        %v3287 = vld [vmem:[#allocation3 + $0x14] sm:$0xf]
        %v3288 = vld [vmem:[#allocation3 + $0x18] sm:$0xff]
        %v3289 = vld [vmem:[#allocation3 + $0x20] sm:$0xf]
        %v3290 = vld [vmem:[#allocation3 + $0x24] sm:$0xff]
        %v3291 = vld [vmem:[#allocation3 + $0x2c] sm:$0xf]
        %v3292 = vld [vmem:[#allocation3 + $0x30] sm:$0xff]
        %v3293 = vld [vmem:[#allocation3 + $0x38] sm:$0xf]
        %v3294 = vld [vmem:[#allocation3 + $0x3c] sm:$0xff]
        %v3295 = vld [vmem:[#allocation3 + $0x44] sm:$0xf]
        %v3296 = vld [vmem:[#allocation3 + $0x48] sm:$0xff]
        %v3297 = vld [vmem:[#allocation3 + $0x50] sm:$0xf]
        %v3298 = vld [vmem:[#allocation3 + $0x54] sm:$0xff]
        %v3299 = vld [vmem:[#allocation3 + $0x5c] sm:$0xf]
        %v3301 = vperm.slane %v2867, 0
        %v3319 = vunpack.c.l.b16 %v3284
        %v3320 = vunpack.c.h.b16 %v3284
        %v3321 = vunpack.c.l.b16 %v3285
        %v3322 = vunpack.c.l.b16 %v3286
        %v3323 = vunpack.c.h.b16 %v3286
        %v3324 = vunpack.c.l.b16 %v3287
        %v3325 = vunpack.c.l.b16 %v3288
        %v3326 = vunpack.c.h.b16 %v3288
        %v3327 = vunpack.c.l.b16 %v3289
        %v3328 = vunpack.c.l.b16 %v3290
        %v3329 = vunpack.c.h.b16 %v3290
        %v3330 = vunpack.c.l.b16 %v3291
        %v3331 = vunpack.c.l.b16 %v3292
        %v3332 = vunpack.c.h.b16 %v3292
        %v3333 = vunpack.c.l.b16 %v3293
        %v3334 = vunpack.c.l.b16 %v3294
        %v3335 = vunpack.c.h.b16 %v3294
        %v3336 = vunpack.c.l.b16 %v3295
        %v3337 = vunpack.c.l.b16 %v3296
        %v3338 = vunpack.c.h.b16 %v3296
        %v3339 = vunpack.c.l.b16 %v3297
        %v3340 = vunpack.c.l.b16 %v3298
        %v3341 = vunpack.c.h.b16 %v3298
        %v3342 = vunpack.c.l.b16 %v3299
        %v3343 = vpack.c.b16 %v3322, %v3319
        %v3344 = vpack.c.b16 %v3323, %v3320
        %v3345 = vpack.c.b16 %v3324, %v3321
        %v3346 = vpack.c.b16 %v3328, %v3325
        %v3347 = vpack.c.b16 %v3329, %v3326
        %v3348 = vpack.c.b16 %v3330, %v3327
        %v3349 = vpack.c.b16 %v3334, %v3331
        %v3350 = vpack.c.b16 %v3335, %v3332
        %v3351 = vpack.c.b16 %v3336, %v3333
        %v3352 = vpack.c.b16 %v3340, %v3337
        %v3353 = vpack.c.b16 %v3341, %v3338
        %v3354 = vpack.c.b16 %v3342, %v3339
        %v3399 = vunpack.c.l.b16 %v2830
        %v3400 = vunpack.c.l.b16 %v2831
        %v3401 = vunpack.c.l.b16 %v2832
        %v3402 = vunpack.c.l.b16 %v2833
        %v3403 = vunpack.c.l.b16 %v2834
        %v3404 = vunpack.c.l.b16 %v2835
        %v3405 = vunpack.c.l.b16 %v2836
        %v3406 = vunpack.c.l.b16 %v2837
        %v3407 = vunpack.c.l.b16 %v2838
        %v3408 = vunpack.c.l.b16 %v2839
        %v3409 = vunpack.c.l.b16 %v2840
        %v3410 = vunpack.c.l.b16 %v2841
        %v3411 = vunpack.c.l.b16 %v2842
        %v3412 = vunpack.c.l.b16 %v2843
        %v3413 = vunpack.c.l.b16 %v2844
        %v3414 = vunpack.c.l.b16 %v2845
        %v3415 = vunpack.c.l.b16 %v2846
        %v3416 = vunpack.c.l.b16 %v2847
        %v3417 = vunpack.c.l.b16 %v2848
        %v3418 = vunpack.c.l.b16 %v2849
        %v3419 = vunpack.c.l.b16 %v2850
        %v3420 = vunpack.c.l.b16 %v2851
        %v3421 = vunpack.c.l.b16 %v2852
        %v3422 = vunpack.c.l.b16 %v2853
        %v3423 = vunpack.c.l.b16 %v2854
        %v3424 = vunpack.c.l.b16 %v2855
        %v3425 = vunpack.c.l.b16 %v2856
        %v3426 = vunpack.c.l.b16 %v2857
        %v3427 = vunpack.c.l.b16 %v2858
        %v3428 = vunpack.c.l.b16 %v2859
        %v3429 = vunpack.c.l.b16 %v2860
        %v3430 = vunpack.c.l.b16 %v2861
        %v3431 = vunpack.c.l.b16 %v2862
        %v3432 = vunpack.c.l.b16 %v2863
        %v3433 = vunpack.c.l.b16 %v2864
        %v3434 = vunpack.c.l.b16 %v2865
        %v3435 = vpack.c.b16 %v3400, %v3399
        %v3436 = vpack.c.b16 %v3402, %v3401
        %v3437 = vpack.c.b16 %v3404, %v3403
        %v3438 = vpack.c.b16 %v3406, %v3405
        %v3439 = vpack.c.b16 %v3408, %v3407
        %v3440 = vpack.c.b16 %v3410, %v3409
        %v3441 = vpack.c.b16 %v3412, %v3411
        %v3442 = vpack.c.b16 %v3414, %v3413
        %v3443 = vpack.c.b16 %v3416, %v3415
        %v3444 = vpack.c.b16 %v3418, %v3417
        %v3445 = vpack.c.b16 %v3420, %v3419
        %v3446 = vpack.c.b16 %v3422, %v3421
        %v3447 = vpack.c.b16 %v3424, %v3423
        %v3448 = vpack.c.b16 %v3426, %v3425
        %v3449 = vpack.c.b16 %v3428, %v3427
        %v3450 = vpack.c.b16 %v3430, %v3429
        %v3451 = vpack.c.b16 %v3432, %v3431
        %v3452 = vpack.c.b16 %v3434, %v3433
        %v3472 = vsel %vm544, %v3345, 0
        %v3475 = vsel %vm544, %v3348, 0
        %v3478 = vsel %vm544, %v3351, 0
        %v3481 = vsel %vm544, %v3354, 0
        %3483 = vmatpush.bf16.msra.mxu0 %v3442
        %3484 = vmatpush.bf16.msra.mxu0 %v3441
        %3485 = vmatpush.bf16.msra.mxu0 %v3440
        %3486 = vmatpush.bf16.msra.mxu0 %v3439
        %3487 = vmatpush.bf16.msra.mxu0 %v3438
        %3488 = vmatpush.bf16.msra.mxu0 %v3437
        %3489 = vmatpush.bf16.msra.mxu0 %v3436
        %3490 = vmatpush.bf16.msra.mxu0 %v3435
        %3491 = vmatmul.bf16.gmra.mxu0 %v3343
        %v3492 = vpop.f32.mrf.mxu0
        %v3493 = vadd.f32 %v3301, %v3492
        %v3494 = vpop.f32.mrf.mxu0
        %v3495 = vadd.f32 %v3301, %v3494
        %3496 = vmatmul.bf16.gmra.mxu0 %v3346
        %v3497 = vpop.f32.mrf.mxu0
        %v3498 = vadd.f32 %v3301, %v3497
        %v3499 = vpop.f32.mrf.mxu0
        %v3500 = vadd.f32 %v3301, %v3499
        %3501 = vmatmul.bf16.gmra.mxu0 %v3349
        %v3502 = vpop.f32.mrf.mxu0
        %v3503 = vadd.f32 %v3301, %v3502
        %v3504 = vpop.f32.mrf.mxu0
        %v3505 = vadd.f32 %v3301, %v3504
        %3506 = vmatmul.bf16.gmra.mxu0 %v3352
        %v3507 = vpop.f32.mrf.mxu0
        %v3508 = vadd.f32 %v3301, %v3507
        %v3509 = vpop.f32.mrf.mxu0
        %v3510 = vadd.f32 %v3301, %v3509
        %3511 = vdwg.mxu0
        %3512 = vmatpush.bf16.msra.mxu0 %v3450
        %3513 = vmatpush.bf16.msra.mxu0 %v3449
        %3514 = vmatpush.bf16.msra.mxu0 %v3448
        %3515 = vmatpush.bf16.msra.mxu0 %v3447
        %3516 = vmatpush.bf16.msra.mxu0 %v3446
        %3517 = vmatpush.bf16.msra.mxu0 %v3445
        %3518 = vmatpush.bf16.msra.mxu0 %v3444
        %3519 = vmatpush.bf16.msra.mxu0 %v3443
        %3520 = vmatmul.bf16.gmra.mxu0 %v3344
        %v3521 = vpop.f32.mrf.mxu0
        %v3522 = vadd.f32 %v3493, %v3521
        %v3523 = vpop.f32.mrf.mxu0
        %v3524 = vadd.f32 %v3495, %v3523
        %3525 = vmatmul.bf16.gmra.mxu0 %v3347
        %v3526 = vpop.f32.mrf.mxu0
        %v3527 = vadd.f32 %v3498, %v3526
        %v3528 = vpop.f32.mrf.mxu0
        %v3529 = vadd.f32 %v3500, %v3528
        %3530 = vmatmul.bf16.gmra.mxu0 %v3350
        %v3531 = vpop.f32.mrf.mxu0
        %v3532 = vadd.f32 %v3503, %v3531
        %v3533 = vpop.f32.mrf.mxu0
        %v3534 = vadd.f32 %v3505, %v3533
        %3535 = vmatmul.bf16.gmra.mxu0 %v3353
        %v3536 = vpop.f32.mrf.mxu0
        %v3537 = vadd.f32 %v3508, %v3536
        %v3538 = vpop.f32.mrf.mxu0
        %v3539 = vadd.f32 %v3510, %v3538
        %3540 = vdwg.mxu0
        %3541 = vmatpush.bf16.msra.mxu0 0
        %3542 = vmatpush.bf16.msra.mxu0 0
        %3543 = vmatpush.bf16.msra.mxu0 0
        %3544 = vmatpush.bf16.msra.mxu0 0
        %3545 = vmatpush.bf16.msra.mxu0 0
        %3546 = vmatpush.bf16.msra.mxu0 0
        %3547 = vmatpush.bf16.msra.mxu0 %v3452
        %3548 = vmatpush.bf16.msra.mxu0 %v3451
        %3549 = vmatmul.bf16.gmra.mxu0 %v3472
        %v3550 = vpop.f32.mrf.mxu0
        %v3551 = vadd.f32 %v3522, %v3550
        %v3552 = vpop.f32.mrf.mxu0
        %v3553 = vadd.f32 %v3524, %v3552
        %3554 = vmatmul.bf16.gmra.mxu0 %v3475
        %v3555 = vpop.f32.mrf.mxu0
        %v3556 = vadd.f32 %v3527, %v3555
        %v3557 = vpop.f32.mrf.mxu0
        %v3558 = vadd.f32 %v3529, %v3557
        %3559 = vmatmul.bf16.gmra.mxu0 %v3478
        %v3560 = vpop.f32.mrf.mxu0
        %v3561 = vadd.f32 %v3532, %v3560
        %v3562 = vpop.f32.mrf.mxu0
        %v3563 = vadd.f32 %v3534, %v3562
        %3564 = vmatmul.bf16.gmra.mxu0 %v3481
        %v3565 = vpop.f32.mrf.mxu0
        %v3566 = vadd.f32 %v3537, %v3565
        %v3567 = vpop.f32.mrf.mxu0
        %v3568 = vadd.f32 %v3539, %v3567
        %3569 = vdwg.mxu0
        %v3570 = vmax.f32 %v3551, 0.0
        %v3571 = vmax.f32 %v3553, 0.0
        %v3572 = vmax.f32 %v3556, 0.0
        %v3573 = vmax.f32 %v3558, 0.0
        %v3574 = vmax.f32 %v3561, 0.0
        %v3575 = vmax.f32 %v3563, 0.0
        %v3576 = vmax.f32 %v3566, 0.0
        %v3577 = vmax.f32 %v3568, 0.0
        %s3578 = scalar_lea.vmem [#allocation10], 144
        %v3579 = vld [vmem:[%s3578] sm:$0xf]
        %v3580 = vld [vmem:[%s3578 + $0x4] sm:$0xf]
        %v3581 = vld [vmem:[%s3578 + $0x8] sm:$0xf]
        %v3582 = vld [vmem:[%s3578 + $0xc] sm:$0xf]
        %v3583 = vld [vmem:[%s3578 + $0x10] sm:$0xf]
        %v3584 = vld [vmem:[%s3578 + $0x14] sm:$0xf]
        %v3585 = vld [vmem:[%s3578 + $0x18] sm:$0xf]
        %v3586 = vld [vmem:[%s3578 + $0x1c] sm:$0xf]
        %v3587 = vld [vmem:[%s3578 + $0x20] sm:$0xf]
        %v3588 = vld [vmem:[%s3578 + $0x24] sm:$0xf]
        %v3589 = vld [vmem:[%s3578 + $0x28] sm:$0xf]
        %v3590 = vld [vmem:[%s3578 + $0x2c] sm:$0xf]
        %v3591 = vld [vmem:[%s3578 + $0x30] sm:$0xf]
        %v3592 = vld [vmem:[%s3578 + $0x34] sm:$0xf]
        %v3593 = vld [vmem:[%s3578 + $0x38] sm:$0xf]
        %v3594 = vld [vmem:[%s3578 + $0x3c] sm:$0xf]
        %v3595 = vld [vmem:[%s3578 + $0x40] sm:$0xf]
        %v3596 = vld [vmem:[%s3578 + $0x44] sm:$0xf]
        %v3597 = vld [vmem:[%s3578 + $0x48] sm:$0xf]
        %v3598 = vld [vmem:[%s3578 + $0x4c] sm:$0xf]
        %v3599 = vld [vmem:[%s3578 + $0x50] sm:$0xf]
        %v3600 = vld [vmem:[%s3578 + $0x54] sm:$0xf]
        %v3601 = vld [vmem:[%s3578 + $0x58] sm:$0xf]
        %v3602 = vld [vmem:[%s3578 + $0x5c] sm:$0xf]
        %v3603 = vld [vmem:[%s3578 + $0x60] sm:$0xf]
        %v3604 = vld [vmem:[%s3578 + $0x64] sm:$0xf]
        %v3605 = vld [vmem:[%s3578 + $0x68] sm:$0xf]
        %v3606 = vld [vmem:[%s3578 + $0x6c] sm:$0xf]
        %v3607 = vld [vmem:[%s3578 + $0x70] sm:$0xf]
        %v3608 = vld [vmem:[%s3578 + $0x74] sm:$0xf]
        %v3609 = vld [vmem:[%s3578 + $0x78] sm:$0xf]
        %v3610 = vld [vmem:[%s3578 + $0x7c] sm:$0xf]
        %v3611 = vld [vmem:[%s3578 + $0x80] sm:$0xf]
        %v3612 = vld [vmem:[%s3578 + $0x84] sm:$0xf]
        %v3613 = vld [vmem:[%s3578 + $0x88] sm:$0xf]
        %v3614 = vld [vmem:[%s3578 + $0x8c] sm:$0xf]
        %s3615 = scalar_lea.vmem %s6, 1
        %v3616 = vld [vmem:[%s3615] sm:$0x1]
        %3617 = vst.msk [vmem:[%s611 + $0x1] sm:$0xff] %vm544, %v3570
        %3618 = vst.msk [vmem:[%s611 + $0x11] sm:$0xff] %vm544, %v3571
        %3619 = vst.msk [vmem:[%s611 + $0x21] sm:$0xff] %vm544, %v3572
        %3620 = vst.msk [vmem:[%s611 + $0x31] sm:$0xff] %vm544, %v3573
        %3621 = vst.msk [vmem:[%s611 + $0x41] sm:$0xff] %vm544, %v3574
        %3622 = vst.msk [vmem:[%s611 + $0x51] sm:$0xff] %vm544, %v3575
        %3623 = vst.msk [vmem:[%s611 + $0x61] sm:$0xff] %vm544, %v3576
        %3624 = vst.msk [vmem:[%s611 + $0x71] sm:$0xff] %vm544, %v3577
        %v3625 = vld [vmem:[#allocation2] sm:$0xff]
        %v3626 = vld [vmem:[#allocation2 + $0x10] sm:$0xff]
        %v3627 = vld [vmem:[#allocation2 + $0x20] sm:$0xff]
        %v3628 = vld [vmem:[#allocation2 + $0x30] sm:$0xff]
        %v3629 = vld [vmem:[#allocation2 + $0x40] sm:$0xff]
        %v3630 = vld [vmem:[#allocation2 + $0x50] sm:$0xff]
        %v3631 = vld [vmem:[#allocation2 + $0x60] sm:$0xff]
        %v3632 = vld [vmem:[#allocation2 + $0x70] sm:$0xff]
        %v3633 = vpack.c.bf16 %v3625, %v3625
        %v3634 = vpack.c.bf16 %v3626, %v3626
        %v3635 = vpack.c.bf16 %v3627, %v3627
        %v3636 = vpack.c.bf16 %v3628, %v3628
        %v3637 = vpack.c.bf16 %v3629, %v3629
        %v3638 = vpack.c.bf16 %v3630, %v3630
        %v3639 = vpack.c.bf16 %v3631, %v3631
        %v3640 = vpack.c.bf16 %v3632, %v3632
        %3641 = vst.msk [vmem:[#allocation3] sm:$0xf] %vm636, %v3633
        %3642 = vst.msk [vmem:[#allocation3 + $0xc] sm:$0xf] %vm636, %v3634
        %3643 = vst.msk [vmem:[#allocation3 + $0x18] sm:$0xf] %vm636, %v3635
        %3644 = vst.msk [vmem:[#allocation3 + $0x24] sm:$0xf] %vm636, %v3636
        %3645 = vst.msk [vmem:[#allocation3 + $0x30] sm:$0xf] %vm636, %v3637
        %3646 = vst.msk [vmem:[#allocation3 + $0x3c] sm:$0xf] %vm636, %v3638
        %3647 = vst.msk [vmem:[#allocation3 + $0x48] sm:$0xf] %vm636, %v3639
        %3648 = vst.msk [vmem:[#allocation3 + $0x54] sm:$0xf] %vm636, %v3640
        %v3649 = vld [vmem:[#allocation2 + $0x1] sm:$0xff]
        %v3650 = vld [vmem:[#allocation2 + $0x11] sm:$0xff]
        %v3651 = vld [vmem:[#allocation2 + $0x21] sm:$0xff]
        %v3652 = vld [vmem:[#allocation2 + $0x31] sm:$0xff]
        %v3653 = vld [vmem:[#allocation2 + $0x41] sm:$0xff]
        %v3654 = vld [vmem:[#allocation2 + $0x51] sm:$0xff]
        %v3655 = vld [vmem:[#allocation2 + $0x61] sm:$0xff]
        %v3656 = vld [vmem:[#allocation2 + $0x71] sm:$0xff]
        %v3657 = vpack.c.bf16 %v3649, %v3649
        %v3658 = vpack.c.bf16 %v3650, %v3650
        %v3659 = vpack.c.bf16 %v3651, %v3651
        %v3660 = vpack.c.bf16 %v3652, %v3652
        %v3661 = vpack.c.bf16 %v3653, %v3653
        %v3662 = vpack.c.bf16 %v3654, %v3654
        %v3663 = vpack.c.bf16 %v3655, %v3655
        %v3664 = vpack.c.bf16 %v3656, %v3656
        %3673 = vrot.lane.b32.xlu0 %v3657, 32
        %v3674 = vpop.permute.xlu0 %3673
        %3675 = vrot.lane.b32.xlu0 %v3658, 32
        %v3676 = vpop.permute.xlu0 %3675
        %3677 = vrot.lane.b32.xlu0 %v3659, 32
        %v3678 = vpop.permute.xlu0 %3677
        %3679 = vrot.lane.b32.xlu0 %v3660, 32
        %v3680 = vpop.permute.xlu0 %3679
        %3681 = vrot.lane.b32.xlu0 %v3661, 32
        %v3682 = vpop.permute.xlu0 %3681
        %3683 = vrot.lane.b32.xlu0 %v3662, 32
        %v3684 = vpop.permute.xlu0 %3683
        %3685 = vrot.lane.b32.xlu0 %v3663, 32
        %v3686 = vpop.permute.xlu0 %3685
        %3687 = vrot.lane.b32.xlu0 %v3664, 32
        %v3688 = vpop.permute.xlu0 %3687
        %3697 = vst.msk [vmem:[#allocation3] sm:$0xf] %vm693, %v3674
        %3698 = vst.msk [vmem:[#allocation3 + $0xc] sm:$0xf] %vm693, %v3676
        %3699 = vst.msk [vmem:[#allocation3 + $0x18] sm:$0xf] %vm693, %v3678
        %3700 = vst.msk [vmem:[#allocation3 + $0x24] sm:$0xf] %vm693, %v3680
        %3701 = vst.msk [vmem:[#allocation3 + $0x30] sm:$0xf] %vm693, %v3682
        %3702 = vst.msk [vmem:[#allocation3 + $0x3c] sm:$0xf] %vm693, %v3684
        %3703 = vst.msk [vmem:[#allocation3 + $0x48] sm:$0xf] %vm693, %v3686
        %3704 = vst.msk [vmem:[#allocation3 + $0x54] sm:$0xf] %vm693, %v3688
        %v3705 = vld [vmem:[#allocation2 + $0x2] sm:$0xff]
        %v3706 = vld [vmem:[#allocation2 + $0x12] sm:$0xff]
        %v3707 = vld [vmem:[#allocation2 + $0x22] sm:$0xff]
        %v3708 = vld [vmem:[#allocation2 + $0x32] sm:$0xff]
        %v3709 = vld [vmem:[#allocation2 + $0x42] sm:$0xff]
        %v3710 = vld [vmem:[#allocation2 + $0x52] sm:$0xff]
        %v3711 = vld [vmem:[#allocation2 + $0x62] sm:$0xff]
        %v3712 = vld [vmem:[#allocation2 + $0x72] sm:$0xff]
        %v3713 = vpack.c.bf16 %v3705, %v3705
        %v3714 = vpack.c.bf16 %v3706, %v3706
        %v3715 = vpack.c.bf16 %v3707, %v3707
        %v3716 = vpack.c.bf16 %v3708, %v3708
        %v3717 = vpack.c.bf16 %v3709, %v3709
        %v3718 = vpack.c.bf16 %v3710, %v3710
        %v3719 = vpack.c.bf16 %v3711, %v3711
        %v3720 = vpack.c.bf16 %v3712, %v3712
        %3729 = vrot.lane.b32.xlu0 %v3713, 64
        %v3730 = vpop.permute.xlu0 %3729
        %3731 = vrot.lane.b32.xlu0 %v3714, 64
        %v3732 = vpop.permute.xlu0 %3731
        %3733 = vrot.lane.b32.xlu0 %v3715, 64
        %v3734 = vpop.permute.xlu0 %3733
        %3735 = vrot.lane.b32.xlu0 %v3716, 64
        %v3736 = vpop.permute.xlu0 %3735
        %3737 = vrot.lane.b32.xlu0 %v3717, 64
        %v3738 = vpop.permute.xlu0 %3737
        %3739 = vrot.lane.b32.xlu0 %v3718, 64
        %v3740 = vpop.permute.xlu0 %3739
        %3741 = vrot.lane.b32.xlu0 %v3719, 64
        %v3742 = vpop.permute.xlu0 %3741
        %3743 = vrot.lane.b32.xlu0 %v3720, 64
        %v3744 = vpop.permute.xlu0 %3743
        %3753 = vst.msk [vmem:[#allocation3] sm:$0xf] %vm750, %v3730
        %3754 = vst.msk [vmem:[#allocation3 + $0xc] sm:$0xf] %vm750, %v3732
        %3755 = vst.msk [vmem:[#allocation3 + $0x18] sm:$0xf] %vm750, %v3734
        %3756 = vst.msk [vmem:[#allocation3 + $0x24] sm:$0xf] %vm750, %v3736
        %3757 = vst.msk [vmem:[#allocation3 + $0x30] sm:$0xf] %vm750, %v3738
        %3758 = vst.msk [vmem:[#allocation3 + $0x3c] sm:$0xf] %vm750, %v3740
        %3759 = vst.msk [vmem:[#allocation3 + $0x48] sm:$0xf] %vm750, %v3742
        %3760 = vst.msk [vmem:[#allocation3 + $0x54] sm:$0xf] %vm750, %v3744
        %v3761 = vld [vmem:[%s611] sm:$0xff]
        %v3762 = vld [vmem:[%s611 + $0x10] sm:$0xff]
        %v3763 = vld [vmem:[%s611 + $0x20] sm:$0xff]
        %v3764 = vld [vmem:[%s611 + $0x30] sm:$0xff]
        %v3765 = vld [vmem:[%s611 + $0x40] sm:$0xff]
        %v3766 = vld [vmem:[%s611 + $0x50] sm:$0xff]
        %v3767 = vld [vmem:[%s611 + $0x60] sm:$0xff]
        %v3768 = vld [vmem:[%s611 + $0x70] sm:$0xff]
        %v3769 = vpack.c.bf16 %v3761, %v3761
        %v3770 = vpack.c.bf16 %v3762, %v3762
        %v3771 = vpack.c.bf16 %v3763, %v3763
        %v3772 = vpack.c.bf16 %v3764, %v3764
        %v3773 = vpack.c.bf16 %v3765, %v3765
        %v3774 = vpack.c.bf16 %v3766, %v3766
        %v3775 = vpack.c.bf16 %v3767, %v3767
        %v3776 = vpack.c.bf16 %v3768, %v3768
        %3785 = vrot.lane.b32.xlu0 %v3769, 96
        %v3786 = vpop.permute.xlu0 %3785
        %3787 = vrot.lane.b32.xlu0 %v3770, 96
        %v3788 = vpop.permute.xlu0 %3787
        %3789 = vrot.lane.b32.xlu0 %v3771, 96
        %v3790 = vpop.permute.xlu0 %3789
        %3791 = vrot.lane.b32.xlu0 %v3772, 96
        %v3792 = vpop.permute.xlu0 %3791
        %3793 = vrot.lane.b32.xlu0 %v3773, 96
        %v3794 = vpop.permute.xlu0 %3793
        %3795 = vrot.lane.b32.xlu0 %v3774, 96
        %v3796 = vpop.permute.xlu0 %3795
        %3797 = vrot.lane.b32.xlu0 %v3775, 96
        %v3798 = vpop.permute.xlu0 %3797
        %3799 = vrot.lane.b32.xlu0 %v3776, 96
        %v3800 = vpop.permute.xlu0 %3799
        %3809 = vst.msk [vmem:[#allocation3] sm:$0xf] %vm807, %v3786
        %3810 = vst.msk [vmem:[#allocation3 + $0xc] sm:$0xf] %vm807, %v3788
        %3811 = vst.msk [vmem:[#allocation3 + $0x18] sm:$0xf] %vm807, %v3790
        %3812 = vst.msk [vmem:[#allocation3 + $0x24] sm:$0xf] %vm807, %v3792
        %3813 = vst.msk [vmem:[#allocation3 + $0x30] sm:$0xf] %vm807, %v3794
        %3814 = vst.msk [vmem:[#allocation3 + $0x3c] sm:$0xf] %vm807, %v3796
        %3815 = vst.msk [vmem:[#allocation3 + $0x48] sm:$0xf] %vm807, %v3798
        %3816 = vst.msk [vmem:[#allocation3 + $0x54] sm:$0xf] %vm807, %v3800
        %v3817 = vld [vmem:[%s611 + $0x1] sm:$0xff]
        %v3818 = vld [vmem:[%s611 + $0x11] sm:$0xff]
        %v3819 = vld [vmem:[%s611 + $0x21] sm:$0xff]
        %v3820 = vld [vmem:[%s611 + $0x31] sm:$0xff]
        %v3821 = vld [vmem:[%s611 + $0x41] sm:$0xff]
        %v3822 = vld [vmem:[%s611 + $0x51] sm:$0xff]
        %v3823 = vld [vmem:[%s611 + $0x61] sm:$0xff]
        %v3824 = vld [vmem:[%s611 + $0x71] sm:$0xff]
        %v3825 = vpack.c.bf16 %v3817, %v3817
        %v3826 = vpack.c.bf16 %v3818, %v3818
        %v3827 = vpack.c.bf16 %v3819, %v3819
        %v3828 = vpack.c.bf16 %v3820, %v3820
        %v3829 = vpack.c.bf16 %v3821, %v3821
        %v3830 = vpack.c.bf16 %v3822, %v3822
        %v3831 = vpack.c.bf16 %v3823, %v3823
        %v3832 = vpack.c.bf16 %v3824, %v3824
        %3833 = vst.msk [vmem:[#allocation3 + $0x4] sm:$0xf] %vm636, %v3825
        %3834 = vst.msk [vmem:[#allocation3 + $0x10] sm:$0xf] %vm636, %v3826
        %3835 = vst.msk [vmem:[#allocation3 + $0x1c] sm:$0xf] %vm636, %v3827
        %3836 = vst.msk [vmem:[#allocation3 + $0x28] sm:$0xf] %vm636, %v3828
        %3837 = vst.msk [vmem:[#allocation3 + $0x34] sm:$0xf] %vm636, %v3829
        %3838 = vst.msk [vmem:[#allocation3 + $0x40] sm:$0xf] %vm636, %v3830
        %3839 = vst.msk [vmem:[#allocation3 + $0x4c] sm:$0xf] %vm636, %v3831
        %3840 = vst.msk [vmem:[#allocation3 + $0x58] sm:$0xf] %vm636, %v3832
        %v3841 = vld [vmem:[%s611 + $0x2] sm:$0xff]
        %v3842 = vld [vmem:[%s611 + $0x12] sm:$0xff]
        %v3843 = vld [vmem:[%s611 + $0x22] sm:$0xff]
        %v3844 = vld [vmem:[%s611 + $0x32] sm:$0xff]
        %v3845 = vld [vmem:[%s611 + $0x42] sm:$0xff]
        %v3846 = vld [vmem:[%s611 + $0x52] sm:$0xff]
        %v3847 = vld [vmem:[%s611 + $0x62] sm:$0xff]
        %v3848 = vld [vmem:[%s611 + $0x72] sm:$0xff]
        %v3849 = vpack.c.bf16 %v3841, %v3841
        %v3850 = vpack.c.bf16 %v3842, %v3842
        %v3851 = vpack.c.bf16 %v3843, %v3843
        %v3852 = vpack.c.bf16 %v3844, %v3844
        %v3853 = vpack.c.bf16 %v3845, %v3845
        %v3854 = vpack.c.bf16 %v3846, %v3846
        %v3855 = vpack.c.bf16 %v3847, %v3847
        %v3856 = vpack.c.bf16 %v3848, %v3848
        %3865 = vrot.lane.b32.xlu0 %v3849, 32
        %v3866 = vpop.permute.xlu0 %3865
        %3867 = vrot.lane.b32.xlu0 %v3850, 32
        %v3868 = vpop.permute.xlu0 %3867
        %3869 = vrot.lane.b32.xlu0 %v3851, 32
        %v3870 = vpop.permute.xlu0 %3869
        %3871 = vrot.lane.b32.xlu0 %v3852, 32
        %v3872 = vpop.permute.xlu0 %3871
        %3873 = vrot.lane.b32.xlu0 %v3853, 32
        %v3874 = vpop.permute.xlu0 %3873
        %3875 = vrot.lane.b32.xlu0 %v3854, 32
        %v3876 = vpop.permute.xlu0 %3875
        %3877 = vrot.lane.b32.xlu0 %v3855, 32
        %v3878 = vpop.permute.xlu0 %3877
        %3879 = vrot.lane.b32.xlu0 %v3856, 32
        %v3880 = vpop.permute.xlu0 %3879
        %3889 = vst.msk [vmem:[#allocation3 + $0x4] sm:$0xf] %vm693, %v3866
        %3890 = vst.msk [vmem:[#allocation3 + $0x10] sm:$0xf] %vm693, %v3868
        %3891 = vst.msk [vmem:[#allocation3 + $0x1c] sm:$0xf] %vm693, %v3870
        %3892 = vst.msk [vmem:[#allocation3 + $0x28] sm:$0xf] %vm693, %v3872
        %3893 = vst.msk [vmem:[#allocation3 + $0x34] sm:$0xf] %vm693, %v3874
        %3894 = vst.msk [vmem:[#allocation3 + $0x40] sm:$0xf] %vm693, %v3876
        %3895 = vst.msk [vmem:[#allocation3 + $0x4c] sm:$0xf] %vm693, %v3878
        %3896 = vst.msk [vmem:[#allocation3 + $0x58] sm:$0xf] %vm693, %v3880
        %v3897 = vld [vmem:[%s896] sm:$0xff]
        %v3898 = vld [vmem:[%s896 + $0x10] sm:$0xff]
        %v3899 = vld [vmem:[%s896 + $0x20] sm:$0xff]
        %v3900 = vld [vmem:[%s896 + $0x30] sm:$0xff]
        %v3901 = vld [vmem:[%s896 + $0x40] sm:$0xff]
        %v3902 = vld [vmem:[%s896 + $0x50] sm:$0xff]
        %v3903 = vld [vmem:[%s896 + $0x60] sm:$0xff]
        %v3904 = vld [vmem:[%s896 + $0x70] sm:$0xff]
        %v3905 = vpack.c.bf16 %v3897, %v3897
        %v3906 = vpack.c.bf16 %v3898, %v3898
        %v3907 = vpack.c.bf16 %v3899, %v3899
        %v3908 = vpack.c.bf16 %v3900, %v3900
        %v3909 = vpack.c.bf16 %v3901, %v3901
        %v3910 = vpack.c.bf16 %v3902, %v3902
        %v3911 = vpack.c.bf16 %v3903, %v3903
        %v3912 = vpack.c.bf16 %v3904, %v3904
        %3921 = vrot.lane.b32.xlu0 %v3905, 64
        %v3922 = vpop.permute.xlu0 %3921
        %3923 = vrot.lane.b32.xlu0 %v3906, 64
        %v3924 = vpop.permute.xlu0 %3923
        %3925 = vrot.lane.b32.xlu0 %v3907, 64
        %v3926 = vpop.permute.xlu0 %3925
        %3927 = vrot.lane.b32.xlu0 %v3908, 64
        %v3928 = vpop.permute.xlu0 %3927
        %3929 = vrot.lane.b32.xlu0 %v3909, 64
        %v3930 = vpop.permute.xlu0 %3929
        %3931 = vrot.lane.b32.xlu0 %v3910, 64
        %v3932 = vpop.permute.xlu0 %3931
        %3933 = vrot.lane.b32.xlu0 %v3911, 64
        %v3934 = vpop.permute.xlu0 %3933
        %3935 = vrot.lane.b32.xlu0 %v3912, 64
        %v3936 = vpop.permute.xlu0 %3935
        %3945 = vst.msk [vmem:[#allocation3 + $0x4] sm:$0xf] %vm750, %v3922
        %3946 = vst.msk [vmem:[#allocation3 + $0x10] sm:$0xf] %vm750, %v3924
        %3947 = vst.msk [vmem:[#allocation3 + $0x1c] sm:$0xf] %vm750, %v3926
        %3948 = vst.msk [vmem:[#allocation3 + $0x28] sm:$0xf] %vm750, %v3928
        %3949 = vst.msk [vmem:[#allocation3 + $0x34] sm:$0xf] %vm750, %v3930
        %3950 = vst.msk [vmem:[#allocation3 + $0x40] sm:$0xf] %vm750, %v3932
        %3951 = vst.msk [vmem:[#allocation3 + $0x4c] sm:$0xf] %vm750, %v3934
        %3952 = vst.msk [vmem:[#allocation3 + $0x58] sm:$0xf] %vm750, %v3936
        %v3953 = vld [vmem:[%s896 + $0x1] sm:$0xff]
        %v3954 = vld [vmem:[%s896 + $0x11] sm:$0xff]
        %v3955 = vld [vmem:[%s896 + $0x21] sm:$0xff]
        %v3956 = vld [vmem:[%s896 + $0x31] sm:$0xff]
        %v3957 = vld [vmem:[%s896 + $0x41] sm:$0xff]
        %v3958 = vld [vmem:[%s896 + $0x51] sm:$0xff]
        %v3959 = vld [vmem:[%s896 + $0x61] sm:$0xff]
        %v3960 = vld [vmem:[%s896 + $0x71] sm:$0xff]
        %v3961 = vpack.c.bf16 %v3953, %v3953
        %v3962 = vpack.c.bf16 %v3954, %v3954
        %v3963 = vpack.c.bf16 %v3955, %v3955
        %v3964 = vpack.c.bf16 %v3956, %v3956
        %v3965 = vpack.c.bf16 %v3957, %v3957
        %v3966 = vpack.c.bf16 %v3958, %v3958
        %v3967 = vpack.c.bf16 %v3959, %v3959
        %v3968 = vpack.c.bf16 %v3960, %v3960
        %3977 = vrot.lane.b32.xlu0 %v3961, 96
        %v3978 = vpop.permute.xlu0 %3977
        %3979 = vrot.lane.b32.xlu0 %v3962, 96
        %v3980 = vpop.permute.xlu0 %3979
        %3981 = vrot.lane.b32.xlu0 %v3963, 96
        %v3982 = vpop.permute.xlu0 %3981
        %3983 = vrot.lane.b32.xlu0 %v3964, 96
        %v3984 = vpop.permute.xlu0 %3983
        %3985 = vrot.lane.b32.xlu0 %v3965, 96
        %v3986 = vpop.permute.xlu0 %3985
        %3987 = vrot.lane.b32.xlu0 %v3966, 96
        %v3988 = vpop.permute.xlu0 %3987
        %3989 = vrot.lane.b32.xlu0 %v3967, 96
        %v3990 = vpop.permute.xlu0 %3989
        %3991 = vrot.lane.b32.xlu0 %v3968, 96
        %v3992 = vpop.permute.xlu0 %3991
        %4001 = vst.msk [vmem:[#allocation3 + $0x4] sm:$0xf] %vm807, %v3978
        %4002 = vst.msk [vmem:[#allocation3 + $0x10] sm:$0xf] %vm807, %v3980
        %4003 = vst.msk [vmem:[#allocation3 + $0x1c] sm:$0xf] %vm807, %v3982
        %4004 = vst.msk [vmem:[#allocation3 + $0x28] sm:$0xf] %vm807, %v3984
        %4005 = vst.msk [vmem:[#allocation3 + $0x34] sm:$0xf] %vm807, %v3986
        %4006 = vst.msk [vmem:[#allocation3 + $0x40] sm:$0xf] %vm807, %v3988
        %4007 = vst.msk [vmem:[#allocation3 + $0x4c] sm:$0xf] %vm807, %v3990
        %4008 = vst.msk [vmem:[#allocation3 + $0x58] sm:$0xf] %vm807, %v3992
        %v4009 = vld [vmem:[%s896 + $0x2] sm:$0xff]
        %v4010 = vld [vmem:[%s896 + $0x12] sm:$0xff]
        %v4011 = vld [vmem:[%s896 + $0x22] sm:$0xff]
        %v4012 = vld [vmem:[%s896 + $0x32] sm:$0xff]
        %v4013 = vld [vmem:[%s896 + $0x42] sm:$0xff]
        %v4014 = vld [vmem:[%s896 + $0x52] sm:$0xff]
        %v4015 = vld [vmem:[%s896 + $0x62] sm:$0xff]
        %v4016 = vld [vmem:[%s896 + $0x72] sm:$0xff]
        %v4017 = vpack.c.bf16 %v4009, %v4009
        %v4018 = vpack.c.bf16 %v4010, %v4010
        %v4019 = vpack.c.bf16 %v4011, %v4011
        %v4020 = vpack.c.bf16 %v4012, %v4012
        %v4021 = vpack.c.bf16 %v4013, %v4013
        %v4022 = vpack.c.bf16 %v4014, %v4014
        %v4023 = vpack.c.bf16 %v4015, %v4015
        %v4024 = vpack.c.bf16 %v4016, %v4016
        %4025 = vst.msk [vmem:[#allocation3 + $0x8] sm:$0xf] %vm636, %v4017
        %4026 = vst.msk [vmem:[#allocation3 + $0x14] sm:$0xf] %vm636, %v4018
        %4027 = vst.msk [vmem:[#allocation3 + $0x20] sm:$0xf] %vm636, %v4019
        %4028 = vst.msk [vmem:[#allocation3 + $0x2c] sm:$0xf] %vm636, %v4020
        %4029 = vst.msk [vmem:[#allocation3 + $0x38] sm:$0xf] %vm636, %v4021
        %4030 = vst.msk [vmem:[#allocation3 + $0x44] sm:$0xf] %vm636, %v4022
        %4031 = vst.msk [vmem:[#allocation3 + $0x50] sm:$0xf] %vm636, %v4023
        %4032 = vst.msk [vmem:[#allocation3 + $0x5c] sm:$0xf] %vm636, %v4024
        %v4033 = vld [vmem:[#allocation3] sm:$0xff]
        %v4034 = vld [vmem:[#allocation3 + $0x8] sm:$0xf]
        %v4035 = vld [vmem:[#allocation3 + $0xc] sm:$0xff]
        %v4036 = vld [vmem:[#allocation3 + $0x14] sm:$0xf]
        %v4037 = vld [vmem:[#allocation3 + $0x18] sm:$0xff]
        %v4038 = vld [vmem:[#allocation3 + $0x20] sm:$0xf]
        %v4039 = vld [vmem:[#allocation3 + $0x24] sm:$0xff]
        %v4040 = vld [vmem:[#allocation3 + $0x2c] sm:$0xf]
        %v4041 = vld [vmem:[#allocation3 + $0x30] sm:$0xff]
        %v4042 = vld [vmem:[#allocation3 + $0x38] sm:$0xf]
        %v4043 = vld [vmem:[#allocation3 + $0x3c] sm:$0xff]
        %v4044 = vld [vmem:[#allocation3 + $0x44] sm:$0xf]
        %v4045 = vld [vmem:[#allocation3 + $0x48] sm:$0xff]
        %v4046 = vld [vmem:[#allocation3 + $0x50] sm:$0xf]
        %v4047 = vld [vmem:[#allocation3 + $0x54] sm:$0xff]
        %v4048 = vld [vmem:[#allocation3 + $0x5c] sm:$0xf]
        %v4050 = vperm.slane %v3616, 0
        %v4068 = vunpack.c.l.b16 %v4033
        %v4069 = vunpack.c.h.b16 %v4033
        %v4070 = vunpack.c.l.b16 %v4034
        %v4071 = vunpack.c.l.b16 %v4035
        %v4072 = vunpack.c.h.b16 %v4035
        %v4073 = vunpack.c.l.b16 %v4036
        %v4074 = vunpack.c.l.b16 %v4037
        %v4075 = vunpack.c.h.b16 %v4037
        %v4076 = vunpack.c.l.b16 %v4038
        %v4077 = vunpack.c.l.b16 %v4039
        %v4078 = vunpack.c.h.b16 %v4039
        %v4079 = vunpack.c.l.b16 %v4040
        %v4080 = vunpack.c.l.b16 %v4041
        %v4081 = vunpack.c.h.b16 %v4041
        %v4082 = vunpack.c.l.b16 %v4042
        %v4083 = vunpack.c.l.b16 %v4043
        %v4084 = vunpack.c.h.b16 %v4043
        %v4085 = vunpack.c.l.b16 %v4044
        %v4086 = vunpack.c.l.b16 %v4045
        %v4087 = vunpack.c.h.b16 %v4045
        %v4088 = vunpack.c.l.b16 %v4046
        %v4089 = vunpack.c.l.b16 %v4047
        %v4090 = vunpack.c.h.b16 %v4047
        %v4091 = vunpack.c.l.b16 %v4048
        %v4092 = vpack.c.b16 %v4071, %v4068
        %v4093 = vpack.c.b16 %v4072, %v4069
        %v4094 = vpack.c.b16 %v4073, %v4070
        %v4095 = vpack.c.b16 %v4077, %v4074
        %v4096 = vpack.c.b16 %v4078, %v4075
        %v4097 = vpack.c.b16 %v4079, %v4076
        %v4098 = vpack.c.b16 %v4083, %v4080
        %v4099 = vpack.c.b16 %v4084, %v4081
        %v4100 = vpack.c.b16 %v4085, %v4082
        %v4101 = vpack.c.b16 %v4089, %v4086
        %v4102 = vpack.c.b16 %v4090, %v4087
        %v4103 = vpack.c.b16 %v4091, %v4088
        %v4148 = vunpack.c.l.b16 %v3579
        %v4149 = vunpack.c.l.b16 %v3580
        %v4150 = vunpack.c.l.b16 %v3581
        %v4151 = vunpack.c.l.b16 %v3582
        %v4152 = vunpack.c.l.b16 %v3583
        %v4153 = vunpack.c.l.b16 %v3584
        %v4154 = vunpack.c.l.b16 %v3585
        %v4155 = vunpack.c.l.b16 %v3586
        %v4156 = vunpack.c.l.b16 %v3587
        %v4157 = vunpack.c.l.b16 %v3588
        %v4158 = vunpack.c.l.b16 %v3589
        %v4159 = vunpack.c.l.b16 %v3590
        %v4160 = vunpack.c.l.b16 %v3591
        %v4161 = vunpack.c.l.b16 %v3592
        %v4162 = vunpack.c.l.b16 %v3593
        %v4163 = vunpack.c.l.b16 %v3594
        %v4164 = vunpack.c.l.b16 %v3595
        %v4165 = vunpack.c.l.b16 %v3596
        %v4166 = vunpack.c.l.b16 %v3597
        %v4167 = vunpack.c.l.b16 %v3598
        %v4168 = vunpack.c.l.b16 %v3599
        %v4169 = vunpack.c.l.b16 %v3600
        %v4170 = vunpack.c.l.b16 %v3601
        %v4171 = vunpack.c.l.b16 %v3602
        %v4172 = vunpack.c.l.b16 %v3603
        %v4173 = vunpack.c.l.b16 %v3604
        %v4174 = vunpack.c.l.b16 %v3605
        %v4175 = vunpack.c.l.b16 %v3606
        %v4176 = vunpack.c.l.b16 %v3607
        %v4177 = vunpack.c.l.b16 %v3608
        %v4178 = vunpack.c.l.b16 %v3609
        %v4179 = vunpack.c.l.b16 %v3610
        %v4180 = vunpack.c.l.b16 %v3611
        %v4181 = vunpack.c.l.b16 %v3612
        %v4182 = vunpack.c.l.b16 %v3613
        %v4183 = vunpack.c.l.b16 %v3614
        %v4184 = vpack.c.b16 %v4149, %v4148
        %v4185 = vpack.c.b16 %v4151, %v4150
        %v4186 = vpack.c.b16 %v4153, %v4152
        %v4187 = vpack.c.b16 %v4155, %v4154
        %v4188 = vpack.c.b16 %v4157, %v4156
        %v4189 = vpack.c.b16 %v4159, %v4158
        %v4190 = vpack.c.b16 %v4161, %v4160
        %v4191 = vpack.c.b16 %v4163, %v4162
        %v4192 = vpack.c.b16 %v4165, %v4164
        %v4193 = vpack.c.b16 %v4167, %v4166
        %v4194 = vpack.c.b16 %v4169, %v4168
        %v4195 = vpack.c.b16 %v4171, %v4170
        %v4196 = vpack.c.b16 %v4173, %v4172
        %v4197 = vpack.c.b16 %v4175, %v4174
        %v4198 = vpack.c.b16 %v4177, %v4176
        %v4199 = vpack.c.b16 %v4179, %v4178
        %v4200 = vpack.c.b16 %v4181, %v4180
        %v4201 = vpack.c.b16 %v4183, %v4182
        %v4221 = vsel %vm544, %v4094, 0
        %v4224 = vsel %vm544, %v4097, 0
        %v4227 = vsel %vm544, %v4100, 0
        %v4230 = vsel %vm544, %v4103, 0
        %4232 = vmatpush.bf16.msra.mxu0 %v4191
        %4233 = vmatpush.bf16.msra.mxu0 %v4190
        %4234 = vmatpush.bf16.msra.mxu0 %v4189
        %4235 = vmatpush.bf16.msra.mxu0 %v4188
        %4236 = vmatpush.bf16.msra.mxu0 %v4187
        %4237 = vmatpush.bf16.msra.mxu0 %v4186
        %4238 = vmatpush.bf16.msra.mxu0 %v4185
        %4239 = vmatpush.bf16.msra.mxu0 %v4184
        %4240 = vmatmul.bf16.gmra.mxu0 %v4092
        %v4241 = vpop.f32.mrf.mxu0
        %v4242 = vadd.f32 %v4050, %v4241
        %v4243 = vpop.f32.mrf.mxu0
        %v4244 = vadd.f32 %v4050, %v4243
        %4245 = vmatmul.bf16.gmra.mxu0 %v4095
        %v4246 = vpop.f32.mrf.mxu0
        %v4247 = vadd.f32 %v4050, %v4246
        %v4248 = vpop.f32.mrf.mxu0
        %v4249 = vadd.f32 %v4050, %v4248
        %4250 = vmatmul.bf16.gmra.mxu0 %v4098
        %v4251 = vpop.f32.mrf.mxu0
        %v4252 = vadd.f32 %v4050, %v4251
        %v4253 = vpop.f32.mrf.mxu0
        %v4254 = vadd.f32 %v4050, %v4253
        %4255 = vmatmul.bf16.gmra.mxu0 %v4101
        %v4256 = vpop.f32.mrf.mxu0
        %v4257 = vadd.f32 %v4050, %v4256
        %v4258 = vpop.f32.mrf.mxu0
        %v4259 = vadd.f32 %v4050, %v4258
        %4260 = vdwg.mxu0
        %4261 = vmatpush.bf16.msra.mxu0 %v4199
        %4262 = vmatpush.bf16.msra.mxu0 %v4198
        %4263 = vmatpush.bf16.msra.mxu0 %v4197
        %4264 = vmatpush.bf16.msra.mxu0 %v4196
        %4265 = vmatpush.bf16.msra.mxu0 %v4195
        %4266 = vmatpush.bf16.msra.mxu0 %v4194
        %4267 = vmatpush.bf16.msra.mxu0 %v4193
        %4268 = vmatpush.bf16.msra.mxu0 %v4192
        %4269 = vmatmul.bf16.gmra.mxu0 %v4093
        %v4270 = vpop.f32.mrf.mxu0
        %v4271 = vadd.f32 %v4242, %v4270
        %v4272 = vpop.f32.mrf.mxu0
        %v4273 = vadd.f32 %v4244, %v4272
        %4274 = vmatmul.bf16.gmra.mxu0 %v4096
        %v4275 = vpop.f32.mrf.mxu0
        %v4276 = vadd.f32 %v4247, %v4275
        %v4277 = vpop.f32.mrf.mxu0
        %v4278 = vadd.f32 %v4249, %v4277
        %4279 = vmatmul.bf16.gmra.mxu0 %v4099
        %v4280 = vpop.f32.mrf.mxu0
        %v4281 = vadd.f32 %v4252, %v4280
        %v4282 = vpop.f32.mrf.mxu0
        %v4283 = vadd.f32 %v4254, %v4282
        %4284 = vmatmul.bf16.gmra.mxu0 %v4102
        %v4285 = vpop.f32.mrf.mxu0
        %v4286 = vadd.f32 %v4257, %v4285
        %v4287 = vpop.f32.mrf.mxu0
        %v4288 = vadd.f32 %v4259, %v4287
        %4289 = vdwg.mxu0
        %4290 = vmatpush.bf16.msra.mxu0 0
        %4291 = vmatpush.bf16.msra.mxu0 0
        %4292 = vmatpush.bf16.msra.mxu0 0
        %4293 = vmatpush.bf16.msra.mxu0 0
        %4294 = vmatpush.bf16.msra.mxu0 0
        %4295 = vmatpush.bf16.msra.mxu0 0
        %4296 = vmatpush.bf16.msra.mxu0 %v4201
        %4297 = vmatpush.bf16.msra.mxu0 %v4200
        %4298 = vmatmul.bf16.gmra.mxu0 %v4221
        %v4299 = vpop.f32.mrf.mxu0
        %v4300 = vadd.f32 %v4271, %v4299
        %v4301 = vpop.f32.mrf.mxu0
        %v4302 = vadd.f32 %v4273, %v4301
        %4303 = vmatmul.bf16.gmra.mxu0 %v4224
        %v4304 = vpop.f32.mrf.mxu0
        %v4305 = vadd.f32 %v4276, %v4304
        %v4306 = vpop.f32.mrf.mxu0
        %v4307 = vadd.f32 %v4278, %v4306
        %4308 = vmatmul.bf16.gmra.mxu0 %v4227
        %v4309 = vpop.f32.mrf.mxu0
        %v4310 = vadd.f32 %v4281, %v4309
        %v4311 = vpop.f32.mrf.mxu0
        %v4312 = vadd.f32 %v4283, %v4311
        %4313 = vmatmul.bf16.gmra.mxu0 %v4230
        %v4314 = vpop.f32.mrf.mxu0
        %v4315 = vadd.f32 %v4286, %v4314
        %v4316 = vpop.f32.mrf.mxu0
        %v4317 = vadd.f32 %v4288, %v4316
        %4318 = vdwg.mxu0
        %v4319 = vadd.f32 %v4300, %v2821
        %v4320 = vadd.f32 %v4302, %v2822
        %v4321 = vadd.f32 %v4305, %v2823
        %v4322 = vadd.f32 %v4307, %v2824
        %v4323 = vadd.f32 %v4310, %v2825
        %v4324 = vadd.f32 %v4312, %v2826
        %v4325 = vadd.f32 %v4315, %v2827
        %v4326 = vadd.f32 %v4317, %v2828
        %v4327 = vmax.f32 %v4319, 0.0
        %v4328 = vmax.f32 %v4320, 0.0
        %v4329 = vmax.f32 %v4321, 0.0
        %v4330 = vmax.f32 %v4322, 0.0
        %v4331 = vmax.f32 %v4323, 0.0
        %v4332 = vmax.f32 %v4324, 0.0
        %v4333 = vmax.f32 %v4325, 0.0
        %v4334 = vmax.f32 %v4326, 0.0
        %v4335 = vld [vmem:[%s7] sm:$0xf]
        %v4336 = vld [vmem:[%s7 + $0x4] sm:$0xf]
        %v4337 = vld [vmem:[%s7 + $0x8] sm:$0xf]
        %v4338 = vld [vmem:[%s7 + $0xc] sm:$0xf]
        %v4339 = vld [vmem:[%s7 + $0x10] sm:$0xf]
        %v4340 = vld [vmem:[%s7 + $0x14] sm:$0xf]
        %v4341 = vld [vmem:[%s7 + $0x18] sm:$0xf]
        %v4342 = vld [vmem:[%s7 + $0x1c] sm:$0xf]
        %v4343 = vld [vmem:[%s7 + $0x20] sm:$0xf]
        %v4344 = vld [vmem:[%s7 + $0x24] sm:$0xf]
        %v4345 = vld [vmem:[%s7 + $0x28] sm:$0xf]
        %v4346 = vld [vmem:[%s7 + $0x2c] sm:$0xf]
        %v4347 = vld [vmem:[%s7 + $0x30] sm:$0xf]
        %v4348 = vld [vmem:[%s7 + $0x34] sm:$0xf]
        %v4349 = vld [vmem:[%s7 + $0x38] sm:$0xf]
        %v4350 = vld [vmem:[%s7 + $0x3c] sm:$0xf]
        %v4351 = vld [vmem:[%s7 + $0x40] sm:$0xf]
        %v4352 = vld [vmem:[%s7 + $0x44] sm:$0xf]
        %v4353 = vld [vmem:[%s7 + $0x48] sm:$0xf]
        %v4354 = vld [vmem:[%s7 + $0x4c] sm:$0xf]
        %v4355 = vld [vmem:[%s7 + $0x50] sm:$0xf]
        %v4356 = vld [vmem:[%s7 + $0x54] sm:$0xf]
        %v4357 = vld [vmem:[%s7 + $0x58] sm:$0xf]
        %v4358 = vld [vmem:[%s7 + $0x5c] sm:$0xf]
        %v4359 = vld [vmem:[%s7 + $0x60] sm:$0xf]
        %v4360 = vld [vmem:[%s7 + $0x64] sm:$0xf]
        %v4361 = vld [vmem:[%s7 + $0x68] sm:$0xf]
        %v4362 = vld [vmem:[%s7 + $0x6c] sm:$0xf]
        %v4363 = vld [vmem:[%s7 + $0x70] sm:$0xf]
        %v4364 = vld [vmem:[%s7 + $0x74] sm:$0xf]
        %v4365 = vld [vmem:[%s7 + $0x78] sm:$0xf]
        %v4366 = vld [vmem:[%s7 + $0x7c] sm:$0xf]
        %v4367 = vld [vmem:[%s7 + $0x80] sm:$0xf]
        %v4368 = vld [vmem:[%s7 + $0x84] sm:$0xf]
        %v4369 = vld [vmem:[%s7 + $0x88] sm:$0xf]
        %v4370 = vld [vmem:[%s7 + $0x8c] sm:$0xf]
        %v4371 = vld [vmem:[%s8] sm:$0x1]
        %4372 = vst.msk [vmem:[%s611 + $0x1] sm:$0xff] %vm544, %v4327
        %4373 = vst.msk [vmem:[%s611 + $0x11] sm:$0xff] %vm544, %v4328
        %4374 = vst.msk [vmem:[%s611 + $0x21] sm:$0xff] %vm544, %v4329
        %4375 = vst.msk [vmem:[%s611 + $0x31] sm:$0xff] %vm544, %v4330
        %4376 = vst.msk [vmem:[%s611 + $0x41] sm:$0xff] %vm544, %v4331
        %4377 = vst.msk [vmem:[%s611 + $0x51] sm:$0xff] %vm544, %v4332
        %4378 = vst.msk [vmem:[%s611 + $0x61] sm:$0xff] %vm544, %v4333
        %4379 = vst.msk [vmem:[%s611 + $0x71] sm:$0xff] %vm544, %v4334
        %v4380 = vld [vmem:[#allocation2] sm:$0xff]
        %v4381 = vld [vmem:[#allocation2 + $0x10] sm:$0xff]
        %v4382 = vld [vmem:[#allocation2 + $0x20] sm:$0xff]
        %v4383 = vld [vmem:[#allocation2 + $0x30] sm:$0xff]
        %v4384 = vld [vmem:[#allocation2 + $0x40] sm:$0xff]
        %v4385 = vld [vmem:[#allocation2 + $0x50] sm:$0xff]
        %v4386 = vld [vmem:[#allocation2 + $0x60] sm:$0xff]
        %v4387 = vld [vmem:[#allocation2 + $0x70] sm:$0xff]
        %v4388 = vpack.c.bf16 %v4380, %v4380
        %v4389 = vpack.c.bf16 %v4381, %v4381
        %v4390 = vpack.c.bf16 %v4382, %v4382
        %v4391 = vpack.c.bf16 %v4383, %v4383
        %v4392 = vpack.c.bf16 %v4384, %v4384
        %v4393 = vpack.c.bf16 %v4385, %v4385
        %v4394 = vpack.c.bf16 %v4386, %v4386
        %v4395 = vpack.c.bf16 %v4387, %v4387
        %4396 = vst.msk [vmem:[#allocation3] sm:$0xf] %vm636, %v4388
        %4397 = vst.msk [vmem:[#allocation3 + $0xc] sm:$0xf] %vm636, %v4389
        %4398 = vst.msk [vmem:[#allocation3 + $0x18] sm:$0xf] %vm636, %v4390
        %4399 = vst.msk [vmem:[#allocation3 + $0x24] sm:$0xf] %vm636, %v4391
        %4400 = vst.msk [vmem:[#allocation3 + $0x30] sm:$0xf] %vm636, %v4392
        %4401 = vst.msk [vmem:[#allocation3 + $0x3c] sm:$0xf] %vm636, %v4393
        %4402 = vst.msk [vmem:[#allocation3 + $0x48] sm:$0xf] %vm636, %v4394
        %4403 = vst.msk [vmem:[#allocation3 + $0x54] sm:$0xf] %vm636, %v4395
        %v4404 = vld [vmem:[#allocation2 + $0x1] sm:$0xff]
        %v4405 = vld [vmem:[#allocation2 + $0x11] sm:$0xff]
        %v4406 = vld [vmem:[#allocation2 + $0x21] sm:$0xff]
        %v4407 = vld [vmem:[#allocation2 + $0x31] sm:$0xff]
        %v4408 = vld [vmem:[#allocation2 + $0x41] sm:$0xff]
        %v4409 = vld [vmem:[#allocation2 + $0x51] sm:$0xff]
        %v4410 = vld [vmem:[#allocation2 + $0x61] sm:$0xff]
        %v4411 = vld [vmem:[#allocation2 + $0x71] sm:$0xff]
        %v4412 = vpack.c.bf16 %v4404, %v4404
        %v4413 = vpack.c.bf16 %v4405, %v4405
        %v4414 = vpack.c.bf16 %v4406, %v4406
        %v4415 = vpack.c.bf16 %v4407, %v4407
        %v4416 = vpack.c.bf16 %v4408, %v4408
        %v4417 = vpack.c.bf16 %v4409, %v4409
        %v4418 = vpack.c.bf16 %v4410, %v4410
        %v4419 = vpack.c.bf16 %v4411, %v4411
        %4428 = vrot.lane.b32.xlu0 %v4412, 32
        %v4429 = vpop.permute.xlu0 %4428
        %4430 = vrot.lane.b32.xlu0 %v4413, 32
        %v4431 = vpop.permute.xlu0 %4430
        %4432 = vrot.lane.b32.xlu0 %v4414, 32
        %v4433 = vpop.permute.xlu0 %4432
        %4434 = vrot.lane.b32.xlu0 %v4415, 32
        %v4435 = vpop.permute.xlu0 %4434
        %4436 = vrot.lane.b32.xlu0 %v4416, 32
        %v4437 = vpop.permute.xlu0 %4436
        %4438 = vrot.lane.b32.xlu0 %v4417, 32
        %v4439 = vpop.permute.xlu0 %4438
        %4440 = vrot.lane.b32.xlu0 %v4418, 32
        %v4441 = vpop.permute.xlu0 %4440
        %4442 = vrot.lane.b32.xlu0 %v4419, 32
        %v4443 = vpop.permute.xlu0 %4442
        %4452 = vst.msk [vmem:[#allocation3] sm:$0xf] %vm693, %v4429
        %4453 = vst.msk [vmem:[#allocation3 + $0xc] sm:$0xf] %vm693, %v4431
        %4454 = vst.msk [vmem:[#allocation3 + $0x18] sm:$0xf] %vm693, %v4433
        %4455 = vst.msk [vmem:[#allocation3 + $0x24] sm:$0xf] %vm693, %v4435
        %4456 = vst.msk [vmem:[#allocation3 + $0x30] sm:$0xf] %vm693, %v4437
        %4457 = vst.msk [vmem:[#allocation3 + $0x3c] sm:$0xf] %vm693, %v4439
        %4458 = vst.msk [vmem:[#allocation3 + $0x48] sm:$0xf] %vm693, %v4441
        %4459 = vst.msk [vmem:[#allocation3 + $0x54] sm:$0xf] %vm693, %v4443
        %v4460 = vld [vmem:[#allocation2 + $0x2] sm:$0xff]
        %v4461 = vld [vmem:[#allocation2 + $0x12] sm:$0xff]
        %v4462 = vld [vmem:[#allocation2 + $0x22] sm:$0xff]
        %v4463 = vld [vmem:[#allocation2 + $0x32] sm:$0xff]
        %v4464 = vld [vmem:[#allocation2 + $0x42] sm:$0xff]
        %v4465 = vld [vmem:[#allocation2 + $0x52] sm:$0xff]
        %v4466 = vld [vmem:[#allocation2 + $0x62] sm:$0xff]
        %v4467 = vld [vmem:[#allocation2 + $0x72] sm:$0xff]
        %v4468 = vpack.c.bf16 %v4460, %v4460
        %v4469 = vpack.c.bf16 %v4461, %v4461
        %v4470 = vpack.c.bf16 %v4462, %v4462
        %v4471 = vpack.c.bf16 %v4463, %v4463
        %v4472 = vpack.c.bf16 %v4464, %v4464
        %v4473 = vpack.c.bf16 %v4465, %v4465
        %v4474 = vpack.c.bf16 %v4466, %v4466
        %v4475 = vpack.c.bf16 %v4467, %v4467
        %4484 = vrot.lane.b32.xlu0 %v4468, 64
        %v4485 = vpop.permute.xlu0 %4484
        %4486 = vrot.lane.b32.xlu0 %v4469, 64
        %v4487 = vpop.permute.xlu0 %4486
        %4488 = vrot.lane.b32.xlu0 %v4470, 64
        %v4489 = vpop.permute.xlu0 %4488
        %4490 = vrot.lane.b32.xlu0 %v4471, 64
        %v4491 = vpop.permute.xlu0 %4490
        %4492 = vrot.lane.b32.xlu0 %v4472, 64
        %v4493 = vpop.permute.xlu0 %4492
        %4494 = vrot.lane.b32.xlu0 %v4473, 64
        %v4495 = vpop.permute.xlu0 %4494
        %4496 = vrot.lane.b32.xlu0 %v4474, 64
        %v4497 = vpop.permute.xlu0 %4496
        %4498 = vrot.lane.b32.xlu0 %v4475, 64
        %v4499 = vpop.permute.xlu0 %4498
        %4508 = vst.msk [vmem:[#allocation3] sm:$0xf] %vm750, %v4485
        %4509 = vst.msk [vmem:[#allocation3 + $0xc] sm:$0xf] %vm750, %v4487
        %4510 = vst.msk [vmem:[#allocation3 + $0x18] sm:$0xf] %vm750, %v4489
        %4511 = vst.msk [vmem:[#allocation3 + $0x24] sm:$0xf] %vm750, %v4491
        %4512 = vst.msk [vmem:[#allocation3 + $0x30] sm:$0xf] %vm750, %v4493
        %4513 = vst.msk [vmem:[#allocation3 + $0x3c] sm:$0xf] %vm750, %v4495
        %4514 = vst.msk [vmem:[#allocation3 + $0x48] sm:$0xf] %vm750, %v4497
        %4515 = vst.msk [vmem:[#allocation3 + $0x54] sm:$0xf] %vm750, %v4499
        %v4516 = vld [vmem:[%s611] sm:$0xff]
        %v4517 = vld [vmem:[%s611 + $0x10] sm:$0xff]
        %v4518 = vld [vmem:[%s611 + $0x20] sm:$0xff]
        %v4519 = vld [vmem:[%s611 + $0x30] sm:$0xff]
        %v4520 = vld [vmem:[%s611 + $0x40] sm:$0xff]
        %v4521 = vld [vmem:[%s611 + $0x50] sm:$0xff]
        %v4522 = vld [vmem:[%s611 + $0x60] sm:$0xff]
        %v4523 = vld [vmem:[%s611 + $0x70] sm:$0xff]
        %v4524 = vpack.c.bf16 %v4516, %v4516
        %v4525 = vpack.c.bf16 %v4517, %v4517
        %v4526 = vpack.c.bf16 %v4518, %v4518
        %v4527 = vpack.c.bf16 %v4519, %v4519
        %v4528 = vpack.c.bf16 %v4520, %v4520
        %v4529 = vpack.c.bf16 %v4521, %v4521
        %v4530 = vpack.c.bf16 %v4522, %v4522
        %v4531 = vpack.c.bf16 %v4523, %v4523
        %4540 = vrot.lane.b32.xlu0 %v4524, 96
        %v4541 = vpop.permute.xlu0 %4540
        %4542 = vrot.lane.b32.xlu0 %v4525, 96
        %v4543 = vpop.permute.xlu0 %4542
        %4544 = vrot.lane.b32.xlu0 %v4526, 96
        %v4545 = vpop.permute.xlu0 %4544
        %4546 = vrot.lane.b32.xlu0 %v4527, 96
        %v4547 = vpop.permute.xlu0 %4546
        %4548 = vrot.lane.b32.xlu0 %v4528, 96
        %v4549 = vpop.permute.xlu0 %4548
        %4550 = vrot.lane.b32.xlu0 %v4529, 96
        %v4551 = vpop.permute.xlu0 %4550
        %4552 = vrot.lane.b32.xlu0 %v4530, 96
        %v4553 = vpop.permute.xlu0 %4552
        %4554 = vrot.lane.b32.xlu0 %v4531, 96
        %v4555 = vpop.permute.xlu0 %4554
        %4564 = vst.msk [vmem:[#allocation3] sm:$0xf] %vm807, %v4541
        %4565 = vst.msk [vmem:[#allocation3 + $0xc] sm:$0xf] %vm807, %v4543
        %4566 = vst.msk [vmem:[#allocation3 + $0x18] sm:$0xf] %vm807, %v4545
        %4567 = vst.msk [vmem:[#allocation3 + $0x24] sm:$0xf] %vm807, %v4547
        %4568 = vst.msk [vmem:[#allocation3 + $0x30] sm:$0xf] %vm807, %v4549
        %4569 = vst.msk [vmem:[#allocation3 + $0x3c] sm:$0xf] %vm807, %v4551
        %4570 = vst.msk [vmem:[#allocation3 + $0x48] sm:$0xf] %vm807, %v4553
        %4571 = vst.msk [vmem:[#allocation3 + $0x54] sm:$0xf] %vm807, %v4555
        %v4572 = vld [vmem:[%s611 + $0x1] sm:$0xff]
        %v4573 = vld [vmem:[%s611 + $0x11] sm:$0xff]
        %v4574 = vld [vmem:[%s611 + $0x21] sm:$0xff]
        %v4575 = vld [vmem:[%s611 + $0x31] sm:$0xff]
        %v4576 = vld [vmem:[%s611 + $0x41] sm:$0xff]
        %v4577 = vld [vmem:[%s611 + $0x51] sm:$0xff]
        %v4578 = vld [vmem:[%s611 + $0x61] sm:$0xff]
        %v4579 = vld [vmem:[%s611 + $0x71] sm:$0xff]
        %v4580 = vpack.c.bf16 %v4572, %v4572
        %v4581 = vpack.c.bf16 %v4573, %v4573
        %v4582 = vpack.c.bf16 %v4574, %v4574
        %v4583 = vpack.c.bf16 %v4575, %v4575
        %v4584 = vpack.c.bf16 %v4576, %v4576
        %v4585 = vpack.c.bf16 %v4577, %v4577
        %v4586 = vpack.c.bf16 %v4578, %v4578
        %v4587 = vpack.c.bf16 %v4579, %v4579
        %4588 = vst.msk [vmem:[#allocation3 + $0x4] sm:$0xf] %vm636, %v4580
        %4589 = vst.msk [vmem:[#allocation3 + $0x10] sm:$0xf] %vm636, %v4581
        %4590 = vst.msk [vmem:[#allocation3 + $0x1c] sm:$0xf] %vm636, %v4582
        %4591 = vst.msk [vmem:[#allocation3 + $0x28] sm:$0xf] %vm636, %v4583
        %4592 = vst.msk [vmem:[#allocation3 + $0x34] sm:$0xf] %vm636, %v4584
        %4593 = vst.msk [vmem:[#allocation3 + $0x40] sm:$0xf] %vm636, %v4585
        %4594 = vst.msk [vmem:[#allocation3 + $0x4c] sm:$0xf] %vm636, %v4586
        %4595 = vst.msk [vmem:[#allocation3 + $0x58] sm:$0xf] %vm636, %v4587
        %v4596 = vld [vmem:[%s611 + $0x2] sm:$0xff]
        %v4597 = vld [vmem:[%s611 + $0x12] sm:$0xff]
        %v4598 = vld [vmem:[%s611 + $0x22] sm:$0xff]
        %v4599 = vld [vmem:[%s611 + $0x32] sm:$0xff]
        %v4600 = vld [vmem:[%s611 + $0x42] sm:$0xff]
        %v4601 = vld [vmem:[%s611 + $0x52] sm:$0xff]
        %v4602 = vld [vmem:[%s611 + $0x62] sm:$0xff]
        %v4603 = vld [vmem:[%s611 + $0x72] sm:$0xff]
        %v4604 = vpack.c.bf16 %v4596, %v4596
        %v4605 = vpack.c.bf16 %v4597, %v4597
        %v4606 = vpack.c.bf16 %v4598, %v4598
        %v4607 = vpack.c.bf16 %v4599, %v4599
        %v4608 = vpack.c.bf16 %v4600, %v4600
        %v4609 = vpack.c.bf16 %v4601, %v4601
        %v4610 = vpack.c.bf16 %v4602, %v4602
        %v4611 = vpack.c.bf16 %v4603, %v4603
        %4620 = vrot.lane.b32.xlu0 %v4604, 32
        %v4621 = vpop.permute.xlu0 %4620
        %4622 = vrot.lane.b32.xlu0 %v4605, 32
        %v4623 = vpop.permute.xlu0 %4622
        %4624 = vrot.lane.b32.xlu0 %v4606, 32
        %v4625 = vpop.permute.xlu0 %4624
        %4626 = vrot.lane.b32.xlu0 %v4607, 32
        %v4627 = vpop.permute.xlu0 %4626
        %4628 = vrot.lane.b32.xlu0 %v4608, 32
        %v4629 = vpop.permute.xlu0 %4628
        %4630 = vrot.lane.b32.xlu0 %v4609, 32
        %v4631 = vpop.permute.xlu0 %4630
        %4632 = vrot.lane.b32.xlu0 %v4610, 32
        %v4633 = vpop.permute.xlu0 %4632
        %4634 = vrot.lane.b32.xlu0 %v4611, 32
        %v4635 = vpop.permute.xlu0 %4634
        %4644 = vst.msk [vmem:[#allocation3 + $0x4] sm:$0xf] %vm693, %v4621
        %4645 = vst.msk [vmem:[#allocation3 + $0x10] sm:$0xf] %vm693, %v4623
        %4646 = vst.msk [vmem:[#allocation3 + $0x1c] sm:$0xf] %vm693, %v4625
        %4647 = vst.msk [vmem:[#allocation3 + $0x28] sm:$0xf] %vm693, %v4627
        %4648 = vst.msk [vmem:[#allocation3 + $0x34] sm:$0xf] %vm693, %v4629
        %4649 = vst.msk [vmem:[#allocation3 + $0x40] sm:$0xf] %vm693, %v4631
        %4650 = vst.msk [vmem:[#allocation3 + $0x4c] sm:$0xf] %vm693, %v4633
        %4651 = vst.msk [vmem:[#allocation3 + $0x58] sm:$0xf] %vm693, %v4635
        %v4652 = vld [vmem:[%s896] sm:$0xff]
        %v4653 = vld [vmem:[%s896 + $0x10] sm:$0xff]
        %v4654 = vld [vmem:[%s896 + $0x20] sm:$0xff]
        %v4655 = vld [vmem:[%s896 + $0x30] sm:$0xff]
        %v4656 = vld [vmem:[%s896 + $0x40] sm:$0xff]
        %v4657 = vld [vmem:[%s896 + $0x50] sm:$0xff]
        %v4658 = vld [vmem:[%s896 + $0x60] sm:$0xff]
        %v4659 = vld [vmem:[%s896 + $0x70] sm:$0xff]
        %v4660 = vpack.c.bf16 %v4652, %v4652
        %v4661 = vpack.c.bf16 %v4653, %v4653
        %v4662 = vpack.c.bf16 %v4654, %v4654
        %v4663 = vpack.c.bf16 %v4655, %v4655
        %v4664 = vpack.c.bf16 %v4656, %v4656
        %v4665 = vpack.c.bf16 %v4657, %v4657
        %v4666 = vpack.c.bf16 %v4658, %v4658
        %v4667 = vpack.c.bf16 %v4659, %v4659
        %4676 = vrot.lane.b32.xlu0 %v4660, 64
        %v4677 = vpop.permute.xlu0 %4676
        %4678 = vrot.lane.b32.xlu0 %v4661, 64
        %v4679 = vpop.permute.xlu0 %4678
        %4680 = vrot.lane.b32.xlu0 %v4662, 64
        %v4681 = vpop.permute.xlu0 %4680
        %4682 = vrot.lane.b32.xlu0 %v4663, 64
        %v4683 = vpop.permute.xlu0 %4682
        %4684 = vrot.lane.b32.xlu0 %v4664, 64
        %v4685 = vpop.permute.xlu0 %4684
        %4686 = vrot.lane.b32.xlu0 %v4665, 64
        %v4687 = vpop.permute.xlu0 %4686
        %4688 = vrot.lane.b32.xlu0 %v4666, 64
        %v4689 = vpop.permute.xlu0 %4688
        %4690 = vrot.lane.b32.xlu0 %v4667, 64
        %v4691 = vpop.permute.xlu0 %4690
        %4700 = vst.msk [vmem:[#allocation3 + $0x4] sm:$0xf] %vm750, %v4677
        %4701 = vst.msk [vmem:[#allocation3 + $0x10] sm:$0xf] %vm750, %v4679
        %4702 = vst.msk [vmem:[#allocation3 + $0x1c] sm:$0xf] %vm750, %v4681
        %4703 = vst.msk [vmem:[#allocation3 + $0x28] sm:$0xf] %vm750, %v4683
        %4704 = vst.msk [vmem:[#allocation3 + $0x34] sm:$0xf] %vm750, %v4685
        %4705 = vst.msk [vmem:[#allocation3 + $0x40] sm:$0xf] %vm750, %v4687
        %4706 = vst.msk [vmem:[#allocation3 + $0x4c] sm:$0xf] %vm750, %v4689
        %4707 = vst.msk [vmem:[#allocation3 + $0x58] sm:$0xf] %vm750, %v4691
        %v4708 = vld [vmem:[%s896 + $0x1] sm:$0xff]
        %v4709 = vld [vmem:[%s896 + $0x11] sm:$0xff]
        %v4710 = vld [vmem:[%s896 + $0x21] sm:$0xff]
        %v4711 = vld [vmem:[%s896 + $0x31] sm:$0xff]
        %v4712 = vld [vmem:[%s896 + $0x41] sm:$0xff]
        %v4713 = vld [vmem:[%s896 + $0x51] sm:$0xff]
        %v4714 = vld [vmem:[%s896 + $0x61] sm:$0xff]
        %v4715 = vld [vmem:[%s896 + $0x71] sm:$0xff]
        %v4716 = vpack.c.bf16 %v4708, %v4708
        %v4717 = vpack.c.bf16 %v4709, %v4709
        %v4718 = vpack.c.bf16 %v4710, %v4710
        %v4719 = vpack.c.bf16 %v4711, %v4711
        %v4720 = vpack.c.bf16 %v4712, %v4712
        %v4721 = vpack.c.bf16 %v4713, %v4713
        %v4722 = vpack.c.bf16 %v4714, %v4714
        %v4723 = vpack.c.bf16 %v4715, %v4715
        %4732 = vrot.lane.b32.xlu0 %v4716, 96
        %v4733 = vpop.permute.xlu0 %4732
        %4734 = vrot.lane.b32.xlu0 %v4717, 96
        %v4735 = vpop.permute.xlu0 %4734
        %4736 = vrot.lane.b32.xlu0 %v4718, 96
        %v4737 = vpop.permute.xlu0 %4736
        %4738 = vrot.lane.b32.xlu0 %v4719, 96
        %v4739 = vpop.permute.xlu0 %4738
        %4740 = vrot.lane.b32.xlu0 %v4720, 96
        %v4741 = vpop.permute.xlu0 %4740
        %4742 = vrot.lane.b32.xlu0 %v4721, 96
        %v4743 = vpop.permute.xlu0 %4742
        %4744 = vrot.lane.b32.xlu0 %v4722, 96
        %v4745 = vpop.permute.xlu0 %4744
        %4746 = vrot.lane.b32.xlu0 %v4723, 96
        %v4747 = vpop.permute.xlu0 %4746
        %4756 = vst.msk [vmem:[#allocation3 + $0x4] sm:$0xf] %vm807, %v4733
        %4757 = vst.msk [vmem:[#allocation3 + $0x10] sm:$0xf] %vm807, %v4735
        %4758 = vst.msk [vmem:[#allocation3 + $0x1c] sm:$0xf] %vm807, %v4737
        %4759 = vst.msk [vmem:[#allocation3 + $0x28] sm:$0xf] %vm807, %v4739
        %4760 = vst.msk [vmem:[#allocation3 + $0x34] sm:$0xf] %vm807, %v4741
        %4761 = vst.msk [vmem:[#allocation3 + $0x40] sm:$0xf] %vm807, %v4743
        %4762 = vst.msk [vmem:[#allocation3 + $0x4c] sm:$0xf] %vm807, %v4745
        %4763 = vst.msk [vmem:[#allocation3 + $0x58] sm:$0xf] %vm807, %v4747
        %v4764 = vld [vmem:[%s896 + $0x2] sm:$0xff]
        %v4765 = vld [vmem:[%s896 + $0x12] sm:$0xff]
        %v4766 = vld [vmem:[%s896 + $0x22] sm:$0xff]
        %v4767 = vld [vmem:[%s896 + $0x32] sm:$0xff]
        %v4768 = vld [vmem:[%s896 + $0x42] sm:$0xff]
        %v4769 = vld [vmem:[%s896 + $0x52] sm:$0xff]
        %v4770 = vld [vmem:[%s896 + $0x62] sm:$0xff]
        %v4771 = vld [vmem:[%s896 + $0x72] sm:$0xff]
        %v4772 = vpack.c.bf16 %v4764, %v4764
        %v4773 = vpack.c.bf16 %v4765, %v4765
        %v4774 = vpack.c.bf16 %v4766, %v4766
        %v4775 = vpack.c.bf16 %v4767, %v4767
        %v4776 = vpack.c.bf16 %v4768, %v4768
        %v4777 = vpack.c.bf16 %v4769, %v4769
        %v4778 = vpack.c.bf16 %v4770, %v4770
        %v4779 = vpack.c.bf16 %v4771, %v4771
        %4780 = vst.msk [vmem:[#allocation3 + $0x8] sm:$0xf] %vm636, %v4772
        %4781 = vst.msk [vmem:[#allocation3 + $0x14] sm:$0xf] %vm636, %v4773
        %4782 = vst.msk [vmem:[#allocation3 + $0x20] sm:$0xf] %vm636, %v4774
        %4783 = vst.msk [vmem:[#allocation3 + $0x2c] sm:$0xf] %vm636, %v4775
        %4784 = vst.msk [vmem:[#allocation3 + $0x38] sm:$0xf] %vm636, %v4776
        %4785 = vst.msk [vmem:[#allocation3 + $0x44] sm:$0xf] %vm636, %v4777
        %4786 = vst.msk [vmem:[#allocation3 + $0x50] sm:$0xf] %vm636, %v4778
        %4787 = vst.msk [vmem:[#allocation3 + $0x5c] sm:$0xf] %vm636, %v4779
        %v4788 = vld [vmem:[#allocation3] sm:$0xff]
        %v4789 = vld [vmem:[#allocation3 + $0x8] sm:$0xf]
        %v4790 = vld [vmem:[#allocation3 + $0xc] sm:$0xff]
        %v4791 = vld [vmem:[#allocation3 + $0x14] sm:$0xf]
        %v4792 = vld [vmem:[#allocation3 + $0x18] sm:$0xff]
        %v4793 = vld [vmem:[#allocation3 + $0x20] sm:$0xf]
        %v4794 = vld [vmem:[#allocation3 + $0x24] sm:$0xff]
        %v4795 = vld [vmem:[#allocation3 + $0x2c] sm:$0xf]
        %v4796 = vld [vmem:[#allocation3 + $0x30] sm:$0xff]
        %v4797 = vld [vmem:[#allocation3 + $0x38] sm:$0xf]
        %v4798 = vld [vmem:[#allocation3 + $0x3c] sm:$0xff]
        %v4799 = vld [vmem:[#allocation3 + $0x44] sm:$0xf]
        %v4800 = vld [vmem:[#allocation3 + $0x48] sm:$0xff]
        %v4801 = vld [vmem:[#allocation3 + $0x50] sm:$0xf]
        %v4802 = vld [vmem:[#allocation3 + $0x54] sm:$0xff]
        %v4803 = vld [vmem:[#allocation3 + $0x5c] sm:$0xf]
        %v4805 = vperm.slane %v4371, 0
        %v4823 = vunpack.c.l.b16 %v4788
        %v4824 = vunpack.c.h.b16 %v4788
        %v4825 = vunpack.c.l.b16 %v4789
        %v4826 = vunpack.c.l.b16 %v4790
        %v4827 = vunpack.c.h.b16 %v4790
        %v4828 = vunpack.c.l.b16 %v4791
        %v4829 = vunpack.c.l.b16 %v4792
        %v4830 = vunpack.c.h.b16 %v4792
        %v4831 = vunpack.c.l.b16 %v4793
        %v4832 = vunpack.c.l.b16 %v4794
        %v4833 = vunpack.c.h.b16 %v4794
        %v4834 = vunpack.c.l.b16 %v4795
        %v4835 = vunpack.c.l.b16 %v4796
        %v4836 = vunpack.c.h.b16 %v4796
        %v4837 = vunpack.c.l.b16 %v4797
        %v4838 = vunpack.c.l.b16 %v4798
        %v4839 = vunpack.c.h.b16 %v4798
        %v4840 = vunpack.c.l.b16 %v4799
        %v4841 = vunpack.c.l.b16 %v4800
        %v4842 = vunpack.c.h.b16 %v4800
        %v4843 = vunpack.c.l.b16 %v4801
        %v4844 = vunpack.c.l.b16 %v4802
        %v4845 = vunpack.c.h.b16 %v4802
        %v4846 = vunpack.c.l.b16 %v4803
        %v4847 = vpack.c.b16 %v4826, %v4823
        %v4848 = vpack.c.b16 %v4827, %v4824
        %v4849 = vpack.c.b16 %v4828, %v4825
        %v4850 = vpack.c.b16 %v4832, %v4829
        %v4851 = vpack.c.b16 %v4833, %v4830
        %v4852 = vpack.c.b16 %v4834, %v4831
        %v4853 = vpack.c.b16 %v4838, %v4835
        %v4854 = vpack.c.b16 %v4839, %v4836
        %v4855 = vpack.c.b16 %v4840, %v4837
        %v4856 = vpack.c.b16 %v4844, %v4841
        %v4857 = vpack.c.b16 %v4845, %v4842
        %v4858 = vpack.c.b16 %v4846, %v4843
        %v4903 = vunpack.c.l.b16 %v4335
        %v4904 = vunpack.c.l.b16 %v4336
        %v4905 = vunpack.c.l.b16 %v4337
        %v4906 = vunpack.c.l.b16 %v4338
        %v4907 = vunpack.c.l.b16 %v4339
        %v4908 = vunpack.c.l.b16 %v4340
        %v4909 = vunpack.c.l.b16 %v4341
        %v4910 = vunpack.c.l.b16 %v4342
        %v4911 = vunpack.c.l.b16 %v4343
        %v4912 = vunpack.c.l.b16 %v4344
        %v4913 = vunpack.c.l.b16 %v4345
        %v4914 = vunpack.c.l.b16 %v4346
        %v4915 = vunpack.c.l.b16 %v4347
        %v4916 = vunpack.c.l.b16 %v4348
        %v4917 = vunpack.c.l.b16 %v4349
        %v4918 = vunpack.c.l.b16 %v4350
        %v4919 = vunpack.c.l.b16 %v4351
        %v4920 = vunpack.c.l.b16 %v4352
        %v4921 = vunpack.c.l.b16 %v4353
        %v4922 = vunpack.c.l.b16 %v4354
        %v4923 = vunpack.c.l.b16 %v4355
        %v4924 = vunpack.c.l.b16 %v4356
        %v4925 = vunpack.c.l.b16 %v4357
        %v4926 = vunpack.c.l.b16 %v4358
        %v4927 = vunpack.c.l.b16 %v4359
        %v4928 = vunpack.c.l.b16 %v4360
        %v4929 = vunpack.c.l.b16 %v4361
        %v4930 = vunpack.c.l.b16 %v4362
        %v4931 = vunpack.c.l.b16 %v4363
        %v4932 = vunpack.c.l.b16 %v4364
        %v4933 = vunpack.c.l.b16 %v4365
        %v4934 = vunpack.c.l.b16 %v4366
        %v4935 = vunpack.c.l.b16 %v4367
        %v4936 = vunpack.c.l.b16 %v4368
        %v4937 = vunpack.c.l.b16 %v4369
        %v4938 = vunpack.c.l.b16 %v4370
        %v4939 = vpack.c.b16 %v4904, %v4903
        %v4940 = vpack.c.b16 %v4906, %v4905
        %v4941 = vpack.c.b16 %v4908, %v4907
        %v4942 = vpack.c.b16 %v4910, %v4909
        %v4943 = vpack.c.b16 %v4912, %v4911
        %v4944 = vpack.c.b16 %v4914, %v4913
        %v4945 = vpack.c.b16 %v4916, %v4915
        %v4946 = vpack.c.b16 %v4918, %v4917
        %v4947 = vpack.c.b16 %v4920, %v4919
        %v4948 = vpack.c.b16 %v4922, %v4921
        %v4949 = vpack.c.b16 %v4924, %v4923
        %v4950 = vpack.c.b16 %v4926, %v4925
        %v4951 = vpack.c.b16 %v4928, %v4927
        %v4952 = vpack.c.b16 %v4930, %v4929
        %v4953 = vpack.c.b16 %v4932, %v4931
        %v4954 = vpack.c.b16 %v4934, %v4933
        %v4955 = vpack.c.b16 %v4936, %v4935
        %v4956 = vpack.c.b16 %v4938, %v4937
        %v4976 = vsel %vm544, %v4849, 0
        %v4979 = vsel %vm544, %v4852, 0
        %v4982 = vsel %vm544, %v4855, 0
        %v4985 = vsel %vm544, %v4858, 0
        %4987 = vmatpush.bf16.msra.mxu0 %v4946
        %4988 = vmatpush.bf16.msra.mxu0 %v4945
        %4989 = vmatpush.bf16.msra.mxu0 %v4944
        %4990 = vmatpush.bf16.msra.mxu0 %v4943
        %4991 = vmatpush.bf16.msra.mxu0 %v4942
        %4992 = vmatpush.bf16.msra.mxu0 %v4941
        %4993 = vmatpush.bf16.msra.mxu0 %v4940
        %4994 = vmatpush.bf16.msra.mxu0 %v4939
        %4995 = vmatmul.bf16.gmra.mxu0 %v4847
        %v4996 = vpop.f32.mrf.mxu0
        %v4997 = vadd.f32 %v4805, %v4996
        %v4998 = vpop.f32.mrf.mxu0
        %v4999 = vadd.f32 %v4805, %v4998
        %5000 = vmatmul.bf16.gmra.mxu0 %v4850
        %v5001 = vpop.f32.mrf.mxu0
        %v5002 = vadd.f32 %v4805, %v5001
        %v5003 = vpop.f32.mrf.mxu0
        %v5004 = vadd.f32 %v4805, %v5003
        %5005 = vmatmul.bf16.gmra.mxu0 %v4853
        %v5006 = vpop.f32.mrf.mxu0
        %v5007 = vadd.f32 %v4805, %v5006
        %v5008 = vpop.f32.mrf.mxu0
        %v5009 = vadd.f32 %v4805, %v5008
        %5010 = vmatmul.bf16.gmra.mxu0 %v4856
        %v5011 = vpop.f32.mrf.mxu0
        %v5012 = vadd.f32 %v4805, %v5011
        %v5013 = vpop.f32.mrf.mxu0
        %v5014 = vadd.f32 %v4805, %v5013
        %5015 = vdwg.mxu0
        %5016 = vmatpush.bf16.msra.mxu0 %v4954
        %5017 = vmatpush.bf16.msra.mxu0 %v4953
        %5018 = vmatpush.bf16.msra.mxu0 %v4952
        %5019 = vmatpush.bf16.msra.mxu0 %v4951
        %5020 = vmatpush.bf16.msra.mxu0 %v4950
        %5021 = vmatpush.bf16.msra.mxu0 %v4949
        %5022 = vmatpush.bf16.msra.mxu0 %v4948
        %5023 = vmatpush.bf16.msra.mxu0 %v4947
        %5024 = vmatmul.bf16.gmra.mxu0 %v4848
        %v5025 = vpop.f32.mrf.mxu0
        %v5026 = vadd.f32 %v4997, %v5025
        %v5027 = vpop.f32.mrf.mxu0
        %v5028 = vadd.f32 %v4999, %v5027
        %5029 = vmatmul.bf16.gmra.mxu0 %v4851
        %v5030 = vpop.f32.mrf.mxu0
        %v5031 = vadd.f32 %v5002, %v5030
        %v5032 = vpop.f32.mrf.mxu0
        %v5033 = vadd.f32 %v5004, %v5032
        %5034 = vmatmul.bf16.gmra.mxu0 %v4854
        %v5035 = vpop.f32.mrf.mxu0
        %v5036 = vadd.f32 %v5007, %v5035
        %v5037 = vpop.f32.mrf.mxu0
        %v5038 = vadd.f32 %v5009, %v5037
        %5039 = vmatmul.bf16.gmra.mxu0 %v4857
        %v5040 = vpop.f32.mrf.mxu0
        %v5041 = vadd.f32 %v5012, %v5040
        %v5042 = vpop.f32.mrf.mxu0
        %v5043 = vadd.f32 %v5014, %v5042
        %5044 = vdwg.mxu0
        %5045 = vmatpush.bf16.msra.mxu0 0
        %5046 = vmatpush.bf16.msra.mxu0 0
        %5047 = vmatpush.bf16.msra.mxu0 0
        %5048 = vmatpush.bf16.msra.mxu0 0
        %5049 = vmatpush.bf16.msra.mxu0 0
        %5050 = vmatpush.bf16.msra.mxu0 0
        %5051 = vmatpush.bf16.msra.mxu0 %v4956
        %5052 = vmatpush.bf16.msra.mxu0 %v4955
        %5053 = vmatmul.bf16.gmra.mxu0 %v4976
        %v5054 = vpop.f32.mrf.mxu0
        %v5055 = vadd.f32 %v5026, %v5054
        %v5056 = vpop.f32.mrf.mxu0
        %v5057 = vadd.f32 %v5028, %v5056
        %5058 = vmatmul.bf16.gmra.mxu0 %v4979
        %v5059 = vpop.f32.mrf.mxu0
        %v5060 = vadd.f32 %v5031, %v5059
        %v5061 = vpop.f32.mrf.mxu0
        %v5062 = vadd.f32 %v5033, %v5061
        %5063 = vmatmul.bf16.gmra.mxu0 %v4982
        %v5064 = vpop.f32.mrf.mxu0
        %v5065 = vadd.f32 %v5036, %v5064
        %v5066 = vpop.f32.mrf.mxu0
        %v5067 = vadd.f32 %v5038, %v5066
        %5068 = vmatmul.bf16.gmra.mxu0 %v4985
        %v5069 = vpop.f32.mrf.mxu0
        %v5070 = vadd.f32 %v5041, %v5069
        %v5071 = vpop.f32.mrf.mxu0
        %v5072 = vadd.f32 %v5043, %v5071
        %5073 = vdwg.mxu0
        %v5074 = vmax.f32 %v5055, 0.0
        %v5075 = vmax.f32 %v5057, 0.0
        %v5076 = vmax.f32 %v5060, 0.0
        %v5077 = vmax.f32 %v5062, 0.0
        %v5078 = vmax.f32 %v5065, 0.0
        %v5079 = vmax.f32 %v5067, 0.0
        %v5080 = vmax.f32 %v5070, 0.0
        %v5081 = vmax.f32 %v5072, 0.0
        %5082 = vxpose.xlu0.b32.start [1/16] %v5074, 128
        %5083 = vxpose.xlu0.b32.cont [2/16] %v5075, 128
        %5084 = vxpose.xlu0.b32.cont [3/16] %v5076, 128
        %5085 = vxpose.xlu0.b32.cont [4/16] %v5077, 128
        %5086 = vxpose.xlu0.b32.cont [5/16] %v5078, 128
        %5087 = vxpose.xlu0.b32.cont [6/16] %v5079, 128
        %5088 = vxpose.xlu0.b32.cont [7/16] %v5080, 128
        %5089 = vxpose.xlu0.b32.cont [8/16] %v5081, 128
        %5090 = vxpose.xlu0.b32.cont [9/16] 0.0, 128
        %5091 = vxpose.xlu0.b32.cont [10/16] 0.0, 128
        %5092 = vxpose.xlu0.b32.cont [11/16] 0.0, 128
        %5093 = vxpose.xlu0.b32.cont [12/16] 0.0, 128
        %5094 = vxpose.xlu0.b32.cont [13/16] 0.0, 128
        %5095 = vxpose.xlu0.b32.cont [14/16] 0.0, 128
        %5096 = vxpose.xlu0.b32.cont [15/16] 0.0, 128
        %5097 = vxpose.xlu0.b32.end [16/16] 0.0, 128
        %v5098 = vpop.trf.xlu0
        %v5099 = vpop.trf.xlu0
        %v5100 = vpop.trf.xlu0
        %v5101 = vpop.trf.xlu0
        %v5102 = vpop.trf.xlu0
        %v5103 = vpop.trf.xlu0
        %v5104 = vpop.trf.xlu0
        %v5105 = vpop.trf.xlu0
        %v5106 = vpop.trf.xlu0
        %v5107 = vpop.trf.xlu0
        %v5108 = vpop.trf.xlu0
        %v5109 = vpop.trf.xlu0
        %v5110 = vpop.trf.xlu0
        %v5111 = vpop.trf.xlu0
        %v5112 = vpop.trf.xlu0
        %v5113 = vpop.trf.xlu0
        %v5114 = vld [vmem:[%s10] sm:$0x1]
        %v5115 = vpack.c.bf16 %v5098, %v5098
        %v5116 = vld [vmem:[#allocation11] sm:$0xf]
        %v5117 = vld [vmem:[#allocation11 + $0x4] sm:$0xf]
        %v5118 = vld [vmem:[#allocation11 + $0x8] sm:$0xf]
        %v5119 = vld [vmem:[#allocation11 + $0xc] sm:$0xf]
        %v5120 = vld [vmem:[#allocation11 + $0x10] sm:$0xf]
        %v5121 = vld [vmem:[#allocation11 + $0x14] sm:$0xf]
        %v5122 = vld [vmem:[#allocation11 + $0x18] sm:$0xf]
        %v5123 = vld [vmem:[#allocation11 + $0x1c] sm:$0xf]
        %v5132 = vunpack.c.l.b16 %v5116
        %v5133 = vunpack.c.l.b16 %v5117
        %v5134 = vunpack.c.l.b16 %v5118
        %v5135 = vunpack.c.l.b16 %v5119
        %v5136 = vunpack.c.l.b16 %v5120
        %v5137 = vunpack.c.l.b16 %v5121
        %v5138 = vunpack.c.l.b16 %v5122
        %v5139 = vunpack.c.l.b16 %v5123
        %v5140 = vpack.c.b16 %v5133, %v5132
        %v5141 = vpack.c.b16 %v5135, %v5134
        %v5142 = vpack.c.b16 %v5137, %v5136
        %v5143 = vpack.c.b16 %v5139, %v5138
        %vm5148 = vcmask 523264
        %v5150 = vsel %vm5148, %v5115, 0
        %5152 = vmatpush.bf16.msra.mxu0 0
        %5153 = vmatpush.bf16.msra.mxu0 0
        %5154 = vmatpush.bf16.msra.mxu0 0
        %5155 = vmatpush.bf16.msra.mxu0 0
        %5156 = vmatpush.bf16.msra.mxu0 %v5143
        %5157 = vmatpush.bf16.msra.mxu0 %v5142
        %5158 = vmatpush.bf16.msra.mxu0 %v5141
        %5159 = vmatpush.bf16.msra.mxu0 %v5140
        %5160 = vmatmul.bf16.gmra.mxu0 %v5150
        %v5161 = vpop.f32.mrf.mxu0
        %v5162 = vadd.f32 0.0, %v5161
        %v5163 = vpop.f32.mrf.mxu0
        %5164 = vdwg.mxu0
        %v5165 = vadd.f32 %v5114, %v5162
        %s5166 = scalar_lea.vmem [#allocation11], 32
        %v5167 = vld [vmem:[%s5166] sm:$0xf]
        %v5168 = vld [vmem:[%s5166 + $0x4] sm:$0xf]
        %v5169 = vld [vmem:[%s5166 + $0x8] sm:$0xf]
        %v5170 = vld [vmem:[%s5166 + $0xc] sm:$0xf]
        %v5171 = vld [vmem:[%s5166 + $0x10] sm:$0xf]
        %v5172 = vld [vmem:[%s5166 + $0x14] sm:$0xf]
        %v5173 = vld [vmem:[%s5166 + $0x18] sm:$0xf]
        %v5174 = vld [vmem:[%s5166 + $0x1c] sm:$0xf]
        %v5175 = vshrl.u32 %v5115, 16
        %v5185 = vunpack.c.l.b16 %v5167
        %v5186 = vunpack.c.l.b16 %v5168
        %v5187 = vunpack.c.l.b16 %v5169
        %v5188 = vunpack.c.l.b16 %v5170
        %v5189 = vunpack.c.l.b16 %v5171
        %v5190 = vunpack.c.l.b16 %v5172
        %v5191 = vunpack.c.l.b16 %v5173
        %v5192 = vunpack.c.l.b16 %v5174
        %v5193 = vpack.c.b16 %v5186, %v5185
        %v5194 = vpack.c.b16 %v5188, %v5187
        %v5195 = vpack.c.b16 %v5190, %v5189
        %v5196 = vpack.c.b16 %v5192, %v5191
        %v5202 = vsel %vm5148, %v5175, 0
        %5204 = vmatpush.bf16.msra.mxu0 0
        %5205 = vmatpush.bf16.msra.mxu0 0
        %5206 = vmatpush.bf16.msra.mxu0 0
        %5207 = vmatpush.bf16.msra.mxu0 0
        %5208 = vmatpush.bf16.msra.mxu0 %v5196
        %5209 = vmatpush.bf16.msra.mxu0 %v5195
        %5210 = vmatpush.bf16.msra.mxu0 %v5194
        %5211 = vmatpush.bf16.msra.mxu0 %v5193
        %5212 = vmatmul.bf16.gmra.mxu0 %v5202
        %v5213 = vpop.f32.mrf.mxu0
        %v5214 = vadd.f32 0.0, %v5213
        %v5215 = vpop.f32.mrf.mxu0
        %5216 = vdwg.mxu0
        %v5217 = vadd.f32 %v5165, %v5214
        %s5218 = scalar_lea.vmem [#allocation11], 64
        %v5219 = vld [vmem:[%s5218] sm:$0xf]
        %v5220 = vld [vmem:[%s5218 + $0x4] sm:$0xf]
        %v5221 = vld [vmem:[%s5218 + $0x8] sm:$0xf]
        %v5222 = vld [vmem:[%s5218 + $0xc] sm:$0xf]
        %v5223 = vld [vmem:[%s5218 + $0x10] sm:$0xf]
        %v5224 = vld [vmem:[%s5218 + $0x14] sm:$0xf]
        %v5225 = vld [vmem:[%s5218 + $0x18] sm:$0xf]
        %v5226 = vld [vmem:[%s5218 + $0x1c] sm:$0xf]
        %v5228 = vrot.slane %v5115, 1
        %v5237 = vunpack.c.l.b16 %v5219
        %v5238 = vunpack.c.l.b16 %v5220
        %v5239 = vunpack.c.l.b16 %v5221
        %v5240 = vunpack.c.l.b16 %v5222
        %v5241 = vunpack.c.l.b16 %v5223
        %v5242 = vunpack.c.l.b16 %v5224
        %v5243 = vunpack.c.l.b16 %v5225
        %v5244 = vunpack.c.l.b16 %v5226
        %v5245 = vpack.c.b16 %v5238, %v5237
        %v5246 = vpack.c.b16 %v5240, %v5239
        %v5247 = vpack.c.b16 %v5242, %v5241
        %v5248 = vpack.c.b16 %v5244, %v5243
        %v5254 = vsel %vm5148, %v5228, 0
        %5256 = vmatpush.bf16.msra.mxu0 0
        %5257 = vmatpush.bf16.msra.mxu0 0
        %5258 = vmatpush.bf16.msra.mxu0 0
        %5259 = vmatpush.bf16.msra.mxu0 0
        %5260 = vmatpush.bf16.msra.mxu0 %v5248
        %5261 = vmatpush.bf16.msra.mxu0 %v5247
        %5262 = vmatpush.bf16.msra.mxu0 %v5246
        %5263 = vmatpush.bf16.msra.mxu0 %v5245
        %5264 = vmatmul.bf16.gmra.mxu0 %v5254
        %v5265 = vpop.f32.mrf.mxu0
        %v5266 = vadd.f32 0.0, %v5265
        %v5267 = vpop.f32.mrf.mxu0
        %5268 = vdwg.mxu0
        %v5269 = vadd.f32 %v5217, %v5266
        %s5270 = scalar_lea.vmem [#allocation11], 96
        %v5271 = vld [vmem:[%s5270] sm:$0xf]
        %v5272 = vld [vmem:[%s5270 + $0x4] sm:$0xf]
        %v5273 = vld [vmem:[%s5270 + $0x8] sm:$0xf]
        %v5274 = vld [vmem:[%s5270 + $0xc] sm:$0xf]
        %v5275 = vld [vmem:[%s5270 + $0x10] sm:$0xf]
        %v5276 = vld [vmem:[%s5270 + $0x14] sm:$0xf]
        %v5277 = vld [vmem:[%s5270 + $0x18] sm:$0xf]
        %v5278 = vld [vmem:[%s5270 + $0x1c] sm:$0xf]
        %v5279 = vrot.slane %v5175, 1
        %v5288 = vunpack.c.l.b16 %v5271
        %v5289 = vunpack.c.l.b16 %v5272
        %v5290 = vunpack.c.l.b16 %v5273
        %v5291 = vunpack.c.l.b16 %v5274
        %v5292 = vunpack.c.l.b16 %v5275
        %v5293 = vunpack.c.l.b16 %v5276
        %v5294 = vunpack.c.l.b16 %v5277
        %v5295 = vunpack.c.l.b16 %v5278
        %v5296 = vpack.c.b16 %v5289, %v5288
        %v5297 = vpack.c.b16 %v5291, %v5290
        %v5298 = vpack.c.b16 %v5293, %v5292
        %v5299 = vpack.c.b16 %v5295, %v5294
        %v5305 = vsel %vm5148, %v5279, 0
        %5307 = vmatpush.bf16.msra.mxu0 0
        %5308 = vmatpush.bf16.msra.mxu0 0
        %5309 = vmatpush.bf16.msra.mxu0 0
        %5310 = vmatpush.bf16.msra.mxu0 0
        %5311 = vmatpush.bf16.msra.mxu0 %v5299
        %5312 = vmatpush.bf16.msra.mxu0 %v5298
        %5313 = vmatpush.bf16.msra.mxu0 %v5297
        %5314 = vmatpush.bf16.msra.mxu0 %v5296
        %5315 = vmatmul.bf16.gmra.mxu0 %v5305
        %v5316 = vpop.f32.mrf.mxu0
        %v5317 = vadd.f32 0.0, %v5316
        %v5318 = vpop.f32.mrf.mxu0
        %5319 = vdwg.mxu0
        %v5320 = vadd.f32 %v5269, %v5317
        %s5321 = scalar_lea.vmem [#allocation11], 128
        %v5322 = vld [vmem:[%s5321] sm:$0xf]
        %v5323 = vld [vmem:[%s5321 + $0x4] sm:$0xf]
        %v5324 = vld [vmem:[%s5321 + $0x8] sm:$0xf]
        %v5325 = vld [vmem:[%s5321 + $0xc] sm:$0xf]
        %v5326 = vld [vmem:[%s5321 + $0x10] sm:$0xf]
        %v5327 = vld [vmem:[%s5321 + $0x14] sm:$0xf]
        %v5328 = vld [vmem:[%s5321 + $0x18] sm:$0xf]
        %v5329 = vld [vmem:[%s5321 + $0x1c] sm:$0xf]
        %v5330 = vrot.slane %v5115, 2
        %v5339 = vunpack.c.l.b16 %v5322
        %v5340 = vunpack.c.l.b16 %v5323
        %v5341 = vunpack.c.l.b16 %v5324
        %v5342 = vunpack.c.l.b16 %v5325
        %v5343 = vunpack.c.l.b16 %v5326
        %v5344 = vunpack.c.l.b16 %v5327
        %v5345 = vunpack.c.l.b16 %v5328
        %v5346 = vunpack.c.l.b16 %v5329
        %v5347 = vpack.c.b16 %v5340, %v5339
        %v5348 = vpack.c.b16 %v5342, %v5341
        %v5349 = vpack.c.b16 %v5344, %v5343
        %v5350 = vpack.c.b16 %v5346, %v5345
        %v5356 = vsel %vm5148, %v5330, 0
        %5358 = vmatpush.bf16.msra.mxu0 0
        %5359 = vmatpush.bf16.msra.mxu0 0
        %5360 = vmatpush.bf16.msra.mxu0 0
        %5361 = vmatpush.bf16.msra.mxu0 0
        %5362 = vmatpush.bf16.msra.mxu0 %v5350
        %5363 = vmatpush.bf16.msra.mxu0 %v5349
        %5364 = vmatpush.bf16.msra.mxu0 %v5348
        %5365 = vmatpush.bf16.msra.mxu0 %v5347
        %5366 = vmatmul.bf16.gmra.mxu0 %v5356
        %v5367 = vpop.f32.mrf.mxu0
        %v5368 = vadd.f32 0.0, %v5367
        %v5369 = vpop.f32.mrf.mxu0
        %5370 = vdwg.mxu0
        %v5371 = vadd.f32 %v5320, %v5368
        %s5372 = scalar_lea.vmem [#allocation11], 160
        %v5373 = vld [vmem:[%s5372] sm:$0xf]
        %v5374 = vld [vmem:[%s5372 + $0x4] sm:$0xf]
        %v5375 = vld [vmem:[%s5372 + $0x8] sm:$0xf]
        %v5376 = vld [vmem:[%s5372 + $0xc] sm:$0xf]
        %v5377 = vld [vmem:[%s5372 + $0x10] sm:$0xf]
        %v5378 = vld [vmem:[%s5372 + $0x14] sm:$0xf]
        %v5379 = vld [vmem:[%s5372 + $0x18] sm:$0xf]
        %v5380 = vld [vmem:[%s5372 + $0x1c] sm:$0xf]
        %v5381 = vrot.slane %v5175, 2
        %v5390 = vunpack.c.l.b16 %v5373
        %v5391 = vunpack.c.l.b16 %v5374
        %v5392 = vunpack.c.l.b16 %v5375
        %v5393 = vunpack.c.l.b16 %v5376
        %v5394 = vunpack.c.l.b16 %v5377
        %v5395 = vunpack.c.l.b16 %v5378
        %v5396 = vunpack.c.l.b16 %v5379
        %v5397 = vunpack.c.l.b16 %v5380
        %v5398 = vpack.c.b16 %v5391, %v5390
        %v5399 = vpack.c.b16 %v5393, %v5392
        %v5400 = vpack.c.b16 %v5395, %v5394
        %v5401 = vpack.c.b16 %v5397, %v5396
        %v5407 = vsel %vm5148, %v5381, 0
        %5409 = vmatpush.bf16.msra.mxu0 0
        %5410 = vmatpush.bf16.msra.mxu0 0
        %5411 = vmatpush.bf16.msra.mxu0 0
        %5412 = vmatpush.bf16.msra.mxu0 0
        %5413 = vmatpush.bf16.msra.mxu0 %v5401
        %5414 = vmatpush.bf16.msra.mxu0 %v5400
        %5415 = vmatpush.bf16.msra.mxu0 %v5399
        %5416 = vmatpush.bf16.msra.mxu0 %v5398
        %5417 = vmatmul.bf16.gmra.mxu0 %v5407
        %v5418 = vpop.f32.mrf.mxu0
        %v5419 = vadd.f32 0.0, %v5418
        %v5420 = vpop.f32.mrf.mxu0
        %5421 = vdwg.mxu0
        %v5422 = vadd.f32 %v5371, %v5419
        %s5423 = scalar_lea.vmem [#allocation11], 192
        %v5424 = vld [vmem:[%s5423] sm:$0xf]
        %v5425 = vld [vmem:[%s5423 + $0x4] sm:$0xf]
        %v5426 = vld [vmem:[%s5423 + $0x8] sm:$0xf]
        %v5427 = vld [vmem:[%s5423 + $0xc] sm:$0xf]
        %v5428 = vld [vmem:[%s5423 + $0x10] sm:$0xf]
        %v5429 = vld [vmem:[%s5423 + $0x14] sm:$0xf]
        %v5430 = vld [vmem:[%s5423 + $0x18] sm:$0xf]
        %v5431 = vld [vmem:[%s5423 + $0x1c] sm:$0xf]
        %v5432 = vrot.slane %v5115, 3
        %v5441 = vunpack.c.l.b16 %v5424
        %v5442 = vunpack.c.l.b16 %v5425
        %v5443 = vunpack.c.l.b16 %v5426
        %v5444 = vunpack.c.l.b16 %v5427
        %v5445 = vunpack.c.l.b16 %v5428
        %v5446 = vunpack.c.l.b16 %v5429
        %v5447 = vunpack.c.l.b16 %v5430
        %v5448 = vunpack.c.l.b16 %v5431
        %v5449 = vpack.c.b16 %v5442, %v5441
        %v5450 = vpack.c.b16 %v5444, %v5443
        %v5451 = vpack.c.b16 %v5446, %v5445
        %v5452 = vpack.c.b16 %v5448, %v5447
        %v5458 = vsel %vm5148, %v5432, 0
        %5460 = vmatpush.bf16.msra.mxu0 0
        %5461 = vmatpush.bf16.msra.mxu0 0
        %5462 = vmatpush.bf16.msra.mxu0 0
        %5463 = vmatpush.bf16.msra.mxu0 0
        %5464 = vmatpush.bf16.msra.mxu0 %v5452
        %5465 = vmatpush.bf16.msra.mxu0 %v5451
        %5466 = vmatpush.bf16.msra.mxu0 %v5450
        %5467 = vmatpush.bf16.msra.mxu0 %v5449
        %5468 = vmatmul.bf16.gmra.mxu0 %v5458
        %v5469 = vpop.f32.mrf.mxu0
        %v5470 = vadd.f32 0.0, %v5469
        %v5471 = vpop.f32.mrf.mxu0
        %5472 = vdwg.mxu0
        %v5473 = vadd.f32 %v5422, %v5470
        %s5474 = scalar_lea.vmem [#allocation11], 224
        %v5475 = vld [vmem:[%s5474] sm:$0xf]
        %v5476 = vld [vmem:[%s5474 + $0x4] sm:$0xf]
        %v5477 = vld [vmem:[%s5474 + $0x8] sm:$0xf]
        %v5478 = vld [vmem:[%s5474 + $0xc] sm:$0xf]
        %v5479 = vld [vmem:[%s5474 + $0x10] sm:$0xf]
        %v5480 = vld [vmem:[%s5474 + $0x14] sm:$0xf]
        %v5481 = vld [vmem:[%s5474 + $0x18] sm:$0xf]
        %v5482 = vld [vmem:[%s5474 + $0x1c] sm:$0xf]
        %v5483 = vrot.slane %v5175, 3
        %v5492 = vunpack.c.l.b16 %v5475
        %v5493 = vunpack.c.l.b16 %v5476
        %v5494 = vunpack.c.l.b16 %v5477
        %v5495 = vunpack.c.l.b16 %v5478
        %v5496 = vunpack.c.l.b16 %v5479
        %v5497 = vunpack.c.l.b16 %v5480
        %v5498 = vunpack.c.l.b16 %v5481
        %v5499 = vunpack.c.l.b16 %v5482
        %v5500 = vpack.c.b16 %v5493, %v5492
        %v5501 = vpack.c.b16 %v5495, %v5494
        %v5502 = vpack.c.b16 %v5497, %v5496
        %v5503 = vpack.c.b16 %v5499, %v5498
        %v5509 = vsel %vm5148, %v5483, 0
        %5511 = vmatpush.bf16.msra.mxu0 0
        %5512 = vmatpush.bf16.msra.mxu0 0
        %5513 = vmatpush.bf16.msra.mxu0 0
        %5514 = vmatpush.bf16.msra.mxu0 0
        %5515 = vmatpush.bf16.msra.mxu0 %v5503
        %5516 = vmatpush.bf16.msra.mxu0 %v5502
        %5517 = vmatpush.bf16.msra.mxu0 %v5501
        %5518 = vmatpush.bf16.msra.mxu0 %v5500
        %5519 = vmatmul.bf16.gmra.mxu0 %v5509
        %v5520 = vpop.f32.mrf.mxu0
        %v5521 = vadd.f32 0.0, %v5520
        %v5522 = vpop.f32.mrf.mxu0
        %5523 = vdwg.mxu0
        %v5524 = vadd.f32 %v5473, %v5521
        %v5525 = vpack.c.bf16 %v5099, %v5099
        %s5526 = scalar_lea.vmem [#allocation11], 256
        %v5527 = vld [vmem:[%s5526] sm:$0xf]
        %v5528 = vld [vmem:[%s5526 + $0x4] sm:$0xf]
        %v5529 = vld [vmem:[%s5526 + $0x8] sm:$0xf]
        %v5530 = vld [vmem:[%s5526 + $0xc] sm:$0xf]
        %v5531 = vld [vmem:[%s5526 + $0x10] sm:$0xf]
        %v5532 = vld [vmem:[%s5526 + $0x14] sm:$0xf]
        %v5533 = vld [vmem:[%s5526 + $0x18] sm:$0xf]
        %v5534 = vld [vmem:[%s5526 + $0x1c] sm:$0xf]
        %v5543 = vunpack.c.l.b16 %v5527
        %v5544 = vunpack.c.l.b16 %v5528
        %v5545 = vunpack.c.l.b16 %v5529
        %v5546 = vunpack.c.l.b16 %v5530
        %v5547 = vunpack.c.l.b16 %v5531
        %v5548 = vunpack.c.l.b16 %v5532
        %v5549 = vunpack.c.l.b16 %v5533
        %v5550 = vunpack.c.l.b16 %v5534
        %v5551 = vpack.c.b16 %v5544, %v5543
        %v5552 = vpack.c.b16 %v5546, %v5545
        %v5553 = vpack.c.b16 %v5548, %v5547
        %v5554 = vpack.c.b16 %v5550, %v5549
        %v5560 = vsel %vm5148, %v5525, 0
        %5562 = vmatpush.bf16.msra.mxu0 0
        %5563 = vmatpush.bf16.msra.mxu0 0
        %5564 = vmatpush.bf16.msra.mxu0 0
        %5565 = vmatpush.bf16.msra.mxu0 0
        %5566 = vmatpush.bf16.msra.mxu0 %v5554
        %5567 = vmatpush.bf16.msra.mxu0 %v5553
        %5568 = vmatpush.bf16.msra.mxu0 %v5552
        %5569 = vmatpush.bf16.msra.mxu0 %v5551
        %5570 = vmatmul.bf16.gmra.mxu0 %v5560
        %v5571 = vpop.f32.mrf.mxu0
        %v5572 = vadd.f32 0.0, %v5571
        %v5573 = vpop.f32.mrf.mxu0
        %5574 = vdwg.mxu0
        %v5575 = vadd.f32 %v5524, %v5572
        %s5576 = scalar_lea.vmem [#allocation11], 288
        %v5577 = vld [vmem:[%s5576] sm:$0xf]
        %v5578 = vld [vmem:[%s5576 + $0x4] sm:$0xf]
        %v5579 = vld [vmem:[%s5576 + $0x8] sm:$0xf]
        %v5580 = vld [vmem:[%s5576 + $0xc] sm:$0xf]
        %v5581 = vld [vmem:[%s5576 + $0x10] sm:$0xf]
        %v5582 = vld [vmem:[%s5576 + $0x14] sm:$0xf]
        %v5583 = vld [vmem:[%s5576 + $0x18] sm:$0xf]
        %v5584 = vld [vmem:[%s5576 + $0x1c] sm:$0xf]
        %v5585 = vshrl.u32 %v5525, 16
        %v5595 = vunpack.c.l.b16 %v5577
        %v5596 = vunpack.c.l.b16 %v5578
        %v5597 = vunpack.c.l.b16 %v5579
        %v5598 = vunpack.c.l.b16 %v5580
        %v5599 = vunpack.c.l.b16 %v5581
        %v5600 = vunpack.c.l.b16 %v5582
        %v5601 = vunpack.c.l.b16 %v5583
        %v5602 = vunpack.c.l.b16 %v5584
        %v5603 = vpack.c.b16 %v5596, %v5595
        %v5604 = vpack.c.b16 %v5598, %v5597
        %v5605 = vpack.c.b16 %v5600, %v5599
        %v5606 = vpack.c.b16 %v5602, %v5601
        %v5612 = vsel %vm5148, %v5585, 0
        %5614 = vmatpush.bf16.msra.mxu0 0
        %5615 = vmatpush.bf16.msra.mxu0 0
        %5616 = vmatpush.bf16.msra.mxu0 0
        %5617 = vmatpush.bf16.msra.mxu0 0
        %5618 = vmatpush.bf16.msra.mxu0 %v5606
        %5619 = vmatpush.bf16.msra.mxu0 %v5605
        %5620 = vmatpush.bf16.msra.mxu0 %v5604
        %5621 = vmatpush.bf16.msra.mxu0 %v5603
        %5622 = vmatmul.bf16.gmra.mxu0 %v5612
        %v5623 = vpop.f32.mrf.mxu0
        %v5624 = vadd.f32 0.0, %v5623
        %v5625 = vpop.f32.mrf.mxu0
        %5626 = vdwg.mxu0
        %v5627 = vadd.f32 %v5575, %v5624
        %s5628 = scalar_lea.vmem [#allocation11], 320
        %v5629 = vld [vmem:[%s5628] sm:$0xf]
        %v5630 = vld [vmem:[%s5628 + $0x4] sm:$0xf]
        %v5631 = vld [vmem:[%s5628 + $0x8] sm:$0xf]
        %v5632 = vld [vmem:[%s5628 + $0xc] sm:$0xf]
        %v5633 = vld [vmem:[%s5628 + $0x10] sm:$0xf]
        %v5634 = vld [vmem:[%s5628 + $0x14] sm:$0xf]
        %v5635 = vld [vmem:[%s5628 + $0x18] sm:$0xf]
        %v5636 = vld [vmem:[%s5628 + $0x1c] sm:$0xf]
        %v5638 = vrot.slane %v5525, 1
        %v5647 = vunpack.c.l.b16 %v5629
        %v5648 = vunpack.c.l.b16 %v5630
        %v5649 = vunpack.c.l.b16 %v5631
        %v5650 = vunpack.c.l.b16 %v5632
        %v5651 = vunpack.c.l.b16 %v5633
        %v5652 = vunpack.c.l.b16 %v5634
        %v5653 = vunpack.c.l.b16 %v5635
        %v5654 = vunpack.c.l.b16 %v5636
        %v5655 = vpack.c.b16 %v5648, %v5647
        %v5656 = vpack.c.b16 %v5650, %v5649
        %v5657 = vpack.c.b16 %v5652, %v5651
        %v5658 = vpack.c.b16 %v5654, %v5653
        %v5664 = vsel %vm5148, %v5638, 0
        %5666 = vmatpush.bf16.msra.mxu0 0
        %5667 = vmatpush.bf16.msra.mxu0 0
        %5668 = vmatpush.bf16.msra.mxu0 0
        %5669 = vmatpush.bf16.msra.mxu0 0
        %5670 = vmatpush.bf16.msra.mxu0 %v5658
        %5671 = vmatpush.bf16.msra.mxu0 %v5657
        %5672 = vmatpush.bf16.msra.mxu0 %v5656
        %5673 = vmatpush.bf16.msra.mxu0 %v5655
        %5674 = vmatmul.bf16.gmra.mxu0 %v5664
        %v5675 = vpop.f32.mrf.mxu0
        %v5676 = vadd.f32 0.0, %v5675
        %v5677 = vpop.f32.mrf.mxu0
        %5678 = vdwg.mxu0
        %v5679 = vadd.f32 %v5627, %v5676
        %s5680 = scalar_lea.vmem [#allocation11], 352
        %v5681 = vld [vmem:[%s5680] sm:$0xf]
        %v5682 = vld [vmem:[%s5680 + $0x4] sm:$0xf]
        %v5683 = vld [vmem:[%s5680 + $0x8] sm:$0xf]
        %v5684 = vld [vmem:[%s5680 + $0xc] sm:$0xf]
        %v5685 = vld [vmem:[%s5680 + $0x10] sm:$0xf]
        %v5686 = vld [vmem:[%s5680 + $0x14] sm:$0xf]
        %v5687 = vld [vmem:[%s5680 + $0x18] sm:$0xf]
        %v5688 = vld [vmem:[%s5680 + $0x1c] sm:$0xf]
        %v5689 = vrot.slane %v5585, 1
        %v5698 = vunpack.c.l.b16 %v5681
        %v5699 = vunpack.c.l.b16 %v5682
        %v5700 = vunpack.c.l.b16 %v5683
        %v5701 = vunpack.c.l.b16 %v5684
        %v5702 = vunpack.c.l.b16 %v5685
        %v5703 = vunpack.c.l.b16 %v5686
        %v5704 = vunpack.c.l.b16 %v5687
        %v5705 = vunpack.c.l.b16 %v5688
        %v5706 = vpack.c.b16 %v5699, %v5698
        %v5707 = vpack.c.b16 %v5701, %v5700
        %v5708 = vpack.c.b16 %v5703, %v5702
        %v5709 = vpack.c.b16 %v5705, %v5704
        %v5715 = vsel %vm5148, %v5689, 0
        %5717 = vmatpush.bf16.msra.mxu0 0
        %5718 = vmatpush.bf16.msra.mxu0 0
        %5719 = vmatpush.bf16.msra.mxu0 0
        %5720 = vmatpush.bf16.msra.mxu0 0
        %5721 = vmatpush.bf16.msra.mxu0 %v5709
        %5722 = vmatpush.bf16.msra.mxu0 %v5708
        %5723 = vmatpush.bf16.msra.mxu0 %v5707
        %5724 = vmatpush.bf16.msra.mxu0 %v5706
        %5725 = vmatmul.bf16.gmra.mxu0 %v5715
        %v5726 = vpop.f32.mrf.mxu0
        %v5727 = vadd.f32 0.0, %v5726
        %v5728 = vpop.f32.mrf.mxu0
        %5729 = vdwg.mxu0
        %v5730 = vadd.f32 %v5679, %v5727
        %s5731 = scalar_lea.vmem [#allocation11], 384
        %v5732 = vld [vmem:[%s5731] sm:$0xf]
        %v5733 = vld [vmem:[%s5731 + $0x4] sm:$0xf]
        %v5734 = vld [vmem:[%s5731 + $0x8] sm:$0xf]
        %v5735 = vld [vmem:[%s5731 + $0xc] sm:$0xf]
        %v5736 = vld [vmem:[%s5731 + $0x10] sm:$0xf]
        %v5737 = vld [vmem:[%s5731 + $0x14] sm:$0xf]
        %v5738 = vld [vmem:[%s5731 + $0x18] sm:$0xf]
        %v5739 = vld [vmem:[%s5731 + $0x1c] sm:$0xf]
        %v5740 = vrot.slane %v5525, 2
        %v5749 = vunpack.c.l.b16 %v5732
        %v5750 = vunpack.c.l.b16 %v5733
        %v5751 = vunpack.c.l.b16 %v5734
        %v5752 = vunpack.c.l.b16 %v5735
        %v5753 = vunpack.c.l.b16 %v5736
        %v5754 = vunpack.c.l.b16 %v5737
        %v5755 = vunpack.c.l.b16 %v5738
        %v5756 = vunpack.c.l.b16 %v5739
        %v5757 = vpack.c.b16 %v5750, %v5749
        %v5758 = vpack.c.b16 %v5752, %v5751
        %v5759 = vpack.c.b16 %v5754, %v5753
        %v5760 = vpack.c.b16 %v5756, %v5755
        %v5766 = vsel %vm5148, %v5740, 0
        %5768 = vmatpush.bf16.msra.mxu0 0
        %5769 = vmatpush.bf16.msra.mxu0 0
        %5770 = vmatpush.bf16.msra.mxu0 0
        %5771 = vmatpush.bf16.msra.mxu0 0
        %5772 = vmatpush.bf16.msra.mxu0 %v5760
        %5773 = vmatpush.bf16.msra.mxu0 %v5759
        %5774 = vmatpush.bf16.msra.mxu0 %v5758
        %5775 = vmatpush.bf16.msra.mxu0 %v5757
        %5776 = vmatmul.bf16.gmra.mxu0 %v5766
        %v5777 = vpop.f32.mrf.mxu0
        %v5778 = vadd.f32 0.0, %v5777
        %v5779 = vpop.f32.mrf.mxu0
        %5780 = vdwg.mxu0
        %v5781 = vadd.f32 %v5730, %v5778
        %s5782 = scalar_lea.vmem [#allocation11], 416
        %v5783 = vld [vmem:[%s5782] sm:$0xf]
        %v5784 = vld [vmem:[%s5782 + $0x4] sm:$0xf]
        %v5785 = vld [vmem:[%s5782 + $0x8] sm:$0xf]
        %v5786 = vld [vmem:[%s5782 + $0xc] sm:$0xf]
        %v5787 = vld [vmem:[%s5782 + $0x10] sm:$0xf]
        %v5788 = vld [vmem:[%s5782 + $0x14] sm:$0xf]
        %v5789 = vld [vmem:[%s5782 + $0x18] sm:$0xf]
        %v5790 = vld [vmem:[%s5782 + $0x1c] sm:$0xf]
        %v5791 = vrot.slane %v5585, 2
        %v5800 = vunpack.c.l.b16 %v5783
        %v5801 = vunpack.c.l.b16 %v5784
        %v5802 = vunpack.c.l.b16 %v5785
        %v5803 = vunpack.c.l.b16 %v5786
        %v5804 = vunpack.c.l.b16 %v5787
        %v5805 = vunpack.c.l.b16 %v5788
        %v5806 = vunpack.c.l.b16 %v5789
        %v5807 = vunpack.c.l.b16 %v5790
        %v5808 = vpack.c.b16 %v5801, %v5800
        %v5809 = vpack.c.b16 %v5803, %v5802
        %v5810 = vpack.c.b16 %v5805, %v5804
        %v5811 = vpack.c.b16 %v5807, %v5806
        %v5817 = vsel %vm5148, %v5791, 0
        %5819 = vmatpush.bf16.msra.mxu0 0
        %5820 = vmatpush.bf16.msra.mxu0 0
        %5821 = vmatpush.bf16.msra.mxu0 0
        %5822 = vmatpush.bf16.msra.mxu0 0
        %5823 = vmatpush.bf16.msra.mxu0 %v5811
        %5824 = vmatpush.bf16.msra.mxu0 %v5810
        %5825 = vmatpush.bf16.msra.mxu0 %v5809
        %5826 = vmatpush.bf16.msra.mxu0 %v5808
        %5827 = vmatmul.bf16.gmra.mxu0 %v5817
        %v5828 = vpop.f32.mrf.mxu0
        %v5829 = vadd.f32 0.0, %v5828
        %v5830 = vpop.f32.mrf.mxu0
        %5831 = vdwg.mxu0
        %v5832 = vadd.f32 %v5781, %v5829
        %s5833 = scalar_lea.vmem [#allocation11], 448
        %v5834 = vld [vmem:[%s5833] sm:$0xf]
        %v5835 = vld [vmem:[%s5833 + $0x4] sm:$0xf]
        %v5836 = vld [vmem:[%s5833 + $0x8] sm:$0xf]
        %v5837 = vld [vmem:[%s5833 + $0xc] sm:$0xf]
        %v5838 = vld [vmem:[%s5833 + $0x10] sm:$0xf]
        %v5839 = vld [vmem:[%s5833 + $0x14] sm:$0xf]
        %v5840 = vld [vmem:[%s5833 + $0x18] sm:$0xf]
        %v5841 = vld [vmem:[%s5833 + $0x1c] sm:$0xf]
        %v5842 = vrot.slane %v5525, 3
        %v5851 = vunpack.c.l.b16 %v5834
        %v5852 = vunpack.c.l.b16 %v5835
        %v5853 = vunpack.c.l.b16 %v5836
        %v5854 = vunpack.c.l.b16 %v5837
        %v5855 = vunpack.c.l.b16 %v5838
        %v5856 = vunpack.c.l.b16 %v5839
        %v5857 = vunpack.c.l.b16 %v5840
        %v5858 = vunpack.c.l.b16 %v5841
        %v5859 = vpack.c.b16 %v5852, %v5851
        %v5860 = vpack.c.b16 %v5854, %v5853
        %v5861 = vpack.c.b16 %v5856, %v5855
        %v5862 = vpack.c.b16 %v5858, %v5857
        %v5868 = vsel %vm5148, %v5842, 0
        %5870 = vmatpush.bf16.msra.mxu0 0
        %5871 = vmatpush.bf16.msra.mxu0 0
        %5872 = vmatpush.bf16.msra.mxu0 0
        %5873 = vmatpush.bf16.msra.mxu0 0
        %5874 = vmatpush.bf16.msra.mxu0 %v5862
        %5875 = vmatpush.bf16.msra.mxu0 %v5861
        %5876 = vmatpush.bf16.msra.mxu0 %v5860
        %5877 = vmatpush.bf16.msra.mxu0 %v5859
        %5878 = vmatmul.bf16.gmra.mxu0 %v5868
        %v5879 = vpop.f32.mrf.mxu0
        %v5880 = vadd.f32 0.0, %v5879
        %v5881 = vpop.f32.mrf.mxu0
        %5882 = vdwg.mxu0
        %v5883 = vadd.f32 %v5832, %v5880
        %s5884 = scalar_lea.vmem [#allocation11], 480
        %v5885 = vld [vmem:[%s5884] sm:$0xf]
        %v5886 = vld [vmem:[%s5884 + $0x4] sm:$0xf]
        %v5887 = vld [vmem:[%s5884 + $0x8] sm:$0xf]
        %v5888 = vld [vmem:[%s5884 + $0xc] sm:$0xf]
        %v5889 = vld [vmem:[%s5884 + $0x10] sm:$0xf]
        %v5890 = vld [vmem:[%s5884 + $0x14] sm:$0xf]
        %v5891 = vld [vmem:[%s5884 + $0x18] sm:$0xf]
        %v5892 = vld [vmem:[%s5884 + $0x1c] sm:$0xf]
        %v5893 = vrot.slane %v5585, 3
        %v5902 = vunpack.c.l.b16 %v5885
        %v5903 = vunpack.c.l.b16 %v5886
        %v5904 = vunpack.c.l.b16 %v5887
        %v5905 = vunpack.c.l.b16 %v5888
        %v5906 = vunpack.c.l.b16 %v5889
        %v5907 = vunpack.c.l.b16 %v5890
        %v5908 = vunpack.c.l.b16 %v5891
        %v5909 = vunpack.c.l.b16 %v5892
        %v5910 = vpack.c.b16 %v5903, %v5902
        %v5911 = vpack.c.b16 %v5905, %v5904
        %v5912 = vpack.c.b16 %v5907, %v5906
        %v5913 = vpack.c.b16 %v5909, %v5908
        %v5919 = vsel %vm5148, %v5893, 0
        %5921 = vmatpush.bf16.msra.mxu0 0
        %5922 = vmatpush.bf16.msra.mxu0 0
        %5923 = vmatpush.bf16.msra.mxu0 0
        %5924 = vmatpush.bf16.msra.mxu0 0
        %5925 = vmatpush.bf16.msra.mxu0 %v5913
        %5926 = vmatpush.bf16.msra.mxu0 %v5912
        %5927 = vmatpush.bf16.msra.mxu0 %v5911
        %5928 = vmatpush.bf16.msra.mxu0 %v5910
        %5929 = vmatmul.bf16.gmra.mxu0 %v5919
        %v5930 = vpop.f32.mrf.mxu0
        %v5931 = vadd.f32 0.0, %v5930
        %v5932 = vpop.f32.mrf.mxu0
        %5933 = vdwg.mxu0
        %v5934 = vadd.f32 %v5883, %v5931
        %v5935 = vpack.c.bf16 %v5100, %v5100
        %s5936 = scalar_lea.vmem [#allocation11], 512
        %v5937 = vld [vmem:[%s5936] sm:$0xf]
        %v5938 = vld [vmem:[%s5936 + $0x4] sm:$0xf]
        %v5939 = vld [vmem:[%s5936 + $0x8] sm:$0xf]
        %v5940 = vld [vmem:[%s5936 + $0xc] sm:$0xf]
        %v5941 = vld [vmem:[%s5936 + $0x10] sm:$0xf]
        %v5942 = vld [vmem:[%s5936 + $0x14] sm:$0xf]
        %v5943 = vld [vmem:[%s5936 + $0x18] sm:$0xf]
        %v5944 = vld [vmem:[%s5936 + $0x1c] sm:$0xf]
        %v5953 = vunpack.c.l.b16 %v5937
        %v5954 = vunpack.c.l.b16 %v5938
        %v5955 = vunpack.c.l.b16 %v5939
        %v5956 = vunpack.c.l.b16 %v5940
        %v5957 = vunpack.c.l.b16 %v5941
        %v5958 = vunpack.c.l.b16 %v5942
        %v5959 = vunpack.c.l.b16 %v5943
        %v5960 = vunpack.c.l.b16 %v5944
        %v5961 = vpack.c.b16 %v5954, %v5953
        %v5962 = vpack.c.b16 %v5956, %v5955
        %v5963 = vpack.c.b16 %v5958, %v5957
        %v5964 = vpack.c.b16 %v5960, %v5959
        %v5970 = vsel %vm5148, %v5935, 0
        %5972 = vmatpush.bf16.msra.mxu0 0
        %5973 = vmatpush.bf16.msra.mxu0 0
        %5974 = vmatpush.bf16.msra.mxu0 0
        %5975 = vmatpush.bf16.msra.mxu0 0
        %5976 = vmatpush.bf16.msra.mxu0 %v5964
        %5977 = vmatpush.bf16.msra.mxu0 %v5963
        %5978 = vmatpush.bf16.msra.mxu0 %v5962
        %5979 = vmatpush.bf16.msra.mxu0 %v5961
        %5980 = vmatmul.bf16.gmra.mxu0 %v5970
        %v5981 = vpop.f32.mrf.mxu0
        %v5982 = vadd.f32 0.0, %v5981
        %v5983 = vpop.f32.mrf.mxu0
        %5984 = vdwg.mxu0
        %v5985 = vadd.f32 %v5934, %v5982
        %s5986 = scalar_lea.vmem [#allocation11], 544
        %v5987 = vld [vmem:[%s5986] sm:$0xf]
        %v5988 = vld [vmem:[%s5986 + $0x4] sm:$0xf]
        %v5989 = vld [vmem:[%s5986 + $0x8] sm:$0xf]
        %v5990 = vld [vmem:[%s5986 + $0xc] sm:$0xf]
        %v5991 = vld [vmem:[%s5986 + $0x10] sm:$0xf]
        %v5992 = vld [vmem:[%s5986 + $0x14] sm:$0xf]
        %v5993 = vld [vmem:[%s5986 + $0x18] sm:$0xf]
        %v5994 = vld [vmem:[%s5986 + $0x1c] sm:$0xf]
        %v5995 = vshrl.u32 %v5935, 16
        %v6005 = vunpack.c.l.b16 %v5987
        %v6006 = vunpack.c.l.b16 %v5988
        %v6007 = vunpack.c.l.b16 %v5989
        %v6008 = vunpack.c.l.b16 %v5990
        %v6009 = vunpack.c.l.b16 %v5991
        %v6010 = vunpack.c.l.b16 %v5992
        %v6011 = vunpack.c.l.b16 %v5993
        %v6012 = vunpack.c.l.b16 %v5994
        %v6013 = vpack.c.b16 %v6006, %v6005
        %v6014 = vpack.c.b16 %v6008, %v6007
        %v6015 = vpack.c.b16 %v6010, %v6009
        %v6016 = vpack.c.b16 %v6012, %v6011
        %v6022 = vsel %vm5148, %v5995, 0
        %6024 = vmatpush.bf16.msra.mxu0 0
        %6025 = vmatpush.bf16.msra.mxu0 0
        %6026 = vmatpush.bf16.msra.mxu0 0
        %6027 = vmatpush.bf16.msra.mxu0 0
        %6028 = vmatpush.bf16.msra.mxu0 %v6016
        %6029 = vmatpush.bf16.msra.mxu0 %v6015
        %6030 = vmatpush.bf16.msra.mxu0 %v6014
        %6031 = vmatpush.bf16.msra.mxu0 %v6013
        %6032 = vmatmul.bf16.gmra.mxu0 %v6022
        %v6033 = vpop.f32.mrf.mxu0
        %v6034 = vadd.f32 0.0, %v6033
        %v6035 = vpop.f32.mrf.mxu0
        %6036 = vdwg.mxu0
        %v6037 = vadd.f32 %v5985, %v6034
        %s6038 = scalar_lea.vmem [#allocation11], 576
        %v6039 = vld [vmem:[%s6038] sm:$0xf]
        %v6040 = vld [vmem:[%s6038 + $0x4] sm:$0xf]
        %v6041 = vld [vmem:[%s6038 + $0x8] sm:$0xf]
        %v6042 = vld [vmem:[%s6038 + $0xc] sm:$0xf]
        %v6043 = vld [vmem:[%s6038 + $0x10] sm:$0xf]
        %v6044 = vld [vmem:[%s6038 + $0x14] sm:$0xf]
        %v6045 = vld [vmem:[%s6038 + $0x18] sm:$0xf]
        %v6046 = vld [vmem:[%s6038 + $0x1c] sm:$0xf]
        %v6048 = vrot.slane %v5935, 1
        %v6057 = vunpack.c.l.b16 %v6039
        %v6058 = vunpack.c.l.b16 %v6040
        %v6059 = vunpack.c.l.b16 %v6041
        %v6060 = vunpack.c.l.b16 %v6042
        %v6061 = vunpack.c.l.b16 %v6043
        %v6062 = vunpack.c.l.b16 %v6044
        %v6063 = vunpack.c.l.b16 %v6045
        %v6064 = vunpack.c.l.b16 %v6046
        %v6065 = vpack.c.b16 %v6058, %v6057
        %v6066 = vpack.c.b16 %v6060, %v6059
        %v6067 = vpack.c.b16 %v6062, %v6061
        %v6068 = vpack.c.b16 %v6064, %v6063
        %v6074 = vsel %vm5148, %v6048, 0
        %6076 = vmatpush.bf16.msra.mxu0 0
        %6077 = vmatpush.bf16.msra.mxu0 0
        %6078 = vmatpush.bf16.msra.mxu0 0
        %6079 = vmatpush.bf16.msra.mxu0 0
        %6080 = vmatpush.bf16.msra.mxu0 %v6068
        %6081 = vmatpush.bf16.msra.mxu0 %v6067
        %6082 = vmatpush.bf16.msra.mxu0 %v6066
        %6083 = vmatpush.bf16.msra.mxu0 %v6065
        %6084 = vmatmul.bf16.gmra.mxu0 %v6074
        %v6085 = vpop.f32.mrf.mxu0
        %v6086 = vadd.f32 0.0, %v6085
        %v6087 = vpop.f32.mrf.mxu0
        %6088 = vdwg.mxu0
        %v6089 = vadd.f32 %v6037, %v6086
        %s6090 = scalar_lea.vmem [#allocation11], 608
        %v6091 = vld [vmem:[%s6090] sm:$0xf]
        %v6092 = vld [vmem:[%s6090 + $0x4] sm:$0xf]
        %v6093 = vld [vmem:[%s6090 + $0x8] sm:$0xf]
        %v6094 = vld [vmem:[%s6090 + $0xc] sm:$0xf]
        %v6095 = vld [vmem:[%s6090 + $0x10] sm:$0xf]
        %v6096 = vld [vmem:[%s6090 + $0x14] sm:$0xf]
        %v6097 = vld [vmem:[%s6090 + $0x18] sm:$0xf]
        %v6098 = vld [vmem:[%s6090 + $0x1c] sm:$0xf]
        %v6099 = vrot.slane %v5995, 1
        %v6108 = vunpack.c.l.b16 %v6091
        %v6109 = vunpack.c.l.b16 %v6092
        %v6110 = vunpack.c.l.b16 %v6093
        %v6111 = vunpack.c.l.b16 %v6094
        %v6112 = vunpack.c.l.b16 %v6095
        %v6113 = vunpack.c.l.b16 %v6096
        %v6114 = vunpack.c.l.b16 %v6097
        %v6115 = vunpack.c.l.b16 %v6098
        %v6116 = vpack.c.b16 %v6109, %v6108
        %v6117 = vpack.c.b16 %v6111, %v6110
        %v6118 = vpack.c.b16 %v6113, %v6112
        %v6119 = vpack.c.b16 %v6115, %v6114
        %v6125 = vsel %vm5148, %v6099, 0
        %6127 = vmatpush.bf16.msra.mxu0 0
        %6128 = vmatpush.bf16.msra.mxu0 0
        %6129 = vmatpush.bf16.msra.mxu0 0
        %6130 = vmatpush.bf16.msra.mxu0 0
        %6131 = vmatpush.bf16.msra.mxu0 %v6119
        %6132 = vmatpush.bf16.msra.mxu0 %v6118
        %6133 = vmatpush.bf16.msra.mxu0 %v6117
        %6134 = vmatpush.bf16.msra.mxu0 %v6116
        %6135 = vmatmul.bf16.gmra.mxu0 %v6125
        %v6136 = vpop.f32.mrf.mxu0
        %v6137 = vadd.f32 0.0, %v6136
        %v6138 = vpop.f32.mrf.mxu0
        %6139 = vdwg.mxu0
        %v6140 = vadd.f32 %v6089, %v6137
        %s6141 = scalar_lea.vmem [#allocation11], 640
        %v6142 = vld [vmem:[%s6141] sm:$0xf]
        %v6143 = vld [vmem:[%s6141 + $0x4] sm:$0xf]
        %v6144 = vld [vmem:[%s6141 + $0x8] sm:$0xf]
        %v6145 = vld [vmem:[%s6141 + $0xc] sm:$0xf]
        %v6146 = vld [vmem:[%s6141 + $0x10] sm:$0xf]
        %v6147 = vld [vmem:[%s6141 + $0x14] sm:$0xf]
        %v6148 = vld [vmem:[%s6141 + $0x18] sm:$0xf]
        %v6149 = vld [vmem:[%s6141 + $0x1c] sm:$0xf]
        %v6150 = vrot.slane %v5935, 2
        %v6159 = vunpack.c.l.b16 %v6142
        %v6160 = vunpack.c.l.b16 %v6143
        %v6161 = vunpack.c.l.b16 %v6144
        %v6162 = vunpack.c.l.b16 %v6145
        %v6163 = vunpack.c.l.b16 %v6146
        %v6164 = vunpack.c.l.b16 %v6147
        %v6165 = vunpack.c.l.b16 %v6148
        %v6166 = vunpack.c.l.b16 %v6149
        %v6167 = vpack.c.b16 %v6160, %v6159
        %v6168 = vpack.c.b16 %v6162, %v6161
        %v6169 = vpack.c.b16 %v6164, %v6163
        %v6170 = vpack.c.b16 %v6166, %v6165
        %v6176 = vsel %vm5148, %v6150, 0
        %6178 = vmatpush.bf16.msra.mxu0 0
        %6179 = vmatpush.bf16.msra.mxu0 0
        %6180 = vmatpush.bf16.msra.mxu0 0
        %6181 = vmatpush.bf16.msra.mxu0 0
        %6182 = vmatpush.bf16.msra.mxu0 %v6170
        %6183 = vmatpush.bf16.msra.mxu0 %v6169
        %6184 = vmatpush.bf16.msra.mxu0 %v6168
        %6185 = vmatpush.bf16.msra.mxu0 %v6167
        %6186 = vmatmul.bf16.gmra.mxu0 %v6176
        %v6187 = vpop.f32.mrf.mxu0
        %v6188 = vadd.f32 0.0, %v6187
        %v6189 = vpop.f32.mrf.mxu0
        %6190 = vdwg.mxu0
        %v6191 = vadd.f32 %v6140, %v6188
        %s6192 = scalar_lea.vmem [#allocation11], 672
        %v6193 = vld [vmem:[%s6192] sm:$0xf]
        %v6194 = vld [vmem:[%s6192 + $0x4] sm:$0xf]
        %v6195 = vld [vmem:[%s6192 + $0x8] sm:$0xf]
        %v6196 = vld [vmem:[%s6192 + $0xc] sm:$0xf]
        %v6197 = vld [vmem:[%s6192 + $0x10] sm:$0xf]
        %v6198 = vld [vmem:[%s6192 + $0x14] sm:$0xf]
        %v6199 = vld [vmem:[%s6192 + $0x18] sm:$0xf]
        %v6200 = vld [vmem:[%s6192 + $0x1c] sm:$0xf]
        %v6201 = vrot.slane %v5995, 2
        %v6210 = vunpack.c.l.b16 %v6193
        %v6211 = vunpack.c.l.b16 %v6194
        %v6212 = vunpack.c.l.b16 %v6195
        %v6213 = vunpack.c.l.b16 %v6196
        %v6214 = vunpack.c.l.b16 %v6197
        %v6215 = vunpack.c.l.b16 %v6198
        %v6216 = vunpack.c.l.b16 %v6199
        %v6217 = vunpack.c.l.b16 %v6200
        %v6218 = vpack.c.b16 %v6211, %v6210
        %v6219 = vpack.c.b16 %v6213, %v6212
        %v6220 = vpack.c.b16 %v6215, %v6214
        %v6221 = vpack.c.b16 %v6217, %v6216
        %v6227 = vsel %vm5148, %v6201, 0
        %6229 = vmatpush.bf16.msra.mxu0 0
        %6230 = vmatpush.bf16.msra.mxu0 0
        %6231 = vmatpush.bf16.msra.mxu0 0
        %6232 = vmatpush.bf16.msra.mxu0 0
        %6233 = vmatpush.bf16.msra.mxu0 %v6221
        %6234 = vmatpush.bf16.msra.mxu0 %v6220
        %6235 = vmatpush.bf16.msra.mxu0 %v6219
        %6236 = vmatpush.bf16.msra.mxu0 %v6218
        %6237 = vmatmul.bf16.gmra.mxu0 %v6227
        %v6238 = vpop.f32.mrf.mxu0
        %v6239 = vadd.f32 0.0, %v6238
        %v6240 = vpop.f32.mrf.mxu0
        %6241 = vdwg.mxu0
        %v6242 = vadd.f32 %v6191, %v6239
        %s6243 = scalar_lea.vmem [#allocation11], 704
        %v6244 = vld [vmem:[%s6243] sm:$0xf]
        %v6245 = vld [vmem:[%s6243 + $0x4] sm:$0xf]
        %v6246 = vld [vmem:[%s6243 + $0x8] sm:$0xf]
        %v6247 = vld [vmem:[%s6243 + $0xc] sm:$0xf]
        %v6248 = vld [vmem:[%s6243 + $0x10] sm:$0xf]
        %v6249 = vld [vmem:[%s6243 + $0x14] sm:$0xf]
        %v6250 = vld [vmem:[%s6243 + $0x18] sm:$0xf]
        %v6251 = vld [vmem:[%s6243 + $0x1c] sm:$0xf]
        %v6252 = vrot.slane %v5935, 3
        %v6261 = vunpack.c.l.b16 %v6244
        %v6262 = vunpack.c.l.b16 %v6245
        %v6263 = vunpack.c.l.b16 %v6246
        %v6264 = vunpack.c.l.b16 %v6247
        %v6265 = vunpack.c.l.b16 %v6248
        %v6266 = vunpack.c.l.b16 %v6249
        %v6267 = vunpack.c.l.b16 %v6250
        %v6268 = vunpack.c.l.b16 %v6251
        %v6269 = vpack.c.b16 %v6262, %v6261
        %v6270 = vpack.c.b16 %v6264, %v6263
        %v6271 = vpack.c.b16 %v6266, %v6265
        %v6272 = vpack.c.b16 %v6268, %v6267
        %v6278 = vsel %vm5148, %v6252, 0
        %6280 = vmatpush.bf16.msra.mxu0 0
        %6281 = vmatpush.bf16.msra.mxu0 0
        %6282 = vmatpush.bf16.msra.mxu0 0
        %6283 = vmatpush.bf16.msra.mxu0 0
        %6284 = vmatpush.bf16.msra.mxu0 %v6272
        %6285 = vmatpush.bf16.msra.mxu0 %v6271
        %6286 = vmatpush.bf16.msra.mxu0 %v6270
        %6287 = vmatpush.bf16.msra.mxu0 %v6269
        %6288 = vmatmul.bf16.gmra.mxu0 %v6278
        %v6289 = vpop.f32.mrf.mxu0
        %v6290 = vadd.f32 0.0, %v6289
        %v6291 = vpop.f32.mrf.mxu0
        %6292 = vdwg.mxu0
        %v6293 = vadd.f32 %v6242, %v6290
        %s6294 = scalar_lea.vmem [#allocation11], 736
        %v6295 = vld [vmem:[%s6294] sm:$0xf]
        %v6296 = vld [vmem:[%s6294 + $0x4] sm:$0xf]
        %v6297 = vld [vmem:[%s6294 + $0x8] sm:$0xf]
        %v6298 = vld [vmem:[%s6294 + $0xc] sm:$0xf]
        %v6299 = vld [vmem:[%s6294 + $0x10] sm:$0xf]
        %v6300 = vld [vmem:[%s6294 + $0x14] sm:$0xf]
        %v6301 = vld [vmem:[%s6294 + $0x18] sm:$0xf]
        %v6302 = vld [vmem:[%s6294 + $0x1c] sm:$0xf]
        %v6303 = vrot.slane %v5995, 3
        %v6312 = vunpack.c.l.b16 %v6295
        %v6313 = vunpack.c.l.b16 %v6296
        %v6314 = vunpack.c.l.b16 %v6297
        %v6315 = vunpack.c.l.b16 %v6298
        %v6316 = vunpack.c.l.b16 %v6299
        %v6317 = vunpack.c.l.b16 %v6300
        %v6318 = vunpack.c.l.b16 %v6301
        %v6319 = vunpack.c.l.b16 %v6302
        %v6320 = vpack.c.b16 %v6313, %v6312
        %v6321 = vpack.c.b16 %v6315, %v6314
        %v6322 = vpack.c.b16 %v6317, %v6316
        %v6323 = vpack.c.b16 %v6319, %v6318
        %v6329 = vsel %vm5148, %v6303, 0
        %6331 = vmatpush.bf16.msra.mxu0 0
        %6332 = vmatpush.bf16.msra.mxu0 0
        %6333 = vmatpush.bf16.msra.mxu0 0
        %6334 = vmatpush.bf16.msra.mxu0 0
        %6335 = vmatpush.bf16.msra.mxu0 %v6323
        %6336 = vmatpush.bf16.msra.mxu0 %v6322
        %6337 = vmatpush.bf16.msra.mxu0 %v6321
        %6338 = vmatpush.bf16.msra.mxu0 %v6320
        %6339 = vmatmul.bf16.gmra.mxu0 %v6329
        %v6340 = vpop.f32.mrf.mxu0
        %v6341 = vadd.f32 0.0, %v6340
        %v6342 = vpop.f32.mrf.mxu0
        %6343 = vdwg.mxu0
        %v6344 = vadd.f32 %v6293, %v6341
        %v6345 = vpack.c.bf16 %v5101, %v5101
        %s6346 = scalar_lea.vmem [#allocation11], 768
        %v6347 = vld [vmem:[%s6346] sm:$0xf]
        %v6348 = vld [vmem:[%s6346 + $0x4] sm:$0xf]
        %v6349 = vld [vmem:[%s6346 + $0x8] sm:$0xf]
        %v6350 = vld [vmem:[%s6346 + $0xc] sm:$0xf]
        %v6351 = vld [vmem:[%s6346 + $0x10] sm:$0xf]
        %v6352 = vld [vmem:[%s6346 + $0x14] sm:$0xf]
        %v6353 = vld [vmem:[%s6346 + $0x18] sm:$0xf]
        %v6354 = vld [vmem:[%s6346 + $0x1c] sm:$0xf]
        %v6363 = vunpack.c.l.b16 %v6347
        %v6364 = vunpack.c.l.b16 %v6348
        %v6365 = vunpack.c.l.b16 %v6349
        %v6366 = vunpack.c.l.b16 %v6350
        %v6367 = vunpack.c.l.b16 %v6351
        %v6368 = vunpack.c.l.b16 %v6352
        %v6369 = vunpack.c.l.b16 %v6353
        %v6370 = vunpack.c.l.b16 %v6354
        %v6371 = vpack.c.b16 %v6364, %v6363
        %v6372 = vpack.c.b16 %v6366, %v6365
        %v6373 = vpack.c.b16 %v6368, %v6367
        %v6374 = vpack.c.b16 %v6370, %v6369
        %v6380 = vsel %vm5148, %v6345, 0
        %6382 = vmatpush.bf16.msra.mxu0 0
        %6383 = vmatpush.bf16.msra.mxu0 0
        %6384 = vmatpush.bf16.msra.mxu0 0
        %6385 = vmatpush.bf16.msra.mxu0 0
        %6386 = vmatpush.bf16.msra.mxu0 %v6374
        %6387 = vmatpush.bf16.msra.mxu0 %v6373
        %6388 = vmatpush.bf16.msra.mxu0 %v6372
        %6389 = vmatpush.bf16.msra.mxu0 %v6371
        %6390 = vmatmul.bf16.gmra.mxu0 %v6380
        %v6391 = vpop.f32.mrf.mxu0
        %v6392 = vadd.f32 0.0, %v6391
        %v6393 = vpop.f32.mrf.mxu0
        %6394 = vdwg.mxu0
        %v6395 = vadd.f32 %v6344, %v6392
        %s6396 = scalar_lea.vmem [#allocation11], 800
        %v6397 = vld [vmem:[%s6396] sm:$0xf]
        %v6398 = vld [vmem:[%s6396 + $0x4] sm:$0xf]
        %v6399 = vld [vmem:[%s6396 + $0x8] sm:$0xf]
        %v6400 = vld [vmem:[%s6396 + $0xc] sm:$0xf]
        %v6401 = vld [vmem:[%s6396 + $0x10] sm:$0xf]
        %v6402 = vld [vmem:[%s6396 + $0x14] sm:$0xf]
        %v6403 = vld [vmem:[%s6396 + $0x18] sm:$0xf]
        %v6404 = vld [vmem:[%s6396 + $0x1c] sm:$0xf]
        %v6405 = vshrl.u32 %v6345, 16
        %v6415 = vunpack.c.l.b16 %v6397
        %v6416 = vunpack.c.l.b16 %v6398
        %v6417 = vunpack.c.l.b16 %v6399
        %v6418 = vunpack.c.l.b16 %v6400
        %v6419 = vunpack.c.l.b16 %v6401
        %v6420 = vunpack.c.l.b16 %v6402
        %v6421 = vunpack.c.l.b16 %v6403
        %v6422 = vunpack.c.l.b16 %v6404
        %v6423 = vpack.c.b16 %v6416, %v6415
        %v6424 = vpack.c.b16 %v6418, %v6417
        %v6425 = vpack.c.b16 %v6420, %v6419
        %v6426 = vpack.c.b16 %v6422, %v6421
        %v6432 = vsel %vm5148, %v6405, 0
        %6434 = vmatpush.bf16.msra.mxu0 0
        %6435 = vmatpush.bf16.msra.mxu0 0
        %6436 = vmatpush.bf16.msra.mxu0 0
        %6437 = vmatpush.bf16.msra.mxu0 0
        %6438 = vmatpush.bf16.msra.mxu0 %v6426
        %6439 = vmatpush.bf16.msra.mxu0 %v6425
        %6440 = vmatpush.bf16.msra.mxu0 %v6424
        %6441 = vmatpush.bf16.msra.mxu0 %v6423
        %6442 = vmatmul.bf16.gmra.mxu0 %v6432
        %v6443 = vpop.f32.mrf.mxu0
        %v6444 = vadd.f32 0.0, %v6443
        %v6445 = vpop.f32.mrf.mxu0
        %6446 = vdwg.mxu0
        %v6447 = vadd.f32 %v6395, %v6444
        %s6448 = scalar_lea.vmem [#allocation11], 832
        %v6449 = vld [vmem:[%s6448] sm:$0xf]
        %v6450 = vld [vmem:[%s6448 + $0x4] sm:$0xf]
        %v6451 = vld [vmem:[%s6448 + $0x8] sm:$0xf]
        %v6452 = vld [vmem:[%s6448 + $0xc] sm:$0xf]
        %v6453 = vld [vmem:[%s6448 + $0x10] sm:$0xf]
        %v6454 = vld [vmem:[%s6448 + $0x14] sm:$0xf]
        %v6455 = vld [vmem:[%s6448 + $0x18] sm:$0xf]
        %v6456 = vld [vmem:[%s6448 + $0x1c] sm:$0xf]
        %v6458 = vrot.slane %v6345, 1
        %v6467 = vunpack.c.l.b16 %v6449
        %v6468 = vunpack.c.l.b16 %v6450
        %v6469 = vunpack.c.l.b16 %v6451
        %v6470 = vunpack.c.l.b16 %v6452
        %v6471 = vunpack.c.l.b16 %v6453
        %v6472 = vunpack.c.l.b16 %v6454
        %v6473 = vunpack.c.l.b16 %v6455
        %v6474 = vunpack.c.l.b16 %v6456
        %v6475 = vpack.c.b16 %v6468, %v6467
        %v6476 = vpack.c.b16 %v6470, %v6469
        %v6477 = vpack.c.b16 %v6472, %v6471
        %v6478 = vpack.c.b16 %v6474, %v6473
        %v6484 = vsel %vm5148, %v6458, 0
        %6486 = vmatpush.bf16.msra.mxu0 0
        %6487 = vmatpush.bf16.msra.mxu0 0
        %6488 = vmatpush.bf16.msra.mxu0 0
        %6489 = vmatpush.bf16.msra.mxu0 0
        %6490 = vmatpush.bf16.msra.mxu0 %v6478
        %6491 = vmatpush.bf16.msra.mxu0 %v6477
        %6492 = vmatpush.bf16.msra.mxu0 %v6476
        %6493 = vmatpush.bf16.msra.mxu0 %v6475
        %6494 = vmatmul.bf16.gmra.mxu0 %v6484
        %v6495 = vpop.f32.mrf.mxu0
        %v6496 = vadd.f32 0.0, %v6495
        %v6497 = vpop.f32.mrf.mxu0
        %6498 = vdwg.mxu0
        %v6499 = vadd.f32 %v6447, %v6496
        %s6500 = scalar_lea.vmem [#allocation11], 864
        %v6501 = vld [vmem:[%s6500] sm:$0xf]
        %v6502 = vld [vmem:[%s6500 + $0x4] sm:$0xf]
        %v6503 = vld [vmem:[%s6500 + $0x8] sm:$0xf]
        %v6504 = vld [vmem:[%s6500 + $0xc] sm:$0xf]
        %v6505 = vld [vmem:[%s6500 + $0x10] sm:$0xf]
        %v6506 = vld [vmem:[%s6500 + $0x14] sm:$0xf]
        %v6507 = vld [vmem:[%s6500 + $0x18] sm:$0xf]
        %v6508 = vld [vmem:[%s6500 + $0x1c] sm:$0xf]
        %v6509 = vrot.slane %v6405, 1
        %v6518 = vunpack.c.l.b16 %v6501
        %v6519 = vunpack.c.l.b16 %v6502
        %v6520 = vunpack.c.l.b16 %v6503
        %v6521 = vunpack.c.l.b16 %v6504
        %v6522 = vunpack.c.l.b16 %v6505
        %v6523 = vunpack.c.l.b16 %v6506
        %v6524 = vunpack.c.l.b16 %v6507
        %v6525 = vunpack.c.l.b16 %v6508
        %v6526 = vpack.c.b16 %v6519, %v6518
        %v6527 = vpack.c.b16 %v6521, %v6520
        %v6528 = vpack.c.b16 %v6523, %v6522
        %v6529 = vpack.c.b16 %v6525, %v6524
        %v6535 = vsel %vm5148, %v6509, 0
        %6537 = vmatpush.bf16.msra.mxu0 0
        %6538 = vmatpush.bf16.msra.mxu0 0
        %6539 = vmatpush.bf16.msra.mxu0 0
        %6540 = vmatpush.bf16.msra.mxu0 0
        %6541 = vmatpush.bf16.msra.mxu0 %v6529
        %6542 = vmatpush.bf16.msra.mxu0 %v6528
        %6543 = vmatpush.bf16.msra.mxu0 %v6527
        %6544 = vmatpush.bf16.msra.mxu0 %v6526
        %6545 = vmatmul.bf16.gmra.mxu0 %v6535
        %v6546 = vpop.f32.mrf.mxu0
        %v6547 = vadd.f32 0.0, %v6546
        %v6548 = vpop.f32.mrf.mxu0
        %6549 = vdwg.mxu0
        %v6550 = vadd.f32 %v6499, %v6547
        %s6551 = scalar_lea.vmem [#allocation11], 896
        %v6552 = vld [vmem:[%s6551] sm:$0xf]
        %v6553 = vld [vmem:[%s6551 + $0x4] sm:$0xf]
        %v6554 = vld [vmem:[%s6551 + $0x8] sm:$0xf]
        %v6555 = vld [vmem:[%s6551 + $0xc] sm:$0xf]
        %v6556 = vld [vmem:[%s6551 + $0x10] sm:$0xf]
        %v6557 = vld [vmem:[%s6551 + $0x14] sm:$0xf]
        %v6558 = vld [vmem:[%s6551 + $0x18] sm:$0xf]
        %v6559 = vld [vmem:[%s6551 + $0x1c] sm:$0xf]
        %v6560 = vrot.slane %v6345, 2
        %v6569 = vunpack.c.l.b16 %v6552
        %v6570 = vunpack.c.l.b16 %v6553
        %v6571 = vunpack.c.l.b16 %v6554
        %v6572 = vunpack.c.l.b16 %v6555
        %v6573 = vunpack.c.l.b16 %v6556
        %v6574 = vunpack.c.l.b16 %v6557
        %v6575 = vunpack.c.l.b16 %v6558
        %v6576 = vunpack.c.l.b16 %v6559
        %v6577 = vpack.c.b16 %v6570, %v6569
        %v6578 = vpack.c.b16 %v6572, %v6571
        %v6579 = vpack.c.b16 %v6574, %v6573
        %v6580 = vpack.c.b16 %v6576, %v6575
        %v6586 = vsel %vm5148, %v6560, 0
        %6588 = vmatpush.bf16.msra.mxu0 0
        %6589 = vmatpush.bf16.msra.mxu0 0
        %6590 = vmatpush.bf16.msra.mxu0 0
        %6591 = vmatpush.bf16.msra.mxu0 0
        %6592 = vmatpush.bf16.msra.mxu0 %v6580
        %6593 = vmatpush.bf16.msra.mxu0 %v6579
        %6594 = vmatpush.bf16.msra.mxu0 %v6578
        %6595 = vmatpush.bf16.msra.mxu0 %v6577
        %6596 = vmatmul.bf16.gmra.mxu0 %v6586
        %v6597 = vpop.f32.mrf.mxu0
        %v6598 = vadd.f32 0.0, %v6597
        %v6599 = vpop.f32.mrf.mxu0
        %6600 = vdwg.mxu0
        %v6601 = vadd.f32 %v6550, %v6598
        %s6602 = scalar_lea.vmem [#allocation11], 928
        %v6603 = vld [vmem:[%s6602] sm:$0xf]
        %v6604 = vld [vmem:[%s6602 + $0x4] sm:$0xf]
        %v6605 = vld [vmem:[%s6602 + $0x8] sm:$0xf]
        %v6606 = vld [vmem:[%s6602 + $0xc] sm:$0xf]
        %v6607 = vld [vmem:[%s6602 + $0x10] sm:$0xf]
        %v6608 = vld [vmem:[%s6602 + $0x14] sm:$0xf]
        %v6609 = vld [vmem:[%s6602 + $0x18] sm:$0xf]
        %v6610 = vld [vmem:[%s6602 + $0x1c] sm:$0xf]
        %v6611 = vrot.slane %v6405, 2
        %v6620 = vunpack.c.l.b16 %v6603
        %v6621 = vunpack.c.l.b16 %v6604
        %v6622 = vunpack.c.l.b16 %v6605
        %v6623 = vunpack.c.l.b16 %v6606
        %v6624 = vunpack.c.l.b16 %v6607
        %v6625 = vunpack.c.l.b16 %v6608
        %v6626 = vunpack.c.l.b16 %v6609
        %v6627 = vunpack.c.l.b16 %v6610
        %v6628 = vpack.c.b16 %v6621, %v6620
        %v6629 = vpack.c.b16 %v6623, %v6622
        %v6630 = vpack.c.b16 %v6625, %v6624
        %v6631 = vpack.c.b16 %v6627, %v6626
        %v6637 = vsel %vm5148, %v6611, 0
        %6639 = vmatpush.bf16.msra.mxu0 0
        %6640 = vmatpush.bf16.msra.mxu0 0
        %6641 = vmatpush.bf16.msra.mxu0 0
        %6642 = vmatpush.bf16.msra.mxu0 0
        %6643 = vmatpush.bf16.msra.mxu0 %v6631
        %6644 = vmatpush.bf16.msra.mxu0 %v6630
        %6645 = vmatpush.bf16.msra.mxu0 %v6629
        %6646 = vmatpush.bf16.msra.mxu0 %v6628
        %6647 = vmatmul.bf16.gmra.mxu0 %v6637
        %v6648 = vpop.f32.mrf.mxu0
        %v6649 = vadd.f32 0.0, %v6648
        %v6650 = vpop.f32.mrf.mxu0
        %6651 = vdwg.mxu0
        %v6652 = vadd.f32 %v6601, %v6649
        %s6653 = scalar_lea.vmem [#allocation11], 960
        %v6654 = vld [vmem:[%s6653] sm:$0xf]
        %v6655 = vld [vmem:[%s6653 + $0x4] sm:$0xf]
        %v6656 = vld [vmem:[%s6653 + $0x8] sm:$0xf]
        %v6657 = vld [vmem:[%s6653 + $0xc] sm:$0xf]
        %v6658 = vld [vmem:[%s6653 + $0x10] sm:$0xf]
        %v6659 = vld [vmem:[%s6653 + $0x14] sm:$0xf]
        %v6660 = vld [vmem:[%s6653 + $0x18] sm:$0xf]
        %v6661 = vld [vmem:[%s6653 + $0x1c] sm:$0xf]
        %v6662 = vrot.slane %v6345, 3
        %v6671 = vunpack.c.l.b16 %v6654
        %v6672 = vunpack.c.l.b16 %v6655
        %v6673 = vunpack.c.l.b16 %v6656
        %v6674 = vunpack.c.l.b16 %v6657
        %v6675 = vunpack.c.l.b16 %v6658
        %v6676 = vunpack.c.l.b16 %v6659
        %v6677 = vunpack.c.l.b16 %v6660
        %v6678 = vunpack.c.l.b16 %v6661
        %v6679 = vpack.c.b16 %v6672, %v6671
        %v6680 = vpack.c.b16 %v6674, %v6673
        %v6681 = vpack.c.b16 %v6676, %v6675
        %v6682 = vpack.c.b16 %v6678, %v6677
        %v6688 = vsel %vm5148, %v6662, 0
        %6690 = vmatpush.bf16.msra.mxu0 0
        %6691 = vmatpush.bf16.msra.mxu0 0
        %6692 = vmatpush.bf16.msra.mxu0 0
        %6693 = vmatpush.bf16.msra.mxu0 0
        %6694 = vmatpush.bf16.msra.mxu0 %v6682
        %6695 = vmatpush.bf16.msra.mxu0 %v6681
        %6696 = vmatpush.bf16.msra.mxu0 %v6680
        %6697 = vmatpush.bf16.msra.mxu0 %v6679
        %6698 = vmatmul.bf16.gmra.mxu0 %v6688
        %v6699 = vpop.f32.mrf.mxu0
        %v6700 = vadd.f32 0.0, %v6699
        %v6701 = vpop.f32.mrf.mxu0
        %6702 = vdwg.mxu0
        %v6703 = vadd.f32 %v6652, %v6700
        %s6704 = scalar_lea.vmem [#allocation11], 992
        %v6705 = vld [vmem:[%s6704] sm:$0xf]
        %v6706 = vld [vmem:[%s6704 + $0x4] sm:$0xf]
        %v6707 = vld [vmem:[%s6704 + $0x8] sm:$0xf]
        %v6708 = vld [vmem:[%s6704 + $0xc] sm:$0xf]
        %v6709 = vld [vmem:[%s6704 + $0x10] sm:$0xf]
        %v6710 = vld [vmem:[%s6704 + $0x14] sm:$0xf]
        %v6711 = vld [vmem:[%s6704 + $0x18] sm:$0xf]
        %v6712 = vld [vmem:[%s6704 + $0x1c] sm:$0xf]
        %v6713 = vrot.slane %v6405, 3
        %v6722 = vunpack.c.l.b16 %v6705
        %v6723 = vunpack.c.l.b16 %v6706
        %v6724 = vunpack.c.l.b16 %v6707
        %v6725 = vunpack.c.l.b16 %v6708
        %v6726 = vunpack.c.l.b16 %v6709
        %v6727 = vunpack.c.l.b16 %v6710
        %v6728 = vunpack.c.l.b16 %v6711
        %v6729 = vunpack.c.l.b16 %v6712
        %v6730 = vpack.c.b16 %v6723, %v6722
        %v6731 = vpack.c.b16 %v6725, %v6724
        %v6732 = vpack.c.b16 %v6727, %v6726
        %v6733 = vpack.c.b16 %v6729, %v6728
        %v6739 = vsel %vm5148, %v6713, 0
        %6741 = vmatpush.bf16.msra.mxu0 0
        %6742 = vmatpush.bf16.msra.mxu0 0
        %6743 = vmatpush.bf16.msra.mxu0 0
        %6744 = vmatpush.bf16.msra.mxu0 0
        %6745 = vmatpush.bf16.msra.mxu0 %v6733
        %6746 = vmatpush.bf16.msra.mxu0 %v6732
        %6747 = vmatpush.bf16.msra.mxu0 %v6731
        %6748 = vmatpush.bf16.msra.mxu0 %v6730
        %6749 = vmatmul.bf16.gmra.mxu0 %v6739
        %v6750 = vpop.f32.mrf.mxu0
        %v6751 = vadd.f32 0.0, %v6750
        %v6752 = vpop.f32.mrf.mxu0
        %6753 = vdwg.mxu0
        %v6754 = vadd.f32 %v6703, %v6751
        %vm6755 = vcmask 516096
        %6756 = vst.msk [vmem:[%s529] sm:$0x1] %vm6755, %v6754
        %v6757 = vld [vmem:[%s11] sm:$0xff]
        %v6758 = vld [vmem:[%s11 + $0x8] sm:$0xff]
        %v6759 = vld [vmem:[%s11 + $0x10] sm:$0xff]
        %v6760 = vld [vmem:[%s11 + $0x18] sm:$0xff]
        %v6761 = vld [vmem:[%s11 + $0x20] sm:$0xff]
        %v6762 = vld [vmem:[%s11 + $0x28] sm:$0xff]
        %v6763 = vld [vmem:[%s11 + $0x30] sm:$0xff]
        %v6764 = vld [vmem:[%s11 + $0x38] sm:$0xff]
        %6773 = vrot.lane.b32.xlu0 %v6757, 32
        %v6774 = vpop.permute.xlu0 %6773
        %6775 = vrot.lane.b32.xlu0 %v6758, 32
        %v6776 = vpop.permute.xlu0 %6775
        %6777 = vrot.lane.b32.xlu0 %v6759, 32
        %v6778 = vpop.permute.xlu0 %6777
        %6779 = vrot.lane.b32.xlu0 %v6760, 32
        %v6780 = vpop.permute.xlu0 %6779
        %6781 = vrot.lane.b32.xlu0 %v6761, 32
        %v6782 = vpop.permute.xlu0 %6781
        %6783 = vrot.lane.b32.xlu0 %v6762, 32
        %v6784 = vpop.permute.xlu0 %6783
        %6785 = vrot.lane.b32.xlu0 %v6763, 32
        %v6786 = vpop.permute.xlu0 %6785
        %6787 = vrot.lane.b32.xlu0 %v6764, 32
        %v6788 = vpop.permute.xlu0 %6787
        %v6797 = vmul.f32 %v5074, %v6774
        %v6798 = vmul.f32 %v5075, %v6776
        %v6799 = vmul.f32 %v5076, %v6778
        %v6800 = vmul.f32 %v5077, %v6780
        %v6801 = vmul.f32 %v5078, %v6782
        %v6802 = vmul.f32 %v5079, %v6784
        %v6803 = vmul.f32 %v5080, %v6786
        %v6804 = vmul.f32 %v5081, %v6788
        %6813 = vrot.lane.b32.xlu0 %v6797, 96
        %v6814 = vpop.permute.xlu0 %6813
        %6815 = vrot.lane.b32.xlu0 %v6798, 96
        %v6816 = vpop.permute.xlu0 %6815
        %6817 = vrot.lane.b32.xlu0 %v6799, 96
        %v6818 = vpop.permute.xlu0 %6817
        %6819 = vrot.lane.b32.xlu0 %v6800, 96
        %v6820 = vpop.permute.xlu0 %6819
        %6821 = vrot.lane.b32.xlu0 %v6801, 96
        %v6822 = vpop.permute.xlu0 %6821
        %6823 = vrot.lane.b32.xlu0 %v6802, 96
        %v6824 = vpop.permute.xlu0 %6823
        %6825 = vrot.lane.b32.xlu0 %v6803, 96
        %v6826 = vpop.permute.xlu0 %6825
        %6827 = vrot.lane.b32.xlu0 %v6804, 96
        %v6828 = vpop.permute.xlu0 %6827
        %vm6837 = vcmask 105472
        %v6838 = vsel %vm6837, %v6814, 0.0
        %v6839 = vsel %vm6837, %v6816, 0.0
        %v6840 = vadd.f32 %v6838, %v6839
        %v6841 = vsel %vm6837, %v6818, 0.0
        %v6842 = vadd.f32 %v6840, %v6841
        %v6843 = vsel %vm6837, %v6820, 0.0
        %v6844 = vadd.f32 %v6842, %v6843
        %v6845 = vsel %vm6837, %v6822, 0.0
        %v6846 = vadd.f32 %v6844, %v6845
        %v6847 = vsel %vm6837, %v6824, 0.0
        %v6848 = vadd.f32 %v6846, %v6847
        %v6849 = vsel %vm6837, %v6826, 0.0
        %v6850 = vadd.f32 %v6848, %v6849
        %v6851 = vsel %vm6837, %v6828, 0.0
        %v6852 = vadd.f32 %v6850, %v6851
        %6853 = vadd.xlane.f32.xlu0 %v6852
        %v6854 = vpop.xlane.xlu0 %6853
        %v6855 = vrot.slane %v6854, 4
        %v6856 = vadd.f32 %v6854, %v6855
        %v6857 = vrot.slane %v6856, 2
        %v6858 = vadd.f32 %v6856, %v6857
        %v6859 = vrot.slane %v6858, 1
        %v6860 = vadd.f32 %v6858, %v6859
        %s6861 = vtos %v6860
        %v6862 = vld [vmem:[#allocation4] sm:$0x1]
        %v6863 = vstv %s6861
        %v6864 = vadd.f32 %v6863, %v6862
        %v6865 = vtanh.pop %v6864
        %vm6866 = vcmask 0
        %6867 = vst.msk [vmem:[%s542] sm:$0x1] %vm6866, %v6865
        %s6868 = sand.u32 %s320, 1
        %s6869 = scalar_lea.sflag [#allocation7], %s6868
        %s6870 = sand.u32 %s320, 1
        %s6871 = scalar_lea.vmem [#allocation13], %s6870
        %p6872 = scmp.lt.s32.totalorder %s34, 1
        %s6873 = scalar_select %p6872, %s34, 1
        %s6874 = scalar_lea.vmem %s14, %s6873
        // Predicated region
        $region89: #{_lambda_.1} parent=71 // pred_check
          %p6875 = pneg %p330
        $region90: #{_lambda_.1} parent=71 // pred_check_branch
          %6877 = sbr.rel (%p6875) target = $region92
        $region91: #{_lambda_.1} parent=71 // pred_region
          %6879 = vsyncadd %s6869, 0
          %s6880 = scalar_lea.hbm %s13, %s34
          %s6882 = sshll.u32 %s6871, 4
          %s6883 = int_to_ptr.vmem [resolvable:$true] %s6882
          %s6884 = sshll.u32 %s6880, 4
          %s6885 = int_to_ptr.hbm [resolvable:$true] %s6884
          %6887 = dma.vmem_to_hbm [thread:$0]  %s6883, 16, %s6885, %s6869
        $region92: #{_lambda_.1} parent=71 // pred_fallthru
          _
        // Predicated region
        $region93: #{_lambda_.1} parent=71 // pred_check
          %p6888 = pneg %p356
        $region94: #{_lambda_.1} parent=71 // pred_check_branch
          %6890 = sbr.rel (%p6888) target = $region96
        $region95: #{_lambda_.1} parent=71 // pred_region
          _
        $region96: #{_lambda_.1} parent=71 // pred_fallthru
          _
      $region72: #{_lambda_.1} parent=5 // pred_fallthru
        _
      %p6891 = scmp.le.s32.totalorder 2, %s29
      // Predicated region
      $region97: #{_lambda_.1} parent=5 // pred_check
        %p6892 = pneg %p6891
      $region98: #{_lambda_.1} parent=5 // pred_check_branch
        %6894 = sbr.rel (%p6892) target = $region100
      $region99: #{_lambda_.1} parent=5 // pred_region
        %s6895 = ssub.s32 %s29, 2
        // Predicated region
        $region101: #{_lambda_.1} parent=99 // pred_check
          %p6896 = pneg %p336
        $region102: #{_lambda_.1} parent=99 // pred_check_branch
          %6898 = sbr.rel (%p6896) target = $region104
        $region103: #{_lambda_.1} parent=99 // pred_region
          %s6899 = sand.u32 %s321, 1
          %s6900 = scalar_lea.sflag [#allocation7], %s6899
          %s6901 = sand.u32 %s321, 1
          %s6902 = scalar_lea.vmem [#allocation13], %s6901
          %6904 = dma.done %s6900, 16
        $region104: #{_lambda_.1} parent=99 // pred_fallthru
          _
        // Predicated region
        $region105: #{_lambda_.1} parent=99 // pred_check
          %p6905 = pneg %p362
        $region106: #{_lambda_.1} parent=99 // pred_check_branch
          %6907 = sbr.rel (%p6905) target = $region108
        $region107: #{_lambda_.1} parent=99 // pred_region
          %p6908 = scmp.lt.s32.totalorder %s35, 1
          %s6909 = scalar_select %p6908, %s35, 1
          %s6910 = scalar_lea.vmem %s14, %s6909
        $region108: #{_lambda_.1} parent=99 // pred_fallthru
          _
      $region100: #{_lambda_.1} parent=5 // pred_fallthru
        _
    $region6: #{_lambda_.1} parent=1 // loop_footer
      %s33 = sadd.s32 1, %s29
    $region7: #{_lambda_.1} parent=1 // loop_footer_branch
      %28 = sbr.rel target = $region3
    $region8: #{_lambda_.1} parent=1 // loop_exit
      _
    %6911 = vsyncpa [#allocation6], 1
    %s6912 = scalar_lea.sflag [#allocation6], 1
    %6913 = vsyncpa %s6912, 1
    %6914 = vsyncpa [#allocation9], 1
    %6915 = vsyncpa [#allocation12], 1
    %6916 = vsyncpa [#allocation7], 1
    %s6917 = scalar_lea.sflag [#allocation7], 1
    %6918 = vsyncpa %s6917, 1

</llo_original>
